<compile_context>
chip_gen: v6e
topology: v6e:2x2x1
jax: 0.10.0
libtpu: 0.0.40
codegen_flags: <defaults>
</compile_context>

<pallas_src>
import math

import jax
import jax.numpy as jnp
from jax import lax
from jax.experimental import pallas as pl
from jax.experimental.pallas import tpu as pltpu


# ----------------------------------------------------------------------------
# Generation-aware sizing helpers
# ----------------------------------------------------------------------------
_VMEM_LIMIT_CACHE = None


def _vmem_limit():
    """~3/4 of physical VMEM, capped at 100 MiB; 48 MiB fallback (safe on v7x)."""
    global _VMEM_LIMIT_CACHE
    if _VMEM_LIMIT_CACHE is None:
        lim = 48 * 1024 * 1024
        try:
            info = pltpu.get_tpu_info()
            cap = int(getattr(info, "vmem_capacity_bytes", 0) or 0)
            if cap > 0:
                lim = min(cap * 3 // 4, 100 * 1024 * 1024)
        except Exception:
            pass
        _VMEM_LIMIT_CACHE = int(lim)
    return _VMEM_LIMIT_CACHE


def _row_tile(n):
    cap = 1024 if _vmem_limit() >= 96 * 1024 * 1024 else 512
    return n if n <= cap else cap


def _round_up(x, m):
    return -(-x // m) * m


def _pick_time_chunk(T, B, Hp, budget_bytes=4 * 1024 * 1024):
    """Largest divisor of T whose per-direction gx chunk stays under the budget."""
    per_step = B * 4 * Hp * 2  # bf16 bytes per timestep per direction
    target = max(1, min(T, budget_bytes // max(per_step, 1)))
    for tc in range(target, 0, -1):
        if T % tc == 0:
            return tc
    return T


# ----------------------------------------------------------------------------
# Pallas kernels
# ----------------------------------------------------------------------------
def _gates_single_kernel(x_ref, w_ref, b_ref, gx_ref):
    """gx = x @ W (both directions fused along columns) + b, stored bf16."""
    acc = jnp.dot(x_ref[...], w_ref[...], preferred_element_type=jnp.float32)
    gx_ref[...] = (acc + b_ref[...]).astype(gx_ref.dtype)


def _gates_pair_kernel(hf_ref, hr_ref, wf_ref, wr_ref, b_ref, gx_ref):
    """Same, but the previous layer's fwd/rev halves are separate operands
    (avoids a concat HBM pass): gx = hf @ Wf + hr @ Wr + b."""
    acc = jnp.dot(hf_ref[...], wf_ref[...], preferred_element_type=jnp.float32)
    acc = acc + jnp.dot(hr_ref[...], wr_ref[...], preferred_element_type=jnp.float32)
    gx_ref[...] = (acc + b_ref[...]).astype(gx_ref.dtype)


def _lstm_recurrence_kernel(gxf_ref, gxr_ref, whh_ref, outf_ref, outr_ref,
                            hf, cf, hr, cr):
    """One time-chunk of BOTH directions, interleaved.

    gxf_ref: (Tc, B, 4Hp) bf16  forward chunk k (ascending time inside)
    gxr_ref: (Tc, B, 4Hp) bf16  reverse chunk nT-1-k (processed descending)
    whh_ref: (2, Hp, 4Hp) bf16  recurrent weights [fwd, rev]
    outf_ref/outr_ref: (Tc, B, Hp) bf16 hidden outputs (time-aligned to input)
    hf/cf/hr/cr: (B, Hp) f32 recurrent state, carried across grid steps
    """
    k = pl.program_id(0)
    Tc, _, _ = gxf_ref.shape
    Hp = hf.shape[-1]

    @pl.when(k == 0)
    def _():
        hf[...] = jnp.zeros_like(hf)
        cf[...] = jnp.zeros_like(cf)
        hr[...] = jnp.zeros_like(hr)
        cr[...] = jnp.zeros_like(cr)

    w_f = whh_ref[0]  # (Hp, 4Hp) bf16, hoisted out of the loop
    w_r = whh_ref[1]

    def cell(gates, c):
        i_g = jax.nn.sigmoid(gates[:, 0 * Hp:1 * Hp])
        f_g = jax.nn.sigmoid(gates[:, 1 * Hp:2 * Hp])
        g_g = jnp.tanh(gates[:, 2 * Hp:3 * Hp])
        o_g = jax.nn.sigmoid(gates[:, 3 * Hp:4 * Hp])
        c_new = f_g * c + i_g * g_g
        h_new = o_g * jnp.tanh(c_new)
        return h_new, c_new

    def step(s, carry):
        tr = Tc - 1 - s  # reverse direction walks the chunk backwards
        gates_f = gxf_ref[s].astype(jnp.float32) + jnp.dot(
            hf[...].astype(jnp.bfloat16), w_f, preferred_element_type=jnp.float32)
        gates_r = gxr_ref[tr].astype(jnp.float32) + jnp.dot(
            hr[...].astype(jnp.bfloat16), w_r, preferred_element_type=jnp.float32)
        h_f, c_f = cell(gates_f, cf[...])
        h_r, c_r = cell(gates_r, cr[...])
        hf[...] = h_f
        cf[...] = c_f
        hr[...] = h_r
        cr[...] = c_r
        outf_ref[s] = h_f.astype(outf_ref.dtype)
        outr_ref[tr] = h_r.astype(outr_ref.dtype)
        return carry

    lax.fori_loop(0, Tc, step, 0, unroll=True if Tc <= 16 else 4)


def _fc_kernel(hf_ref, hr_ref, wf_ref, wr_ref, b_ref, o_ref):
    """y = hf @ Wf + hr @ Wr + b (weights pre-padded to lane-dense widths)."""
    acc = jnp.dot(hf_ref[...], wf_ref[...], preferred_element_type=jnp.float32)
    acc = acc + jnp.dot(hr_ref[...], wr_ref[...], preferred_element_type=jnp.float32)
    o_ref[...] = acc + b_ref[...]


# ----------------------------------------------------------------------------
# Pallas wrappers
# ----------------------------------------------------------------------------
def lstm_gates_single(x, w, b):
    """x: (N, D) bf16, w: (D, 8Hp) bf16, b: (1, 8Hp) f32 -> (N, 8Hp) bf16."""
    N, D = x.shape
    G = w.shape[1]
    tn = _row_tile(N)
    cost = pl.CostEstimate(flops=2 * N * D * G, transcendentals=0,
                           bytes_accessed=N * D * 2 + D * G * 2 + G * 4 + N * G * 2)
    return pl.pallas_call(
        _gates_single_kernel,
        out_shape=jax.ShapeDtypeStruct((N, G), jnp.bfloat16),
        grid_spec=pltpu.PrefetchScalarGridSpec(
            num_scalar_prefetch=0,
            grid=(pl.cdiv(N, tn),),
            in_specs=[
                pl.BlockSpec((tn, D), lambda i: (i, 0)),
                pl.BlockSpec((D, G), lambda i: (0, 0)),
                pl.BlockSpec((1, G), lambda i: (0, 0)),
            ],
            out_specs=pl.BlockSpec((tn, G), lambda i: (i, 0)),
        ),
        compiler_params=pltpu.CompilerParams(
            dimension_semantics=("parallel",), vmem_limit_bytes=_vmem_limit()),
        cost_estimate=cost,
    )(x, w, b)


def lstm_gates_pair(hf, hr, wf, wr, b):
    """hf/hr: (N, Hp) bf16, wf/wr: (Hp, 8Hp) bf16, b: (1, 8Hp) f32 -> (N, 8Hp) bf16."""
    N, Hp = hf.shape
    G = wf.shape[1]
    tn = _row_tile(N)
    cost = pl.CostEstimate(flops=2 * 2 * N * Hp * G, transcendentals=0,
                           bytes_accessed=2 * N * Hp * 2 + 2 * Hp * G * 2 + G * 4 + N * G * 2)
    return pl.pallas_call(
        _gates_pair_kernel,
        out_shape=jax.ShapeDtypeStruct((N, G), jnp.bfloat16),
        grid_spec=pltpu.PrefetchScalarGridSpec(
            num_scalar_prefetch=0,
            grid=(pl.cdiv(N, tn),),
            in_specs=[
                pl.BlockSpec((tn, Hp), lambda i: (i, 0)),
                pl.BlockSpec((tn, Hp), lambda i: (i, 0)),
                pl.BlockSpec((Hp, G), lambda i: (0, 0)),
                pl.BlockSpec((Hp, G), lambda i: (0, 0)),
                pl.BlockSpec((1, G), lambda i: (0, 0)),
            ],
            out_specs=pl.BlockSpec((tn, G), lambda i: (i, 0)),
        ),
        compiler_params=pltpu.CompilerParams(
            dimension_semantics=("parallel",), vmem_limit_bytes=_vmem_limit()),
        cost_estimate=cost,
    )(hf, hr, wf, wr, b)


def lstm_recurrence(gx, w_hh, Hp, Tc):
    """Chunked, direction-interleaved recurrence.

    gx:   (T, B, 8Hp) bf16  (columns [0:4Hp]=fwd gates, [4Hp:8Hp]=rev gates)
    w_hh: (2, Hp, 4Hp) bf16
    returns (out_f, out_r), each (T, B, Hp) bf16 time-aligned to the input.
    """
    T, B, _ = gx.shape
    G = 4 * Hp
    nT = T // Tc
    cost = pl.CostEstimate(
        flops=2 * 2 * T * B * Hp * G,
        transcendentals=2 * T * B * 5 * Hp,
        bytes_accessed=gx.size * 2 + w_hh.size * 2 + 2 * T * B * Hp * 2)
    return pl.pallas_call(
        _lstm_recurrence_kernel,
        out_shape=(jax.ShapeDtypeStruct((T, B, Hp), jnp.bfloat16),
                   jax.ShapeDtypeStruct((T, B, Hp), jnp.bfloat16)),
        grid_spec=pltpu.PrefetchScalarGridSpec(
            num_scalar_prefetch=0,
            grid=(nT,),
            in_specs=[
                pl.BlockSpec((Tc, B, G), lambda k: (k, 0, 0)),            # fwd gx chunk
                pl.BlockSpec((Tc, B, G), lambda k: (nT - 1 - k, 0, 1)),   # rev gx chunk
                pl.BlockSpec((2, Hp, G), lambda k: (0, 0, 0)),            # w_hh (resident)
            ],
            out_specs=[
                pl.BlockSpec((Tc, B, Hp), lambda k: (k, 0, 0)),           # fwd out chunk
                pl.BlockSpec((Tc, B, Hp), lambda k: (nT - 1 - k, 0, 0)),  # rev out chunk
            ],
            scratch_shapes=[pltpu.VMEM((B, Hp), jnp.float32)] * 4,        # hf, cf, hr, cr
        ),
        compiler_params=pltpu.CompilerParams(
            dimension_semantics=("arbitrary",), vmem_limit_bytes=_vmem_limit()),
        cost_estimate=cost,
    )(gx, gx, w_hh)


def fc_pair(hf, hr, wf, wr, b):
    """hf/hr: (N, Hp) bf16, wf/wr: (Hp, Op) bf16, b: (1, Op) f32 -> (N, Op) f32."""
    N, Hp = hf.shape
    Op = wf.shape[1]
    tn = _row_tile(N)
    cost = pl.CostEstimate(flops=2 * 2 * N * Hp * Op, transcendentals=0,
                           bytes_accessed=2 * N * Hp * 2 + 2 * Hp * Op * 2 + Op * 4 + N * Op * 4)
    return pl.pallas_call(
        _fc_kernel,
        out_shape=jax.ShapeDtypeStruct((N, Op), jnp.float32),
        grid_spec=pltpu.PrefetchScalarGridSpec(
            num_scalar_prefetch=0,
            grid=(pl.cdiv(N, tn),),
            in_specs=[
                pl.BlockSpec((tn, Hp), lambda i: (i, 0)),
                pl.BlockSpec((tn, Hp), lambda i: (i, 0)),
                pl.BlockSpec((Hp, Op), lambda i: (0, 0)),
                pl.BlockSpec((Hp, Op), lambda i: (0, 0)),
                pl.BlockSpec((1, Op), lambda i: (0, 0)),
            ],
            out_specs=pl.BlockSpec((tn, Op), lambda i: (i, 0)),
        ),
        compiler_params=pltpu.CompilerParams(
            dimension_semantics=("parallel",), vmem_limit_bytes=_vmem_limit()),
        cost_estimate=cost,
    )(hf, hr, wf, wr, b)


def lstm_model_forward(x, kparams):
    """Full LSTMModel.forward. x: (B, T, input_size) batch_first, like PyTorch."""
    B, T, D = x.shape
    Hp = kparams["H_pad"]
    N = T * B
    # Single transpose to time-major rows (row = t*B + b), cast to bf16 once.
    act0 = jnp.transpose(x, (1, 0, 2)).reshape(N, D).astype(jnp.bfloat16)
    act = None
    Tc = _pick_time_chunk(T, B, Hp)
    for li, lp in enumerate(kparams["layers"]):
        if li == 0:
            gx = lstm_gates_single(act0, lp["w_x"], lp["b"])
        else:
            gx = lstm_gates_pair(act[0], act[1], lp["w_hf"], lp["w_hr"], lp["b"])
        gx = gx.reshape(T, B, 8 * Hp)                       # metadata-only
        out_f, out_r = lstm_recurrence(gx, lp["w_hh"], Hp, Tc)
        act = (out_f.reshape(N, Hp), out_r.reshape(N, Hp))  # no concat HBM pass
    y = fc_pair(act[0], act[1], kparams["fc_wf"], kparams["fc_wr"], kparams["fc_b"])
    O = kparams["output_size"]
    y = y[:, :O].reshape(T, B, O)
    return jnp.transpose(y, (1, 0, 2))                       # (B, T, O)


# ----------------------------------------------------------------------------
# Parameter init (logical / PyTorch-style) and kernel-layout preparation
# ----------------------------------------------------------------------------
def init_params(key, input_size, hidden_size, output_size, num_layers=2,
                bidirectional=True):
    assert bidirectional, "kernel is specialized for the bidirectional=True default"
    k = 1.0 / math.sqrt(hidden_size)
    lstm = []
    for layer in range(num_layers):
        d_in = input_size if layer == 0 else 2 * hidden_size
        key, k1, k2, k3, k4 = jax.random.split(key, 5)
        w_ih = jax.random.uniform(k1, (2, d_in, 4 * hidden_size), jnp.float32, -k, k)
        w_hh = jax.random.uniform(k2, (2, hidden_size, 4 * hidden_size), jnp.float32, -k, k)
        b_ih = jax.random.uniform(k3, (2, 1, 4 * hidden_size), jnp.float32, -k, k)
        b_hh = jax.random.uniform(k4, (2, 1, 4 * hidden_size), jnp.float32, -k, k)
        lstm.append((w_ih, w_hh, b_ih + b_hh))   # PyTorch adds b_ih + b_hh
    key, kf1, kf2 = jax.random.split(key, 3)
    kf = 1.0 / math.sqrt(2 * hidden_size)
    fc_w = jax.random.uniform(kf1, (2 * hidden_size, output_size), jnp.float32, -kf, kf)
    fc_b = jax.random.uniform(kf2, (1, output_size), jnp.float32, -kf, kf)
    return {"lstm": lstm, "fc_w": fc_w, "fc_b": fc_b}


def _pad_gate_cols(w, H, Hp):
    """(..., 4H) -> (..., 4Hp): each gate block (i,f,g,o) zero-padded to Hp cols."""
    out = jnp.zeros(w.shape[:-1] + (4 * Hp,), w.dtype)
    for g in range(4):
        out = out.at[..., g * Hp:g * Hp + H].set(w[..., g * H:(g + 1) * H])
    return out


def _pad_rows(w, rows_p):
    out = jnp.zeros((rows_p,) + w.shape[1:], w.dtype)
    return out.at[: w.shape[0]].set(w)


def prepare_kernel_params(params, hidden_size):
    """Pad H to a multiple of 128 (lane-dense gates/stores), fuse directions along
    columns, pre-pad the FC head, and cast matmul weights to bf16."""
    H = hidden_size
    Hp = _round_up(H, 128)
    layers = []
    for li, (w_ih, w_hh, b) in enumerate(params["lstm"]):
        w_ih_p = _pad_gate_cols(w_ih, H, Hp)                     # (2, d_in, 4Hp)
        b_p = _pad_gate_cols(b, H, Hp)                           # (2, 1, 4Hp)
        w_hh_p = _pad_gate_cols(w_hh, H, Hp)                     # (2, H, 4Hp)
        w_hh_p = jnp.zeros((2, Hp, 4 * Hp), w_hh.dtype).at[:, :H, :].set(w_hh_p)
        w_cat = jnp.concatenate([w_ih_p[0], w_ih_p[1]], axis=-1)  # (d_in, 8Hp)
        b_cat = jnp.concatenate([b_p[0], b_p[1]], axis=-1)        # (1, 8Hp)
        layer = {"b": b_cat.astype(jnp.float32),
                 "w_hh": w_hh_p.astype(jnp.bfloat16)}
        if li == 0:
            layer["w_x"] = w_cat.astype(jnp.bfloat16)
        else:
            # previous layer's features are [fwd_h (H), rev_h (H)]; split & pad rows
            layer["w_hf"] = _pad_rows(w_cat[:H], Hp).astype(jnp.bfloat16)
            layer["w_hr"] = _pad_rows(w_cat[H:2 * H], Hp).astype(jnp.bfloat16)
        layers.append(layer)
    fc_w, fc_b = params["fc_w"], params["fc_b"]
    O = fc_w.shape[1]
    Op = _round_up(max(O, 1), 128)
    fc_wf = jnp.zeros((Hp, Op), fc_w.dtype).at[:H, :O].set(fc_w[:H])
    fc_wr = jnp.zeros((Hp, Op), fc_w.dtype).at[:H, :O].set(fc_w[H:2 * H])
    fc_bp = jnp.zeros((1, Op), jnp.float32).at[:, :O].set(fc_b.reshape(1, O))
    return {"layers": layers,
            "fc_wf": fc_wf.astype(jnp.bfloat16),
            "fc_wr": fc_wr.astype(jnp.bfloat16),
            "fc_b": fc_bp,
            "H_pad": Hp,
            "output_size": O}


# ----------------------------------------------------------------------------
# Pure-JAX reference (same math & rounding as the kernel) for correctness
# ----------------------------------------------------------------------------
def _ref_forward(x, params, hidden_size):
    B, T, _ = x.shape
    H = hidden_size
    h_seq = x.astype(jnp.bfloat16)                                # (B, T, D)
    for (w_ih, w_hh, b) in params["lstm"]:
        w_ih_b = w_ih.astype(jnp.bfloat16)
        w_hh_b = w_hh.astype(jnp.bfloat16)
        dir_outs = []
        for d in range(2):
            seq = h_seq if d == 0 else h_seq[:, ::-1, :]
            D_in = seq.shape[-1]
            gx = (jnp.dot(seq.reshape(B * T, D_in), w_ih_b[d],
                          preferred_element_type=jnp.float32).reshape(B, T, 4 * H)
                  + b[d])
            gx = gx.astype(jnp.bfloat16)                          # kernel stores gx bf16
            h = jnp.zeros((B, H), jnp.float32)
            c = jnp.zeros((B, H), jnp.float32)
            outs = []
            for t in range(T):
                gates = gx[:, t].astype(jnp.float32) + jnp.dot(
                    h.astype(jnp.bfloat16), w_hh_b[d], preferred_element_type=jnp.float32)
                i = jax.nn.sigmoid(gates[:, 0 * H:1 * H])
                f = jax.nn.sigmoid(gates[:, 1 * H:2 * H])
                g = jnp.tanh(gates[:, 2 * H:3 * H])
                o = jax.nn.sigmoid(gates[:, 3 * H:4 * H])
                c = f * c + i * g
                h = o * jnp.tanh(c)
                outs.append(h.astype(jnp.bfloat16))               # kernel stores h bf16
            out = jnp.stack(outs, axis=1)                         # (B, T, H)
            if d == 1:
                out = out[:, ::-1, :]
            dir_outs.append(out)
        h_seq = jnp.concatenate(dir_outs, axis=-1)                # (B, T, 2H) bf16
    flat = h_seq.reshape(B * T, -1)
    y = (jnp.dot(flat, params["fc_w"].astype(jnp.bfloat16),
                 preferred_element_type=jnp.float32) + params["fc_b"])
    return y.reshape(B, T, -1)


# ----------------------------------------------------------------------------
if __name__ == "__main__":
    B, T = 2, 8
    input_size, hidden_size, output_size = 16, 32, 8

    key = jax.random.PRNGKey(0)
    key, kx = jax.random.split(key)
    x = jax.random.normal(kx, (B, T, input_size), jnp.float32)
    params = init_params(key, input_size, hidden_size, output_size)
    kparams = prepare_kernel_params(params, hidden_size)

    fwd = jax.jit(lambda inp: lstm_model_forward(inp, kparams))
    out = jax.block_until_ready(fwd(x))

    assert out.shape == (B, T, output_size), out.shape
    assert bool(jnp.all(jnp.isfinite(out)))

    ref = jax.block_until_ready(_ref_forward(x, params, hidden_size))
    max_err = float(jnp.max(jnp.abs(out - ref)))
    assert max_err < 5e-3, max_err

    print("KERNEL_OK")
</pallas_src>

<mosaic_0001>
module attributes {stable_mosaic.version = 11 : i64} {
  func.func @_gates_single_kernel(%arg0: i32, %arg1: memref<16x16xbf16, #tpu.memory_space<vmem>>, %arg2: memref<16x1024xbf16, #tpu.memory_space<vmem>>, %arg3: memref<1x1024xf32, #tpu.memory_space<vmem>>, %arg4: memref<16x1024xbf16, #tpu.memory_space<vmem>>) attributes {dimension_semantics = [#tpu.dimension_semantics<parallel>], iteration_bounds = array<i64: 1>, scalar_prefetch = 0 : i64, scratch_operands = 0 : i64, tpu.core_type = #tpu.core_type<tc>, window_params = [{transform_indices = @transform_0, window_bounds = array<i64: 16, 16>}, {pipeline_mode = #tpu.pipeline_mode<synchronous>, transform_indices = @transform_1, window_bounds = array<i64: 16, 1024>}, {pipeline_mode = #tpu.pipeline_mode<synchronous>, transform_indices = @transform_2, window_bounds = array<i64: 1, 1024>}, {transform_indices = @transform_3, window_bounds = array<i64: 16, 1024>}]} {
    %c0 = arith.constant 0 : index
    %c0_0 = arith.constant 0 : index
    %0 = vector.load %arg1[%c0, %c0_0] : memref<16x16xbf16, #tpu.memory_space<vmem>>, vector<16x16xbf16>
    %c0_1 = arith.constant 0 : index
    %c0_2 = arith.constant 0 : index
    %1 = vector.load %arg2[%c0_1, %c0_2] : memref<16x1024xbf16, #tpu.memory_space<vmem>>, vector<16x1024xbf16>
    %cst = arith.constant dense<0.000000e+00> : vector<16x1024xf32>
    %2 = tpu.matmul %0, %1, %cst {dimension_numbers = #tpu.dot_dimension_numbers<[1], [0], [0], [1], [0, 0, 1, 1], [], []>} : vector<16x16xbf16>, vector<16x1024xbf16>, vector<16x1024xf32> -> vector<16x1024xf32>
    %c0_3 = arith.constant 0 : index
    %c0_4 = arith.constant 0 : index
    %3 = vector.load %arg3[%c0_3, %c0_4] : memref<1x1024xf32, #tpu.memory_space<vmem>>, vector<1x1024xf32>
    %4 = vector.broadcast %3 : vector<1x1024xf32> to vector<16x1024xf32>
    %5 = arith.addf %2, %4 : vector<16x1024xf32>
    %6 = arith.truncf %5 : vector<16x1024xf32> to vector<16x1024xbf16>
    %c0_5 = arith.constant 0 : index
    %c0_6 = arith.constant 0 : index
    %7 = vector.load %arg4[%c0_5, %c0_6] : memref<16x1024xbf16, #tpu.memory_space<vmem>>, vector<16x1024xbf16>
    tpu.vector_store %arg4[%c0_5, %c0_6], %6 {strides = array<i32>} : memref<16x1024xbf16, #tpu.memory_space<vmem>>, vector<16x1024xbf16>,
    return
  }
  func.func @transform_0(%arg0: i32) -> (i32, i32) {
    %c0_i32 = arith.constant 0 : i32
    %c0_i32_0 = arith.constant 0 : i32
    return %arg0, %c0_i32 : i32, i32
  }
  func.func @transform_1(%arg0: i32) -> (i32, i32) {
    %c0_i32 = arith.constant 0 : i32
    %c0_i32_0 = arith.constant 0 : i32
    %c0_i32_1 = arith.constant 0 : i32
    return %c0_i32, %c0_i32_0 : i32, i32
  }
  func.func @transform_2(%arg0: i32) -> (i32, i32) {
    %c0_i32 = arith.constant 0 : i32
    %c0_i32_0 = arith.constant 0 : i32
    %c0_i32_1 = arith.constant 0 : i32
    return %c0_i32, %c0_i32_0 : i32, i32
  }
  func.func @transform_3(%arg0: i32) -> (i32, i32) {
    %c0_i32 = arith.constant 0 : i32
    %c0_i32_0 = arith.constant 0 : i32
    return %arg0, %c0_i32 : i32, i32
  }
}

module attributes {stable_mosaic.version = 11 : i64} {
  func.func @_gates_pair_kernel(%arg0: i32, %arg1: memref<16x128xbf16, #tpu.memory_space<vmem>>, %arg2: memref<16x128xbf16, #tpu.memory_space<vmem>>, %arg3: memref<128x1024xbf16, #tpu.memory_space<vmem>>, %arg4: memref<128x1024xbf16, #tpu.memory_space<vmem>>, %arg5: memref<1x1024xf32, #tpu.memory_space<vmem>>, %arg6: memref<16x1024xbf16, #tpu.memory_space<vmem>>) attributes {dimension_semantics = [#tpu.dimension_semantics<parallel>], iteration_bounds = array<i64: 1>, scalar_prefetch = 0 : i64, scratch_operands = 0 : i64, tpu.core_type = #tpu.core_type<tc>, window_params = [{transform_indices = @transform_0, window_bounds = array<i64: 16, 128>}, {transform_indices = @transform_1, window_bounds = array<i64: 16, 128>}, {pipeline_mode = #tpu.pipeline_mode<synchronous>, transform_indices = @transform_2, window_bounds = array<i64: 128, 1024>}, {pipeline_mode = #tpu.pipeline_mode<synchronous>, transform_indices = @transform_3, window_bounds = array<i64: 128, 1024>}, {pipeline_mode = #tpu.pipeline_mode<synchronous>, transform_indices = @transform_4, window_bounds = array<i64: 1, 1024>}, {transform_indices = @transform_5, window_bounds = array<i64: 16, 1024>}]} {
    %c0 = arith.constant 0 : index
    %c0_0 = arith.constant 0 : index
    %0 = vector.load %arg1[%c0, %c0_0] : memref<16x128xbf16, #tpu.memory_space<vmem>>, vector<16x128xbf16>
    %c0_1 = arith.constant 0 : index
    %c0_2 = arith.constant 0 : index
    %1 = vector.load %arg3[%c0_1, %c0_2] : memref<128x1024xbf16, #tpu.memory_space<vmem>>, vector<128x1024xbf16>
    %cst = arith.constant dense<0.000000e+00> : vector<16x1024xf32>
    %2 = tpu.matmul %0, %1, %cst {dimension_numbers = #tpu.dot_dimension_numbers<[1], [0], [0], [1], [0, 0, 1, 1], [], []>} : vector<16x128xbf16>, vector<128x1024xbf16>, vector<16x1024xf32> -> vector<16x1024xf32>
    %c0_3 = arith.constant 0 : index
    %c0_4 = arith.constant 0 : index
    %3 = vector.load %arg2[%c0_3, %c0_4] : memref<16x128xbf16, #tpu.memory_space<vmem>>, vector<16x128xbf16>
    %c0_5 = arith.constant 0 : index
    %c0_6 = arith.constant 0 : index
    %4 = vector.load %arg4[%c0_5, %c0_6] : memref<128x1024xbf16, #tpu.memory_space<vmem>>, vector<128x1024xbf16>
    %cst_7 = arith.constant dense<0.000000e+00> : vector<16x1024xf32>
    %5 = tpu.matmul %3, %4, %cst_7 {dimension_numbers = #tpu.dot_dimension_numbers<[1], [0], [0], [1], [0, 0, 1, 1], [], []>} : vector<16x128xbf16>, vector<128x1024xbf16>, vector<16x1024xf32> -> vector<16x1024xf32>
    %6 = arith.addf %2, %5 : vector<16x1024xf32>
    %c0_8 = arith.constant 0 : index
    %c0_9 = arith.constant 0 : index
    %7 = vector.load %arg5[%c0_8, %c0_9] : memref<1x1024xf32, #tpu.memory_space<vmem>>, vector<1x1024xf32>
    %8 = vector.broadcast %7 : vector<1x1024xf32> to vector<16x1024xf32>
    %9 = arith.addf %6, %8 : vector<16x1024xf32>
    %10 = arith.truncf %9 : vector<16x1024xf32> to vector<16x1024xbf16>
    %c0_10 = arith.constant 0 : index
    %c0_11 = arith.constant 0 : index
    %11 = vector.load %arg6[%c0_10, %c0_11] : memref<16x1024xbf16, #tpu.memory_space<vmem>>, vector<16x1024xbf16>
    tpu.vector_store %arg6[%c0_10, %c0_11], %10 {strides = array<i32>} : memref<16x1024xbf16, #tpu.memory_space<vmem>>, vector<16x1024xbf16>,
    return
  }
  func.func @transform_0(%arg0: i32) -> (i32, i32) {
    %c0_i32 = arith.constant 0 : i32
    %c0_i32_0 = arith.constant 0 : i32
    return %arg0, %c0_i32 : i32, i32
  }
  func.func @transform_1(%arg0: i32) -> (i32, i32) {
    %c0_i32 = arith.constant 0 : i32
    %c0_i32_0 = arith.constant 0 : i32
    return %arg0, %c0_i32 : i32, i32
  }
  func.func @transform_2(%arg0: i32) -> (i32, i32) {
    %c0_i32 = arith.constant 0 : i32
    %c0_i32_0 = arith.constant 0 : i32
    %c0_i32_1 = arith.constant 0 : i32
    return %c0_i32, %c0_i32_0 : i32, i32
  }
  func.func @transform_3(%arg0: i32) -> (i32, i32) {
    %c0_i32 = arith.constant 0 : i32
    %c0_i32_0 = arith.constant 0 : i32
    %c0_i32_1 = arith.constant 0 : i32
    return %c0_i32, %c0_i32_0 : i32, i32
  }
  func.func @transform_4(%arg0: i32) -> (i32, i32) {
    %c0_i32 = arith.constant 0 : i32
    %c0_i32_0 = arith.constant 0 : i32
    %c0_i32_1 = arith.constant 0 : i32
    return %c0_i32, %c0_i32_0 : i32, i32
  }
  func.func @transform_5(%arg0: i32) -> (i32, i32) {
    %c0_i32 = arith.constant 0 : i32
    %c0_i32_0 = arith.constant 0 : i32
    return %arg0, %c0_i32 : i32, i32
  }
}

module attributes {stable_mosaic.version = 11 : i64} {
  func.func @_lstm_recurrence_kernel(%arg0: i32, %arg1: memref<8x2x512xbf16, #tpu.memory_space<vmem>>, %arg2: memref<8x2x512xbf16, #tpu.memory_space<vmem>>, %arg3: memref<2x128x512xbf16, #tpu.memory_space<vmem>>, %arg4: memref<8x2x128xbf16, #tpu.memory_space<vmem>>, %arg5: memref<8x2x128xbf16, #tpu.memory_space<vmem>>, %arg6: memref<2x128xf32, #tpu.memory_space<vmem>>, %arg7: memref<2x128xf32, #tpu.memory_space<vmem>>, %arg8: memref<2x128xf32, #tpu.memory_space<vmem>>, %arg9: memref<2x128xf32, #tpu.memory_space<vmem>>) attributes {dimension_semantics = [#tpu.dimension_semantics<arbitrary>], iteration_bounds = array<i64: 1>, scalar_prefetch = 0 : i64, scratch_operands = 4 : i64, tpu.core_type = #tpu.core_type<tc>, window_params = [{transform_indices = @transform_0, window_bounds = array<i64: 8, 2, 512>}, {transform_indices = @transform_1, window_bounds = array<i64: 8, 2, 512>}, {pipeline_mode = #tpu.pipeline_mode<synchronous>, transform_indices = @transform_2, window_bounds = array<i64: 2, 128, 512>}, {transform_indices = @transform_3, window_bounds = array<i64: 8, 2, 128>}, {transform_indices = @transform_4, window_bounds = array<i64: 8, 2, 128>}]} {
    %c0_i32 = arith.constant 0 : i32
    %0 = arith.cmpi eq, %arg0, %c0_i32 : i32
    %1 = arith.extui %0 : i1 to i32
    %c0_i32_0 = arith.constant 0 : i32
    %2 = arith.cmpi ne, %1, %c0_i32_0 : i32
    scf.if %2 {
      %cst_269 = arith.constant 0.000000e+00 : f32
      %671 = vector.broadcast %cst_269 : f32 to vector<2x128xf32>
      %c0_270 = arith.constant 0 : index
      %c0_271 = arith.constant 0 : index
      %672 = vector.load %arg6[%c0_270, %c0_271] : memref<2x128xf32, #tpu.memory_space<vmem>>, vector<2x128xf32>
      tpu.vector_store %arg6[%c0_270, %c0_271], %671 {strides = array<i32>} : memref<2x128xf32, #tpu.memory_space<vmem>>, vector<2x128xf32>,
      %cst_272 = arith.constant 0.000000e+00 : f32
      %673 = vector.broadcast %cst_272 : f32 to vector<2x128xf32>
      %c0_273 = arith.constant 0 : index
      %c0_274 = arith.constant 0 : index
      %674 = vector.load %arg7[%c0_273, %c0_274] : memref<2x128xf32, #tpu.memory_space<vmem>>, vector<2x128xf32>
      tpu.vector_store %arg7[%c0_273, %c0_274], %673 {strides = array<i32>} : memref<2x128xf32, #tpu.memory_space<vmem>>, vector<2x128xf32>,
      %cst_275 = arith.constant 0.000000e+00 : f32
      %675 = vector.broadcast %cst_275 : f32 to vector<2x128xf32>
      %c0_276 = arith.constant 0 : index
      %c0_277 = arith.constant 0 : index
      %676 = vector.load %arg8[%c0_276, %c0_277] : memref<2x128xf32, #tpu.memory_space<vmem>>, vector<2x128xf32>
      tpu.vector_store %arg8[%c0_276, %c0_277], %675 {strides = array<i32>} : memref<2x128xf32, #tpu.memory_space<vmem>>, vector<2x128xf32>,
      %cst_278 = arith.constant 0.000000e+00 : f32
      %677 = vector.broadcast %cst_278 : f32 to vector<2x128xf32>
      %c0_279 = arith.constant 0 : index
      %c0_280 = arith.constant 0 : index
      %678 = vector.load %arg9[%c0_279, %c0_280] : memref<2x128xf32, #tpu.memory_space<vmem>>, vector<2x128xf32>
      tpu.vector_store %arg9[%c0_279, %c0_280], %677 {strides = array<i32>} : memref<2x128xf32, #tpu.memory_space<vmem>>, vector<2x128xf32>,
    } else {
    }
    %c0 = arith.constant 0 : index
    %c0_1 = arith.constant 0 : index
    %c0_2 = arith.constant 0 : index
    %3 = vector.load %arg3[%c0, %c0_1, %c0_2] : memref<2x128x512xbf16, #tpu.memory_space<vmem>>, vector<1x128x512xbf16>
    %4 = vector.shape_cast %3 : vector<1x128x512xbf16> to vector<128x512xbf16>
    %c1 = arith.constant 1 : index
    %c0_3 = arith.constant 0 : index
    %c0_4 = arith.constant 0 : index
    %5 = vector.load %arg3[%c1, %c0_3, %c0_4] : memref<2x128x512xbf16, #tpu.memory_space<vmem>>, vector<1x128x512xbf16>
    %6 = vector.shape_cast %5 : vector<1x128x512xbf16> to vector<128x512xbf16>
    %c0_i32_5 = arith.constant 0 : i32
    %c7_i32 = arith.constant 7 : i32
    %7 = arith.subi %c7_i32, %c0_i32_5 : i32
    %8 = arith.index_cast %c0_i32_5 : i32 to index
    %c0_6 = arith.constant 0 : index
    %c0_7 = arith.constant 0 : index
    %9 = vector.load %arg1[%8, %c0_6, %c0_7] : memref<8x2x512xbf16, #tpu.memory_space<vmem>>, vector<1x2x512xbf16>
    %10 = vector.shape_cast %9 : vector<1x2x512xbf16> to vector<2x512xbf16>
    %11 = arith.extf %10 : vector<2x512xbf16> to vector<2x512xf32>
    %c0_8 = arith.constant 0 : index
    %c0_9 = arith.constant 0 : index
    %12 = vector.load %arg6[%c0_8, %c0_9] : memref<2x128xf32, #tpu.memory_space<vmem>>, vector<2x128xf32>
    %13 = arith.truncf %12 : vector<2x128xf32> to vector<2x128xbf16>
    %cst = arith.constant dense<0.000000e+00> : vector<2x512xf32>
    %14 = tpu.matmul %13, %4, %cst {dimension_numbers = #tpu.dot_dimension_numbers<[1], [0], [0], [1], [0, 0, 1, 1], [], []>} : vector<2x128xbf16>, vector<128x512xbf16>, vector<2x512xf32> -> vector<2x512xf32>
    %15 = arith.addf %11, %14 : vector<2x512xf32>
    %16 = arith.index_cast %7 : i32 to index
    %c0_10 = arith.constant 0 : index
    %c0_11 = arith.constant 0 : index
    %17 = vector.load %arg2[%16, %c0_10, %c0_11] : memref<8x2x512xbf16, #tpu.memory_space<vmem>>, vector<1x2x512xbf16>
    %18 = vector.shape_cast %17 : vector<1x2x512xbf16> to vector<2x512xbf16>
    %19 = arith.extf %18 : vector<2x512xbf16> to vector<2x512xf32>
    %c0_12 = arith.constant 0 : index
    %c0_13 = arith.constant 0 : index
    %20 = vector.load %arg8[%c0_12, %c0_13] : memref<2x128xf32, #tpu.memory_space<vmem>>, vector<2x128xf32>
    %21 = arith.truncf %20 : vector<2x128xf32> to vector<2x128xbf16>
    %cst_14 = arith.constant dense<0.000000e+00> : vector<2x512xf32>
    %22 = tpu.matmul %21, %6, %cst_14 {dimension_numbers = #tpu.dot_dimension_numbers<[1], [0], [0], [1], [0, 0, 1, 1], [], []>} : vector<2x128xbf16>, vector<128x512xbf16>, vector<2x512xf32> -> vector<2x512xf32>
    %23 = arith.addf %19, %22 : vector<2x512xf32>
    %c0_15 = arith.constant 0 : index
    %c0_16 = arith.constant 0 : index
    %24 = vector.load %arg7[%c0_15, %c0_16] : memref<2x128xf32, #tpu.memory_space<vmem>>, vector<2x128xf32>
    %25 = vector.extract_strided_slice %15 {offsets = [0, 0], sizes = [2, 128], strides = [1, 1]} : vector<2x512xf32> to vector<2x128xf32>
    %26 = arith.negf %25 : vector<2x128xf32>
    %27 = math.exp %26 : vector<2x128xf32>
    %cst_17 = arith.constant 1.000000e+00 : f32
    %28 = vector.broadcast %cst_17 : f32 to vector<2x128xf32>
    %29 = arith.addf %28, %27 : vector<2x128xf32>
    %30 = arith.divf %28, %29 : vector<2x128xf32>
    %31 = vector.extract_strided_slice %15 {offsets = [0, 128], sizes = [2, 128], strides = [1, 1]} : vector<2x512xf32> to vector<2x128xf32>
    %32 = arith.negf %31 : vector<2x128xf32>
    %33 = math.exp %32 : vector<2x128xf32>
    %cst_18 = arith.constant 1.000000e+00 : f32
    %34 = vector.broadcast %cst_18 : f32 to vector<2x128xf32>
    %35 = arith.addf %34, %33 : vector<2x128xf32>
    %36 = arith.divf %34, %35 : vector<2x128xf32>
    %37 = vector.extract_strided_slice %15 {offsets = [0, 256], sizes = [2, 128], strides = [1, 1]} : vector<2x512xf32> to vector<2x128xf32>
    %38 = math.tanh %37 : vector<2x128xf32>
    %39 = vector.extract_strided_slice %15 {offsets = [0, 384], sizes = [2, 128], strides = [1, 1]} : vector<2x512xf32> to vector<2x128xf32>
    %40 = arith.negf %39 : vector<2x128xf32>
    %41 = math.exp %40 : vector<2x128xf32>
    %cst_19 = arith.constant 1.000000e+00 : f32
    %42 = vector.broadcast %cst_19 : f32 to vector<2x128xf32>
    %43 = arith.addf %42, %41 : vector<2x128xf32>
    %44 = arith.divf %42, %43 : vector<2x128xf32>
    %45 = arith.mulf %36, %24 : vector<2x128xf32>
    %46 = arith.mulf %30, %38 : vector<2x128xf32>
    %47 = arith.addf %45, %46 : vector<2x128xf32>
    %48 = math.tanh %47 : vector<2x128xf32>
    %49 = arith.mulf %44, %48 : vector<2x128xf32>
    %c0_20 = arith.constant 0 : index
    %c0_21 = arith.constant 0 : index
    %50 = vector.load %arg9[%c0_20, %c0_21] : memref<2x128xf32, #tpu.memory_space<vmem>>, vector<2x128xf32>
    %51 = vector.extract_strided_slice %23 {offsets = [0, 0], sizes = [2, 128], strides = [1, 1]} : vector<2x512xf32> to vector<2x128xf32>
    %52 = arith.negf %51 : vector<2x128xf32>
    %53 = math.exp %52 : vector<2x128xf32>
    %cst_22 = arith.constant 1.000000e+00 : f32
    %54 = vector.broadcast %cst_22 : f32 to vector<2x128xf32>
    %55 = arith.addf %54, %53 : vector<2x128xf32>
    %56 = arith.divf %54, %55 : vector<2x128xf32>
    %57 = vector.extract_strided_slice %23 {offsets = [0, 128], sizes = [2, 128], strides = [1, 1]} : vector<2x512xf32> to vector<2x128xf32>
    %58 = arith.negf %57 : vector<2x128xf32>
    %59 = math.exp %58 : vector<2x128xf32>
    %cst_23 = arith.constant 1.000000e+00 : f32
    %60 = vector.broadcast %cst_23 : f32 to vector<2x128xf32>
    %61 = arith.addf %60, %59 : vector<2x128xf32>
    %62 = arith.divf %60, %61 : vector<2x128xf32>
    %63 = vector.extract_strided_slice %23 {offsets = [0, 256], sizes = [2, 128], strides = [1, 1]} : vector<2x512xf32> to vector<2x128xf32>
    %64 = math.tanh %63 : vector<2x128xf32>
    %65 = vector.extract_strided_slice %23 {offsets = [0, 384], sizes = [2, 128], strides = [1, 1]} : vector<2x512xf32> to vector<2x128xf32>
    %66 = arith.negf %65 : vector<2x128xf32>
    %67 = math.exp %66 : vector<2x128xf32>
    %cst_24 = arith.constant 1.000000e+00 : f32
    %68 = vector.broadcast %cst_24 : f32 to vector<2x128xf32>
    %69 = arith.addf %68, %67 : vector<2x128xf32>
    %70 = arith.divf %68, %69 : vector<2x128xf32>
    %71 = arith.mulf %62, %50 : vector<2x128xf32>
    %72 = arith.mulf %56, %64 : vector<2x128xf32>
    %73 = arith.addf %71, %72 : vector<2x128xf32>
    %74 = math.tanh %73 : vector<2x128xf32>
    %75 = arith.mulf %70, %74 : vector<2x128xf32>
    %c0_25 = arith.constant 0 : index
    %c0_26 = arith.constant 0 : index
    %76 = vector.load %arg6[%c0_25, %c0_26] : memref<2x128xf32, #tpu.memory_space<vmem>>, vector<2x128xf32>
    tpu.vector_store %arg6[%c0_25, %c0_26], %49 {strides = array<i32>} : memref<2x128xf32, #tpu.memory_space<vmem>>, vector<2x128xf32>,
    %c0_27 = arith.constant 0 : index
    %c0_28 = arith.constant 0 : index
    %77 = vector.load %arg7[%c0_27, %c0_28] : memref<2x128xf32, #tpu.memory_space<vmem>>, vector<2x128xf32>
    tpu.vector_store %arg7[%c0_27, %c0_28], %47 {strides = array<i32>} : memref<2x128xf32, #tpu.memory_space<vmem>>, vector<2x128xf32>,
    %c0_29 = arith.constant 0 : index
    %c0_30 = arith.constant 0 : index
    %78 = vector.load %arg8[%c0_29, %c0_30] : memref<2x128xf32, #tpu.memory_space<vmem>>, vector<2x128xf32>
    tpu.vector_store %arg8[%c0_29, %c0_30], %75 {strides = array<i32>} : memref<2x128xf32, #tpu.memory_space<vmem>>, vector<2x128xf32>,
    %c0_31 = arith.constant 0 : index
    %c0_32 = arith.constant 0 : index
    %79 = vector.load %arg9[%c0_31, %c0_32] : memref<2x128xf32, #tpu.memory_space<vmem>>, vector<2x128xf32>
    tpu.vector_store %arg9[%c0_31, %c0_32], %73 {strides = array<i32>} : memref<2x128xf32, #tpu.memory_space<vmem>>, vector<2x128xf32>,
    %80 = arith.truncf %49 : vector<2x128xf32> to vector<2x128xbf16>
    %81 = arith.index_cast %c0_i32_5 : i32 to index
    %c0_33 = arith.constant 0 : index
    %c0_34 = arith.constant 0 : index
    %82 = vector.load %arg4[%81, %c0_33, %c0_34] : memref<8x2x128xbf16, #tpu.memory_space<vmem>>, vector<1x2x128xbf16>
    %83 = vector.shape_cast %82 : vector<1x2x128xbf16> to vector<2x128xbf16>
    %84 = vector.shape_cast %80 : vector<2x128xbf16> to vector<1x2x128xbf16>
    tpu.vector_store %arg4[%81, %c0_33, %c0_34], %84 {strides = array<i32>} : memref<8x2x128xbf16, #tpu.memory_space<vmem>>, vector<1x2x128xbf16>,
    %85 = arith.truncf %75 : vector<2x128xf32> to vector<2x128xbf16>
    %86 = arith.index_cast %7 : i32 to index
    %c0_35 = arith.constant 0 : index
    %c0_36 = arith.constant 0 : index
    %87 = vector.load %arg5[%86, %c0_35, %c0_36] : memref<8x2x128xbf16, #tpu.memory_space<vmem>>, vector<1x2x128xbf16>
    %88 = vector.shape_cast %87 : vector<1x2x128xbf16> to vector<2x128xbf16>
    %89 = vector.shape_cast %85 : vector<2x128xbf16> to vector<1x2x128xbf16>
    tpu.vector_store %arg5[%86, %c0_35, %c0_36], %89 {strides = array<i32>} : memref<8x2x128xbf16, #tpu.memory_space<vmem>>, vector<1x2x128xbf16>,
    %c1_i32 = arith.constant 1 : i32
    %c7_i32_37 = arith.constant 7 : i32
    %90 = arith.subi %c7_i32_37, %c1_i32 : i32
    %91 = arith.index_cast %c1_i32 : i32 to index
    %c0_38 = arith.constant 0 : index
    %c0_39 = arith.constant 0 : index
    %92 = vector.load %arg1[%91, %c0_38, %c0_39] : memref<8x2x512xbf16, #tpu.memory_space<vmem>>, vector<1x2x512xbf16>
    %93 = vector.shape_cast %92 : vector<1x2x512xbf16> to vector<2x512xbf16>
    %94 = arith.extf %93 : vector<2x512xbf16> to vector<2x512xf32>
    %c0_40 = arith.constant 0 : index
    %c0_41 = arith.constant 0 : index
    %95 = vector.load %arg6[%c0_40, %c0_41] : memref<2x128xf32, #tpu.memory_space<vmem>>, vector<2x128xf32>
    %96 = arith.truncf %95 : vector<2x128xf32> to vector<2x128xbf16>
    %cst_42 = arith.constant dense<0.000000e+00> : vector<2x512xf32>
    %97 = tpu.matmul %96, %4, %cst_42 {dimension_numbers = #tpu.dot_dimension_numbers<[1], [0], [0], [1], [0, 0, 1, 1], [], []>} : vector<2x128xbf16>, vector<128x512xbf16>, vector<2x512xf32> -> vector<2x512xf32>
    %98 = arith.addf %94, %97 : vector<2x512xf32>
    %99 = arith.index_cast %90 : i32 to index
    %c0_43 = arith.constant 0 : index
    %c0_44 = arith.constant 0 : index
    %100 = vector.load %arg2[%99, %c0_43, %c0_44] : memref<8x2x512xbf16, #tpu.memory_space<vmem>>, vector<1x2x512xbf16>
    %101 = vector.shape_cast %100 : vector<1x2x512xbf16> to vector<2x512xbf16>
    %102 = arith.extf %101 : vector<2x512xbf16> to vector<2x512xf32>
    %c0_45 = arith.constant 0 : index
    %c0_46 = arith.constant 0 : index
    %103 = vector.load %arg8[%c0_45, %c0_46] : memref<2x128xf32, #tpu.memory_space<vmem>>, vector<2x128xf32>
    %104 = arith.truncf %103 : vector<2x128xf32> to vector<2x128xbf16>
    %cst_47 = arith.constant dense<0.000000e+00> : vector<2x512xf32>
    %105 = tpu.matmul %104, %6, %cst_47 {dimension_numbers = #tpu.dot_dimension_numbers<[1], [0], [0], [1], [0, 0, 1, 1], [], []>} : vector<2x128xbf16>, vector<128x512xbf16>, vector<2x512xf32> -> vector<2x512xf32>
    %106 = arith.addf %102, %105 : vector<2x512xf32>
    %c0_48 = arith.constant 0 : index
    %c0_49 = arith.constant 0 : index
    %107 = vector.load %arg7[%c0_48, %c0_49] : memref<2x128xf32, #tpu.memory_space<vmem>>, vector<2x128xf32>
    %108 = vector.extract_strided_slice %98 {offsets = [0, 0], sizes = [2, 128], strides = [1, 1]} : vector<2x512xf32> to vector<2x128xf32>
    %109 = arith.negf %108 : vector<2x128xf32>
    %110 = math.exp %109 : vector<2x128xf32>
    %cst_50 = arith.constant 1.000000e+00 : f32
    %111 = vector.broadcast %cst_50 : f32 to vector<2x128xf32>
    %112 = arith.addf %111, %110 : vector<2x128xf32>
    %113 = arith.divf %111, %112 : vector<2x128xf32>
    %114 = vector.extract_strided_slice %98 {offsets = [0, 128], sizes = [2, 128], strides = [1, 1]} : vector<2x512xf32> to vector<2x128xf32>
    %115 = arith.negf %114 : vector<2x128xf32>
    %116 = math.exp %115 : vector<2x128xf32>
    %cst_51 = arith.constant 1.000000e+00 : f32
    %117 = vector.broadcast %cst_51 : f32 to vector<2x128xf32>
    %118 = arith.addf %117, %116 : vector<2x128xf32>
    %119 = arith.divf %117, %118 : vector<2x128xf32>
    %120 = vector.extract_strided_slice %98 {offsets = [0, 256], sizes = [2, 128], strides = [1, 1]} : vector<2x512xf32> to vector<2x128xf32>
    %121 = math.tanh %120 : vector<2x128xf32>
    %122 = vector.extract_strided_slice %98 {offsets = [0, 384], sizes = [2, 128], strides = [1, 1]} : vector<2x512xf32> to vector<2x128xf32>
    %123 = arith.negf %122 : vector<2x128xf32>
    %124 = math.exp %123 : vector<2x128xf32>
    %cst_52 = arith.constant 1.000000e+00 : f32
    %125 = vector.broadcast %cst_52 : f32 to vector<2x128xf32>
    %126 = arith.addf %125, %124 : vector<2x128xf32>
    %127 = arith.divf %125, %126 : vector<2x128xf32>
    %128 = arith.mulf %119, %107 : vector<2x128xf32>
    %129 = arith.mulf %113, %121 : vector<2x128xf32>
    %130 = arith.addf %128, %129 : vector<2x128xf32>
    %131 = math.tanh %130 : vector<2x128xf32>
    %132 = arith.mulf %127, %131 : vector<2x128xf32>
    %c0_53 = arith.constant 0 : index
    %c0_54 = arith.constant 0 : index
    %133 = vector.load %arg9[%c0_53, %c0_54] : memref<2x128xf32, #tpu.memory_space<vmem>>, vector<2x128xf32>
    %134 = vector.extract_strided_slice %106 {offsets = [0, 0], sizes = [2, 128], strides = [1, 1]} : vector<2x512xf32> to vector<2x128xf32>
    %135 = arith.negf %134 : vector<2x128xf32>
    %136 = math.exp %135 : vector<2x128xf32>
    %cst_55 = arith.constant 1.000000e+00 : f32
    %137 = vector.broadcast %cst_55 : f32 to vector<2x128xf32>
    %138 = arith.addf %137, %136 : vector<2x128xf32>
    %139 = arith.divf %137, %138 : vector<2x128xf32>
    %140 = vector.extract_strided_slice %106 {offsets = [0, 128], sizes = [2, 128], strides = [1, 1]} : vector<2x512xf32> to vector<2x128xf32>
    %141 = arith.negf %140 : vector<2x128xf32>
    %142 = math.exp %141 : vector<2x128xf32>
    %cst_56 = arith.constant 1.000000e+00 : f32
    %143 = vector.broadcast %cst_56 : f32 to vector<2x128xf32>
    %144 = arith.addf %143, %142 : vector<2x128xf32>
    %145 = arith.divf %143, %144 : vector<2x128xf32>
    %146 = vector.extract_strided_slice %106 {offsets = [0, 256], sizes = [2, 128], strides = [1, 1]} : vector<2x512xf32> to vector<2x128xf32>
    %147 = math.tanh %146 : vector<2x128xf32>
    %148 = vector.extract_strided_slice %106 {offsets = [0, 384], sizes = [2, 128], strides = [1, 1]} : vector<2x512xf32> to vector<2x128xf32>
    %149 = arith.negf %148 : vector<2x128xf32>
    %150 = math.exp %149 : vector<2x128xf32>
    %cst_57 = arith.constant 1.000000e+00 : f32
    %151 = vector.broadcast %cst_57 : f32 to vector<2x128xf32>
    %152 = arith.addf %151, %150 : vector<2x128xf32>
    %153 = arith.divf %151, %152 : vector<2x128xf32>
    %154 = arith.mulf %145, %133 : vector<2x128xf32>
    %155 = arith.mulf %139, %147 : vector<2x128xf32>
    %156 = arith.addf %154, %155 : vector<2x128xf32>
    %157 = math.tanh %156 : vector<2x128xf32>
    %158 = arith.mulf %153, %157 : vector<2x128xf32>
    %c0_58 = arith.constant 0 : index
    %c0_59 = arith.constant 0 : index
    %159 = vector.load %arg6[%c0_58, %c0_59] : memref<2x128xf32, #tpu.memory_space<vmem>>, vector<2x128xf32>
    tpu.vector_store %arg6[%c0_58, %c0_59], %132 {strides = array<i32>} : memref<2x128xf32, #tpu.memory_space<vmem>>, vector<2x128xf32>,
    %c0_60 = arith.constant 0 : index
    %c0_61 = arith.constant 0 : index
    %160 = vector.load %arg7[%c0_60, %c0_61] : memref<2x128xf32, #tpu.memory_space<vmem>>, vector<2x128xf32>
    tpu.vector_store %arg7[%c0_60, %c0_61], %130 {strides = array<i32>} : memref<2x128xf32, #tpu.memory_space<vmem>>, vector<2x128xf32>,
    %c0_62 = arith.constant 0 : index
    %c0_63 = arith.constant 0 : index
    %161 = vector.load %arg8[%c0_62, %c0_63] : memref<2x128xf32, #tpu.memory_space<vmem>>, vector<2x128xf32>
    tpu.vector_store %arg8[%c0_62, %c0_63], %158 {strides = array<i32>} : memref<2x128xf32, #tpu.memory_space<vmem>>, vector<2x128xf32>,
    %c0_64 = arith.constant 0 : index
    %c0_65 = arith.constant 0 : index
    %162 = vector.load %arg9[%c0_64, %c0_65] : memref<2x128xf32, #tpu.memory_space<vmem>>, vector<2x128xf32>
    tpu.vector_store %arg9[%c0_64, %c0_65], %156 {strides = array<i32>} : memref<2x128xf32, #tpu.memory_space<vmem>>, vector<2x128xf32>,
    %163 = arith.truncf %132 : vector<2x128xf32> to vector<2x128xbf16>
    %164 = arith.index_cast %c1_i32 : i32 to index
    %c0_66 = arith.constant 0 : index
    %c0_67 = arith.constant 0 : index
    %165 = vector.load %arg4[%164, %c0_66, %c0_67] : memref<8x2x128xbf16, #tpu.memory_space<vmem>>, vector<1x2x128xbf16>
    %166 = vector.shape_cast %165 : vector<1x2x128xbf16> to vector<2x128xbf16>
    %167 = vector.shape_cast %163 : vector<2x128xbf16> to vector<1x2x128xbf16>
    tpu.vector_store %arg4[%164, %c0_66, %c0_67], %167 {strides = array<i32>} : memref<8x2x128xbf16, #tpu.memory_space<vmem>>, vector<1x2x128xbf16>,
    %168 = arith.truncf %158 : vector<2x128xf32> to vector<2x128xbf16>
    %169 = arith.index_cast %90 : i32 to index
    %c0_68 = arith.constant 0 : index
    %c0_69 = arith.constant 0 : index
    %170 = vector.load %arg5[%169, %c0_68, %c0_69] : memref<8x2x128xbf16, #tpu.memory_space<vmem>>, vector<1x2x128xbf16>
    %171 = vector.shape_cast %170 : vector<1x2x128xbf16> to vector<2x128xbf16>
    %172 = vector.shape_cast %168 : vector<2x128xbf16> to vector<1x2x128xbf16>
    tpu.vector_store %arg5[%169, %c0_68, %c0_69], %172 {strides = array<i32>} : memref<8x2x128xbf16, #tpu.memory_space<vmem>>, vector<1x2x128xbf16>,
    %c2_i32 = arith.constant 2 : i32
    %c7_i32_70 = arith.constant 7 : i32
    %173 = arith.subi %c7_i32_70, %c2_i32 : i32
    %174 = arith.index_cast %c2_i32 : i32 to index
    %c0_71 = arith.constant 0 : index
    %c0_72 = arith.constant 0 : index
    %175 = vector.load %arg1[%174, %c0_71, %c0_72] : memref<8x2x512xbf16, #tpu.memory_space<vmem>>, vector<1x2x512xbf16>
    %176 = vector.shape_cast %175 : vector<1x2x512xbf16> to vector<2x512xbf16>
    %177 = arith.extf %176 : vector<2x512xbf16> to vector<2x512xf32>
    %c0_73 = arith.constant 0 : index
    %c0_74 = arith.constant 0 : index
    %178 = vector.load %arg6[%c0_73, %c0_74] : memref<2x128xf32, #tpu.memory_space<vmem>>, vector<2x128xf32>
    %179 = arith.truncf %178 : vector<2x128xf32> to vector<2x128xbf16>
    %cst_75 = arith.constant dense<0.000000e+00> : vector<2x512xf32>
    %180 = tpu.matmul %179, %4, %cst_75 {dimension_numbers = #tpu.dot_dimension_numbers<[1], [0], [0], [1], [0, 0, 1, 1], [], []>} : vector<2x128xbf16>, vector<128x512xbf16>, vector<2x512xf32> -> vector<2x512xf32>
    %181 = arith.addf %177, %180 : vector<2x512xf32>
    %182 = arith.index_cast %173 : i32 to index
    %c0_76 = arith.constant 0 : index
    %c0_77 = arith.constant 0 : index
    %183 = vector.load %arg2[%182, %c0_76, %c0_77] : memref<8x2x512xbf16, #tpu.memory_space<vmem>>, vector<1x2x512xbf16>
    %184 = vector.shape_cast %183 : vector<1x2x512xbf16> to vector<2x512xbf16>
    %185 = arith.extf %184 : vector<2x512xbf16> to vector<2x512xf32>
    %c0_78 = arith.constant 0 : index
    %c0_79 = arith.constant 0 : index
    %186 = vector.load %arg8[%c0_78, %c0_79] : memref<2x128xf32, #tpu.memory_space<vmem>>, vector<2x128xf32>
    %187 = arith.truncf %186 : vector<2x128xf32> to vector<2x128xbf16>
    %cst_80 = arith.constant dense<0.000000e+00> : vector<2x512xf32>
    %188 = tpu.matmul %187, %6, %cst_80 {dimension_numbers = #tpu.dot_dimension_numbers<[1], [0], [0], [1], [0, 0, 1, 1], [], []>} : vector<2x128xbf16>, vector<128x512xbf16>, vector<2x512xf32> -> vector<2x512xf32>
    %189 = arith.addf %185, %188 : vector<2x512xf32>
    %c0_81 = arith.constant 0 : index
    %c0_82 = arith.constant 0 : index
    %190 = vector.load %arg7[%c0_81, %c0_82] : memref<2x128xf32, #tpu.memory_space<vmem>>, vector<2x128xf32>
    %191 = vector.extract_strided_slice %181 {offsets = [0, 0], sizes = [2, 128], strides = [1, 1]} : vector<2x512xf32> to vector<2x128xf32>
    %192 = arith.negf %191 : vector<2x128xf32>
    %193 = math.exp %192 : vector<2x128xf32>
    %cst_83 = arith.constant 1.000000e+00 : f32
    %194 = vector.broadcast %cst_83 : f32 to vector<2x128xf32>
    %195 = arith.addf %194, %193 : vector<2x128xf32>
    %196 = arith.divf %194, %195 : vector<2x128xf32>
    %197 = vector.extract_strided_slice %181 {offsets = [0, 128], sizes = [2, 128], strides = [1, 1]} : vector<2x512xf32> to vector<2x128xf32>
    %198 = arith.negf %197 : vector<2x128xf32>
    %199 = math.exp %198 : vector<2x128xf32>
    %cst_84 = arith.constant 1.000000e+00 : f32
    %200 = vector.broadcast %cst_84 : f32 to vector<2x128xf32>
    %201 = arith.addf %200, %199 : vector<2x128xf32>
    %202 = arith.divf %200, %201 : vector<2x128xf32>
    %203 = vector.extract_strided_slice %181 {offsets = [0, 256], sizes = [2, 128], strides = [1, 1]} : vector<2x512xf32> to vector<2x128xf32>
    %204 = math.tanh %203 : vector<2x128xf32>
    %205 = vector.extract_strided_slice %181 {offsets = [0, 384], sizes = [2, 128], strides = [1, 1]} : vector<2x512xf32> to vector<2x128xf32>
    %206 = arith.negf %205 : vector<2x128xf32>
    %207 = math.exp %206 : vector<2x128xf32>
    %cst_85 = arith.constant 1.000000e+00 : f32
    %208 = vector.broadcast %cst_85 : f32 to vector<2x128xf32>
    %209 = arith.addf %208, %207 : vector<2x128xf32>
    %210 = arith.divf %208, %209 : vector<2x128xf32>
    %211 = arith.mulf %202, %190 : vector<2x128xf32>
    %212 = arith.mulf %196, %204 : vector<2x128xf32>
    %213 = arith.addf %211, %212 : vector<2x128xf32>
    %214 = math.tanh %213 : vector<2x128xf32>
    %215 = arith.mulf %210, %214 : vector<2x128xf32>
    %c0_86 = arith.constant 0 : index
    %c0_87 = arith.constant 0 : index
    %216 = vector.load %arg9[%c0_86, %c0_87] : memref<2x128xf32, #tpu.memory_space<vmem>>, vector<2x128xf32>
    %217 = vector.extract_strided_slice %189 {offsets = [0, 0], sizes = [2, 128], strides = [1, 1]} : vector<2x512xf32> to vector<2x128xf32>
    %218 = arith.negf %217 : vector<2x128xf32>
    %219 = math.exp %218 : vector<2x128xf32>
    %cst_88 = arith.constant 1.000000e+00 : f32
    %220 = vector.broadcast %cst_88 : f32 to vector<2x128xf32>
    %221 = arith.addf %220, %219 : vector<2x128xf32>
    %222 = arith.divf %220, %221 : vector<2x128xf32>
    %223 = vector.extract_strided_slice %189 {offsets = [0, 128], sizes = [2, 128], strides = [1, 1]} : vector<2x512xf32> to vector<2x128xf32>
    %224 = arith.negf %223 : vector<2x128xf32>
    %225 = math.exp %224 : vector<2x128xf32>
    %cst_89 = arith.constant 1.000000e+00 : f32
    %226 = vector.broadcast %cst_89 : f32 to vector<2x128xf32>
    %227 = arith.addf %226, %225 : vector<2x128xf32>
    %228 = arith.divf %226, %227 : vector<2x128xf32>
    %229 = vector.extract_strided_slice %189 {offsets = [0, 256], sizes = [2, 128], strides = [1, 1]} : vector<2x512xf32> to vector<2x128xf32>
    %230 = math.tanh %229 : vector<2x128xf32>
    %231 = vector.extract_strided_slice %189 {offsets = [0, 384], sizes = [2, 128], strides = [1, 1]} : vector<2x512xf32> to vector<2x128xf32>
    %232 = arith.negf %231 : vector<2x128xf32>
    %233 = math.exp %232 : vector<2x128xf32>
    %cst_90 = arith.constant 1.000000e+00 : f32
    %234 = vector.broadcast %cst_90 : f32 to vector<2x128xf32>
    %235 = arith.addf %234, %233 : vector<2x128xf32>
    %236 = arith.divf %234, %235 : vector<2x128xf32>
    %237 = arith.mulf %228, %216 : vector<2x128xf32>
    %238 = arith.mulf %222, %230 : vector<2x128xf32>
    %239 = arith.addf %237, %238 : vector<2x128xf32>
    %240 = math.tanh %239 : vector<2x128xf32>
    %241 = arith.mulf %236, %240 : vector<2x128xf32>
    %c0_91 = arith.constant 0 : index
    %c0_92 = arith.constant 0 : index
    %242 = vector.load %arg6[%c0_91, %c0_92] : memref<2x128xf32, #tpu.memory_space<vmem>>, vector<2x128xf32>
    tpu.vector_store %arg6[%c0_91, %c0_92], %215 {strides = array<i32>} : memref<2x128xf32, #tpu.memory_space<vmem>>, vector<2x128xf32>,
    %c0_93 = arith.constant 0 : index
    %c0_94 = arith.constant 0 : index
    %243 = vector.load %arg7[%c0_93, %c0_94] : memref<2x128xf32, #tpu.memory_space<vmem>>, vector<2x128xf32>
    tpu.vector_store %arg7[%c0_93, %c0_94], %213 {strides = array<i32>} : memref<2x128xf32, #tpu.memory_space<vmem>>, vector<2x128xf32>,
    %c0_95 = arith.constant 0 : index
    %c0_96 = arith.constant 0 : index
    %244 = vector.load %arg8[%c0_95, %c0_96] : memref<2x128xf32, #tpu.memory_space<vmem>>, vector<2x128xf32>
    tpu.vector_store %arg8[%c0_95, %c0_96], %241 {strides = array<i32>} : memref<2x128xf32, #tpu.memory_space<vmem>>, vector<2x128xf32>,
    %c0_97 = arith.constant 0 : index
    %c0_98 = arith.constant 0 : index
    %245 = vector.load %arg9[%c0_97, %c0_98] : memref<2x128xf32, #tpu.memory_space<vmem>>, vector<2x128xf32>
    tpu.vector_store %arg9[%c0_97, %c0_98], %239 {strides = array<i32>} : memref<2x128xf32, #tpu.memory_space<vmem>>, vector<2x128xf32>,
    %246 = arith.truncf %215 : vector<2x128xf32> to vector<2x128xbf16>
    %247 = arith.index_cast %c2_i32 : i32 to index
    %c0_99 = arith.constant 0 : index
    %c0_100 = arith.constant 0 : index
    %248 = vector.load %arg4[%247, %c0_99, %c0_100] : memref<8x2x128xbf16, #tpu.memory_space<vmem>>, vector<1x2x128xbf16>
    %249 = vector.shape_cast %248 : vector<1x2x128xbf16> to vector<2x128xbf16>
    %250 = vector.shape_cast %246 : vector<2x128xbf16> to vector<1x2x128xbf16>
    tpu.vector_store %arg4[%247, %c0_99, %c0_100], %250 {strides = array<i32>} : memref<8x2x128xbf16, #tpu.memory_space<vmem>>, vector<1x2x128xbf16>,
    %251 = arith.truncf %241 : vector<2x128xf32> to vector<2x128xbf16>
    %252 = arith.index_cast %173 : i32 to index
    %c0_101 = arith.constant 0 : index
    %c0_102 = arith.constant 0 : index
    %253 = vector.load %arg5[%252, %c0_101, %c0_102] : memref<8x2x128xbf16, #tpu.memory_space<vmem>>, vector<1x2x128xbf16>
    %254 = vector.shape_cast %253 : vector<1x2x128xbf16> to vector<2x128xbf16>
    %255 = vector.shape_cast %251 : vector<2x128xbf16> to vector<1x2x128xbf16>
    tpu.vector_store %arg5[%252, %c0_101, %c0_102], %255 {strides = array<i32>} : memref<8x2x128xbf16, #tpu.memory_space<vmem>>, vector<1x2x128xbf16>,
    %c3_i32 = arith.constant 3 : i32
    %c7_i32_103 = arith.constant 7 : i32
    %256 = arith.subi %c7_i32_103, %c3_i32 : i32
    %257 = arith.index_cast %c3_i32 : i32 to index
    %c0_104 = arith.constant 0 : index
    %c0_105 = arith.constant 0 : index
    %258 = vector.load %arg1[%257, %c0_104, %c0_105] : memref<8x2x512xbf16, #tpu.memory_space<vmem>>, vector<1x2x512xbf16>
    %259 = vector.shape_cast %258 : vector<1x2x512xbf16> to vector<2x512xbf16>
    %260 = arith.extf %259 : vector<2x512xbf16> to vector<2x512xf32>
    %c0_106 = arith.constant 0 : index
    %c0_107 = arith.constant 0 : index
    %261 = vector.load %arg6[%c0_106, %c0_107] : memref<2x128xf32, #tpu.memory_space<vmem>>, vector<2x128xf32>
    %262 = arith.truncf %261 : vector<2x128xf32> to vector<2x128xbf16>
    %cst_108 = arith.constant dense<0.000000e+00> : vector<2x512xf32>
    %263 = tpu.matmul %262, %4, %cst_108 {dimension_numbers = #tpu.dot_dimension_numbers<[1], [0], [0], [1], [0, 0, 1, 1], [], []>} : vector<2x128xbf16>, vector<128x512xbf16>, vector<2x512xf32> -> vector<2x512xf32>
    %264 = arith.addf %260, %263 : vector<2x512xf32>
    %265 = arith.index_cast %256 : i32 to index
    %c0_109 = arith.constant 0 : index
    %c0_110 = arith.constant 0 : index
    %266 = vector.load %arg2[%265, %c0_109, %c0_110] : memref<8x2x512xbf16, #tpu.memory_space<vmem>>, vector<1x2x512xbf16>
    %267 = vector.shape_cast %266 : vector<1x2x512xbf16> to vector<2x512xbf16>
    %268 = arith.extf %267 : vector<2x512xbf16> to vector<2x512xf32>
    %c0_111 = arith.constant 0 : index
    %c0_112 = arith.constant 0 : index
    %269 = vector.load %arg8[%c0_111, %c0_112] : memref<2x128xf32, #tpu.memory_space<vmem>>, vector<2x128xf32>
    %270 = arith.truncf %269 : vector<2x128xf32> to vector<2x128xbf16>
    %cst_113 = arith.constant dense<0.000000e+00> : vector<2x512xf32>
    %271 = tpu.matmul %270, %6, %cst_113 {dimension_numbers = #tpu.dot_dimension_numbers<[1], [0], [0], [1], [0, 0, 1, 1], [], []>} : vector<2x128xbf16>, vector<128x512xbf16>, vector<2x512xf32> -> vector<2x512xf32>
    %272 = arith.addf %268, %271 : vector<2x512xf32>
    %c0_114 = arith.constant 0 : index
    %c0_115 = arith.constant 0 : index
    %273 = vector.load %arg7[%c0_114, %c0_115] : memref<2x128xf32, #tpu.memory_space<vmem>>, vector<2x128xf32>
    %274 = vector.extract_strided_slice %264 {offsets = [0, 0], sizes = [2, 128], strides = [1, 1]} : vector<2x512xf32> to vector<2x128xf32>
    %275 = arith.negf %274 : vector<2x128xf32>
    %276 = math.exp %275 : vector<2x128xf32>
    %cst_116 = arith.constant 1.000000e+00 : f32
    %277 = vector.broadcast %cst_116 : f32 to vector<2x128xf32>
    %278 = arith.addf %277, %276 : vector<2x128xf32>
    %279 = arith.divf %277, %278 : vector<2x128xf32>
    %280 = vector.extract_strided_slice %264 {offsets = [0, 128], sizes = [2, 128], strides = [1, 1]} : vector<2x512xf32> to vector<2x128xf32>
    %281 = arith.negf %280 : vector<2x128xf32>
    %282 = math.exp %281 : vector<2x128xf32>
    %cst_117 = arith.constant 1.000000e+00 : f32
    %283 = vector.broadcast %cst_117 : f32 to vector<2x128xf32>
    %284 = arith.addf %283, %282 : vector<2x128xf32>
    %285 = arith.divf %283, %284 : vector<2x128xf32>
    %286 = vector.extract_strided_slice %264 {offsets = [0, 256], sizes = [2, 128], strides = [1, 1]} : vector<2x512xf32> to vector<2x128xf32>
    %287 = math.tanh %286 : vector<2x128xf32>
    %288 = vector.extract_strided_slice %264 {offsets = [0, 384], sizes = [2, 128], strides = [1, 1]} : vector<2x512xf32> to vector<2x128xf32>
    %289 = arith.negf %288 : vector<2x128xf32>
    %290 = math.exp %289 : vector<2x128xf32>
    %cst_118 = arith.constant 1.000000e+00 : f32
    %291 = vector.broadcast %cst_118 : f32 to vector<2x128xf32>
    %292 = arith.addf %291, %290 : vector<2x128xf32>
    %293 = arith.divf %291, %292 : vector<2x128xf32>
    %294 = arith.mulf %285, %273 : vector<2x128xf32>
    %295 = arith.mulf %279, %287 : vector<2x128xf32>
    %296 = arith.addf %294, %295 : vector<2x128xf32>
    %297 = math.tanh %296 : vector<2x128xf32>
    %298 = arith.mulf %293, %297 : vector<2x128xf32>
    %c0_119 = arith.constant 0 : index
    %c0_120 = arith.constant 0 : index
    %299 = vector.load %arg9[%c0_119, %c0_120] : memref<2x128xf32, #tpu.memory_space<vmem>>, vector<2x128xf32>
    %300 = vector.extract_strided_slice %272 {offsets = [0, 0], sizes = [2, 128], strides = [1, 1]} : vector<2x512xf32> to vector<2x128xf32>
    %301 = arith.negf %300 : vector<2x128xf32>
    %302 = math.exp %301 : vector<2x128xf32>
    %cst_121 = arith.constant 1.000000e+00 : f32
    %303 = vector.broadcast %cst_121 : f32 to vector<2x128xf32>
    %304 = arith.addf %303, %302 : vector<2x128xf32>
    %305 = arith.divf %303, %304 : vector<2x128xf32>
    %306 = vector.extract_strided_slice %272 {offsets = [0, 128], sizes = [2, 128], strides = [1, 1]} : vector<2x512xf32> to vector<2x128xf32>
    %307 = arith.negf %306 : vector<2x128xf32>
    %308 = math.exp %307 : vector<2x128xf32>
    %cst_122 = arith.constant 1.000000e+00 : f32
    %309 = vector.broadcast %cst_122 : f32 to vector<2x128xf32>
    %310 = arith.addf %309, %308 : vector<2x128xf32>
    %311 = arith.divf %309, %310 : vector<2x128xf32>
    %312 = vector.extract_strided_slice %272 {offsets = [0, 256], sizes = [2, 128], strides = [1, 1]} : vector<2x512xf32> to vector<2x128xf32>
    %313 = math.tanh %312 : vector<2x128xf32>
    %314 = vector.extract_strided_slice %272 {offsets = [0, 384], sizes = [2, 128], strides = [1, 1]} : vector<2x512xf32> to vector<2x128xf32>
    %315 = arith.negf %314 : vector<2x128xf32>
    %316 = math.exp %315 : vector<2x128xf32>
    %cst_123 = arith.constant 1.000000e+00 : f32
    %317 = vector.broadcast %cst_123 : f32 to vector<2x128xf32>
    %318 = arith.addf %317, %316 : vector<2x128xf32>
    %319 = arith.divf %317, %318 : vector<2x128xf32>
    %320 = arith.mulf %311, %299 : vector<2x128xf32>
    %321 = arith.mulf %305, %313 : vector<2x128xf32>
    %322 = arith.addf %320, %321 : vector<2x128xf32>
    %323 = math.tanh %322 : vector<2x128xf32>
    %324 = arith.mulf %319, %323 : vector<2x128xf32>
    %c0_124 = arith.constant 0 : index
    %c0_125 = arith.constant 0 : index
    %325 = vector.load %arg6[%c0_124, %c0_125] : memref<2x128xf32, #tpu.memory_space<vmem>>, vector<2x128xf32>
    tpu.vector_store %arg6[%c0_124, %c0_125], %298 {strides = array<i32>} : memref<2x128xf32, #tpu.memory_space<vmem>>, vector<2x128xf32>,
    %c0_126 = arith.constant 0 : index
    %c0_127 = arith.constant 0 : index
    %326 = vector.load %arg7[%c0_126, %c0_127] : memref<2x128xf32, #tpu.memory_space<vmem>>, vector<2x128xf32>
    tpu.vector_store %arg7[%c0_126, %c0_127], %296 {strides = array<i32>} : memref<2x128xf32, #tpu.memory_space<vmem>>, vector<2x128xf32>,
    %c0_128 = arith.constant 0 : index
    %c0_129 = arith.constant 0 : index
    %327 = vector.load %arg8[%c0_128, %c0_129] : memref<2x128xf32, #tpu.memory_space<vmem>>, vector<2x128xf32>
    tpu.vector_store %arg8[%c0_128, %c0_129], %324 {strides = array<i32>} : memref<2x128xf32, #tpu.memory_space<vmem>>, vector<2x128xf32>,
    %c0_130 = arith.constant 0 : index
    %c0_131 = arith.constant 0 : index
    %328 = vector.load %arg9[%c0_130, %c0_131] : memref<2x128xf32, #tpu.memory_space<vmem>>, vector<2x128xf32>
    tpu.vector_store %arg9[%c0_130, %c0_131], %322 {strides = array<i32>} : memref<2x128xf32, #tpu.memory_space<vmem>>, vector<2x128xf32>,
    %329 = arith.truncf %298 : vector<2x128xf32> to vector<2x128xbf16>
    %330 = arith.index_cast %c3_i32 : i32 to index
    %c0_132 = arith.constant 0 : index
    %c0_133 = arith.constant 0 : index
    %331 = vector.load %arg4[%330, %c0_132, %c0_133] : memref<8x2x128xbf16, #tpu.memory_space<vmem>>, vector<1x2x128xbf16>
    %332 = vector.shape_cast %331 : vector<1x2x128xbf16> to vector<2x128xbf16>
    %333 = vector.shape_cast %329 : vector<2x128xbf16> to vector<1x2x128xbf16>
    tpu.vector_store %arg4[%330, %c0_132, %c0_133], %333 {strides = array<i32>} : memref<8x2x128xbf16, #tpu.memory_space<vmem>>, vector<1x2x128xbf16>,
    %334 = arith.truncf %324 : vector<2x128xf32> to vector<2x128xbf16>
    %335 = arith.index_cast %256 : i32 to index
    %c0_134 = arith.constant 0 : index
    %c0_135 = arith.constant 0 : index
    %336 = vector.load %arg5[%335, %c0_134, %c0_135] : memref<8x2x128xbf16, #tpu.memory_space<vmem>>, vector<1x2x128xbf16>
    %337 = vector.shape_cast %336 : vector<1x2x128xbf16> to vector<2x128xbf16>
    %338 = vector.shape_cast %334 : vector<2x128xbf16> to vector<1x2x128xbf16>
    tpu.vector_store %arg5[%335, %c0_134, %c0_135], %338 {strides = array<i32>} : memref<8x2x128xbf16, #tpu.memory_space<vmem>>, vector<1x2x128xbf16>,
    %c4_i32 = arith.constant 4 : i32
    %c7_i32_136 = arith.constant 7 : i32
    %339 = arith.subi %c7_i32_136, %c4_i32 : i32
    %340 = arith.index_cast %c4_i32 : i32 to index
    %c0_137 = arith.constant 0 : index
    %c0_138 = arith.constant 0 : index
    %341 = vector.load %arg1[%340, %c0_137, %c0_138] : memref<8x2x512xbf16, #tpu.memory_space<vmem>>, vector<1x2x512xbf16>
    %342 = vector.shape_cast %341 : vector<1x2x512xbf16> to vector<2x512xbf16>
    %343 = arith.extf %342 : vector<2x512xbf16> to vector<2x512xf32>
    %c0_139 = arith.constant 0 : index
    %c0_140 = arith.constant 0 : index
    %344 = vector.load %arg6[%c0_139, %c0_140] : memref<2x128xf32, #tpu.memory_space<vmem>>, vector<2x128xf32>
    %345 = arith.truncf %344 : vector<2x128xf32> to vector<2x128xbf16>
    %cst_141 = arith.constant dense<0.000000e+00> : vector<2x512xf32>
    %346 = tpu.matmul %345, %4, %cst_141 {dimension_numbers = #tpu.dot_dimension_numbers<[1], [0], [0], [1], [0, 0, 1, 1], [], []>} : vector<2x128xbf16>, vector<128x512xbf16>, vector<2x512xf32> -> vector<2x512xf32>
    %347 = arith.addf %343, %346 : vector<2x512xf32>
    %348 = arith.index_cast %339 : i32 to index
    %c0_142 = arith.constant 0 : index
    %c0_143 = arith.constant 0 : index
    %349 = vector.load %arg2[%348, %c0_142, %c0_143] : memref<8x2x512xbf16, #tpu.memory_space<vmem>>, vector<1x2x512xbf16>
    %350 = vector.shape_cast %349 : vector<1x2x512xbf16> to vector<2x512xbf16>
    %351 = arith.extf %350 : vector<2x512xbf16> to vector<2x512xf32>
    %c0_144 = arith.constant 0 : index
    %c0_145 = arith.constant 0 : index
    %352 = vector.load %arg8[%c0_144, %c0_145] : memref<2x128xf32, #tpu.memory_space<vmem>>, vector<2x128xf32>
    %353 = arith.truncf %352 : vector<2x128xf32> to vector<2x128xbf16>
    %cst_146 = arith.constant dense<0.000000e+00> : vector<2x512xf32>
    %354 = tpu.matmul %353, %6, %cst_146 {dimension_numbers = #tpu.dot_dimension_numbers<[1], [0], [0], [1], [0, 0, 1, 1], [], []>} : vector<2x128xbf16>, vector<128x512xbf16>, vector<2x512xf32> -> vector<2x512xf32>
    %355 = arith.addf %351, %354 : vector<2x512xf32>
    %c0_147 = arith.constant 0 : index
    %c0_148 = arith.constant 0 : index
    %356 = vector.load %arg7[%c0_147, %c0_148] : memref<2x128xf32, #tpu.memory_space<vmem>>, vector<2x128xf32>
    %357 = vector.extract_strided_slice %347 {offsets = [0, 0], sizes = [2, 128], strides = [1, 1]} : vector<2x512xf32> to vector<2x128xf32>
    %358 = arith.negf %357 : vector<2x128xf32>
    %359 = math.exp %358 : vector<2x128xf32>
    %cst_149 = arith.constant 1.000000e+00 : f32
    %360 = vector.broadcast %cst_149 : f32 to vector<2x128xf32>
    %361 = arith.addf %360, %359 : vector<2x128xf32>
    %362 = arith.divf %360, %361 : vector<2x128xf32>
    %363 = vector.extract_strided_slice %347 {offsets = [0, 128], sizes = [2, 128], strides = [1, 1]} : vector<2x512xf32> to vector<2x128xf32>
    %364 = arith.negf %363 : vector<2x128xf32>
    %365 = math.exp %364 : vector<2x128xf32>
    %cst_150 = arith.constant 1.000000e+00 : f32
    %366 = vector.broadcast %cst_150 : f32 to vector<2x128xf32>
    %367 = arith.addf %366, %365 : vector<2x128xf32>
    %368 = arith.divf %366, %367 : vector<2x128xf32>
    %369 = vector.extract_strided_slice %347 {offsets = [0, 256], sizes = [2, 128], strides = [1, 1]} : vector<2x512xf32> to vector<2x128xf32>
    %370 = math.tanh %369 : vector<2x128xf32>
    %371 = vector.extract_strided_slice %347 {offsets = [0, 384], sizes = [2, 128], strides = [1, 1]} : vector<2x512xf32> to vector<2x128xf32>
    %372 = arith.negf %371 : vector<2x128xf32>
    %373 = math.exp %372 : vector<2x128xf32>
    %cst_151 = arith.constant 1.000000e+00 : f32
    %374 = vector.broadcast %cst_151 : f32 to vector<2x128xf32>
    %375 = arith.addf %374, %373 : vector<2x128xf32>
    %376 = arith.divf %374, %375 : vector<2x128xf32>
    %377 = arith.mulf %368, %356 : vector<2x128xf32>
    %378 = arith.mulf %362, %370 : vector<2x128xf32>
    %379 = arith.addf %377, %378 : vector<2x128xf32>
    %380 = math.tanh %379 : vector<2x128xf32>
    %381 = arith.mulf %376, %380 : vector<2x128xf32>
    %c0_152 = arith.constant 0 : index
    %c0_153 = arith.constant 0 : index
    %382 = vector.load %arg9[%c0_152, %c0_153] : memref<2x128xf32, #tpu.memory_space<vmem>>, vector<2x128xf32>
    %383 = vector.extract_strided_slice %355 {offsets = [0, 0], sizes = [2, 128], strides = [1, 1]} : vector<2x512xf32> to vector<2x128xf32>
    %384 = arith.negf %383 : vector<2x128xf32>
    %385 = math.exp %384 : vector<2x128xf32>
    %cst_154 = arith.constant 1.000000e+00 : f32
    %386 = vector.broadcast %cst_154 : f32 to vector<2x128xf32>
    %387 = arith.addf %386, %385 : vector<2x128xf32>
    %388 = arith.divf %386, %387 : vector<2x128xf32>
    %389 = vector.extract_strided_slice %355 {offsets = [0, 128], sizes = [2, 128], strides = [1, 1]} : vector<2x512xf32> to vector<2x128xf32>
    %390 = arith.negf %389 : vector<2x128xf32>
    %391 = math.exp %390 : vector<2x128xf32>
    %cst_155 = arith.constant 1.000000e+00 : f32
    %392 = vector.broadcast %cst_155 : f32 to vector<2x128xf32>
    %393 = arith.addf %392, %391 : vector<2x128xf32>
    %394 = arith.divf %392, %393 : vector<2x128xf32>
    %395 = vector.extract_strided_slice %355 {offsets = [0, 256], sizes = [2, 128], strides = [1, 1]} : vector<2x512xf32> to vector<2x128xf32>
    %396 = math.tanh %395 : vector<2x128xf32>
    %397 = vector.extract_strided_slice %355 {offsets = [0, 384], sizes = [2, 128], strides = [1, 1]} : vector<2x512xf32> to vector<2x128xf32>
    %398 = arith.negf %397 : vector<2x128xf32>
    %399 = math.exp %398 : vector<2x128xf32>
    %cst_156 = arith.constant 1.000000e+00 : f32
    %400 = vector.broadcast %cst_156 : f32 to vector<2x128xf32>
    %401 = arith.addf %400, %399 : vector<2x128xf32>
    %402 = arith.divf %400, %401 : vector<2x128xf32>
    %403 = arith.mulf %394, %382 : vector<2x128xf32>
    %404 = arith.mulf %388, %396 : vector<2x128xf32>
    %405 = arith.addf %403, %404 : vector<2x128xf32>
    %406 = math.tanh %405 : vector<2x128xf32>
    %407 = arith.mulf %402, %406 : vector<2x128xf32>
    %c0_157 = arith.constant 0 : index
    %c0_158 = arith.constant 0 : index
    %408 = vector.load %arg6[%c0_157, %c0_158] : memref<2x128xf32, #tpu.memory_space<vmem>>, vector<2x128xf32>
    tpu.vector_store %arg6[%c0_157, %c0_158], %381 {strides = array<i32>} : memref<2x128xf32, #tpu.memory_space<vmem>>, vector<2x128xf32>,
    %c0_159 = arith.constant 0 : index
    %c0_160 = arith.constant 0 : index
    %409 = vector.load %arg7[%c0_159, %c0_160] : memref<2x128xf32, #tpu.memory_space<vmem>>, vector<2x128xf32>
    tpu.vector_store %arg7[%c0_159, %c0_160], %379 {strides = array<i32>} : memref<2x128xf32, #tpu.memory_space<vmem>>, vector<2x128xf32>,
    %c0_161 = arith.constant 0 : index
    %c0_162 = arith.constant 0 : index
    %410 = vector.load %arg8[%c0_161, %c0_162] : memref<2x128xf32, #tpu.memory_space<vmem>>, vector<2x128xf32>
    tpu.vector_store %arg8[%c0_161, %c0_162], %407 {strides = array<i32>} : memref<2x128xf32, #tpu.memory_space<vmem>>, vector<2x128xf32>,
    %c0_163 = arith.constant 0 : index
    %c0_164 = arith.constant 0 : index
    %411 = vector.load %arg9[%c0_163, %c0_164] : memref<2x128xf32, #tpu.memory_space<vmem>>, vector<2x128xf32>
    tpu.vector_store %arg9[%c0_163, %c0_164], %405 {strides = array<i32>} : memref<2x128xf32, #tpu.memory_space<vmem>>, vector<2x128xf32>,
    %412 = arith.truncf %381 : vector<2x128xf32> to vector<2x128xbf16>
    %413 = arith.index_cast %c4_i32 : i32 to index
    %c0_165 = arith.constant 0 : index
    %c0_166 = arith.constant 0 : index
    %414 = vector.load %arg4[%413, %c0_165, %c0_166] : memref<8x2x128xbf16, #tpu.memory_space<vmem>>, vector<1x2x128xbf16>
    %415 = vector.shape_cast %414 : vector<1x2x128xbf16> to vector<2x128xbf16>
    %416 = vector.shape_cast %412 : vector<2x128xbf16> to vector<1x2x128xbf16>
    tpu.vector_store %arg4[%413, %c0_165, %c0_166], %416 {strides = array<i32>} : memref<8x2x128xbf16, #tpu.memory_space<vmem>>, vector<1x2x128xbf16>,
    %417 = arith.truncf %407 : vector<2x128xf32> to vector<2x128xbf16>
    %418 = arith.index_cast %339 : i32 to index
    %c0_167 = arith.constant 0 : index
    %c0_168 = arith.constant 0 : index
    %419 = vector.load %arg5[%418, %c0_167, %c0_168] : memref<8x2x128xbf16, #tpu.memory_space<vmem>>, vector<1x2x128xbf16>
    %420 = vector.shape_cast %419 : vector<1x2x128xbf16> to vector<2x128xbf16>
    %421 = vector.shape_cast %417 : vector<2x128xbf16> to vector<1x2x128xbf16>
    tpu.vector_store %arg5[%418, %c0_167, %c0_168], %421 {strides = array<i32>} : memref<8x2x128xbf16, #tpu.memory_space<vmem>>, vector<1x2x128xbf16>,
    %c5_i32 = arith.constant 5 : i32
    %c7_i32_169 = arith.constant 7 : i32
    %422 = arith.subi %c7_i32_169, %c5_i32 : i32
    %423 = arith.index_cast %c5_i32 : i32 to index
    %c0_170 = arith.constant 0 : index
    %c0_171 = arith.constant 0 : index
    %424 = vector.load %arg1[%423, %c0_170, %c0_171] : memref<8x2x512xbf16, #tpu.memory_space<vmem>>, vector<1x2x512xbf16>
    %425 = vector.shape_cast %424 : vector<1x2x512xbf16> to vector<2x512xbf16>
    %426 = arith.extf %425 : vector<2x512xbf16> to vector<2x512xf32>
    %c0_172 = arith.constant 0 : index
    %c0_173 = arith.constant 0 : index
    %427 = vector.load %arg6[%c0_172, %c0_173] : memref<2x128xf32, #tpu.memory_space<vmem>>, vector<2x128xf32>
    %428 = arith.truncf %427 : vector<2x128xf32> to vector<2x128xbf16>
    %cst_174 = arith.constant dense<0.000000e+00> : vector<2x512xf32>
    %429 = tpu.matmul %428, %4, %cst_174 {dimension_numbers = #tpu.dot_dimension_numbers<[1], [0], [0], [1], [0, 0, 1, 1], [], []>} : vector<2x128xbf16>, vector<128x512xbf16>, vector<2x512xf32> -> vector<2x512xf32>
    %430 = arith.addf %426, %429 : vector<2x512xf32>
    %431 = arith.index_cast %422 : i32 to index
    %c0_175 = arith.constant 0 : index
    %c0_176 = arith.constant 0 : index
    %432 = vector.load %arg2[%431, %c0_175, %c0_176] : memref<8x2x512xbf16, #tpu.memory_space<vmem>>, vector<1x2x512xbf16>
    %433 = vector.shape_cast %432 : vector<1x2x512xbf16> to vector<2x512xbf16>
    %434 = arith.extf %433 : vector<2x512xbf16> to vector<2x512xf32>
    %c0_177 = arith.constant 0 : index
    %c0_178 = arith.constant 0 : index
    %435 = vector.load %arg8[%c0_177, %c0_178] : memref<2x128xf32, #tpu.memory_space<vmem>>, vector<2x128xf32>
    %436 = arith.truncf %435 : vector<2x128xf32> to vector<2x128xbf16>
    %cst_179 = arith.constant dense<0.000000e+00> : vector<2x512xf32>
    %437 = tpu.matmul %436, %6, %cst_179 {dimension_numbers = #tpu.dot_dimension_numbers<[1], [0], [0], [1], [0, 0, 1, 1], [], []>} : vector<2x128xbf16>, vector<128x512xbf16>, vector<2x512xf32> -> vector<2x512xf32>
    %438 = arith.addf %434, %437 : vector<2x512xf32>
    %c0_180 = arith.constant 0 : index
    %c0_181 = arith.constant 0 : index
    %439 = vector.load %arg7[%c0_180, %c0_181] : memref<2x128xf32, #tpu.memory_space<vmem>>, vector<2x128xf32>
    %440 = vector.extract_strided_slice %430 {offsets = [0, 0], sizes = [2, 128], strides = [1, 1]} : vector<2x512xf32> to vector<2x128xf32>
    %441 = arith.negf %440 : vector<2x128xf32>
    %442 = math.exp %441 : vector<2x128xf32>
    %cst_182 = arith.constant 1.000000e+00 : f32
    %443 = vector.broadcast %cst_182 : f32 to vector<2x128xf32>
    %444 = arith.addf %443, %442 : vector<2x128xf32>
    %445 = arith.divf %443, %444 : vector<2x128xf32>
    %446 = vector.extract_strided_slice %430 {offsets = [0, 128], sizes = [2, 128], strides = [1, 1]} : vector<2x512xf32> to vector<2x128xf32>
    %447 = arith.negf %446 : vector<2x128xf32>
    %448 = math.exp %447 : vector<2x128xf32>
    %cst_183 = arith.constant 1.000000e+00 : f32
    %449 = vector.broadcast %cst_183 : f32 to vector<2x128xf32>
    %450 = arith.addf %449, %448 : vector<2x128xf32>
    %451 = arith.divf %449, %450 : vector<2x128xf32>
    %452 = vector.extract_strided_slice %430 {offsets = [0, 256], sizes = [2, 128], strides = [1, 1]} : vector<2x512xf32> to vector<2x128xf32>
    %453 = math.tanh %452 : vector<2x128xf32>
    %454 = vector.extract_strided_slice %430 {offsets = [0, 384], sizes = [2, 128], strides = [1, 1]} : vector<2x512xf32> to vector<2x128xf32>
    %455 = arith.negf %454 : vector<2x128xf32>
    %456 = math.exp %455 : vector<2x128xf32>
    %cst_184 = arith.constant 1.000000e+00 : f32
    %457 = vector.broadcast %cst_184 : f32 to vector<2x128xf32>
    %458 = arith.addf %457, %456 : vector<2x128xf32>
    %459 = arith.divf %457, %458 : vector<2x128xf32>
    %460 = arith.mulf %451, %439 : vector<2x128xf32>
    %461 = arith.mulf %445, %453 : vector<2x128xf32>
    %462 = arith.addf %460, %461 : vector<2x128xf32>
    %463 = math.tanh %462 : vector<2x128xf32>
    %464 = arith.mulf %459, %463 : vector<2x128xf32>
    %c0_185 = arith.constant 0 : index
    %c0_186 = arith.constant 0 : index
    %465 = vector.load %arg9[%c0_185, %c0_186] : memref<2x128xf32, #tpu.memory_space<vmem>>, vector<2x128xf32>
    %466 = vector.extract_strided_slice %438 {offsets = [0, 0], sizes = [2, 128], strides = [1, 1]} : vector<2x512xf32> to vector<2x128xf32>
    %467 = arith.negf %466 : vector<2x128xf32>
    %468 = math.exp %467 : vector<2x128xf32>
    %cst_187 = arith.constant 1.000000e+00 : f32
    %469 = vector.broadcast %cst_187 : f32 to vector<2x128xf32>
    %470 = arith.addf %469, %468 : vector<2x128xf32>
    %471 = arith.divf %469, %470 : vector<2x128xf32>
    %472 = vector.extract_strided_slice %438 {offsets = [0, 128], sizes = [2, 128], strides = [1, 1]} : vector<2x512xf32> to vector<2x128xf32>
    %473 = arith.negf %472 : vector<2x128xf32>
    %474 = math.exp %473 : vector<2x128xf32>
    %cst_188 = arith.constant 1.000000e+00 : f32
    %475 = vector.broadcast %cst_188 : f32 to vector<2x128xf32>
    %476 = arith.addf %475, %474 : vector<2x128xf32>
    %477 = arith.divf %475, %476 : vector<2x128xf32>
    %478 = vector.extract_strided_slice %438 {offsets = [0, 256], sizes = [2, 128], strides = [1, 1]} : vector<2x512xf32> to vector<2x128xf32>
    %479 = math.tanh %478 : vector<2x128xf32>
    %480 = vector.extract_strided_slice %438 {offsets = [0, 384], sizes = [2, 128], strides = [1, 1]} : vector<2x512xf32> to vector<2x128xf32>
    %481 = arith.negf %480 : vector<2x128xf32>
    %482 = math.exp %481 : vector<2x128xf32>
    %cst_189 = arith.constant 1.000000e+00 : f32
    %483 = vector.broadcast %cst_189 : f32 to vector<2x128xf32>
    %484 = arith.addf %483, %482 : vector<2x128xf32>
    %485 = arith.divf %483, %484 : vector<2x128xf32>
    %486 = arith.mulf %477, %465 : vector<2x128xf32>
    %487 = arith.mulf %471, %479 : vector<2x128xf32>
    %488 = arith.addf %486, %487 : vector<2x128xf32>
    %489 = math.tanh %488 : vector<2x128xf32>
    %490 = arith.mulf %485, %489 : vector<2x128xf32>
    %c0_190 = arith.constant 0 : index
    %c0_191 = arith.constant 0 : index
    %491 = vector.load %arg6[%c0_190, %c0_191] : memref<2x128xf32, #tpu.memory_space<vmem>>, vector<2x128xf32>
    tpu.vector_store %arg6[%c0_190, %c0_191], %464 {strides = array<i32>} : memref<2x128xf32, #tpu.memory_space<vmem>>, vector<2x128xf32>,
    %c0_192 = arith.constant 0 : index
    %c0_193 = arith.constant 0 : index
    %492 = vector.load %arg7[%c0_192, %c0_193] : memref<2x128xf32, #tpu.memory_space<vmem>>, vector<2x128xf32>
    tpu.vector_store %arg7[%c0_192, %c0_193], %462 {strides = array<i32>} : memref<2x128xf32, #tpu.memory_space<vmem>>, vector<2x128xf32>,
    %c0_194 = arith.constant 0 : index
    %c0_195 = arith.constant 0 : index
    %493 = vector.load %arg8[%c0_194, %c0_195] : memref<2x128xf32, #tpu.memory_space<vmem>>, vector<2x128xf32>
    tpu.vector_store %arg8[%c0_194, %c0_195], %490 {strides = array<i32>} : memref<2x128xf32, #tpu.memory_space<vmem>>, vector<2x128xf32>,
    %c0_196 = arith.constant 0 : index
    %c0_197 = arith.constant 0 : index
    %494 = vector.load %arg9[%c0_196, %c0_197] : memref<2x128xf32, #tpu.memory_space<vmem>>, vector<2x128xf32>
    tpu.vector_store %arg9[%c0_196, %c0_197], %488 {strides = array<i32>} : memref<2x128xf32, #tpu.memory_space<vmem>>, vector<2x128xf32>,
    %495 = arith.truncf %464 : vector<2x128xf32> to vector<2x128xbf16>
    %496 = arith.index_cast %c5_i32 : i32 to index
    %c0_198 = arith.constant 0 : index
    %c0_199 = arith.constant 0 : index
    %497 = vector.load %arg4[%496, %c0_198, %c0_199] : memref<8x2x128xbf16, #tpu.memory_space<vmem>>, vector<1x2x128xbf16>
    %498 = vector.shape_cast %497 : vector<1x2x128xbf16> to vector<2x128xbf16>
    %499 = vector.shape_cast %495 : vector<2x128xbf16> to vector<1x2x128xbf16>
    tpu.vector_store %arg4[%496, %c0_198, %c0_199], %499 {strides = array<i32>} : memref<8x2x128xbf16, #tpu.memory_space<vmem>>, vector<1x2x128xbf16>,
    %500 = arith.truncf %490 : vector<2x128xf32> to vector<2x128xbf16>
    %501 = arith.index_cast %422 : i32 to index
    %c0_200 = arith.constant 0 : index
    %c0_201 = arith.constant 0 : index
    %502 = vector.load %arg5[%501, %c0_200, %c0_201] : memref<8x2x128xbf16, #tpu.memory_space<vmem>>, vector<1x2x128xbf16>
    %503 = vector.shape_cast %502 : vector<1x2x128xbf16> to vector<2x128xbf16>
    %504 = vector.shape_cast %500 : vector<2x128xbf16> to vector<1x2x128xbf16>
    tpu.vector_store %arg5[%501, %c0_200, %c0_201], %504 {strides = array<i32>} : memref<8x2x128xbf16, #tpu.memory_space<vmem>>, vector<1x2x128xbf16>,
    %c6_i32 = arith.constant 6 : i32
    %c7_i32_202 = arith.constant 7 : i32
    %505 = arith.subi %c7_i32_202, %c6_i32 : i32
    %506 = arith.index_cast %c6_i32 : i32 to index
    %c0_203 = arith.constant 0 : index
    %c0_204 = arith.constant 0 : index
    %507 = vector.load %arg1[%506, %c0_203, %c0_204] : memref<8x2x512xbf16, #tpu.memory_space<vmem>>, vector<1x2x512xbf16>
    %508 = vector.shape_cast %507 : vector<1x2x512xbf16> to vector<2x512xbf16>
    %509 = arith.extf %508 : vector<2x512xbf16> to vector<2x512xf32>
    %c0_205 = arith.constant 0 : index
    %c0_206 = arith.constant 0 : index
    %510 = vector.load %arg6[%c0_205, %c0_206] : memref<2x128xf32, #tpu.memory_space<vmem>>, vector<2x128xf32>
    %511 = arith.truncf %510 : vector<2x128xf32> to vector<2x128xbf16>
    %cst_207 = arith.constant dense<0.000000e+00> : vector<2x512xf32>
    %512 = tpu.matmul %511, %4, %cst_207 {dimension_numbers = #tpu.dot_dimension_numbers<[1], [0], [0], [1], [0, 0, 1, 1], [], []>} : vector<2x128xbf16>, vector<128x512xbf16>, vector<2x512xf32> -> vector<2x512xf32>
    %513 = arith.addf %509, %512 : vector<2x512xf32>
    %514 = arith.index_cast %505 : i32 to index
    %c0_208 = arith.constant 0 : index
    %c0_209 = arith.constant 0 : index
    %515 = vector.load %arg2[%514, %c0_208, %c0_209] : memref<8x2x512xbf16, #tpu.memory_space<vmem>>, vector<1x2x512xbf16>
    %516 = vector.shape_cast %515 : vector<1x2x512xbf16> to vector<2x512xbf16>
    %517 = arith.extf %516 : vector<2x512xbf16> to vector<2x512xf32>
    %c0_210 = arith.constant 0 : index
    %c0_211 = arith.constant 0 : index
    %518 = vector.load %arg8[%c0_210, %c0_211] : memref<2x128xf32, #tpu.memory_space<vmem>>, vector<2x128xf32>
    %519 = arith.truncf %518 : vector<2x128xf32> to vector<2x128xbf16>
    %cst_212 = arith.constant dense<0.000000e+00> : vector<2x512xf32>
    %520 = tpu.matmul %519, %6, %cst_212 {dimension_numbers = #tpu.dot_dimension_numbers<[1], [0], [0], [1], [0, 0, 1, 1], [], []>} : vector<2x128xbf16>, vector<128x512xbf16>, vector<2x512xf32> -> vector<2x512xf32>
    %521 = arith.addf %517, %520 : vector<2x512xf32>
    %c0_213 = arith.constant 0 : index
    %c0_214 = arith.constant 0 : index
    %522 = vector.load %arg7[%c0_213, %c0_214] : memref<2x128xf32, #tpu.memory_space<vmem>>, vector<2x128xf32>
    %523 = vector.extract_strided_slice %513 {offsets = [0, 0], sizes = [2, 128], strides = [1, 1]} : vector<2x512xf32> to vector<2x128xf32>
    %524 = arith.negf %523 : vector<2x128xf32>
    %525 = math.exp %524 : vector<2x128xf32>
    %cst_215 = arith.constant 1.000000e+00 : f32
    %526 = vector.broadcast %cst_215 : f32 to vector<2x128xf32>
    %527 = arith.addf %526, %525 : vector<2x128xf32>
    %528 = arith.divf %526, %527 : vector<2x128xf32>
    %529 = vector.extract_strided_slice %513 {offsets = [0, 128], sizes = [2, 128], strides = [1, 1]} : vector<2x512xf32> to vector<2x128xf32>
    %530 = arith.negf %529 : vector<2x128xf32>
    %531 = math.exp %530 : vector<2x128xf32>
    %cst_216 = arith.constant 1.000000e+00 : f32
    %532 = vector.broadcast %cst_216 : f32 to vector<2x128xf32>
    %533 = arith.addf %532, %531 : vector<2x128xf32>
    %534 = arith.divf %532, %533 : vector<2x128xf32>
    %535 = vector.extract_strided_slice %513 {offsets = [0, 256], sizes = [2, 128], strides = [1, 1]} : vector<2x512xf32> to vector<2x128xf32>
    %536 = math.tanh %535 : vector<2x128xf32>
    %537 = vector.extract_strided_slice %513 {offsets = [0, 384], sizes = [2, 128], strides = [1, 1]} : vector<2x512xf32> to vector<2x128xf32>
    %538 = arith.negf %537 : vector<2x128xf32>
    %539 = math.exp %538 : vector<2x128xf32>
    %cst_217 = arith.constant 1.000000e+00 : f32
    %540 = vector.broadcast %cst_217 : f32 to vector<2x128xf32>
    %541 = arith.addf %540, %539 : vector<2x128xf32>
    %542 = arith.divf %540, %541 : vector<2x128xf32>
    %543 = arith.mulf %534, %522 : vector<2x128xf32>
    %544 = arith.mulf %528, %536 : vector<2x128xf32>
    %545 = arith.addf %543, %544 : vector<2x128xf32>
    %546 = math.tanh %545 : vector<2x128xf32>
    %547 = arith.mulf %542, %546 : vector<2x128xf32>
    %c0_218 = arith.constant 0 : index
    %c0_219 = arith.constant 0 : index
    %548 = vector.load %arg9[%c0_218, %c0_219] : memref<2x128xf32, #tpu.memory_space<vmem>>, vector<2x128xf32>
    %549 = vector.extract_strided_slice %521 {offsets = [0, 0], sizes = [2, 128], strides = [1, 1]} : vector<2x512xf32> to vector<2x128xf32>
    %550 = arith.negf %549 : vector<2x128xf32>
    %551 = math.exp %550 : vector<2x128xf32>
    %cst_220 = arith.constant 1.000000e+00 : f32
    %552 = vector.broadcast %cst_220 : f32 to vector<2x128xf32>
    %553 = arith.addf %552, %551 : vector<2x128xf32>
    %554 = arith.divf %552, %553 : vector<2x128xf32>
    %555 = vector.extract_strided_slice %521 {offsets = [0, 128], sizes = [2, 128], strides = [1, 1]} : vector<2x512xf32> to vector<2x128xf32>
    %556 = arith.negf %555 : vector<2x128xf32>
    %557 = math.exp %556 : vector<2x128xf32>
    %cst_221 = arith.constant 1.000000e+00 : f32
    %558 = vector.broadcast %cst_221 : f32 to vector<2x128xf32>
    %559 = arith.addf %558, %557 : vector<2x128xf32>
    %560 = arith.divf %558, %559 : vector<2x128xf32>
    %561 = vector.extract_strided_slice %521 {offsets = [0, 256], sizes = [2, 128], strides = [1, 1]} : vector<2x512xf32> to vector<2x128xf32>
    %562 = math.tanh %561 : vector<2x128xf32>
    %563 = vector.extract_strided_slice %521 {offsets = [0, 384], sizes = [2, 128], strides = [1, 1]} : vector<2x512xf32> to vector<2x128xf32>
    %564 = arith.negf %563 : vector<2x128xf32>
    %565 = math.exp %564 : vector<2x128xf32>
    %cst_222 = arith.constant 1.000000e+00 : f32
    %566 = vector.broadcast %cst_222 : f32 to vector<2x128xf32>
    %567 = arith.addf %566, %565 : vector<2x128xf32>
    %568 = arith.divf %566, %567 : vector<2x128xf32>
    %569 = arith.mulf %560, %548 : vector<2x128xf32>
    %570 = arith.mulf %554, %562 : vector<2x128xf32>
    %571 = arith.addf %569, %570 : vector<2x128xf32>
    %572 = math.tanh %571 : vector<2x128xf32>
    %573 = arith.mulf %568, %572 : vector<2x128xf32>
    %c0_223 = arith.constant 0 : index
    %c0_224 = arith.constant 0 : index
    %574 = vector.load %arg6[%c0_223, %c0_224] : memref<2x128xf32, #tpu.memory_space<vmem>>, vector<2x128xf32>
    tpu.vector_store %arg6[%c0_223, %c0_224], %547 {strides = array<i32>} : memref<2x128xf32, #tpu.memory_space<vmem>>, vector<2x128xf32>,
    %c0_225 = arith.constant 0 : index
    %c0_226 = arith.constant 0 : index
    %575 = vector.load %arg7[%c0_225, %c0_226] : memref<2x128xf32, #tpu.memory_space<vmem>>, vector<2x128xf32>
    tpu.vector_store %arg7[%c0_225, %c0_226], %545 {strides = array<i32>} : memref<2x128xf32, #tpu.memory_space<vmem>>, vector<2x128xf32>,
    %c0_227 = arith.constant 0 : index
    %c0_228 = arith.constant 0 : index
    %576 = vector.load %arg8[%c0_227, %c0_228] : memref<2x128xf32, #tpu.memory_space<vmem>>, vector<2x128xf32>
    tpu.vector_store %arg8[%c0_227, %c0_228], %573 {strides = array<i32>} : memref<2x128xf32, #tpu.memory_space<vmem>>, vector<2x128xf32>,
    %c0_229 = arith.constant 0 : index
    %c0_230 = arith.constant 0 : index
    %577 = vector.load %arg9[%c0_229, %c0_230] : memref<2x128xf32, #tpu.memory_space<vmem>>, vector<2x128xf32>
    tpu.vector_store %arg9[%c0_229, %c0_230], %571 {strides = array<i32>} : memref<2x128xf32, #tpu.memory_space<vmem>>, vector<2x128xf32>,
    %578 = arith.truncf %547 : vector<2x128xf32> to vector<2x128xbf16>
    %579 = arith.index_cast %c6_i32 : i32 to index
    %c0_231 = arith.constant 0 : index
    %c0_232 = arith.constant 0 : index
    %580 = vector.load %arg4[%579, %c0_231, %c0_232] : memref<8x2x128xbf16, #tpu.memory_space<vmem>>, vector<1x2x128xbf16>
    %581 = vector.shape_cast %580 : vector<1x2x128xbf16> to vector<2x128xbf16>
    %582 = vector.shape_cast %578 : vector<2x128xbf16> to vector<1x2x128xbf16>
    tpu.vector_store %arg4[%579, %c0_231, %c0_232], %582 {strides = array<i32>} : memref<8x2x128xbf16, #tpu.memory_space<vmem>>, vector<1x2x128xbf16>,
    %583 = arith.truncf %573 : vector<2x128xf32> to vector<2x128xbf16>
    %584 = arith.index_cast %505 : i32 to index
    %c0_233 = arith.constant 0 : index
    %c0_234 = arith.constant 0 : index
    %585 = vector.load %arg5[%584, %c0_233, %c0_234] : memref<8x2x128xbf16, #tpu.memory_space<vmem>>, vector<1x2x128xbf16>
    %586 = vector.shape_cast %585 : vector<1x2x128xbf16> to vector<2x128xbf16>
    %587 = vector.shape_cast %583 : vector<2x128xbf16> to vector<1x2x128xbf16>
    tpu.vector_store %arg5[%584, %c0_233, %c0_234], %587 {strides = array<i32>} : memref<8x2x128xbf16, #tpu.memory_space<vmem>>, vector<1x2x128xbf16>,
    %c7_i32_235 = arith.constant 7 : i32
    %c7_i32_236 = arith.constant 7 : i32
    %588 = arith.subi %c7_i32_236, %c7_i32_235 : i32
    %589 = arith.index_cast %c7_i32_235 : i32 to index
    %c0_237 = arith.constant 0 : index
    %c0_238 = arith.constant 0 : index
    %590 = vector.load %arg1[%589, %c0_237, %c0_238] : memref<8x2x512xbf16, #tpu.memory_space<vmem>>, vector<1x2x512xbf16>
    %591 = vector.shape_cast %590 : vector<1x2x512xbf16> to vector<2x512xbf16>
    %592 = arith.extf %591 : vector<2x512xbf16> to vector<2x512xf32>
    %c0_239 = arith.constant 0 : index
    %c0_240 = arith.constant 0 : index
    %593 = vector.load %arg6[%c0_239, %c0_240] : memref<2x128xf32, #tpu.memory_space<vmem>>, vector<2x128xf32>
    %594 = arith.truncf %593 : vector<2x128xf32> to vector<2x128xbf16>
    %cst_241 = arith.constant dense<0.000000e+00> : vector<2x512xf32>
    %595 = tpu.matmul %594, %4, %cst_241 {dimension_numbers = #tpu.dot_dimension_numbers<[1], [0], [0], [1], [0, 0, 1, 1], [], []>} : vector<2x128xbf16>, vector<128x512xbf16>, vector<2x512xf32> -> vector<2x512xf32>
    %596 = arith.addf %592, %595 : vector<2x512xf32>
    %597 = arith.index_cast %588 : i32 to index
    %c0_242 = arith.constant 0 : index
    %c0_243 = arith.constant 0 : index
    %598 = vector.load %arg2[%597, %c0_242, %c0_243] : memref<8x2x512xbf16, #tpu.memory_space<vmem>>, vector<1x2x512xbf16>
    %599 = vector.shape_cast %598 : vector<1x2x512xbf16> to vector<2x512xbf16>
    %600 = arith.extf %599 : vector<2x512xbf16> to vector<2x512xf32>
    %c0_244 = arith.constant 0 : index
    %c0_245 = arith.constant 0 : index
    %601 = vector.load %arg8[%c0_244, %c0_245] : memref<2x128xf32, #tpu.memory_space<vmem>>, vector<2x128xf32>
    %602 = arith.truncf %601 : vector<2x128xf32> to vector<2x128xbf16>
    %cst_246 = arith.constant dense<0.000000e+00> : vector<2x512xf32>
    %603 = tpu.matmul %602, %6, %cst_246 {dimension_numbers = #tpu.dot_dimension_numbers<[1], [0], [0], [1], [0, 0, 1, 1], [], []>} : vector<2x128xbf16>, vector<128x512xbf16>, vector<2x512xf32> -> vector<2x512xf32>
    %604 = arith.addf %600, %603 : vector<2x512xf32>
    %c0_247 = arith.constant 0 : index
    %c0_248 = arith.constant 0 : index
    %605 = vector.load %arg7[%c0_247, %c0_248] : memref<2x128xf32, #tpu.memory_space<vmem>>, vector<2x128xf32>
    %606 = vector.extract_strided_slice %596 {offsets = [0, 0], sizes = [2, 128], strides = [1, 1]} : vector<2x512xf32> to vector<2x128xf32>
    %607 = arith.negf %606 : vector<2x128xf32>
    %608 = math.exp %607 : vector<2x128xf32>
    %cst_249 = arith.constant 1.000000e+00 : f32
    %609 = vector.broadcast %cst_249 : f32 to vector<2x128xf32>
    %610 = arith.addf %609, %608 : vector<2x128xf32>
    %611 = arith.divf %609, %610 : vector<2x128xf32>
    %612 = vector.extract_strided_slice %596 {offsets = [0, 128], sizes = [2, 128], strides = [1, 1]} : vector<2x512xf32> to vector<2x128xf32>
    %613 = arith.negf %612 : vector<2x128xf32>
    %614 = math.exp %613 : vector<2x128xf32>
    %cst_250 = arith.constant 1.000000e+00 : f32
    %615 = vector.broadcast %cst_250 : f32 to vector<2x128xf32>
    %616 = arith.addf %615, %614 : vector<2x128xf32>
    %617 = arith.divf %615, %616 : vector<2x128xf32>
    %618 = vector.extract_strided_slice %596 {offsets = [0, 256], sizes = [2, 128], strides = [1, 1]} : vector<2x512xf32> to vector<2x128xf32>
    %619 = math.tanh %618 : vector<2x128xf32>
    %620 = vector.extract_strided_slice %596 {offsets = [0, 384], sizes = [2, 128], strides = [1, 1]} : vector<2x512xf32> to vector<2x128xf32>
    %621 = arith.negf %620 : vector<2x128xf32>
    %622 = math.exp %621 : vector<2x128xf32>
    %cst_251 = arith.constant 1.000000e+00 : f32
    %623 = vector.broadcast %cst_251 : f32 to vector<2x128xf32>
    %624 = arith.addf %623, %622 : vector<2x128xf32>
    %625 = arith.divf %623, %624 : vector<2x128xf32>
    %626 = arith.mulf %617, %605 : vector<2x128xf32>
    %627 = arith.mulf %611, %619 : vector<2x128xf32>
    %628 = arith.addf %626, %627 : vector<2x128xf32>
    %629 = math.tanh %628 : vector<2x128xf32>
    %630 = arith.mulf %625, %629 : vector<2x128xf32>
    %c0_252 = arith.constant 0 : index
    %c0_253 = arith.constant 0 : index
    %631 = vector.load %arg9[%c0_252, %c0_253] : memref<2x128xf32, #tpu.memory_space<vmem>>, vector<2x128xf32>
    %632 = vector.extract_strided_slice %604 {offsets = [0, 0], sizes = [2, 128], strides = [1, 1]} : vector<2x512xf32> to vector<2x128xf32>
    %633 = arith.negf %632 : vector<2x128xf32>
    %634 = math.exp %633 : vector<2x128xf32>
    %cst_254 = arith.constant 1.000000e+00 : f32
    %635 = vector.broadcast %cst_254 : f32 to vector<2x128xf32>
    %636 = arith.addf %635, %634 : vector<2x128xf32>
    %637 = arith.divf %635, %636 : vector<2x128xf32>
    %638 = vector.extract_strided_slice %604 {offsets = [0, 128], sizes = [2, 128], strides = [1, 1]} : vector<2x512xf32> to vector<2x128xf32>
    %639 = arith.negf %638 : vector<2x128xf32>
    %640 = math.exp %639 : vector<2x128xf32>
    %cst_255 = arith.constant 1.000000e+00 : f32
    %641 = vector.broadcast %cst_255 : f32 to vector<2x128xf32>
    %642 = arith.addf %641, %640 : vector<2x128xf32>
    %643 = arith.divf %641, %642 : vector<2x128xf32>
    %644 = vector.extract_strided_slice %604 {offsets = [0, 256], sizes = [2, 128], strides = [1, 1]} : vector<2x512xf32> to vector<2x128xf32>
    %645 = math.tanh %644 : vector<2x128xf32>
    %646 = vector.extract_strided_slice %604 {offsets = [0, 384], sizes = [2, 128], strides = [1, 1]} : vector<2x512xf32> to vector<2x128xf32>
    %647 = arith.negf %646 : vector<2x128xf32>
    %648 = math.exp %647 : vector<2x128xf32>
    %cst_256 = arith.constant 1.000000e+00 : f32
    %649 = vector.broadcast %cst_256 : f32 to vector<2x128xf32>
    %650 = arith.addf %649, %648 : vector<2x128xf32>
    %651 = arith.divf %649, %650 : vector<2x128xf32>
    %652 = arith.mulf %643, %631 : vector<2x128xf32>
    %653 = arith.mulf %637, %645 : vector<2x128xf32>
    %654 = arith.addf %652, %653 : vector<2x128xf32>
    %655 = math.tanh %654 : vector<2x128xf32>
    %656 = arith.mulf %651, %655 : vector<2x128xf32>
    %c0_257 = arith.constant 0 : index
    %c0_258 = arith.constant 0 : index
    %657 = vector.load %arg6[%c0_257, %c0_258] : memref<2x128xf32, #tpu.memory_space<vmem>>, vector<2x128xf32>
    tpu.vector_store %arg6[%c0_257, %c0_258], %630 {strides = array<i32>} : memref<2x128xf32, #tpu.memory_space<vmem>>, vector<2x128xf32>,
    %c0_259 = arith.constant 0 : index
    %c0_260 = arith.constant 0 : index
    %658 = vector.load %arg7[%c0_259, %c0_260] : memref<2x128xf32, #tpu.memory_space<vmem>>, vector<2x128xf32>
    tpu.vector_store %arg7[%c0_259, %c0_260], %628 {strides = array<i32>} : memref<2x128xf32, #tpu.memory_space<vmem>>, vector<2x128xf32>,
    %c0_261 = arith.constant 0 : index
    %c0_262 = arith.constant 0 : index
    %659 = vector.load %arg8[%c0_261, %c0_262] : memref<2x128xf32, #tpu.memory_space<vmem>>, vector<2x128xf32>
    tpu.vector_store %arg8[%c0_261, %c0_262], %656 {strides = array<i32>} : memref<2x128xf32, #tpu.memory_space<vmem>>, vector<2x128xf32>,
    %c0_263 = arith.constant 0 : index
    %c0_264 = arith.constant 0 : index
    %660 = vector.load %arg9[%c0_263, %c0_264] : memref<2x128xf32, #tpu.memory_space<vmem>>, vector<2x128xf32>
    tpu.vector_store %arg9[%c0_263, %c0_264], %654 {strides = array<i32>} : memref<2x128xf32, #tpu.memory_space<vmem>>, vector<2x128xf32>,
    %661 = arith.truncf %630 : vector<2x128xf32> to vector<2x128xbf16>
    %662 = arith.index_cast %c7_i32_235 : i32 to index
    %c0_265 = arith.constant 0 : index
    %c0_266 = arith.constant 0 : index
    %663 = vector.load %arg4[%662, %c0_265, %c0_266] : memref<8x2x128xbf16, #tpu.memory_space<vmem>>, vector<1x2x128xbf16>
    %664 = vector.shape_cast %663 : vector<1x2x128xbf16> to vector<2x128xbf16>
    %665 = vector.shape_cast %661 : vector<2x128xbf16> to vector<1x2x128xbf16>
    tpu.vector_store %arg4[%662, %c0_265, %c0_266], %665 {strides = array<i32>} : memref<8x2x128xbf16, #tpu.memory_space<vmem>>, vector<1x2x128xbf16>,
    %666 = arith.truncf %656 : vector<2x128xf32> to vector<2x128xbf16>
    %667 = arith.index_cast %588 : i32 to index
    %c0_267 = arith.constant 0 : index
    %c0_268 = arith.constant 0 : index
    %668 = vector.load %arg5[%667, %c0_267, %c0_268] : memref<8x2x128xbf16, #tpu.memory_space<vmem>>, vector<1x2x128xbf16>
    %669 = vector.shape_cast %668 : vector<1x2x128xbf16> to vector<2x128xbf16>
    %670 = vector.shape_cast %666 : vector<2x128xbf16> to vector<1x2x128xbf16>
    tpu.vector_store %arg5[%667, %c0_267, %c0_268], %670 {strides = array<i32>} : memref<8x2x128xbf16, #tpu.memory_space<vmem>>, vector<1x2x128xbf16>,
    %c8_i32 = arith.constant 8 : i32
    return
  }
  func.func @transform_0(%arg0: i32) -> (i32, i32, i32) {
    %c0_i32 = arith.constant 0 : i32
    %c0_i32_0 = arith.constant 0 : i32
    %c0_i32_1 = arith.constant 0 : i32
    return %arg0, %c0_i32, %c0_i32_0 : i32, i32, i32
  }
  func.func @transform_1(%arg0: i32) -> (i32, i32, i32) {
    %c0_i32 = arith.constant 0 : i32
    %0 = arith.subi %c0_i32, %arg0 : i32
    %c0_i32_0 = arith.constant 0 : i32
    %c1_i32 = arith.constant 1 : i32
    %c0_i32_1 = arith.constant 0 : i32
    return %0, %c0_i32_0, %c1_i32 : i32, i32, i32
  }
  func.func @transform_2(%arg0: i32) -> (i32, i32, i32) {
    %c0_i32 = arith.constant 0 : i32
    %c0_i32_0 = arith.constant 0 : i32
    %c0_i32_1 = arith.constant 0 : i32
    %c0_i32_2 = arith.constant 0 : i32
    return %c0_i32, %c0_i32_0, %c0_i32_1 : i32, i32, i32
  }
  func.func @transform_3(%arg0: i32) -> (i32, i32, i32) {
    %c0_i32 = arith.constant 0 : i32
    %c0_i32_0 = arith.constant 0 : i32
    %c0_i32_1 = arith.constant 0 : i32
    return %arg0, %c0_i32, %c0_i32_0 : i32, i32, i32
  }
  func.func @transform_4(%arg0: i32) -> (i32, i32, i32) {
    %c0_i32 = arith.constant 0 : i32
    %0 = arith.subi %c0_i32, %arg0 : i32
    %c0_i32_0 = arith.constant 0 : i32
    %c0_i32_1 = arith.constant 0 : i32
    %c0_i32_2 = arith.constant 0 : i32
    return %0, %c0_i32_0, %c0_i32_1 : i32, i32, i32
  }
}

module attributes {stable_mosaic.version = 11 : i64} {
  func.func @_lstm_recurrence_kernel(%arg0: i32, %arg1: memref<8x2x512xbf16, #tpu.memory_space<vmem>>, %arg2: memref<8x2x512xbf16, #tpu.memory_space<vmem>>, %arg3: memref<2x128x512xbf16, #tpu.memory_space<vmem>>, %arg4: memref<8x2x128xbf16, #tpu.memory_space<vmem>>, %arg5: memref<8x2x128xbf16, #tpu.memory_space<vmem>>, %arg6: memref<2x128xf32, #tpu.memory_space<vmem>>, %arg7: memref<2x128xf32, #tpu.memory_space<vmem>>, %arg8: memref<2x128xf32, #tpu.memory_space<vmem>>, %arg9: memref<2x128xf32, #tpu.memory_space<vmem>>) attributes {dimension_semantics = [#tpu.dimension_semantics<arbitrary>], iteration_bounds = array<i64: 1>, scalar_prefetch = 0 : i64, scratch_operands = 4 : i64, tpu.core_type = #tpu.core_type<tc>, window_params = [{transform_indices = @transform_0, window_bounds = array<i64: 8, 2, 512>}, {transform_indices = @transform_1, window_bounds = array<i64: 8, 2, 512>}, {pipeline_mode = #tpu.pipeline_mode<synchronous>, transform_indices = @transform_2, window_bounds = array<i64: 2, 128, 512>}, {transform_indices = @transform_3, window_bounds = array<i64: 8, 2, 128>}, {transform_indices = @transform_4, window_bounds = array<i64: 8, 2, 128>}]} {
    %c0_i32 = arith.constant 0 : i32
    %0 = arith.cmpi eq, %arg0, %c0_i32 : i32
    %1 = arith.extui %0 : i1 to i32
    %c0_i32_0 = arith.constant 0 : i32
    %2 = arith.cmpi ne, %1, %c0_i32_0 : i32
    scf.if %2 {
      %cst_269 = arith.constant 0.000000e+00 : f32
      %671 = vector.broadcast %cst_269 : f32 to vector<2x128xf32>
      %c0_270 = arith.constant 0 : index
      %c0_271 = arith.constant 0 : index
      %672 = vector.load %arg6[%c0_270, %c0_271] : memref<2x128xf32, #tpu.memory_space<vmem>>, vector<2x128xf32>
      tpu.vector_store %arg6[%c0_270, %c0_271], %671 {strides = array<i32>} : memref<2x128xf32, #tpu.memory_space<vmem>>, vector<2x128xf32>,
      %cst_272 = arith.constant 0.000000e+00 : f32
      %673 = vector.broadcast %cst_272 : f32 to vector<2x128xf32>
      %c0_273 = arith.constant 0 : index
      %c0_274 = arith.constant 0 : index
      %674 = vector.load %arg7[%c0_273, %c0_274] : memref<2x128xf32, #tpu.memory_space<vmem>>, vector<2x128xf32>
      tpu.vector_store %arg7[%c0_273, %c0_274], %673 {strides = array<i32>} : memref<2x128xf32, #tpu.memory_space<vmem>>, vector<2x128xf32>,
      %cst_275 = arith.constant 0.000000e+00 : f32
      %675 = vector.broadcast %cst_275 : f32 to vector<2x128xf32>
      %c0_276 = arith.constant 0 : index
      %c0_277 = arith.constant 0 : index
      %676 = vector.load %arg8[%c0_276, %c0_277] : memref<2x128xf32, #tpu.memory_space<vmem>>, vector<2x128xf32>
      tpu.vector_store %arg8[%c0_276, %c0_277], %675 {strides = array<i32>} : memref<2x128xf32, #tpu.memory_space<vmem>>, vector<2x128xf32>,
      %cst_278 = arith.constant 0.000000e+00 : f32
      %677 = vector.broadcast %cst_278 : f32 to vector<2x128xf32>
      %c0_279 = arith.constant 0 : index
      %c0_280 = arith.constant 0 : index
      %678 = vector.load %arg9[%c0_279, %c0_280] : memref<2x128xf32, #tpu.memory_space<vmem>>, vector<2x128xf32>
      tpu.vector_store %arg9[%c0_279, %c0_280], %677 {strides = array<i32>} : memref<2x128xf32, #tpu.memory_space<vmem>>, vector<2x128xf32>,
    } else {
    }
    %c0 = arith.constant 0 : index
    %c0_1 = arith.constant 0 : index
    %c0_2 = arith.constant 0 : index
    %3 = vector.load %arg3[%c0, %c0_1, %c0_2] : memref<2x128x512xbf16, #tpu.memory_space<vmem>>, vector<1x128x512xbf16>
    %4 = vector.shape_cast %3 : vector<1x128x512xbf16> to vector<128x512xbf16>
    %c1 = arith.constant 1 : index
    %c0_3 = arith.constant 0 : index
    %c0_4 = arith.constant 0 : index
    %5 = vector.load %arg3[%c1, %c0_3, %c0_4] : memref<2x128x512xbf16, #tpu.memory_space<vmem>>, vector<1x128x512xbf16>
    %6 = vector.shape_cast %5 : vector<1x128x512xbf16> to vector<128x512xbf16>
    %c0_i32_5 = arith.constant 0 : i32
    %c7_i32 = arith.constant 7 : i32
    %7 = arith.subi %c7_i32, %c0_i32_5 : i32
    %8 = arith.index_cast %c0_i32_5 : i32 to index
    %c0_6 = arith.constant 0 : index
    %c0_7 = arith.constant 0 : index
    %9 = vector.load %arg1[%8, %c0_6, %c0_7] : memref<8x2x512xbf16, #tpu.memory_space<vmem>>, vector<1x2x512xbf16>
    %10 = vector.shape_cast %9 : vector<1x2x512xbf16> to vector<2x512xbf16>
    %11 = arith.extf %10 : vector<2x512xbf16> to vector<2x512xf32>
    %c0_8 = arith.constant 0 : index
    %c0_9 = arith.constant 0 : index
    %12 = vector.load %arg6[%c0_8, %c0_9] : memref<2x128xf32, #tpu.memory_space<vmem>>, vector<2x128xf32>
    %13 = arith.truncf %12 : vector<2x128xf32> to vector<2x128xbf16>
    %cst = arith.constant dense<0.000000e+00> : vector<2x512xf32>
    %14 = tpu.matmul %13, %4, %cst {dimension_numbers = #tpu.dot_dimension_numbers<[1], [0], [0], [1], [0, 0, 1, 1], [], []>} : vector<2x128xbf16>, vector<128x512xbf16>, vector<2x512xf32> -> vector<2x512xf32>
    %15 = arith.addf %11, %14 : vector<2x512xf32>
    %16 = arith.index_cast %7 : i32 to index
    %c0_10 = arith.constant 0 : index
    %c0_11 = arith.constant 0 : index
    %17 = vector.load %arg2[%16, %c0_10, %c0_11] : memref<8x2x512xbf16, #tpu.memory_space<vmem>>, vector<1x2x512xbf16>
    %18 = vector.shape_cast %17 : vector<1x2x512xbf16> to vector<2x512xbf16>
    %19 = arith.extf %18 : vector<2x512xbf16> to vector<2x512xf32>
    %c0_12 = arith.constant 0 : index
    %c0_13 = arith.constant 0 : index
    %20 = vector.load %arg8[%c0_12, %c0_13] : memref<2x128xf32, #tpu.memory_space<vmem>>, vector<2x128xf32>
    %21 = arith.truncf %20 : vector<2x128xf32> to vector<2x128xbf16>
    %cst_14 = arith.constant dense<0.000000e+00> : vector<2x512xf32>
    %22 = tpu.matmul %21, %6, %cst_14 {dimension_numbers = #tpu.dot_dimension_numbers<[1], [0], [0], [1], [0, 0, 1, 1], [], []>} : vector<2x128xbf16>, vector<128x512xbf16>, vector<2x512xf32> -> vector<2x512xf32>
    %23 = arith.addf %19, %22 : vector<2x512xf32>
    %c0_15 = arith.constant 0 : index
    %c0_16 = arith.constant 0 : index
    %24 = vector.load %arg7[%c0_15, %c0_16] : memref<2x128xf32, #tpu.memory_space<vmem>>, vector<2x128xf32>
    %25 = vector.extract_strided_slice %15 {offsets = [0, 0], sizes = [2, 128], strides = [1, 1]} : vector<2x512xf32> to vector<2x128xf32>
    %26 = arith.negf %25 : vector<2x128xf32>
    %27 = math.exp %26 : vector<2x128xf32>
    %cst_17 = arith.constant 1.000000e+00 : f32
    %28 = vector.broadcast %cst_17 : f32 to vector<2x128xf32>
    %29 = arith.addf %28, %27 : vector<2x128xf32>
    %30 = arith.divf %28, %29 : vector<2x128xf32>
    %31 = vector.extract_strided_slice %15 {offsets = [0, 128], sizes = [2, 128], strides = [1, 1]} : vector<2x512xf32> to vector<2x128xf32>
    %32 = arith.negf %31 : vector<2x128xf32>
    %33 = math.exp %32 : vector<2x128xf32>
    %cst_18 = arith.constant 1.000000e+00 : f32
    %34 = vector.broadcast %cst_18 : f32 to vector<2x128xf32>
    %35 = arith.addf %34, %33 : vector<2x128xf32>
    %36 = arith.divf %34, %35 : vector<2x128xf32>
    %37 = vector.extract_strided_slice %15 {offsets = [0, 256], sizes = [2, 128], strides = [1, 1]} : vector<2x512xf32> to vector<2x128xf32>
    %38 = math.tanh %37 : vector<2x128xf32>
    %39 = vector.extract_strided_slice %15 {offsets = [0, 384], sizes = [2, 128], strides = [1, 1]} : vector<2x512xf32> to vector<2x128xf32>
    %40 = arith.negf %39 : vector<2x128xf32>
    %41 = math.exp %40 : vector<2x128xf32>
    %cst_19 = arith.constant 1.000000e+00 : f32
    %42 = vector.broadcast %cst_19 : f32 to vector<2x128xf32>
    %43 = arith.addf %42, %41 : vector<2x128xf32>
    %44 = arith.divf %42, %43 : vector<2x128xf32>
    %45 = arith.mulf %36, %24 : vector<2x128xf32>
    %46 = arith.mulf %30, %38 : vector<2x128xf32>
    %47 = arith.addf %45, %46 : vector<2x128xf32>
    %48 = math.tanh %47 : vector<2x128xf32>
    %49 = arith.mulf %44, %48 : vector<2x128xf32>
    %c0_20 = arith.constant 0 : index
    %c0_21 = arith.constant 0 : index
    %50 = vector.load %arg9[%c0_20, %c0_21] : memref<2x128xf32, #tpu.memory_space<vmem>>, vector<2x128xf32>
    %51 = vector.extract_strided_slice %23 {offsets = [0, 0], sizes = [2, 128], strides = [1, 1]} : vector<2x512xf32> to vector<2x128xf32>
    %52 = arith.negf %51 : vector<2x128xf32>
    %53 = math.exp %52 : vector<2x128xf32>
    %cst_22 = arith.constant 1.000000e+00 : f32
    %54 = vector.broadcast %cst_22 : f32 to vector<2x128xf32>
    %55 = arith.addf %54, %53 : vector<2x128xf32>
    %56 = arith.divf %54, %55 : vector<2x128xf32>
    %57 = vector.extract_strided_slice %23 {offsets = [0, 128], sizes = [2, 128], strides = [1, 1]} : vector<2x512xf32> to vector<2x128xf32>
    %58 = arith.negf %57 : vector<2x128xf32>
    %59 = math.exp %58 : vector<2x128xf32>
    %cst_23 = arith.constant 1.000000e+00 : f32
    %60 = vector.broadcast %cst_23 : f32 to vector<2x128xf32>
    %61 = arith.addf %60, %59 : vector<2x128xf32>
    %62 = arith.divf %60, %61 : vector<2x128xf32>
    %63 = vector.extract_strided_slice %23 {offsets = [0, 256], sizes = [2, 128], strides = [1, 1]} : vector<2x512xf32> to vector<2x128xf32>
    %64 = math.tanh %63 : vector<2x128xf32>
    %65 = vector.extract_strided_slice %23 {offsets = [0, 384], sizes = [2, 128], strides = [1, 1]} : vector<2x512xf32> to vector<2x128xf32>
    %66 = arith.negf %65 : vector<2x128xf32>
    %67 = math.exp %66 : vector<2x128xf32>
    %cst_24 = arith.constant 1.000000e+00 : f32
    %68 = vector.broadcast %cst_24 : f32 to vector<2x128xf32>
    %69 = arith.addf %68, %67 : vector<2x128xf32>
    %70 = arith.divf %68, %69 : vector<2x128xf32>
    %71 = arith.mulf %62, %50 : vector<2x128xf32>
    %72 = arith.mulf %56, %64 : vector<2x128xf32>
    %73 = arith.addf %71, %72 : vector<2x128xf32>
    %74 = math.tanh %73 : vector<2x128xf32>
    %75 = arith.mulf %70, %74 : vector<2x128xf32>
    %c0_25 = arith.constant 0 : index
    %c0_26 = arith.constant 0 : index
    %76 = vector.load %arg6[%c0_25, %c0_26] : memref<2x128xf32, #tpu.memory_space<vmem>>, vector<2x128xf32>
    tpu.vector_store %arg6[%c0_25, %c0_26], %49 {strides = array<i32>} : memref<2x128xf32, #tpu.memory_space<vmem>>, vector<2x128xf32>,
    %c0_27 = arith.constant 0 : index
    %c0_28 = arith.constant 0 : index
    %77 = vector.load %arg7[%c0_27, %c0_28] : memref<2x128xf32, #tpu.memory_space<vmem>>, vector<2x128xf32>
    tpu.vector_store %arg7[%c0_27, %c0_28], %47 {strides = array<i32>} : memref<2x128xf32, #tpu.memory_space<vmem>>, vector<2x128xf32>,
    %c0_29 = arith.constant 0 : index
    %c0_30 = arith.constant 0 : index
    %78 = vector.load %arg8[%c0_29, %c0_30] : memref<2x128xf32, #tpu.memory_space<vmem>>, vector<2x128xf32>
    tpu.vector_store %arg8[%c0_29, %c0_30], %75 {strides = array<i32>} : memref<2x128xf32, #tpu.memory_space<vmem>>, vector<2x128xf32>,
    %c0_31 = arith.constant 0 : index
    %c0_32 = arith.constant 0 : index
    %79 = vector.load %arg9[%c0_31, %c0_32] : memref<2x128xf32, #tpu.memory_space<vmem>>, vector<2x128xf32>
    tpu.vector_store %arg9[%c0_31, %c0_32], %73 {strides = array<i32>} : memref<2x128xf32, #tpu.memory_space<vmem>>, vector<2x128xf32>,
    %80 = arith.truncf %49 : vector<2x128xf32> to vector<2x128xbf16>
    %81 = arith.index_cast %c0_i32_5 : i32 to index
    %c0_33 = arith.constant 0 : index
    %c0_34 = arith.constant 0 : index
    %82 = vector.load %arg4[%81, %c0_33, %c0_34] : memref<8x2x128xbf16, #tpu.memory_space<vmem>>, vector<1x2x128xbf16>
    %83 = vector.shape_cast %82 : vector<1x2x128xbf16> to vector<2x128xbf16>
    %84 = vector.shape_cast %80 : vector<2x128xbf16> to vector<1x2x128xbf16>
    tpu.vector_store %arg4[%81, %c0_33, %c0_34], %84 {strides = array<i32>} : memref<8x2x128xbf16, #tpu.memory_space<vmem>>, vector<1x2x128xbf16>,
    %85 = arith.truncf %75 : vector<2x128xf32> to vector<2x128xbf16>
    %86 = arith.index_cast %7 : i32 to index
    %c0_35 = arith.constant 0 : index
    %c0_36 = arith.constant 0 : index
    %87 = vector.load %arg5[%86, %c0_35, %c0_36] : memref<8x2x128xbf16, #tpu.memory_space<vmem>>, vector<1x2x128xbf16>
    %88 = vector.shape_cast %87 : vector<1x2x128xbf16> to vector<2x128xbf16>
    %89 = vector.shape_cast %85 : vector<2x128xbf16> to vector<1x2x128xbf16>
    tpu.vector_store %arg5[%86, %c0_35, %c0_36], %89 {strides = array<i32>} : memref<8x2x128xbf16, #tpu.memory_space<vmem>>, vector<1x2x128xbf16>,
    %c1_i32 = arith.constant 1 : i32
    %c7_i32_37 = arith.constant 7 : i32
    %90 = arith.subi %c7_i32_37, %c1_i32 : i32
    %91 = arith.index_cast %c1_i32 : i32 to index
    %c0_38 = arith.constant 0 : index
    %c0_39 = arith.constant 0 : index
    %92 = vector.load %arg1[%91, %c0_38, %c0_39] : memref<8x2x512xbf16, #tpu.memory_space<vmem>>, vector<1x2x512xbf16>
    %93 = vector.shape_cast %92 : vector<1x2x512xbf16> to vector<2x512xbf16>
    %94 = arith.extf %93 : vector<2x512xbf16> to vector<2x512xf32>
    %c0_40 = arith.constant 0 : index
    %c0_41 = arith.constant 0 : index
    %95 = vector.load %arg6[%c0_40, %c0_41] : memref<2x128xf32, #tpu.memory_space<vmem>>, vector<2x128xf32>
    %96 = arith.truncf %95 : vector<2x128xf32> to vector<2x128xbf16>
    %cst_42 = arith.constant dense<0.000000e+00> : vector<2x512xf32>
    %97 = tpu.matmul %96, %4, %cst_42 {dimension_numbers = #tpu.dot_dimension_numbers<[1], [0], [0], [1], [0, 0, 1, 1], [], []>} : vector<2x128xbf16>, vector<128x512xbf16>, vector<2x512xf32> -> vector<2x512xf32>
    %98 = arith.addf %94, %97 : vector<2x512xf32>
    %99 = arith.index_cast %90 : i32 to index
    %c0_43 = arith.constant 0 : index
    %c0_44 = arith.constant 0 : index
    %100 = vector.load %arg2[%99, %c0_43, %c0_44] : memref<8x2x512xbf16, #tpu.memory_space<vmem>>, vector<1x2x512xbf16>
    %101 = vector.shape_cast %100 : vector<1x2x512xbf16> to vector<2x512xbf16>
    %102 = arith.extf %101 : vector<2x512xbf16> to vector<2x512xf32>
    %c0_45 = arith.constant 0 : index
    %c0_46 = arith.constant 0 : index
    %103 = vector.load %arg8[%c0_45, %c0_46] : memref<2x128xf32, #tpu.memory_space<vmem>>, vector<2x128xf32>
    %104 = arith.truncf %103 : vector<2x128xf32> to vector<2x128xbf16>
    %cst_47 = arith.constant dense<0.000000e+00> : vector<2x512xf32>
    %105 = tpu.matmul %104, %6, %cst_47 {dimension_numbers = #tpu.dot_dimension_numbers<[1], [0], [0], [1], [0, 0, 1, 1], [], []>} : vector<2x128xbf16>, vector<128x512xbf16>, vector<2x512xf32> -> vector<2x512xf32>
    %106 = arith.addf %102, %105 : vector<2x512xf32>
    %c0_48 = arith.constant 0 : index
    %c0_49 = arith.constant 0 : index
    %107 = vector.load %arg7[%c0_48, %c0_49] : memref<2x128xf32, #tpu.memory_space<vmem>>, vector<2x128xf32>
    %108 = vector.extract_strided_slice %98 {offsets = [0, 0], sizes = [2, 128], strides = [1, 1]} : vector<2x512xf32> to vector<2x128xf32>
    %109 = arith.negf %108 : vector<2x128xf32>
    %110 = math.exp %109 : vector<2x128xf32>
    %cst_50 = arith.constant 1.000000e+00 : f32
    %111 = vector.broadcast %cst_50 : f32 to vector<2x128xf32>
    %112 = arith.addf %111, %110 : vector<2x128xf32>
    %113 = arith.divf %111, %112 : vector<2x128xf32>
    %114 = vector.extract_strided_slice %98 {offsets = [0, 128], sizes = [2, 128], strides = [1, 1]} : vector<2x512xf32> to vector<2x128xf32>
    %115 = arith.negf %114 : vector<2x128xf32>
    %116 = math.exp %115 : vector<2x128xf32>
    %cst_51 = arith.constant 1.000000e+00 : f32
    %117 = vector.broadcast %cst_51 : f32 to vector<2x128xf32>
    %118 = arith.addf %117, %116 : vector<2x128xf32>
    %119 = arith.divf %117, %118 : vector<2x128xf32>
    %120 = vector.extract_strided_slice %98 {offsets = [0, 256], sizes = [2, 128], strides = [1, 1]} : vector<2x512xf32> to vector<2x128xf32>
    %121 = math.tanh %120 : vector<2x128xf32>
    %122 = vector.extract_strided_slice %98 {offsets = [0, 384], sizes = [2, 128], strides = [1, 1]} : vector<2x512xf32> to vector<2x128xf32>
    %123 = arith.negf %122 : vector<2x128xf32>
    %124 = math.exp %123 : vector<2x128xf32>
    %cst_52 = arith.constant 1.000000e+00 : f32
    %125 = vector.broadcast %cst_52 : f32 to vector<2x128xf32>
    %126 = arith.addf %125, %124 : vector<2x128xf32>
    %127 = arith.divf %125, %126 : vector<2x128xf32>
    %128 = arith.mulf %119, %107 : vector<2x128xf32>
    %129 = arith.mulf %113, %121 : vector<2x128xf32>
    %130 = arith.addf %128, %129 : vector<2x128xf32>
    %131 = math.tanh %130 : vector<2x128xf32>
    %132 = arith.mulf %127, %131 : vector<2x128xf32>
    %c0_53 = arith.constant 0 : index
    %c0_54 = arith.constant 0 : index
    %133 = vector.load %arg9[%c0_53, %c0_54] : memref<2x128xf32, #tpu.memory_space<vmem>>, vector<2x128xf32>
    %134 = vector.extract_strided_slice %106 {offsets = [0, 0], sizes = [2, 128], strides = [1, 1]} : vector<2x512xf32> to vector<2x128xf32>
    %135 = arith.negf %134 : vector<2x128xf32>
    %136 = math.exp %135 : vector<2x128xf32>
    %cst_55 = arith.constant 1.000000e+00 : f32
    %137 = vector.broadcast %cst_55 : f32 to vector<2x128xf32>
    %138 = arith.addf %137, %136 : vector<2x128xf32>
    %139 = arith.divf %137, %138 : vector<2x128xf32>
    %140 = vector.extract_strided_slice %106 {offsets = [0, 128], sizes = [2, 128], strides = [1, 1]} : vector<2x512xf32> to vector<2x128xf32>
    %141 = arith.negf %140 : vector<2x128xf32>
    %142 = math.exp %141 : vector<2x128xf32>
    %cst_56 = arith.constant 1.000000e+00 : f32
    %143 = vector.broadcast %cst_56 : f32 to vector<2x128xf32>
    %144 = arith.addf %143, %142 : vector<2x128xf32>
    %145 = arith.divf %143, %144 : vector<2x128xf32>
    %146 = vector.extract_strided_slice %106 {offsets = [0, 256], sizes = [2, 128], strides = [1, 1]} : vector<2x512xf32> to vector<2x128xf32>
    %147 = math.tanh %146 : vector<2x128xf32>
    %148 = vector.extract_strided_slice %106 {offsets = [0, 384], sizes = [2, 128], strides = [1, 1]} : vector<2x512xf32> to vector<2x128xf32>
    %149 = arith.negf %148 : vector<2x128xf32>
    %150 = math.exp %149 : vector<2x128xf32>
    %cst_57 = arith.constant 1.000000e+00 : f32
    %151 = vector.broadcast %cst_57 : f32 to vector<2x128xf32>
    %152 = arith.addf %151, %150 : vector<2x128xf32>
    %153 = arith.divf %151, %152 : vector<2x128xf32>
    %154 = arith.mulf %145, %133 : vector<2x128xf32>
    %155 = arith.mulf %139, %147 : vector<2x128xf32>
    %156 = arith.addf %154, %155 : vector<2x128xf32>
    %157 = math.tanh %156 : vector<2x128xf32>
    %158 = arith.mulf %153, %157 : vector<2x128xf32>
    %c0_58 = arith.constant 0 : index
    %c0_59 = arith.constant 0 : index
    %159 = vector.load %arg6[%c0_58, %c0_59] : memref<2x128xf32, #tpu.memory_space<vmem>>, vector<2x128xf32>
    tpu.vector_store %arg6[%c0_58, %c0_59], %132 {strides = array<i32>} : memref<2x128xf32, #tpu.memory_space<vmem>>, vector<2x128xf32>,
    %c0_60 = arith.constant 0 : index
    %c0_61 = arith.constant 0 : index
    %160 = vector.load %arg7[%c0_60, %c0_61] : memref<2x128xf32, #tpu.memory_space<vmem>>, vector<2x128xf32>
    tpu.vector_store %arg7[%c0_60, %c0_61], %130 {strides = array<i32>} : memref<2x128xf32, #tpu.memory_space<vmem>>, vector<2x128xf32>,
    %c0_62 = arith.constant 0 : index
    %c0_63 = arith.constant 0 : index
    %161 = vector.load %arg8[%c0_62, %c0_63] : memref<2x128xf32, #tpu.memory_space<vmem>>, vector<2x128xf32>
    tpu.vector_store %arg8[%c0_62, %c0_63], %158 {strides = array<i32>} : memref<2x128xf32, #tpu.memory_space<vmem>>, vector<2x128xf32>,
    %c0_64 = arith.constant 0 : index
    %c0_65 = arith.constant 0 : index
    %162 = vector.load %arg9[%c0_64, %c0_65] : memref<2x128xf32, #tpu.memory_space<vmem>>, vector<2x128xf32>
    tpu.vector_store %arg9[%c0_64, %c0_65], %156 {strides = array<i32>} : memref<2x128xf32, #tpu.memory_space<vmem>>, vector<2x128xf32>,
    %163 = arith.truncf %132 : vector<2x128xf32> to vector<2x128xbf16>
    %164 = arith.index_cast %c1_i32 : i32 to index
    %c0_66 = arith.constant 0 : index
    %c0_67 = arith.constant 0 : index
    %165 = vector.load %arg4[%164, %c0_66, %c0_67] : memref<8x2x128xbf16, #tpu.memory_space<vmem>>, vector<1x2x128xbf16>
    %166 = vector.shape_cast %165 : vector<1x2x128xbf16> to vector<2x128xbf16>
    %167 = vector.shape_cast %163 : vector<2x128xbf16> to vector<1x2x128xbf16>
    tpu.vector_store %arg4[%164, %c0_66, %c0_67], %167 {strides = array<i32>} : memref<8x2x128xbf16, #tpu.memory_space<vmem>>, vector<1x2x128xbf16>,
    %168 = arith.truncf %158 : vector<2x128xf32> to vector<2x128xbf16>
    %169 = arith.index_cast %90 : i32 to index
    %c0_68 = arith.constant 0 : index
    %c0_69 = arith.constant 0 : index
    %170 = vector.load %arg5[%169, %c0_68, %c0_69] : memref<8x2x128xbf16, #tpu.memory_space<vmem>>, vector<1x2x128xbf16>
    %171 = vector.shape_cast %170 : vector<1x2x128xbf16> to vector<2x128xbf16>
    %172 = vector.shape_cast %168 : vector<2x128xbf16> to vector<1x2x128xbf16>
    tpu.vector_store %arg5[%169, %c0_68, %c0_69], %172 {strides = array<i32>} : memref<8x2x128xbf16, #tpu.memory_space<vmem>>, vector<1x2x128xbf16>,
    %c2_i32 = arith.constant 2 : i32
    %c7_i32_70 = arith.constant 7 : i32
    %173 = arith.subi %c7_i32_70, %c2_i32 : i32
    %174 = arith.index_cast %c2_i32 : i32 to index
    %c0_71 = arith.constant 0 : index
    %c0_72 = arith.constant 0 : index
    %175 = vector.load %arg1[%174, %c0_71, %c0_72] : memref<8x2x512xbf16, #tpu.memory_space<vmem>>, vector<1x2x512xbf16>
    %176 = vector.shape_cast %175 : vector<1x2x512xbf16> to vector<2x512xbf16>
    %177 = arith.extf %176 : vector<2x512xbf16> to vector<2x512xf32>
    %c0_73 = arith.constant 0 : index
    %c0_74 = arith.constant 0 : index
    %178 = vector.load %arg6[%c0_73, %c0_74] : memref<2x128xf32, #tpu.memory_space<vmem>>, vector<2x128xf32>
    %179 = arith.truncf %178 : vector<2x128xf32> to vector<2x128xbf16>
    %cst_75 = arith.constant dense<0.000000e+00> : vector<2x512xf32>
    %180 = tpu.matmul %179, %4, %cst_75 {dimension_numbers = #tpu.dot_dimension_numbers<[1], [0], [0], [1], [0, 0, 1, 1], [], []>} : vector<2x128xbf16>, vector<128x512xbf16>, vector<2x512xf32> -> vector<2x512xf32>
    %181 = arith.addf %177, %180 : vector<2x512xf32>
    %182 = arith.index_cast %173 : i32 to index
    %c0_76 = arith.constant 0 : index
    %c0_77 = arith.constant 0 : index
    %183 = vector.load %arg2[%182, %c0_76, %c0_77] : memref<8x2x512xbf16, #tpu.memory_space<vmem>>, vector<1x2x512xbf16>
    %184 = vector.shape_cast %183 : vector<1x2x512xbf16> to vector<2x512xbf16>
    %185 = arith.extf %184 : vector<2x512xbf16> to vector<2x512xf32>
    %c0_78 = arith.constant 0 : index
    %c0_79 = arith.constant 0 : index
    %186 = vector.load %arg8[%c0_78, %c0_79] : memref<2x128xf32, #tpu.memory_space<vmem>>, vector<2x128xf32>
    %187 = arith.truncf %186 : vector<2x128xf32> to vector<2x128xbf16>
    %cst_80 = arith.constant dense<0.000000e+00> : vector<2x512xf32>
    %188 = tpu.matmul %187, %6, %cst_80 {dimension_numbers = #tpu.dot_dimension_numbers<[1], [0], [0], [1], [0, 0, 1, 1], [], []>} : vector<2x128xbf16>, vector<128x512xbf16>, vector<2x512xf32> -> vector<2x512xf32>
    %189 = arith.addf %185, %188 : vector<2x512xf32>
    %c0_81 = arith.constant 0 : index
    %c0_82 = arith.constant 0 : index
    %190 = vector.load %arg7[%c0_81, %c0_82] : memref<2x128xf32, #tpu.memory_space<vmem>>, vector<2x128xf32>
    %191 = vector.extract_strided_slice %181 {offsets = [0, 0], sizes = [2, 128], strides = [1, 1]} : vector<2x512xf32> to vector<2x128xf32>
    %192 = arith.negf %191 : vector<2x128xf32>
    %193 = math.exp %192 : vector<2x128xf32>
    %cst_83 = arith.constant 1.000000e+00 : f32
    %194 = vector.broadcast %cst_83 : f32 to vector<2x128xf32>
    %195 = arith.addf %194, %193 : vector<2x128xf32>
    %196 = arith.divf %194, %195 : vector<2x128xf32>
    %197 = vector.extract_strided_slice %181 {offsets = [0, 128], sizes = [2, 128], strides = [1, 1]} : vector<2x512xf32> to vector<2x128xf32>
    %198 = arith.negf %197 : vector<2x128xf32>
    %199 = math.exp %198 : vector<2x128xf32>
    %cst_84 = arith.constant 1.000000e+00 : f32
    %200 = vector.broadcast %cst_84 : f32 to vector<2x128xf32>
    %201 = arith.addf %200, %199 : vector<2x128xf32>
    %202 = arith.divf %200, %201 : vector<2x128xf32>
    %203 = vector.extract_strided_slice %181 {offsets = [0, 256], sizes = [2, 128], strides = [1, 1]} : vector<2x512xf32> to vector<2x128xf32>
    %204 = math.tanh %203 : vector<2x128xf32>
    %205 = vector.extract_strided_slice %181 {offsets = [0, 384], sizes = [2, 128], strides = [1, 1]} : vector<2x512xf32> to vector<2x128xf32>
    %206 = arith.negf %205 : vector<2x128xf32>
    %207 = math.exp %206 : vector<2x128xf32>
    %cst_85 = arith.constant 1.000000e+00 : f32
    %208 = vector.broadcast %cst_85 : f32 to vector<2x128xf32>
    %209 = arith.addf %208, %207 : vector<2x128xf32>
    %210 = arith.divf %208, %209 : vector<2x128xf32>
    %211 = arith.mulf %202, %190 : vector<2x128xf32>
    %212 = arith.mulf %196, %204 : vector<2x128xf32>
    %213 = arith.addf %211, %212 : vector<2x128xf32>
    %214 = math.tanh %213 : vector<2x128xf32>
    %215 = arith.mulf %210, %214 : vector<2x128xf32>
    %c0_86 = arith.constant 0 : index
    %c0_87 = arith.constant 0 : index
    %216 = vector.load %arg9[%c0_86, %c0_87] : memref<2x128xf32, #tpu.memory_space<vmem>>, vector<2x128xf32>
    %217 = vector.extract_strided_slice %189 {offsets = [0, 0], sizes = [2, 128], strides = [1, 1]} : vector<2x512xf32> to vector<2x128xf32>
    %218 = arith.negf %217 : vector<2x128xf32>
    %219 = math.exp %218 : vector<2x128xf32>
    %cst_88 = arith.constant 1.000000e+00 : f32
    %220 = vector.broadcast %cst_88 : f32 to vector<2x128xf32>
    %221 = arith.addf %220, %219 : vector<2x128xf32>
    %222 = arith.divf %220, %221 : vector<2x128xf32>
    %223 = vector.extract_strided_slice %189 {offsets = [0, 128], sizes = [2, 128], strides = [1, 1]} : vector<2x512xf32> to vector<2x128xf32>
    %224 = arith.negf %223 : vector<2x128xf32>
    %225 = math.exp %224 : vector<2x128xf32>
    %cst_89 = arith.constant 1.000000e+00 : f32
    %226 = vector.broadcast %cst_89 : f32 to vector<2x128xf32>
    %227 = arith.addf %226, %225 : vector<2x128xf32>
    %228 = arith.divf %226, %227 : vector<2x128xf32>
    %229 = vector.extract_strided_slice %189 {offsets = [0, 256], sizes = [2, 128], strides = [1, 1]} : vector<2x512xf32> to vector<2x128xf32>
    %230 = math.tanh %229 : vector<2x128xf32>
    %231 = vector.extract_strided_slice %189 {offsets = [0, 384], sizes = [2, 128], strides = [1, 1]} : vector<2x512xf32> to vector<2x128xf32>
    %232 = arith.negf %231 : vector<2x128xf32>
    %233 = math.exp %232 : vector<2x128xf32>
    %cst_90 = arith.constant 1.000000e+00 : f32
    %234 = vector.broadcast %cst_90 : f32 to vector<2x128xf32>
    %235 = arith.addf %234, %233 : vector<2x128xf32>
    %236 = arith.divf %234, %235 : vector<2x128xf32>
    %237 = arith.mulf %228, %216 : vector<2x128xf32>
    %238 = arith.mulf %222, %230 : vector<2x128xf32>
    %239 = arith.addf %237, %238 : vector<2x128xf32>
    %240 = math.tanh %239 : vector<2x128xf32>
    %241 = arith.mulf %236, %240 : vector<2x128xf32>
    %c0_91 = arith.constant 0 : index
    %c0_92 = arith.constant 0 : index
    %242 = vector.load %arg6[%c0_91, %c0_92] : memref<2x128xf32, #tpu.memory_space<vmem>>, vector<2x128xf32>
    tpu.vector_store %arg6[%c0_91, %c0_92], %215 {strides = array<i32>} : memref<2x128xf32, #tpu.memory_space<vmem>>, vector<2x128xf32>,
    %c0_93 = arith.constant 0 : index
    %c0_94 = arith.constant 0 : index
    %243 = vector.load %arg7[%c0_93, %c0_94] : memref<2x128xf32, #tpu.memory_space<vmem>>, vector<2x128xf32>
    tpu.vector_store %arg7[%c0_93, %c0_94], %213 {strides = array<i32>} : memref<2x128xf32, #tpu.memory_space<vmem>>, vector<2x128xf32>,
    %c0_95 = arith.constant 0 : index
    %c0_96 = arith.constant 0 : index
    %244 = vector.load %arg8[%c0_95, %c0_96] : memref<2x128xf32, #tpu.memory_space<vmem>>, vector<2x128xf32>
    tpu.vector_store %arg8[%c0_95, %c0_96], %241 {strides = array<i32>} : memref<2x128xf32, #tpu.memory_space<vmem>>, vector<2x128xf32>,
    %c0_97 = arith.constant 0 : index
    %c0_98 = arith.constant 0 : index
    %245 = vector.load %arg9[%c0_97, %c0_98] : memref<2x128xf32, #tpu.memory_space<vmem>>, vector<2x128xf32>
    tpu.vector_store %arg9[%c0_97, %c0_98], %239 {strides = array<i32>} : memref<2x128xf32, #tpu.memory_space<vmem>>, vector<2x128xf32>,
    %246 = arith.truncf %215 : vector<2x128xf32> to vector<2x128xbf16>
    %247 = arith.index_cast %c2_i32 : i32 to index
    %c0_99 = arith.constant 0 : index
    %c0_100 = arith.constant 0 : index
    %248 = vector.load %arg4[%247, %c0_99, %c0_100] : memref<8x2x128xbf16, #tpu.memory_space<vmem>>, vector<1x2x128xbf16>
    %249 = vector.shape_cast %248 : vector<1x2x128xbf16> to vector<2x128xbf16>
    %250 = vector.shape_cast %246 : vector<2x128xbf16> to vector<1x2x128xbf16>
    tpu.vector_store %arg4[%247, %c0_99, %c0_100], %250 {strides = array<i32>} : memref<8x2x128xbf16, #tpu.memory_space<vmem>>, vector<1x2x128xbf16>,
    %251 = arith.truncf %241 : vector<2x128xf32> to vector<2x128xbf16>
    %252 = arith.index_cast %173 : i32 to index
    %c0_101 = arith.constant 0 : index
    %c0_102 = arith.constant 0 : index
    %253 = vector.load %arg5[%252, %c0_101, %c0_102] : memref<8x2x128xbf16, #tpu.memory_space<vmem>>, vector<1x2x128xbf16>
    %254 = vector.shape_cast %253 : vector<1x2x128xbf16> to vector<2x128xbf16>
    %255 = vector.shape_cast %251 : vector<2x128xbf16> to vector<1x2x128xbf16>
    tpu.vector_store %arg5[%252, %c0_101, %c0_102], %255 {strides = array<i32>} : memref<8x2x128xbf16, #tpu.memory_space<vmem>>, vector<1x2x128xbf16>,
    %c3_i32 = arith.constant 3 : i32
    %c7_i32_103 = arith.constant 7 : i32
    %256 = arith.subi %c7_i32_103, %c3_i32 : i32
    %257 = arith.index_cast %c3_i32 : i32 to index
    %c0_104 = arith.constant 0 : index
    %c0_105 = arith.constant 0 : index
    %258 = vector.load %arg1[%257, %c0_104, %c0_105] : memref<8x2x512xbf16, #tpu.memory_space<vmem>>, vector<1x2x512xbf16>
    %259 = vector.shape_cast %258 : vector<1x2x512xbf16> to vector<2x512xbf16>
    %260 = arith.extf %259 : vector<2x512xbf16> to vector<2x512xf32>
    %c0_106 = arith.constant 0 : index
    %c0_107 = arith.constant 0 : index
    %261 = vector.load %arg6[%c0_106, %c0_107] : memref<2x128xf32, #tpu.memory_space<vmem>>, vector<2x128xf32>
    %262 = arith.truncf %261 : vector<2x128xf32> to vector<2x128xbf16>
    %cst_108 = arith.constant dense<0.000000e+00> : vector<2x512xf32>
    %263 = tpu.matmul %262, %4, %cst_108 {dimension_numbers = #tpu.dot_dimension_numbers<[1], [0], [0], [1], [0, 0, 1, 1], [], []>} : vector<2x128xbf16>, vector<128x512xbf16>, vector<2x512xf32> -> vector<2x512xf32>
    %264 = arith.addf %260, %263 : vector<2x512xf32>
    %265 = arith.index_cast %256 : i32 to index
    %c0_109 = arith.constant 0 : index
    %c0_110 = arith.constant 0 : index
    %266 = vector.load %arg2[%265, %c0_109, %c0_110] : memref<8x2x512xbf16, #tpu.memory_space<vmem>>, vector<1x2x512xbf16>
    %267 = vector.shape_cast %266 : vector<1x2x512xbf16> to vector<2x512xbf16>
    %268 = arith.extf %267 : vector<2x512xbf16> to vector<2x512xf32>
    %c0_111 = arith.constant 0 : index
    %c0_112 = arith.constant 0 : index
    %269 = vector.load %arg8[%c0_111, %c0_112] : memref<2x128xf32, #tpu.memory_space<vmem>>, vector<2x128xf32>
    %270 = arith.truncf %269 : vector<2x128xf32> to vector<2x128xbf16>
    %cst_113 = arith.constant dense<0.000000e+00> : vector<2x512xf32>
    %271 = tpu.matmul %270, %6, %cst_113 {dimension_numbers = #tpu.dot_dimension_numbers<[1], [0], [0], [1], [0, 0, 1, 1], [], []>} : vector<2x128xbf16>, vector<128x512xbf16>, vector<2x512xf32> -> vector<2x512xf32>
    %272 = arith.addf %268, %271 : vector<2x512xf32>
    %c0_114 = arith.constant 0 : index
    %c0_115 = arith.constant 0 : index
    %273 = vector.load %arg7[%c0_114, %c0_115] : memref<2x128xf32, #tpu.memory_space<vmem>>, vector<2x128xf32>
    %274 = vector.extract_strided_slice %264 {offsets = [0, 0], sizes = [2, 128], strides = [1, 1]} : vector<2x512xf32> to vector<2x128xf32>
    %275 = arith.negf %274 : vector<2x128xf32>
    %276 = math.exp %275 : vector<2x128xf32>
    %cst_116 = arith.constant 1.000000e+00 : f32
    %277 = vector.broadcast %cst_116 : f32 to vector<2x128xf32>
    %278 = arith.addf %277, %276 : vector<2x128xf32>
    %279 = arith.divf %277, %278 : vector<2x128xf32>
    %280 = vector.extract_strided_slice %264 {offsets = [0, 128], sizes = [2, 128], strides = [1, 1]} : vector<2x512xf32> to vector<2x128xf32>
    %281 = arith.negf %280 : vector<2x128xf32>
    %282 = math.exp %281 : vector<2x128xf32>
    %cst_117 = arith.constant 1.000000e+00 : f32
    %283 = vector.broadcast %cst_117 : f32 to vector<2x128xf32>
    %284 = arith.addf %283, %282 : vector<2x128xf32>
    %285 = arith.divf %283, %284 : vector<2x128xf32>
    %286 = vector.extract_strided_slice %264 {offsets = [0, 256], sizes = [2, 128], strides = [1, 1]} : vector<2x512xf32> to vector<2x128xf32>
    %287 = math.tanh %286 : vector<2x128xf32>
    %288 = vector.extract_strided_slice %264 {offsets = [0, 384], sizes = [2, 128], strides = [1, 1]} : vector<2x512xf32> to vector<2x128xf32>
    %289 = arith.negf %288 : vector<2x128xf32>
    %290 = math.exp %289 : vector<2x128xf32>
    %cst_118 = arith.constant 1.000000e+00 : f32
    %291 = vector.broadcast %cst_118 : f32 to vector<2x128xf32>
    %292 = arith.addf %291, %290 : vector<2x128xf32>
    %293 = arith.divf %291, %292 : vector<2x128xf32>
    %294 = arith.mulf %285, %273 : vector<2x128xf32>
    %295 = arith.mulf %279, %287 : vector<2x128xf32>
    %296 = arith.addf %294, %295 : vector<2x128xf32>
    %297 = math.tanh %296 : vector<2x128xf32>
    %298 = arith.mulf %293, %297 : vector<2x128xf32>
    %c0_119 = arith.constant 0 : index
    %c0_120 = arith.constant 0 : index
    %299 = vector.load %arg9[%c0_119, %c0_120] : memref<2x128xf32, #tpu.memory_space<vmem>>, vector<2x128xf32>
    %300 = vector.extract_strided_slice %272 {offsets = [0, 0], sizes = [2, 128], strides = [1, 1]} : vector<2x512xf32> to vector<2x128xf32>
    %301 = arith.negf %300 : vector<2x128xf32>
    %302 = math.exp %301 : vector<2x128xf32>
    %cst_121 = arith.constant 1.000000e+00 : f32
    %303 = vector.broadcast %cst_121 : f32 to vector<2x128xf32>
    %304 = arith.addf %303, %302 : vector<2x128xf32>
    %305 = arith.divf %303, %304 : vector<2x128xf32>
    %306 = vector.extract_strided_slice %272 {offsets = [0, 128], sizes = [2, 128], strides = [1, 1]} : vector<2x512xf32> to vector<2x128xf32>
    %307 = arith.negf %306 : vector<2x128xf32>
    %308 = math.exp %307 : vector<2x128xf32>
    %cst_122 = arith.constant 1.000000e+00 : f32
    %309 = vector.broadcast %cst_122 : f32 to vector<2x128xf32>
    %310 = arith.addf %309, %308 : vector<2x128xf32>
    %311 = arith.divf %309, %310 : vector<2x128xf32>
    %312 = vector.extract_strided_slice %272 {offsets = [0, 256], sizes = [2, 128], strides = [1, 1]} : vector<2x512xf32> to vector<2x128xf32>
    %313 = math.tanh %312 : vector<2x128xf32>
    %314 = vector.extract_strided_slice %272 {offsets = [0, 384], sizes = [2, 128], strides = [1, 1]} : vector<2x512xf32> to vector<2x128xf32>
    %315 = arith.negf %314 : vector<2x128xf32>
    %316 = math.exp %315 : vector<2x128xf32>
    %cst_123 = arith.constant 1.000000e+00 : f32
    %317 = vector.broadcast %cst_123 : f32 to vector<2x128xf32>
    %318 = arith.addf %317, %316 : vector<2x128xf32>
    %319 = arith.divf %317, %318 : vector<2x128xf32>
    %320 = arith.mulf %311, %299 : vector<2x128xf32>
    %321 = arith.mulf %305, %313 : vector<2x128xf32>
    %322 = arith.addf %320, %321 : vector<2x128xf32>
    %323 = math.tanh %322 : vector<2x128xf32>
    %324 = arith.mulf %319, %323 : vector<2x128xf32>
    %c0_124 = arith.constant 0 : index
    %c0_125 = arith.constant 0 : index
    %325 = vector.load %arg6[%c0_124, %c0_125] : memref<2x128xf32, #tpu.memory_space<vmem>>, vector<2x128xf32>
    tpu.vector_store %arg6[%c0_124, %c0_125], %298 {strides = array<i32>} : memref<2x128xf32, #tpu.memory_space<vmem>>, vector<2x128xf32>,
    %c0_126 = arith.constant 0 : index
    %c0_127 = arith.constant 0 : index
    %326 = vector.load %arg7[%c0_126, %c0_127] : memref<2x128xf32, #tpu.memory_space<vmem>>, vector<2x128xf32>
    tpu.vector_store %arg7[%c0_126, %c0_127], %296 {strides = array<i32>} : memref<2x128xf32, #tpu.memory_space<vmem>>, vector<2x128xf32>,
    %c0_128 = arith.constant 0 : index
    %c0_129 = arith.constant 0 : index
    %327 = vector.load %arg8[%c0_128, %c0_129] : memref<2x128xf32, #tpu.memory_space<vmem>>, vector<2x128xf32>
    tpu.vector_store %arg8[%c0_128, %c0_129], %324 {strides = array<i32>} : memref<2x128xf32, #tpu.memory_space<vmem>>, vector<2x128xf32>,
    %c0_130 = arith.constant 0 : index
    %c0_131 = arith.constant 0 : index
    %328 = vector.load %arg9[%c0_130, %c0_131] : memref<2x128xf32, #tpu.memory_space<vmem>>, vector<2x128xf32>
    tpu.vector_store %arg9[%c0_130, %c0_131], %322 {strides = array<i32>} : memref<2x128xf32, #tpu.memory_space<vmem>>, vector<2x128xf32>,
    %329 = arith.truncf %298 : vector<2x128xf32> to vector<2x128xbf16>
    %330 = arith.index_cast %c3_i32 : i32 to index
    %c0_132 = arith.constant 0 : index
    %c0_133 = arith.constant 0 : index
    %331 = vector.load %arg4[%330, %c0_132, %c0_133] : memref<8x2x128xbf16, #tpu.memory_space<vmem>>, vector<1x2x128xbf16>
    %332 = vector.shape_cast %331 : vector<1x2x128xbf16> to vector<2x128xbf16>
    %333 = vector.shape_cast %329 : vector<2x128xbf16> to vector<1x2x128xbf16>
    tpu.vector_store %arg4[%330, %c0_132, %c0_133], %333 {strides = array<i32>} : memref<8x2x128xbf16, #tpu.memory_space<vmem>>, vector<1x2x128xbf16>,
    %334 = arith.truncf %324 : vector<2x128xf32> to vector<2x128xbf16>
    %335 = arith.index_cast %256 : i32 to index
    %c0_134 = arith.constant 0 : index
    %c0_135 = arith.constant 0 : index
    %336 = vector.load %arg5[%335, %c0_134, %c0_135] : memref<8x2x128xbf16, #tpu.memory_space<vmem>>, vector<1x2x128xbf16>
    %337 = vector.shape_cast %336 : vector<1x2x128xbf16> to vector<2x128xbf16>
    %338 = vector.shape_cast %334 : vector<2x128xbf16> to vector<1x2x128xbf16>
    tpu.vector_store %arg5[%335, %c0_134, %c0_135], %338 {strides = array<i32>} : memref<8x2x128xbf16, #tpu.memory_space<vmem>>, vector<1x2x128xbf16>,
    %c4_i32 = arith.constant 4 : i32
    %c7_i32_136 = arith.constant 7 : i32
    %339 = arith.subi %c7_i32_136, %c4_i32 : i32
    %340 = arith.index_cast %c4_i32 : i32 to index
    %c0_137 = arith.constant 0 : index
    %c0_138 = arith.constant 0 : index
    %341 = vector.load %arg1[%340, %c0_137, %c0_138] : memref<8x2x512xbf16, #tpu.memory_space<vmem>>, vector<1x2x512xbf16>
    %342 = vector.shape_cast %341 : vector<1x2x512xbf16> to vector<2x512xbf16>
    %343 = arith.extf %342 : vector<2x512xbf16> to vector<2x512xf32>
    %c0_139 = arith.constant 0 : index
    %c0_140 = arith.constant 0 : index
    %344 = vector.load %arg6[%c0_139, %c0_140] : memref<2x128xf32, #tpu.memory_space<vmem>>, vector<2x128xf32>
    %345 = arith.truncf %344 : vector<2x128xf32> to vector<2x128xbf16>
    %cst_141 = arith.constant dense<0.000000e+00> : vector<2x512xf32>
    %346 = tpu.matmul %345, %4, %cst_141 {dimension_numbers = #tpu.dot_dimension_numbers<[1], [0], [0], [1], [0, 0, 1, 1], [], []>} : vector<2x128xbf16>, vector<128x512xbf16>, vector<2x512xf32> -> vector<2x512xf32>
    %347 = arith.addf %343, %346 : vector<2x512xf32>
    %348 = arith.index_cast %339 : i32 to index
    %c0_142 = arith.constant 0 : index
    %c0_143 = arith.constant 0 : index
    %349 = vector.load %arg2[%348, %c0_142, %c0_143] : memref<8x2x512xbf16, #tpu.memory_space<vmem>>, vector<1x2x512xbf16>
    %350 = vector.shape_cast %349 : vector<1x2x512xbf16> to vector<2x512xbf16>
    %351 = arith.extf %350 : vector<2x512xbf16> to vector<2x512xf32>
    %c0_144 = arith.constant 0 : index
    %c0_145 = arith.constant 0 : index
    %352 = vector.load %arg8[%c0_144, %c0_145] : memref<2x128xf32, #tpu.memory_space<vmem>>, vector<2x128xf32>
    %353 = arith.truncf %352 : vector<2x128xf32> to vector<2x128xbf16>
    %cst_146 = arith.constant dense<0.000000e+00> : vector<2x512xf32>
    %354 = tpu.matmul %353, %6, %cst_146 {dimension_numbers = #tpu.dot_dimension_numbers<[1], [0], [0], [1], [0, 0, 1, 1], [], []>} : vector<2x128xbf16>, vector<128x512xbf16>, vector<2x512xf32> -> vector<2x512xf32>
    %355 = arith.addf %351, %354 : vector<2x512xf32>
    %c0_147 = arith.constant 0 : index
    %c0_148 = arith.constant 0 : index
    %356 = vector.load %arg7[%c0_147, %c0_148] : memref<2x128xf32, #tpu.memory_space<vmem>>, vector<2x128xf32>
    %357 = vector.extract_strided_slice %347 {offsets = [0, 0], sizes = [2, 128], strides = [1, 1]} : vector<2x512xf32> to vector<2x128xf32>
    %358 = arith.negf %357 : vector<2x128xf32>
    %359 = math.exp %358 : vector<2x128xf32>
    %cst_149 = arith.constant 1.000000e+00 : f32
    %360 = vector.broadcast %cst_149 : f32 to vector<2x128xf32>
    %361 = arith.addf %360, %359 : vector<2x128xf32>
    %362 = arith.divf %360, %361 : vector<2x128xf32>
    %363 = vector.extract_strided_slice %347 {offsets = [0, 128], sizes = [2, 128], strides = [1, 1]} : vector<2x512xf32> to vector<2x128xf32>
    %364 = arith.negf %363 : vector<2x128xf32>
    %365 = math.exp %364 : vector<2x128xf32>
    %cst_150 = arith.constant 1.000000e+00 : f32
    %366 = vector.broadcast %cst_150 : f32 to vector<2x128xf32>
    %367 = arith.addf %366, %365 : vector<2x128xf32>
    %368 = arith.divf %366, %367 : vector<2x128xf32>
    %369 = vector.extract_strided_slice %347 {offsets = [0, 256], sizes = [2, 128], strides = [1, 1]} : vector<2x512xf32> to vector<2x128xf32>
    %370 = math.tanh %369 : vector<2x128xf32>
    %371 = vector.extract_strided_slice %347 {offsets = [0, 384], sizes = [2, 128], strides = [1, 1]} : vector<2x512xf32> to vector<2x128xf32>
    %372 = arith.negf %371 : vector<2x128xf32>
    %373 = math.exp %372 : vector<2x128xf32>
    %cst_151 = arith.constant 1.000000e+00 : f32
    %374 = vector.broadcast %cst_151 : f32 to vector<2x128xf32>
    %375 = arith.addf %374, %373 : vector<2x128xf32>
    %376 = arith.divf %374, %375 : vector<2x128xf32>
    %377 = arith.mulf %368, %356 : vector<2x128xf32>
    %378 = arith.mulf %362, %370 : vector<2x128xf32>
    %379 = arith.addf %377, %378 : vector<2x128xf32>
    %380 = math.tanh %379 : vector<2x128xf32>
    %381 = arith.mulf %376, %380 : vector<2x128xf32>
    %c0_152 = arith.constant 0 : index
    %c0_153 = arith.constant 0 : index
    %382 = vector.load %arg9[%c0_152, %c0_153] : memref<2x128xf32, #tpu.memory_space<vmem>>, vector<2x128xf32>
    %383 = vector.extract_strided_slice %355 {offsets = [0, 0], sizes = [2, 128], strides = [1, 1]} : vector<2x512xf32> to vector<2x128xf32>
    %384 = arith.negf %383 : vector<2x128xf32>
    %385 = math.exp %384 : vector<2x128xf32>
    %cst_154 = arith.constant 1.000000e+00 : f32
    %386 = vector.broadcast %cst_154 : f32 to vector<2x128xf32>
    %387 = arith.addf %386, %385 : vector<2x128xf32>
    %388 = arith.divf %386, %387 : vector<2x128xf32>
    %389 = vector.extract_strided_slice %355 {offsets = [0, 128], sizes = [2, 128], strides = [1, 1]} : vector<2x512xf32> to vector<2x128xf32>
    %390 = arith.negf %389 : vector<2x128xf32>
    %391 = math.exp %390 : vector<2x128xf32>
    %cst_155 = arith.constant 1.000000e+00 : f32
    %392 = vector.broadcast %cst_155 : f32 to vector<2x128xf32>
    %393 = arith.addf %392, %391 : vector<2x128xf32>
    %394 = arith.divf %392, %393 : vector<2x128xf32>
    %395 = vector.extract_strided_slice %355 {offsets = [0, 256], sizes = [2, 128], strides = [1, 1]} : vector<2x512xf32> to vector<2x128xf32>
    %396 = math.tanh %395 : vector<2x128xf32>
    %397 = vector.extract_strided_slice %355 {offsets = [0, 384], sizes = [2, 128], strides = [1, 1]} : vector<2x512xf32> to vector<2x128xf32>
    %398 = arith.negf %397 : vector<2x128xf32>
    %399 = math.exp %398 : vector<2x128xf32>
    %cst_156 = arith.constant 1.000000e+00 : f32
    %400 = vector.broadcast %cst_156 : f32 to vector<2x128xf32>
    %401 = arith.addf %400, %399 : vector<2x128xf32>
    %402 = arith.divf %400, %401 : vector<2x128xf32>
    %403 = arith.mulf %394, %382 : vector<2x128xf32>
    %404 = arith.mulf %388, %396 : vector<2x128xf32>
    %405 = arith.addf %403, %404 : vector<2x128xf32>
    %406 = math.tanh %405 : vector<2x128xf32>
    %407 = arith.mulf %402, %406 : vector<2x128xf32>
    %c0_157 = arith.constant 0 : index
    %c0_158 = arith.constant 0 : index
    %408 = vector.load %arg6[%c0_157, %c0_158] : memref<2x128xf32, #tpu.memory_space<vmem>>, vector<2x128xf32>
    tpu.vector_store %arg6[%c0_157, %c0_158], %381 {strides = array<i32>} : memref<2x128xf32, #tpu.memory_space<vmem>>, vector<2x128xf32>,
    %c0_159 = arith.constant 0 : index
    %c0_160 = arith.constant 0 : index
    %409 = vector.load %arg7[%c0_159, %c0_160] : memref<2x128xf32, #tpu.memory_space<vmem>>, vector<2x128xf32>
    tpu.vector_store %arg7[%c0_159, %c0_160], %379 {strides = array<i32>} : memref<2x128xf32, #tpu.memory_space<vmem>>, vector<2x128xf32>,
    %c0_161 = arith.constant 0 : index
    %c0_162 = arith.constant 0 : index
    %410 = vector.load %arg8[%c0_161, %c0_162] : memref<2x128xf32, #tpu.memory_space<vmem>>, vector<2x128xf32>
    tpu.vector_store %arg8[%c0_161, %c0_162], %407 {strides = array<i32>} : memref<2x128xf32, #tpu.memory_space<vmem>>, vector<2x128xf32>,
    %c0_163 = arith.constant 0 : index
    %c0_164 = arith.constant 0 : index
    %411 = vector.load %arg9[%c0_163, %c0_164] : memref<2x128xf32, #tpu.memory_space<vmem>>, vector<2x128xf32>
    tpu.vector_store %arg9[%c0_163, %c0_164], %405 {strides = array<i32>} : memref<2x128xf32, #tpu.memory_space<vmem>>, vector<2x128xf32>,
    %412 = arith.truncf %381 : vector<2x128xf32> to vector<2x128xbf16>
    %413 = arith.index_cast %c4_i32 : i32 to index
    %c0_165 = arith.constant 0 : index
    %c0_166 = arith.constant 0 : index
    %414 = vector.load %arg4[%413, %c0_165, %c0_166] : memref<8x2x128xbf16, #tpu.memory_space<vmem>>, vector<1x2x128xbf16>
    %415 = vector.shape_cast %414 : vector<1x2x128xbf16> to vector<2x128xbf16>
    %416 = vector.shape_cast %412 : vector<2x128xbf16> to vector<1x2x128xbf16>
    tpu.vector_store %arg4[%413, %c0_165, %c0_166], %416 {strides = array<i32>} : memref<8x2x128xbf16, #tpu.memory_space<vmem>>, vector<1x2x128xbf16>,
    %417 = arith.truncf %407 : vector<2x128xf32> to vector<2x128xbf16>
    %418 = arith.index_cast %339 : i32 to index
    %c0_167 = arith.constant 0 : index
    %c0_168 = arith.constant 0 : index
    %419 = vector.load %arg5[%418, %c0_167, %c0_168] : memref<8x2x128xbf16, #tpu.memory_space<vmem>>, vector<1x2x128xbf16>
    %420 = vector.shape_cast %419 : vector<1x2x128xbf16> to vector<2x128xbf16>
    %421 = vector.shape_cast %417 : vector<2x128xbf16> to vector<1x2x128xbf16>
    tpu.vector_store %arg5[%418, %c0_167, %c0_168], %421 {strides = array<i32>} : memref<8x2x128xbf16, #tpu.memory_space<vmem>>, vector<1x2x128xbf16>,
    %c5_i32 = arith.constant 5 : i32
    %c7_i32_169 = arith.constant 7 : i32
    %422 = arith.subi %c7_i32_169, %c5_i32 : i32
    %423 = arith.index_cast %c5_i32 : i32 to index
    %c0_170 = arith.constant 0 : index
    %c0_171 = arith.constant 0 : index
    %424 = vector.load %arg1[%423, %c0_170, %c0_171] : memref<8x2x512xbf16, #tpu.memory_space<vmem>>, vector<1x2x512xbf16>
    %425 = vector.shape_cast %424 : vector<1x2x512xbf16> to vector<2x512xbf16>
    %426 = arith.extf %425 : vector<2x512xbf16> to vector<2x512xf32>
    %c0_172 = arith.constant 0 : index
    %c0_173 = arith.constant 0 : index
    %427 = vector.load %arg6[%c0_172, %c0_173] : memref<2x128xf32, #tpu.memory_space<vmem>>, vector<2x128xf32>
    %428 = arith.truncf %427 : vector<2x128xf32> to vector<2x128xbf16>
    %cst_174 = arith.constant dense<0.000000e+00> : vector<2x512xf32>
    %429 = tpu.matmul %428, %4, %cst_174 {dimension_numbers = #tpu.dot_dimension_numbers<[1], [0], [0], [1], [0, 0, 1, 1], [], []>} : vector<2x128xbf16>, vector<128x512xbf16>, vector<2x512xf32> -> vector<2x512xf32>
    %430 = arith.addf %426, %429 : vector<2x512xf32>
    %431 = arith.index_cast %422 : i32 to index
    %c0_175 = arith.constant 0 : index
    %c0_176 = arith.constant 0 : index
    %432 = vector.load %arg2[%431, %c0_175, %c0_176] : memref<8x2x512xbf16, #tpu.memory_space<vmem>>, vector<1x2x512xbf16>
    %433 = vector.shape_cast %432 : vector<1x2x512xbf16> to vector<2x512xbf16>
    %434 = arith.extf %433 : vector<2x512xbf16> to vector<2x512xf32>
    %c0_177 = arith.constant 0 : index
    %c0_178 = arith.constant 0 : index
    %435 = vector.load %arg8[%c0_177, %c0_178] : memref<2x128xf32, #tpu.memory_space<vmem>>, vector<2x128xf32>
    %436 = arith.truncf %435 : vector<2x128xf32> to vector<2x128xbf16>
    %cst_179 = arith.constant dense<0.000000e+00> : vector<2x512xf32>
    %437 = tpu.matmul %436, %6, %cst_179 {dimension_numbers = #tpu.dot_dimension_numbers<[1], [0], [0], [1], [0, 0, 1, 1], [], []>} : vector<2x128xbf16>, vector<128x512xbf16>, vector<2x512xf32> -> vector<2x512xf32>
    %438 = arith.addf %434, %437 : vector<2x512xf32>
    %c0_180 = arith.constant 0 : index
    %c0_181 = arith.constant 0 : index
    %439 = vector.load %arg7[%c0_180, %c0_181] : memref<2x128xf32, #tpu.memory_space<vmem>>, vector<2x128xf32>
    %440 = vector.extract_strided_slice %430 {offsets = [0, 0], sizes = [2, 128], strides = [1, 1]} : vector<2x512xf32> to vector<2x128xf32>
    %441 = arith.negf %440 : vector<2x128xf32>
    %442 = math.exp %441 : vector<2x128xf32>
    %cst_182 = arith.constant 1.000000e+00 : f32
    %443 = vector.broadcast %cst_182 : f32 to vector<2x128xf32>
    %444 = arith.addf %443, %442 : vector<2x128xf32>
    %445 = arith.divf %443, %444 : vector<2x128xf32>
    %446 = vector.extract_strided_slice %430 {offsets = [0, 128], sizes = [2, 128], strides = [1, 1]} : vector<2x512xf32> to vector<2x128xf32>
    %447 = arith.negf %446 : vector<2x128xf32>
    %448 = math.exp %447 : vector<2x128xf32>
    %cst_183 = arith.constant 1.000000e+00 : f32
    %449 = vector.broadcast %cst_183 : f32 to vector<2x128xf32>
    %450 = arith.addf %449, %448 : vector<2x128xf32>
    %451 = arith.divf %449, %450 : vector<2x128xf32>
    %452 = vector.extract_strided_slice %430 {offsets = [0, 256], sizes = [2, 128], strides = [1, 1]} : vector<2x512xf32> to vector<2x128xf32>
    %453 = math.tanh %452 : vector<2x128xf32>
    %454 = vector.extract_strided_slice %430 {offsets = [0, 384], sizes = [2, 128], strides = [1, 1]} : vector<2x512xf32> to vector<2x128xf32>
    %455 = arith.negf %454 : vector<2x128xf32>
    %456 = math.exp %455 : vector<2x128xf32>
    %cst_184 = arith.constant 1.000000e+00 : f32
    %457 = vector.broadcast %cst_184 : f32 to vector<2x128xf32>
    %458 = arith.addf %457, %456 : vector<2x128xf32>
    %459 = arith.divf %457, %458 : vector<2x128xf32>
    %460 = arith.mulf %451, %439 : vector<2x128xf32>
    %461 = arith.mulf %445, %453 : vector<2x128xf32>
    %462 = arith.addf %460, %461 : vector<2x128xf32>
    %463 = math.tanh %462 : vector<2x128xf32>
    %464 = arith.mulf %459, %463 : vector<2x128xf32>
    %c0_185 = arith.constant 0 : index
    %c0_186 = arith.constant 0 : index
    %465 = vector.load %arg9[%c0_185, %c0_186] : memref<2x128xf32, #tpu.memory_space<vmem>>, vector<2x128xf32>
    %466 = vector.extract_strided_slice %438 {offsets = [0, 0], sizes = [2, 128], strides = [1, 1]} : vector<2x512xf32> to vector<2x128xf32>
    %467 = arith.negf %466 : vector<2x128xf32>
    %468 = math.exp %467 : vector<2x128xf32>
    %cst_187 = arith.constant 1.000000e+00 : f32
    %469 = vector.broadcast %cst_187 : f32 to vector<2x128xf32>
    %470 = arith.addf %469, %468 : vector<2x128xf32>
    %471 = arith.divf %469, %470 : vector<2x128xf32>
    %472 = vector.extract_strided_slice %438 {offsets = [0, 128], sizes = [2, 128], strides = [1, 1]} : vector<2x512xf32> to vector<2x128xf32>
    %473 = arith.negf %472 : vector<2x128xf32>
    %474 = math.exp %473 : vector<2x128xf32>
    %cst_188 = arith.constant 1.000000e+00 : f32
    %475 = vector.broadcast %cst_188 : f32 to vector<2x128xf32>
    %476 = arith.addf %475, %474 : vector<2x128xf32>
    %477 = arith.divf %475, %476 : vector<2x128xf32>
    %478 = vector.extract_strided_slice %438 {offsets = [0, 256], sizes = [2, 128], strides = [1, 1]} : vector<2x512xf32> to vector<2x128xf32>
    %479 = math.tanh %478 : vector<2x128xf32>
    %480 = vector.extract_strided_slice %438 {offsets = [0, 384], sizes = [2, 128], strides = [1, 1]} : vector<2x512xf32> to vector<2x128xf32>
    %481 = arith.negf %480 : vector<2x128xf32>
    %482 = math.exp %481 : vector<2x128xf32>
    %cst_189 = arith.constant 1.000000e+00 : f32
    %483 = vector.broadcast %cst_189 : f32 to vector<2x128xf32>
    %484 = arith.addf %483, %482 : vector<2x128xf32>
    %485 = arith.divf %483, %484 : vector<2x128xf32>
    %486 = arith.mulf %477, %465 : vector<2x128xf32>
    %487 = arith.mulf %471, %479 : vector<2x128xf32>
    %488 = arith.addf %486, %487 : vector<2x128xf32>
    %489 = math.tanh %488 : vector<2x128xf32>
    %490 = arith.mulf %485, %489 : vector<2x128xf32>
    %c0_190 = arith.constant 0 : index
    %c0_191 = arith.constant 0 : index
    %491 = vector.load %arg6[%c0_190, %c0_191] : memref<2x128xf32, #tpu.memory_space<vmem>>, vector<2x128xf32>
    tpu.vector_store %arg6[%c0_190, %c0_191], %464 {strides = array<i32>} : memref<2x128xf32, #tpu.memory_space<vmem>>, vector<2x128xf32>,
    %c0_192 = arith.constant 0 : index
    %c0_193 = arith.constant 0 : index
    %492 = vector.load %arg7[%c0_192, %c0_193] : memref<2x128xf32, #tpu.memory_space<vmem>>, vector<2x128xf32>
    tpu.vector_store %arg7[%c0_192, %c0_193], %462 {strides = array<i32>} : memref<2x128xf32, #tpu.memory_space<vmem>>, vector<2x128xf32>,
    %c0_194 = arith.constant 0 : index
    %c0_195 = arith.constant 0 : index
    %493 = vector.load %arg8[%c0_194, %c0_195] : memref<2x128xf32, #tpu.memory_space<vmem>>, vector<2x128xf32>
    tpu.vector_store %arg8[%c0_194, %c0_195], %490 {strides = array<i32>} : memref<2x128xf32, #tpu.memory_space<vmem>>, vector<2x128xf32>,
    %c0_196 = arith.constant 0 : index
    %c0_197 = arith.constant 0 : index
    %494 = vector.load %arg9[%c0_196, %c0_197] : memref<2x128xf32, #tpu.memory_space<vmem>>, vector<2x128xf32>
    tpu.vector_store %arg9[%c0_196, %c0_197], %488 {strides = array<i32>} : memref<2x128xf32, #tpu.memory_space<vmem>>, vector<2x128xf32>,
    %495 = arith.truncf %464 : vector<2x128xf32> to vector<2x128xbf16>
    %496 = arith.index_cast %c5_i32 : i32 to index
    %c0_198 = arith.constant 0 : index
    %c0_199 = arith.constant 0 : index
    %497 = vector.load %arg4[%496, %c0_198, %c0_199] : memref<8x2x128xbf16, #tpu.memory_space<vmem>>, vector<1x2x128xbf16>
    %498 = vector.shape_cast %497 : vector<1x2x128xbf16> to vector<2x128xbf16>
    %499 = vector.shape_cast %495 : vector<2x128xbf16> to vector<1x2x128xbf16>
    tpu.vector_store %arg4[%496, %c0_198, %c0_199], %499 {strides = array<i32>} : memref<8x2x128xbf16, #tpu.memory_space<vmem>>, vector<1x2x128xbf16>,
    %500 = arith.truncf %490 : vector<2x128xf32> to vector<2x128xbf16>
    %501 = arith.index_cast %422 : i32 to index
    %c0_200 = arith.constant 0 : index
    %c0_201 = arith.constant 0 : index
    %502 = vector.load %arg5[%501, %c0_200, %c0_201] : memref<8x2x128xbf16, #tpu.memory_space<vmem>>, vector<1x2x128xbf16>
    %503 = vector.shape_cast %502 : vector<1x2x128xbf16> to vector<2x128xbf16>
    %504 = vector.shape_cast %500 : vector<2x128xbf16> to vector<1x2x128xbf16>
    tpu.vector_store %arg5[%501, %c0_200, %c0_201], %504 {strides = array<i32>} : memref<8x2x128xbf16, #tpu.memory_space<vmem>>, vector<1x2x128xbf16>,
    %c6_i32 = arith.constant 6 : i32
    %c7_i32_202 = arith.constant 7 : i32
    %505 = arith.subi %c7_i32_202, %c6_i32 : i32
    %506 = arith.index_cast %c6_i32 : i32 to index
    %c0_203 = arith.constant 0 : index
    %c0_204 = arith.constant 0 : index
    %507 = vector.load %arg1[%506, %c0_203, %c0_204] : memref<8x2x512xbf16, #tpu.memory_space<vmem>>, vector<1x2x512xbf16>
    %508 = vector.shape_cast %507 : vector<1x2x512xbf16> to vector<2x512xbf16>
    %509 = arith.extf %508 : vector<2x512xbf16> to vector<2x512xf32>
    %c0_205 = arith.constant 0 : index
    %c0_206 = arith.constant 0 : index
    %510 = vector.load %arg6[%c0_205, %c0_206] : memref<2x128xf32, #tpu.memory_space<vmem>>, vector<2x128xf32>
    %511 = arith.truncf %510 : vector<2x128xf32> to vector<2x128xbf16>
    %cst_207 = arith.constant dense<0.000000e+00> : vector<2x512xf32>
    %512 = tpu.matmul %511, %4, %cst_207 {dimension_numbers = #tpu.dot_dimension_numbers<[1], [0], [0], [1], [0, 0, 1, 1], [], []>} : vector<2x128xbf16>, vector<128x512xbf16>, vector<2x512xf32> -> vector<2x512xf32>
    %513 = arith.addf %509, %512 : vector<2x512xf32>
    %514 = arith.index_cast %505 : i32 to index
    %c0_208 = arith.constant 0 : index
    %c0_209 = arith.constant 0 : index
    %515 = vector.load %arg2[%514, %c0_208, %c0_209] : memref<8x2x512xbf16, #tpu.memory_space<vmem>>, vector<1x2x512xbf16>
    %516 = vector.shape_cast %515 : vector<1x2x512xbf16> to vector<2x512xbf16>
    %517 = arith.extf %516 : vector<2x512xbf16> to vector<2x512xf32>
    %c0_210 = arith.constant 0 : index
    %c0_211 = arith.constant 0 : index
    %518 = vector.load %arg8[%c0_210, %c0_211] : memref<2x128xf32, #tpu.memory_space<vmem>>, vector<2x128xf32>
    %519 = arith.truncf %518 : vector<2x128xf32> to vector<2x128xbf16>
    %cst_212 = arith.constant dense<0.000000e+00> : vector<2x512xf32>
    %520 = tpu.matmul %519, %6, %cst_212 {dimension_numbers = #tpu.dot_dimension_numbers<[1], [0], [0], [1], [0, 0, 1, 1], [], []>} : vector<2x128xbf16>, vector<128x512xbf16>, vector<2x512xf32> -> vector<2x512xf32>
    %521 = arith.addf %517, %520 : vector<2x512xf32>
    %c0_213 = arith.constant 0 : index
    %c0_214 = arith.constant 0 : index
    %522 = vector.load %arg7[%c0_213, %c0_214] : memref<2x128xf32, #tpu.memory_space<vmem>>, vector<2x128xf32>
    %523 = vector.extract_strided_slice %513 {offsets = [0, 0], sizes = [2, 128], strides = [1, 1]} : vector<2x512xf32> to vector<2x128xf32>
    %524 = arith.negf %523 : vector<2x128xf32>
    %525 = math.exp %524 : vector<2x128xf32>
    %cst_215 = arith.constant 1.000000e+00 : f32
    %526 = vector.broadcast %cst_215 : f32 to vector<2x128xf32>
    %527 = arith.addf %526, %525 : vector<2x128xf32>
    %528 = arith.divf %526, %527 : vector<2x128xf32>
    %529 = vector.extract_strided_slice %513 {offsets = [0, 128], sizes = [2, 128], strides = [1, 1]} : vector<2x512xf32> to vector<2x128xf32>
    %530 = arith.negf %529 : vector<2x128xf32>
    %531 = math.exp %530 : vector<2x128xf32>
    %cst_216 = arith.constant 1.000000e+00 : f32
    %532 = vector.broadcast %cst_216 : f32 to vector<2x128xf32>
    %533 = arith.addf %532, %531 : vector<2x128xf32>
    %534 = arith.divf %532, %533 : vector<2x128xf32>
    %535 = vector.extract_strided_slice %513 {offsets = [0, 256], sizes = [2, 128], strides = [1, 1]} : vector<2x512xf32> to vector<2x128xf32>
    %536 = math.tanh %535 : vector<2x128xf32>
    %537 = vector.extract_strided_slice %513 {offsets = [0, 384], sizes = [2, 128], strides = [1, 1]} : vector<2x512xf32> to vector<2x128xf32>
    %538 = arith.negf %537 : vector<2x128xf32>
    %539 = math.exp %538 : vector<2x128xf32>
    %cst_217 = arith.constant 1.000000e+00 : f32
    %540 = vector.broadcast %cst_217 : f32 to vector<2x128xf32>
    %541 = arith.addf %540, %539 : vector<2x128xf32>
    %542 = arith.divf %540, %541 : vector<2x128xf32>
    %543 = arith.mulf %534, %522 : vector<2x128xf32>
    %544 = arith.mulf %528, %536 : vector<2x128xf32>
    %545 = arith.addf %543, %544 : vector<2x128xf32>
    %546 = math.tanh %545 : vector<2x128xf32>
    %547 = arith.mulf %542, %546 : vector<2x128xf32>
    %c0_218 = arith.constant 0 : index
    %c0_219 = arith.constant 0 : index
    %548 = vector.load %arg9[%c0_218, %c0_219] : memref<2x128xf32, #tpu.memory_space<vmem>>, vector<2x128xf32>
    %549 = vector.extract_strided_slice %521 {offsets = [0, 0], sizes = [2, 128], strides = [1, 1]} : vector<2x512xf32> to vector<2x128xf32>
    %550 = arith.negf %549 : vector<2x128xf32>
    %551 = math.exp %550 : vector<2x128xf32>
    %cst_220 = arith.constant 1.000000e+00 : f32
    %552 = vector.broadcast %cst_220 : f32 to vector<2x128xf32>
    %553 = arith.addf %552, %551 : vector<2x128xf32>
    %554 = arith.divf %552, %553 : vector<2x128xf32>
    %555 = vector.extract_strided_slice %521 {offsets = [0, 128], sizes = [2, 128], strides = [1, 1]} : vector<2x512xf32> to vector<2x128xf32>
    %556 = arith.negf %555 : vector<2x128xf32>
    %557 = math.exp %556 : vector<2x128xf32>
    %cst_221 = arith.constant 1.000000e+00 : f32
    %558 = vector.broadcast %cst_221 : f32 to vector<2x128xf32>
    %559 = arith.addf %558, %557 : vector<2x128xf32>
    %560 = arith.divf %558, %559 : vector<2x128xf32>
    %561 = vector.extract_strided_slice %521 {offsets = [0, 256], sizes = [2, 128], strides = [1, 1]} : vector<2x512xf32> to vector<2x128xf32>
    %562 = math.tanh %561 : vector<2x128xf32>
    %563 = vector.extract_strided_slice %521 {offsets = [0, 384], sizes = [2, 128], strides = [1, 1]} : vector<2x512xf32> to vector<2x128xf32>
    %564 = arith.negf %563 : vector<2x128xf32>
    %565 = math.exp %564 : vector<2x128xf32>
    %cst_222 = arith.constant 1.000000e+00 : f32
    %566 = vector.broadcast %cst_222 : f32 to vector<2x128xf32>
    %567 = arith.addf %566, %565 : vector<2x128xf32>
    %568 = arith.divf %566, %567 : vector<2x128xf32>
    %569 = arith.mulf %560, %548 : vector<2x128xf32>
    %570 = arith.mulf %554, %562 : vector<2x128xf32>
    %571 = arith.addf %569, %570 : vector<2x128xf32>
    %572 = math.tanh %571 : vector<2x128xf32>
    %573 = arith.mulf %568, %572 : vector<2x128xf32>
    %c0_223 = arith.constant 0 : index
    %c0_224 = arith.constant 0 : index
    %574 = vector.load %arg6[%c0_223, %c0_224] : memref<2x128xf32, #tpu.memory_space<vmem>>, vector<2x128xf32>
    tpu.vector_store %arg6[%c0_223, %c0_224], %547 {strides = array<i32>} : memref<2x128xf32, #tpu.memory_space<vmem>>, vector<2x128xf32>,
    %c0_225 = arith.constant 0 : index
    %c0_226 = arith.constant 0 : index
    %575 = vector.load %arg7[%c0_225, %c0_226] : memref<2x128xf32, #tpu.memory_space<vmem>>, vector<2x128xf32>
    tpu.vector_store %arg7[%c0_225, %c0_226], %545 {strides = array<i32>} : memref<2x128xf32, #tpu.memory_space<vmem>>, vector<2x128xf32>,
    %c0_227 = arith.constant 0 : index
    %c0_228 = arith.constant 0 : index
    %576 = vector.load %arg8[%c0_227, %c0_228] : memref<2x128xf32, #tpu.memory_space<vmem>>, vector<2x128xf32>
    tpu.vector_store %arg8[%c0_227, %c0_228], %573 {strides = array<i32>} : memref<2x128xf32, #tpu.memory_space<vmem>>, vector<2x128xf32>,
    %c0_229 = arith.constant 0 : index
    %c0_230 = arith.constant 0 : index
    %577 = vector.load %arg9[%c0_229, %c0_230] : memref<2x128xf32, #tpu.memory_space<vmem>>, vector<2x128xf32>
    tpu.vector_store %arg9[%c0_229, %c0_230], %571 {strides = array<i32>} : memref<2x128xf32, #tpu.memory_space<vmem>>, vector<2x128xf32>,
    %578 = arith.truncf %547 : vector<2x128xf32> to vector<2x128xbf16>
    %579 = arith.index_cast %c6_i32 : i32 to index
    %c0_231 = arith.constant 0 : index
    %c0_232 = arith.constant 0 : index
    %580 = vector.load %arg4[%579, %c0_231, %c0_232] : memref<8x2x128xbf16, #tpu.memory_space<vmem>>, vector<1x2x128xbf16>
    %581 = vector.shape_cast %580 : vector<1x2x128xbf16> to vector<2x128xbf16>
    %582 = vector.shape_cast %578 : vector<2x128xbf16> to vector<1x2x128xbf16>
    tpu.vector_store %arg4[%579, %c0_231, %c0_232], %582 {strides = array<i32>} : memref<8x2x128xbf16, #tpu.memory_space<vmem>>, vector<1x2x128xbf16>,
    %583 = arith.truncf %573 : vector<2x128xf32> to vector<2x128xbf16>
    %584 = arith.index_cast %505 : i32 to index
    %c0_233 = arith.constant 0 : index
    %c0_234 = arith.constant 0 : index
    %585 = vector.load %arg5[%584, %c0_233, %c0_234] : memref<8x2x128xbf16, #tpu.memory_space<vmem>>, vector<1x2x128xbf16>
    %586 = vector.shape_cast %585 : vector<1x2x128xbf16> to vector<2x128xbf16>
    %587 = vector.shape_cast %583 : vector<2x128xbf16> to vector<1x2x128xbf16>
    tpu.vector_store %arg5[%584, %c0_233, %c0_234], %587 {strides = array<i32>} : memref<8x2x128xbf16, #tpu.memory_space<vmem>>, vector<1x2x128xbf16>,
    %c7_i32_235 = arith.constant 7 : i32
    %c7_i32_236 = arith.constant 7 : i32
    %588 = arith.subi %c7_i32_236, %c7_i32_235 : i32
    %589 = arith.index_cast %c7_i32_235 : i32 to index
    %c0_237 = arith.constant 0 : index
    %c0_238 = arith.constant 0 : index
    %590 = vector.load %arg1[%589, %c0_237, %c0_238] : memref<8x2x512xbf16, #tpu.memory_space<vmem>>, vector<1x2x512xbf16>
    %591 = vector.shape_cast %590 : vector<1x2x512xbf16> to vector<2x512xbf16>
    %592 = arith.extf %591 : vector<2x512xbf16> to vector<2x512xf32>
    %c0_239 = arith.constant 0 : index
    %c0_240 = arith.constant 0 : index
    %593 = vector.load %arg6[%c0_239, %c0_240] : memref<2x128xf32, #tpu.memory_space<vmem>>, vector<2x128xf32>
    %594 = arith.truncf %593 : vector<2x128xf32> to vector<2x128xbf16>
    %cst_241 = arith.constant dense<0.000000e+00> : vector<2x512xf32>
    %595 = tpu.matmul %594, %4, %cst_241 {dimension_numbers = #tpu.dot_dimension_numbers<[1], [0], [0], [1], [0, 0, 1, 1], [], []>} : vector<2x128xbf16>, vector<128x512xbf16>, vector<2x512xf32> -> vector<2x512xf32>
    %596 = arith.addf %592, %595 : vector<2x512xf32>
    %597 = arith.index_cast %588 : i32 to index
    %c0_242 = arith.constant 0 : index
    %c0_243 = arith.constant 0 : index
    %598 = vector.load %arg2[%597, %c0_242, %c0_243] : memref<8x2x512xbf16, #tpu.memory_space<vmem>>, vector<1x2x512xbf16>
    %599 = vector.shape_cast %598 : vector<1x2x512xbf16> to vector<2x512xbf16>
    %600 = arith.extf %599 : vector<2x512xbf16> to vector<2x512xf32>
    %c0_244 = arith.constant 0 : index
    %c0_245 = arith.constant 0 : index
    %601 = vector.load %arg8[%c0_244, %c0_245] : memref<2x128xf32, #tpu.memory_space<vmem>>, vector<2x128xf32>
    %602 = arith.truncf %601 : vector<2x128xf32> to vector<2x128xbf16>
    %cst_246 = arith.constant dense<0.000000e+00> : vector<2x512xf32>
    %603 = tpu.matmul %602, %6, %cst_246 {dimension_numbers = #tpu.dot_dimension_numbers<[1], [0], [0], [1], [0, 0, 1, 1], [], []>} : vector<2x128xbf16>, vector<128x512xbf16>, vector<2x512xf32> -> vector<2x512xf32>
    %604 = arith.addf %600, %603 : vector<2x512xf32>
    %c0_247 = arith.constant 0 : index
    %c0_248 = arith.constant 0 : index
    %605 = vector.load %arg7[%c0_247, %c0_248] : memref<2x128xf32, #tpu.memory_space<vmem>>, vector<2x128xf32>
    %606 = vector.extract_strided_slice %596 {offsets = [0, 0], sizes = [2, 128], strides = [1, 1]} : vector<2x512xf32> to vector<2x128xf32>
    %607 = arith.negf %606 : vector<2x128xf32>
    %608 = math.exp %607 : vector<2x128xf32>
    %cst_249 = arith.constant 1.000000e+00 : f32
    %609 = vector.broadcast %cst_249 : f32 to vector<2x128xf32>
    %610 = arith.addf %609, %608 : vector<2x128xf32>
    %611 = arith.divf %609, %610 : vector<2x128xf32>
    %612 = vector.extract_strided_slice %596 {offsets = [0, 128], sizes = [2, 128], strides = [1, 1]} : vector<2x512xf32> to vector<2x128xf32>
    %613 = arith.negf %612 : vector<2x128xf32>
    %614 = math.exp %613 : vector<2x128xf32>
    %cst_250 = arith.constant 1.000000e+00 : f32
    %615 = vector.broadcast %cst_250 : f32 to vector<2x128xf32>
    %616 = arith.addf %615, %614 : vector<2x128xf32>
    %617 = arith.divf %615, %616 : vector<2x128xf32>
    %618 = vector.extract_strided_slice %596 {offsets = [0, 256], sizes = [2, 128], strides = [1, 1]} : vector<2x512xf32> to vector<2x128xf32>
    %619 = math.tanh %618 : vector<2x128xf32>
    %620 = vector.extract_strided_slice %596 {offsets = [0, 384], sizes = [2, 128], strides = [1, 1]} : vector<2x512xf32> to vector<2x128xf32>
    %621 = arith.negf %620 : vector<2x128xf32>
    %622 = math.exp %621 : vector<2x128xf32>
    %cst_251 = arith.constant 1.000000e+00 : f32
    %623 = vector.broadcast %cst_251 : f32 to vector<2x128xf32>
    %624 = arith.addf %623, %622 : vector<2x128xf32>
    %625 = arith.divf %623, %624 : vector<2x128xf32>
    %626 = arith.mulf %617, %605 : vector<2x128xf32>
    %627 = arith.mulf %611, %619 : vector<2x128xf32>
    %628 = arith.addf %626, %627 : vector<2x128xf32>
    %629 = math.tanh %628 : vector<2x128xf32>
    %630 = arith.mulf %625, %629 : vector<2x128xf32>
    %c0_252 = arith.constant 0 : index
    %c0_253 = arith.constant 0 : index
    %631 = vector.load %arg9[%c0_252, %c0_253] : memref<2x128xf32, #tpu.memory_space<vmem>>, vector<2x128xf32>
    %632 = vector.extract_strided_slice %604 {offsets = [0, 0], sizes = [2, 128], strides = [1, 1]} : vector<2x512xf32> to vector<2x128xf32>
    %633 = arith.negf %632 : vector<2x128xf32>
    %634 = math.exp %633 : vector<2x128xf32>
    %cst_254 = arith.constant 1.000000e+00 : f32
    %635 = vector.broadcast %cst_254 : f32 to vector<2x128xf32>
    %636 = arith.addf %635, %634 : vector<2x128xf32>
    %637 = arith.divf %635, %636 : vector<2x128xf32>
    %638 = vector.extract_strided_slice %604 {offsets = [0, 128], sizes = [2, 128], strides = [1, 1]} : vector<2x512xf32> to vector<2x128xf32>
    %639 = arith.negf %638 : vector<2x128xf32>
    %640 = math.exp %639 : vector<2x128xf32>
    %cst_255 = arith.constant 1.000000e+00 : f32
    %641 = vector.broadcast %cst_255 : f32 to vector<2x128xf32>
    %642 = arith.addf %641, %640 : vector<2x128xf32>
    %643 = arith.divf %641, %642 : vector<2x128xf32>
    %644 = vector.extract_strided_slice %604 {offsets = [0, 256], sizes = [2, 128], strides = [1, 1]} : vector<2x512xf32> to vector<2x128xf32>
    %645 = math.tanh %644 : vector<2x128xf32>
    %646 = vector.extract_strided_slice %604 {offsets = [0, 384], sizes = [2, 128], strides = [1, 1]} : vector<2x512xf32> to vector<2x128xf32>
    %647 = arith.negf %646 : vector<2x128xf32>
    %648 = math.exp %647 : vector<2x128xf32>
    %cst_256 = arith.constant 1.000000e+00 : f32
    %649 = vector.broadcast %cst_256 : f32 to vector<2x128xf32>
    %650 = arith.addf %649, %648 : vector<2x128xf32>
    %651 = arith.divf %649, %650 : vector<2x128xf32>
    %652 = arith.mulf %643, %631 : vector<2x128xf32>
    %653 = arith.mulf %637, %645 : vector<2x128xf32>
    %654 = arith.addf %652, %653 : vector<2x128xf32>
    %655 = math.tanh %654 : vector<2x128xf32>
    %656 = arith.mulf %651, %655 : vector<2x128xf32>
    %c0_257 = arith.constant 0 : index
    %c0_258 = arith.constant 0 : index
    %657 = vector.load %arg6[%c0_257, %c0_258] : memref<2x128xf32, #tpu.memory_space<vmem>>, vector<2x128xf32>
    tpu.vector_store %arg6[%c0_257, %c0_258], %630 {strides = array<i32>} : memref<2x128xf32, #tpu.memory_space<vmem>>, vector<2x128xf32>,
    %c0_259 = arith.constant 0 : index
    %c0_260 = arith.constant 0 : index
    %658 = vector.load %arg7[%c0_259, %c0_260] : memref<2x128xf32, #tpu.memory_space<vmem>>, vector<2x128xf32>
    tpu.vector_store %arg7[%c0_259, %c0_260], %628 {strides = array<i32>} : memref<2x128xf32, #tpu.memory_space<vmem>>, vector<2x128xf32>,
    %c0_261 = arith.constant 0 : index
    %c0_262 = arith.constant 0 : index
    %659 = vector.load %arg8[%c0_261, %c0_262] : memref<2x128xf32, #tpu.memory_space<vmem>>, vector<2x128xf32>
    tpu.vector_store %arg8[%c0_261, %c0_262], %656 {strides = array<i32>} : memref<2x128xf32, #tpu.memory_space<vmem>>, vector<2x128xf32>,
    %c0_263 = arith.constant 0 : index
    %c0_264 = arith.constant 0 : index
    %660 = vector.load %arg9[%c0_263, %c0_264] : memref<2x128xf32, #tpu.memory_space<vmem>>, vector<2x128xf32>
    tpu.vector_store %arg9[%c0_263, %c0_264], %654 {strides = array<i32>} : memref<2x128xf32, #tpu.memory_space<vmem>>, vector<2x128xf32>,
    %661 = arith.truncf %630 : vector<2x128xf32> to vector<2x128xbf16>
    %662 = arith.index_cast %c7_i32_235 : i32 to index
    %c0_265 = arith.constant 0 : index
    %c0_266 = arith.constant 0 : index
    %663 = vector.load %arg4[%662, %c0_265, %c0_266] : memref<8x2x128xbf16, #tpu.memory_space<vmem>>, vector<1x2x128xbf16>
    %664 = vector.shape_cast %663 : vector<1x2x128xbf16> to vector<2x128xbf16>
    %665 = vector.shape_cast %661 : vector<2x128xbf16> to vector<1x2x128xbf16>
    tpu.vector_store %arg4[%662, %c0_265, %c0_266], %665 {strides = array<i32>} : memref<8x2x128xbf16, #tpu.memory_space<vmem>>, vector<1x2x128xbf16>,
    %666 = arith.truncf %656 : vector<2x128xf32> to vector<2x128xbf16>
    %667 = arith.index_cast %588 : i32 to index
    %c0_267 = arith.constant 0 : index
    %c0_268 = arith.constant 0 : index
    %668 = vector.load %arg5[%667, %c0_267, %c0_268] : memref<8x2x128xbf16, #tpu.memory_space<vmem>>, vector<1x2x128xbf16>
    %669 = vector.shape_cast %668 : vector<1x2x128xbf16> to vector<2x128xbf16>
    %670 = vector.shape_cast %666 : vector<2x128xbf16> to vector<1x2x128xbf16>
    tpu.vector_store %arg5[%667, %c0_267, %c0_268], %670 {strides = array<i32>} : memref<8x2x128xbf16, #tpu.memory_space<vmem>>, vector<1x2x128xbf16>,
    %c8_i32 = arith.constant 8 : i32
    return
  }
  func.func @transform_0(%arg0: i32) -> (i32, i32, i32) {
    %c0_i32 = arith.constant 0 : i32
    %c0_i32_0 = arith.constant 0 : i32
    %c0_i32_1 = arith.constant 0 : i32
    return %arg0, %c0_i32, %c0_i32_0 : i32, i32, i32
  }
  func.func @transform_1(%arg0: i32) -> (i32, i32, i32) {
    %c0_i32 = arith.constant 0 : i32
    %0 = arith.subi %c0_i32, %arg0 : i32
    %c0_i32_0 = arith.constant 0 : i32
    %c1_i32 = arith.constant 1 : i32
    %c0_i32_1 = arith.constant 0 : i32
    return %0, %c0_i32_0, %c1_i32 : i32, i32, i32
  }
  func.func @transform_2(%arg0: i32) -> (i32, i32, i32) {
    %c0_i32 = arith.constant 0 : i32
    %c0_i32_0 = arith.constant 0 : i32
    %c0_i32_1 = arith.constant 0 : i32
    %c0_i32_2 = arith.constant 0 : i32
    return %c0_i32, %c0_i32_0, %c0_i32_1 : i32, i32, i32
  }
  func.func @transform_3(%arg0: i32) -> (i32, i32, i32) {
    %c0_i32 = arith.constant 0 : i32
    %c0_i32_0 = arith.constant 0 : i32
    %c0_i32_1 = arith.constant 0 : i32
    return %arg0, %c0_i32, %c0_i32_0 : i32, i32, i32
  }
  func.func @transform_4(%arg0: i32) -> (i32, i32, i32) {
    %c0_i32 = arith.constant 0 : i32
    %0 = arith.subi %c0_i32, %arg0 : i32
    %c0_i32_0 = arith.constant 0 : i32
    %c0_i32_1 = arith.constant 0 : i32
    %c0_i32_2 = arith.constant 0 : i32
    return %0, %c0_i32_0, %c0_i32_1 : i32, i32, i32
  }
}

module attributes {stable_mosaic.version = 11 : i64} {
  func.func @_fc_kernel(%arg0: i32, %arg1: memref<16x128xbf16, #tpu.memory_space<vmem>>, %arg2: memref<16x128xbf16, #tpu.memory_space<vmem>>, %arg3: memref<128x128xbf16, #tpu.memory_space<vmem>>, %arg4: memref<128x128xbf16, #tpu.memory_space<vmem>>, %arg5: memref<1x128xf32, #tpu.memory_space<vmem>>, %arg6: memref<16x128xf32, #tpu.memory_space<vmem>>) attributes {dimension_semantics = [#tpu.dimension_semantics<parallel>], iteration_bounds = array<i64: 1>, scalar_prefetch = 0 : i64, scratch_operands = 0 : i64, tpu.core_type = #tpu.core_type<tc>, window_params = [{transform_indices = @transform_0, window_bounds = array<i64: 16, 128>}, {transform_indices = @transform_1, window_bounds = array<i64: 16, 128>}, {pipeline_mode = #tpu.pipeline_mode<synchronous>, transform_indices = @transform_2, window_bounds = array<i64: 128, 128>}, {pipeline_mode = #tpu.pipeline_mode<synchronous>, transform_indices = @transform_3, window_bounds = array<i64: 128, 128>}, {pipeline_mode = #tpu.pipeline_mode<synchronous>, transform_indices = @transform_4, window_bounds = array<i64: 1, 128>}, {transform_indices = @transform_5, window_bounds = array<i64: 16, 128>}]} {
    %c0 = arith.constant 0 : index
    %c0_0 = arith.constant 0 : index
    %0 = vector.load %arg1[%c0, %c0_0] : memref<16x128xbf16, #tpu.memory_space<vmem>>, vector<16x128xbf16>
    %c0_1 = arith.constant 0 : index
    %c0_2 = arith.constant 0 : index
    %1 = vector.load %arg3[%c0_1, %c0_2] : memref<128x128xbf16, #tpu.memory_space<vmem>>, vector<128x128xbf16>
    %cst = arith.constant dense<0.000000e+00> : vector<16x128xf32>
    %2 = tpu.matmul %0, %1, %cst {dimension_numbers = #tpu.dot_dimension_numbers<[1], [0], [0], [1], [0, 0, 1, 1], [], []>} : vector<16x128xbf16>, vector<128x128xbf16>, vector<16x128xf32> -> vector<16x128xf32>
    %c0_3 = arith.constant 0 : index
    %c0_4 = arith.constant 0 : index
    %3 = vector.load %arg2[%c0_3, %c0_4] : memref<16x128xbf16, #tpu.memory_space<vmem>>, vector<16x128xbf16>
    %c0_5 = arith.constant 0 : index
    %c0_6 = arith.constant 0 : index
    %4 = vector.load %arg4[%c0_5, %c0_6] : memref<128x128xbf16, #tpu.memory_space<vmem>>, vector<128x128xbf16>
    %cst_7 = arith.constant dense<0.000000e+00> : vector<16x128xf32>
    %5 = tpu.matmul %3, %4, %cst_7 {dimension_numbers = #tpu.dot_dimension_numbers<[1], [0], [0], [1], [0, 0, 1, 1], [], []>} : vector<16x128xbf16>, vector<128x128xbf16>, vector<16x128xf32> -> vector<16x128xf32>
    %6 = arith.addf %2, %5 : vector<16x128xf32>
    %c0_8 = arith.constant 0 : index
    %c0_9 = arith.constant 0 : index
    %7 = vector.load %arg5[%c0_8, %c0_9] : memref<1x128xf32, #tpu.memory_space<vmem>>, vector<1x128xf32>
    %8 = vector.broadcast %7 : vector<1x128xf32> to vector<16x128xf32>
    %9 = arith.addf %6, %8 : vector<16x128xf32>
    %c0_10 = arith.constant 0 : index
    %c0_11 = arith.constant 0 : index
    %10 = vector.load %arg6[%c0_10, %c0_11] : memref<16x128xf32, #tpu.memory_space<vmem>>, vector<16x128xf32>
    tpu.vector_store %arg6[%c0_10, %c0_11], %9 {strides = array<i32>} : memref<16x128xf32, #tpu.memory_space<vmem>>, vector<16x128xf32>,
    return
  }
  func.func @transform_0(%arg0: i32) -> (i32, i32) {
    %c0_i32 = arith.constant 0 : i32
    %c0_i32_0 = arith.constant 0 : i32
    return %arg0, %c0_i32 : i32, i32
  }
  func.func @transform_1(%arg0: i32) -> (i32, i32) {
    %c0_i32 = arith.constant 0 : i32
    %c0_i32_0 = arith.constant 0 : i32
    return %arg0, %c0_i32 : i32, i32
  }
  func.func @transform_2(%arg0: i32) -> (i32, i32) {
    %c0_i32 = arith.constant 0 : i32
    %c0_i32_0 = arith.constant 0 : i32
    %c0_i32_1 = arith.constant 0 : i32
    return %c0_i32, %c0_i32_0 : i32, i32
  }
  func.func @transform_3(%arg0: i32) -> (i32, i32) {
    %c0_i32 = arith.constant 0 : i32
    %c0_i32_0 = arith.constant 0 : i32
    %c0_i32_1 = arith.constant 0 : i32
    return %c0_i32, %c0_i32_0 : i32, i32
  }
  func.func @transform_4(%arg0: i32) -> (i32, i32) {
    %c0_i32 = arith.constant 0 : i32
    %c0_i32_0 = arith.constant 0 : i32
    %c0_i32_1 = arith.constant 0 : i32
    return %c0_i32, %c0_i32_0 : i32, i32
  }
  func.func @transform_5(%arg0: i32) -> (i32, i32) {
    %c0_i32 = arith.constant 0 : i32
    %c0_i32_0 = arith.constant 0 : i32
    return %arg0, %c0_i32 : i32, i32
  }
}

</mosaic_0001>

<llo_original>
// kernel: _lambda_.5
$region0: #{_lambda_.5}
  #allocation0 [shape = 'u32[]', space=smem, size = 0x4, offset = 0x4, fixed_abs, tag = 'smem constant byte address 0x4 - core index']
  #allocation1 [shape = 'u32[144,128]{1,0:T(1,128)}', space=vmem, size = 0x12000, scoped, tag = 'internal scratch']
  %s0 = inlined_call_operand.vmem [shape: bf16[16,16], index: 0, kind: input, shape index: {}]
  %s1 = inlined_call_operand.hbm [shape: bf16[16,1024], index: 1, kind: input, shape index: {}]
  %s2 = inlined_call_operand.vmem [shape: f32[1,1024], index: 2, kind: input, shape index: {}]
  %s3 = inlined_call_operand.vmem [shape: bf16[16,1024], index: 3, kind: output, shape index: {}]
  %s4 = sld [smem:[#allocation0]]
  $region26: #{_lambda_.5} parent=0
    _
  %s6 = ssub.s32 1, %s4
  %s7 = scalar_select 0, %s6, %s4
  $region1: #{_lambda_.5} parent=0
    #allocation2 [shape = 'u8[32768]{0}', space=vmem, size = 0x8000, scoped, tag = 'input window, operand 1, single buffered']
    #allocation3 [shape = 's32[1]{0}', space=sflag, size = 0x4, scoped, tag = 'scoped memory for _lambda_.5']
    %8 = vsyncpa [#allocation3], 0
    // Predicated region
    $region2: #{_lambda_.5} parent=1 // pred_check
      _
    $region3: #{_lambda_.5} parent=1 // pred_check_branch
      %10 = sbr.rel (0) target = $region5
    $region4: #{_lambda_.5} parent=1 // pred_region
      _
    $region5: #{_lambda_.5} parent=1 // pred_fallthru
      _
    // Predicated region
    $region6: #{_lambda_.5} parent=1 // pred_check
      _
    $region7: #{_lambda_.5} parent=1 // pred_check_branch
      %12 = sbr.rel (0) target = $region9
    $region8: #{_lambda_.5} parent=1 // pred_region
      %s14 = ssub.s32 1024, 1024
      %15 = vsyncadd [#allocation3], %s14
      %s16 = sshll.u32 [#allocation2], 4
      %s17 = int_to_ptr.vmem [resolvable:$true] %s16
      %22 = dma.hbm_to_vmem [thread:$0]  %s1, 1024, %s17, [#allocation3], 512, 512, 32
    $region9: #{_lambda_.5} parent=1 // pred_fallthru
      _
    // Predicated region
    $region10: #{_lambda_.5} parent=1 // pred_check
      _
    $region11: #{_lambda_.5} parent=1 // pred_check_branch
      %24 = sbr.rel (0) target = $region13
    $region12: #{_lambda_.5} parent=1 // pred_region
      _
    $region13: #{_lambda_.5} parent=1 // pred_fallthru
      _
    // Predicated region
    $region14: #{_lambda_.5} parent=1 // pred_check
      _
    $region15: #{_lambda_.5} parent=1 // pred_check_branch
      %26 = sbr.rel (0) target = $region17
    $region16: #{_lambda_.5} parent=1 // pred_region
      %27 = dma.done [#allocation3], 1024
    $region17: #{_lambda_.5} parent=1 // pred_fallthru
      _
    %v29 = vld [vmem:[%s0] sm:$0xf]
    %v30 = vld [vmem:[%s0 + $0x4] sm:$0xf]
    %v31 = vld [vmem:[#allocation2] sm:$0xff]
    %v32 = vld [vmem:[#allocation2 + $0x8] sm:$0xff]
    %v33 = vld [vmem:[#allocation2 + $0x10] sm:$0xff]
    %v34 = vld [vmem:[#allocation2 + $0x18] sm:$0xff]
    %v35 = vld [vmem:[#allocation2 + $0x20] sm:$0xff]
    %v36 = vld [vmem:[#allocation2 + $0x28] sm:$0xff]
    %v37 = vld [vmem:[#allocation2 + $0x30] sm:$0xff]
    %v38 = vld [vmem:[#allocation2 + $0x38] sm:$0xff]
    %v39 = vld [vmem:[%s2] sm:$0xff]
    %v41 = vlaneseq
    %v42 = vshrl.u32 %v41, 7
    %v43 = vsub.s32 0, %v42
    %v44 = vrot.slane %v39, %v43
    %v45 = vlaneseq
    %v46 = vshrl.u32 %v45, 7
    %v47 = vsub.s32 1, %v46
    %v48 = vrot.slane %v39, %v47
    %v49 = vlaneseq
    %v50 = vshrl.u32 %v49, 7
    %v51 = vsub.s32 2, %v50
    %v52 = vrot.slane %v39, %v51
    %v53 = vlaneseq
    %v54 = vshrl.u32 %v53, 7
    %v55 = vsub.s32 3, %v54
    %v56 = vrot.slane %v39, %v55
    %v57 = vlaneseq
    %v58 = vshrl.u32 %v57, 7
    %v59 = vsub.s32 4, %v58
    %v60 = vrot.slane %v39, %v59
    %v61 = vlaneseq
    %v62 = vshrl.u32 %v61, 7
    %v63 = vsub.s32 5, %v62
    %v64 = vrot.slane %v39, %v63
    %v65 = vlaneseq
    %v66 = vshrl.u32 %v65, 7
    %v67 = vsub.s32 6, %v66
    %v68 = vrot.slane %v39, %v67
    %v69 = vlaneseq
    %v70 = vshrl.u32 %v69, 7
    %v71 = vsub.s32 7, %v70
    %v72 = vrot.slane %v39, %v71
    %v83 = vunpack.c.l.b16 %v29
    %v84 = vunpack.c.l.b16 %v30
    %v85 = vpack.c.b16 %v84, %v83
    %v94 = vunpack.c.l.b16 %v31
    %v95 = vunpack.c.h.b16 %v31
    %v96 = vunpack.c.l.b16 %v32
    %v97 = vunpack.c.h.b16 %v32
    %v98 = vunpack.c.l.b16 %v33
    %v99 = vunpack.c.h.b16 %v33
    %v100 = vunpack.c.l.b16 %v34
    %v101 = vunpack.c.h.b16 %v34
    %v102 = vunpack.c.l.b16 %v35
    %v103 = vunpack.c.h.b16 %v35
    %v104 = vunpack.c.l.b16 %v36
    %v105 = vunpack.c.h.b16 %v36
    %v106 = vunpack.c.l.b16 %v37
    %v107 = vunpack.c.h.b16 %v37
    %v108 = vunpack.c.l.b16 %v38
    %v109 = vunpack.c.h.b16 %v38
    %v110 = vpack.c.b16 %v102, %v94
    %v111 = vpack.c.b16 %v103, %v95
    %v112 = vpack.c.b16 %v104, %v96
    %v113 = vpack.c.b16 %v105, %v97
    %v114 = vpack.c.b16 %v106, %v98
    %v115 = vpack.c.b16 %v107, %v99
    %v116 = vpack.c.b16 %v108, %v100
    %v117 = vpack.c.b16 %v109, %v101
    %vm126 = vcmask 130048
    %v128 = vsel %vm126, %v85, 0
    %130 = vmatprep.subr.bf16.mxu0 0
    %131 = vmatpush1.bf16.msra.mxu0 0
    %132 = vmatprep.subr.bf16.mxu0 0
    %133 = vmatpush1.bf16.msra.mxu0 0
    %134 = vmatprep.subr.bf16.mxu0 0
    %135 = vmatpush1.bf16.msra.mxu0 0
    %136 = vmatprep.subr.bf16.mxu0 0
    %137 = vmatpush1.bf16.msra.mxu0 0
    %138 = vmatprep.subr.bf16.mxu0 0
    %139 = vmatpush1.bf16.msra.mxu0 0
    %140 = vmatprep.subr.bf16.mxu0 0
    %141 = vmatpush1.bf16.msra.mxu0 0
    %142 = vmatprep.subr.bf16.mxu0 0
    %143 = vmatpush1.bf16.msra.mxu0 0
    %144 = vmatprep.subr.bf16.mxu0 %v111
    %145 = vmatpush1.bf16.msra.mxu0 %v110
    %146 = vmatprep.subr.bf16.mxu0 0
    %147 = vmatpush2.bf16.msra.mxu0 0
    %148 = vmatprep.subr.bf16.mxu0 0
    %149 = vmatpush2.bf16.msra.mxu0 0
    %150 = vmatprep.subr.bf16.mxu0 0
    %151 = vmatpush2.bf16.msra.mxu0 0
    %152 = vmatprep.subr.bf16.mxu0 0
    %153 = vmatpush2.bf16.msra.mxu0 0
    %154 = vmatprep.subr.bf16.mxu0 0
    %155 = vmatpush2.bf16.msra.mxu0 0
    %156 = vmatprep.subr.bf16.mxu0 0
    %157 = vmatpush2.bf16.msra.mxu0 0
    %158 = vmatprep.subr.bf16.mxu0 0
    %159 = vmatpush2.bf16.msra.mxu0 0
    %160 = vmatprep.subr.bf16.mxu0 0
    %161 = vmatpush2.bf16.msra.mxu0 0
    %162 = vmatprep.mubr.bf16.mxu0 0
    %163 = vmatmul.mubr.bf16.gmra.mxu0 %v128
    %v164 = vpop.f32.mrf.mxu0
    %v165 = vadd.f32 %v44, %v164
    %v166 = vpop.f32.mrf.mxu0
    %v167 = vadd.f32 %v48, %v166
    %v168 = vpop.f32.mrf.mxu0
    %v169 = vadd.f32 %v44, %v168
    %v170 = vpop.f32.mrf.mxu0
    %v171 = vadd.f32 %v48, %v170
    %172 = vdwg.mxu0
    %173 = vmatprep.subr.bf16.mxu0 0
    %174 = vmatpush1.bf16.msra.mxu0 0
    %175 = vmatprep.subr.bf16.mxu0 0
    %176 = vmatpush1.bf16.msra.mxu0 0
    %177 = vmatprep.subr.bf16.mxu0 0
    %178 = vmatpush1.bf16.msra.mxu0 0
    %179 = vmatprep.subr.bf16.mxu0 0
    %180 = vmatpush1.bf16.msra.mxu0 0
    %181 = vmatprep.subr.bf16.mxu0 0
    %182 = vmatpush1.bf16.msra.mxu0 0
    %183 = vmatprep.subr.bf16.mxu0 0
    %184 = vmatpush1.bf16.msra.mxu0 0
    %185 = vmatprep.subr.bf16.mxu0 0
    %186 = vmatpush1.bf16.msra.mxu0 0
    %187 = vmatprep.subr.bf16.mxu0 %v113
    %188 = vmatpush1.bf16.msra.mxu0 %v112
    %189 = vmatprep.subr.bf16.mxu0 0
    %190 = vmatpush2.bf16.msra.mxu0 0
    %191 = vmatprep.subr.bf16.mxu0 0
    %192 = vmatpush2.bf16.msra.mxu0 0
    %193 = vmatprep.subr.bf16.mxu0 0
    %194 = vmatpush2.bf16.msra.mxu0 0
    %195 = vmatprep.subr.bf16.mxu0 0
    %196 = vmatpush2.bf16.msra.mxu0 0
    %197 = vmatprep.subr.bf16.mxu0 0
    %198 = vmatpush2.bf16.msra.mxu0 0
    %199 = vmatprep.subr.bf16.mxu0 0
    %200 = vmatpush2.bf16.msra.mxu0 0
    %201 = vmatprep.subr.bf16.mxu0 0
    %202 = vmatpush2.bf16.msra.mxu0 0
    %203 = vmatprep.subr.bf16.mxu0 0
    %204 = vmatpush2.bf16.msra.mxu0 0
    %205 = vmatprep.mubr.bf16.mxu0 0
    %206 = vmatmul.mubr.bf16.gmra.mxu0 %v128
    %v207 = vpop.f32.mrf.mxu0
    %v208 = vadd.f32 %v52, %v207
    %v209 = vpop.f32.mrf.mxu0
    %v210 = vadd.f32 %v56, %v209
    %v211 = vpop.f32.mrf.mxu0
    %v212 = vadd.f32 %v52, %v211
    %v213 = vpop.f32.mrf.mxu0
    %v214 = vadd.f32 %v56, %v213
    %215 = vdwg.mxu0
    %216 = vmatprep.subr.bf16.mxu0 0
    %217 = vmatpush1.bf16.msra.mxu0 0
    %218 = vmatprep.subr.bf16.mxu0 0
    %219 = vmatpush1.bf16.msra.mxu0 0
    %220 = vmatprep.subr.bf16.mxu0 0
    %221 = vmatpush1.bf16.msra.mxu0 0
    %222 = vmatprep.subr.bf16.mxu0 0
    %223 = vmatpush1.bf16.msra.mxu0 0
    %224 = vmatprep.subr.bf16.mxu0 0
    %225 = vmatpush1.bf16.msra.mxu0 0
    %226 = vmatprep.subr.bf16.mxu0 0
    %227 = vmatpush1.bf16.msra.mxu0 0
    %228 = vmatprep.subr.bf16.mxu0 0
    %229 = vmatpush1.bf16.msra.mxu0 0
    %230 = vmatprep.subr.bf16.mxu0 %v115
    %231 = vmatpush1.bf16.msra.mxu0 %v114
    %232 = vmatprep.subr.bf16.mxu0 0
    %233 = vmatpush2.bf16.msra.mxu0 0
    %234 = vmatprep.subr.bf16.mxu0 0
    %235 = vmatpush2.bf16.msra.mxu0 0
    %236 = vmatprep.subr.bf16.mxu0 0
    %237 = vmatpush2.bf16.msra.mxu0 0
    %238 = vmatprep.subr.bf16.mxu0 0
    %239 = vmatpush2.bf16.msra.mxu0 0
    %240 = vmatprep.subr.bf16.mxu0 0
    %241 = vmatpush2.bf16.msra.mxu0 0
    %242 = vmatprep.subr.bf16.mxu0 0
    %243 = vmatpush2.bf16.msra.mxu0 0
    %244 = vmatprep.subr.bf16.mxu0 0
    %245 = vmatpush2.bf16.msra.mxu0 0
    %246 = vmatprep.subr.bf16.mxu0 0
    %247 = vmatpush2.bf16.msra.mxu0 0
    %248 = vmatprep.mubr.bf16.mxu0 0
    %249 = vmatmul.mubr.bf16.gmra.mxu0 %v128
    %v250 = vpop.f32.mrf.mxu0
    %v251 = vadd.f32 %v60, %v250
    %v252 = vpop.f32.mrf.mxu0
    %v253 = vadd.f32 %v64, %v252
    %v254 = vpop.f32.mrf.mxu0
    %v255 = vadd.f32 %v60, %v254
    %v256 = vpop.f32.mrf.mxu0
    %v257 = vadd.f32 %v64, %v256
    %258 = vdwg.mxu0
    %259 = vmatprep.subr.bf16.mxu0 0
    %260 = vmatpush1.bf16.msra.mxu0 0
    %261 = vmatprep.subr.bf16.mxu0 0
    %262 = vmatpush1.bf16.msra.mxu0 0
    %263 = vmatprep.subr.bf16.mxu0 0
    %264 = vmatpush1.bf16.msra.mxu0 0
    %265 = vmatprep.subr.bf16.mxu0 0
    %266 = vmatpush1.bf16.msra.mxu0 0
    %267 = vmatprep.subr.bf16.mxu0 0
    %268 = vmatpush1.bf16.msra.mxu0 0
    %269 = vmatprep.subr.bf16.mxu0 0
    %270 = vmatpush1.bf16.msra.mxu0 0
    %271 = vmatprep.subr.bf16.mxu0 0
    %272 = vmatpush1.bf16.msra.mxu0 0
    %273 = vmatprep.subr.bf16.mxu0 %v117
    %274 = vmatpush1.bf16.msra.mxu0 %v116
    %275 = vmatprep.subr.bf16.mxu0 0
    %276 = vmatpush2.bf16.msra.mxu0 0
    %277 = vmatprep.subr.bf16.mxu0 0
    %278 = vmatpush2.bf16.msra.mxu0 0
    %279 = vmatprep.subr.bf16.mxu0 0
    %280 = vmatpush2.bf16.msra.mxu0 0
    %281 = vmatprep.subr.bf16.mxu0 0
    %282 = vmatpush2.bf16.msra.mxu0 0
    %283 = vmatprep.subr.bf16.mxu0 0
    %284 = vmatpush2.bf16.msra.mxu0 0
    %285 = vmatprep.subr.bf16.mxu0 0
    %286 = vmatpush2.bf16.msra.mxu0 0
    %287 = vmatprep.subr.bf16.mxu0 0
    %288 = vmatpush2.bf16.msra.mxu0 0
    %289 = vmatprep.subr.bf16.mxu0 0
    %290 = vmatpush2.bf16.msra.mxu0 0
    %291 = vmatprep.mubr.bf16.mxu0 0
    %292 = vmatmul.mubr.bf16.gmra.mxu0 %v128
    %v293 = vpop.f32.mrf.mxu0
    %v294 = vadd.f32 %v68, %v293
    %v295 = vpop.f32.mrf.mxu0
    %v296 = vadd.f32 %v72, %v295
    %v297 = vpop.f32.mrf.mxu0
    %v298 = vadd.f32 %v68, %v297
    %v299 = vpop.f32.mrf.mxu0
    %v300 = vadd.f32 %v72, %v299
    %301 = vdwg.mxu0
    %v302 = vpack.c.bf16 %v169, %v165
    %v303 = vpack.c.bf16 %v171, %v167
    %v304 = vpack.c.bf16 %v212, %v208
    %v305 = vpack.c.bf16 %v214, %v210
    %v306 = vpack.c.bf16 %v255, %v251
    %v307 = vpack.c.bf16 %v257, %v253
    %v308 = vpack.c.bf16 %v298, %v294
    %v309 = vpack.c.bf16 %v300, %v296
    %v318 = vunpack.c.l.b16 %v302
    %v319 = vunpack.c.l.b16 %v303
    %v320 = vunpack.c.l.b16 %v304
    %v321 = vunpack.c.l.b16 %v305
    %v322 = vunpack.c.l.b16 %v306
    %v323 = vunpack.c.l.b16 %v307
    %v324 = vunpack.c.l.b16 %v308
    %v325 = vunpack.c.l.b16 %v309
    %v326 = vunpack.c.h.b16 %v302
    %v327 = vunpack.c.h.b16 %v303
    %v328 = vunpack.c.h.b16 %v304
    %v329 = vunpack.c.h.b16 %v305
    %v330 = vunpack.c.h.b16 %v306
    %v331 = vunpack.c.h.b16 %v307
    %v332 = vunpack.c.h.b16 %v308
    %v333 = vunpack.c.h.b16 %v309
    %v334 = vpack.c.b16 %v319, %v318
    %v335 = vpack.c.b16 %v321, %v320
    %v336 = vpack.c.b16 %v323, %v322
    %v337 = vpack.c.b16 %v325, %v324
    %v338 = vpack.c.b16 %v327, %v326
    %v339 = vpack.c.b16 %v329, %v328
    %v340 = vpack.c.b16 %v331, %v330
    %v341 = vpack.c.b16 %v333, %v332
    %350 = vst [vmem:[%s3] sm:$0xff] %v334
    %351 = vst [vmem:[%s3 + $0x8] sm:$0xff] %v335
    %352 = vst [vmem:[%s3 + $0x10] sm:$0xff] %v336
    %353 = vst [vmem:[%s3 + $0x18] sm:$0xff] %v337
    %354 = vst [vmem:[%s3 + $0x20] sm:$0xff] %v338
    %355 = vst [vmem:[%s3 + $0x28] sm:$0xff] %v339
    %356 = vst [vmem:[%s3 + $0x30] sm:$0xff] %v340
    %357 = vst [vmem:[%s3 + $0x38] sm:$0xff] %v341
    // Predicated region
    $region18: #{_lambda_.5} parent=1 // pred_check
      _
    $region19: #{_lambda_.5} parent=1 // pred_check_branch
      %359 = sbr.rel (0) target = $region21
    $region20: #{_lambda_.5} parent=1 // pred_region
      _
    $region21: #{_lambda_.5} parent=1 // pred_fallthru
      _
    // Predicated region
    $region22: #{_lambda_.5} parent=1 // pred_check
      _
    $region23: #{_lambda_.5} parent=1 // pred_check_branch
      %361 = sbr.rel (0) target = $region25
    $region24: #{_lambda_.5} parent=1 // pred_region
      _
    $region25: #{_lambda_.5} parent=1 // pred_fallthru
      _
    %362 = vsyncpa [#allocation3], 1

// kernel: _lambda_.7
$region0: #{_lambda_.7}
  #allocation0 [shape = 'u32[]', space=smem, size = 0x4, offset = 0x4, fixed_abs, tag = 'smem constant byte address 0x4 - core index']
  #allocation1 [shape = 'u32[144,128]{1,0:T(1,128)}', space=vmem, size = 0x12000, scoped, tag = 'internal scratch']
  %s0 = inlined_call_operand.vmem [shape: bf16[16,128], index: 0, kind: input, shape index: {}]
  %s1 = inlined_call_operand.vmem [shape: bf16[16,128], index: 1, kind: input, shape index: {}]
  %s2 = inlined_call_operand.hbm [shape: bf16[128,1024], index: 2, kind: input, shape index: {}]
  %s3 = inlined_call_operand.vmem [shape: bf16[128,1024], index: 3, kind: input, shape index: {}]
  %s4 = inlined_call_operand.vmem [shape: f32[1,1024], index: 4, kind: input, shape index: {}]
  %s5 = inlined_call_operand.vmem [shape: bf16[16,1024], index: 5, kind: output, shape index: {}]
  %s6 = sld [smem:[#allocation0]]
  $region34: #{_lambda_.7} parent=0
    _
  %s8 = ssub.s32 1, %s6
  %s9 = scalar_select 0, %s8, %s6
  $region1: #{_lambda_.7} parent=0
    #allocation2 [shape = 'u8[262144]{0}', space=vmem, size = 0x40000, scoped, tag = 'input window, operand 2, single buffered']
    #allocation3 [shape = 's32[1]{0}', space=sflag, size = 0x4, scoped, tag = 'scoped memory for _lambda_.7']
    %10 = vsyncpa [#allocation3], 0
    // Predicated region
    $region2: #{_lambda_.7} parent=1 // pred_check
      _
    $region3: #{_lambda_.7} parent=1 // pred_check_branch
      %12 = sbr.rel (0) target = $region5
    $region4: #{_lambda_.7} parent=1 // pred_region
      _
    $region5: #{_lambda_.7} parent=1 // pred_fallthru
      _
    // Predicated region
    $region6: #{_lambda_.7} parent=1 // pred_check
      _
    $region7: #{_lambda_.7} parent=1 // pred_check_branch
      %14 = sbr.rel (0) target = $region9
    $region8: #{_lambda_.7} parent=1 // pred_region
      _
    $region9: #{_lambda_.7} parent=1 // pred_fallthru
      _
    // Predicated region
    $region10: #{_lambda_.7} parent=1 // pred_check
      _
    $region11: #{_lambda_.7} parent=1 // pred_check_branch
      %16 = sbr.rel (0) target = $region13
    $region12: #{_lambda_.7} parent=1 // pred_region
      %s18 = ssub.s32 8192, 8192
      %19 = vsyncadd [#allocation3], %s18
      %s20 = sshll.u32 [#allocation2], 4
      %s21 = int_to_ptr.vmem [resolvable:$true] %s20
      %26 = dma.hbm_to_vmem [thread:$0]  %s2, 8192, %s21, [#allocation3], 512, 512, 32
    $region13: #{_lambda_.7} parent=1 // pred_fallthru
      _
    // Predicated region
    $region14: #{_lambda_.7} parent=1 // pred_check
      _
    $region15: #{_lambda_.7} parent=1 // pred_check_branch
      %28 = sbr.rel (0) target = $region17
    $region16: #{_lambda_.7} parent=1 // pred_region
      _
    $region17: #{_lambda_.7} parent=1 // pred_fallthru
      _
    // Predicated region
    $region18: #{_lambda_.7} parent=1 // pred_check
      _
    $region19: #{_lambda_.7} parent=1 // pred_check_branch
      %30 = sbr.rel (0) target = $region21
    $region20: #{_lambda_.7} parent=1 // pred_region
      _
    $region21: #{_lambda_.7} parent=1 // pred_fallthru
      _
    // Predicated region
    $region22: #{_lambda_.7} parent=1 // pred_check
      _
    $region23: #{_lambda_.7} parent=1 // pred_check_branch
      %32 = sbr.rel (0) target = $region25
    $region24: #{_lambda_.7} parent=1 // pred_region
      %33 = dma.done [#allocation3], 8192
    $region25: #{_lambda_.7} parent=1 // pred_fallthru
      _
    %v35 = vld [vmem:[%s0] sm:$0xf]
    %v36 = vld [vmem:[%s0 + $0x4] sm:$0xf]
    %v37 = vld [vmem:[#allocation2] sm:$0xff]
    %v38 = vld [vmem:[#allocation2 + $0x8] sm:$0xff]
    %v39 = vld [vmem:[#allocation2 + $0x10] sm:$0xff]
    %v40 = vld [vmem:[#allocation2 + $0x18] sm:$0xff]
    %v41 = vld [vmem:[#allocation2 + $0x20] sm:$0xff]
    %v42 = vld [vmem:[#allocation2 + $0x28] sm:$0xff]
    %v43 = vld [vmem:[#allocation2 + $0x30] sm:$0xff]
    %v44 = vld [vmem:[#allocation2 + $0x38] sm:$0xff]
    %v45 = vld [vmem:[#allocation2 + $0x40] sm:$0xff]
    %v46 = vld [vmem:[#allocation2 + $0x48] sm:$0xff]
    %v47 = vld [vmem:[#allocation2 + $0x50] sm:$0xff]
    %v48 = vld [vmem:[#allocation2 + $0x58] sm:$0xff]
    %v49 = vld [vmem:[#allocation2 + $0x60] sm:$0xff]
    %v50 = vld [vmem:[#allocation2 + $0x68] sm:$0xff]
    %v51 = vld [vmem:[#allocation2 + $0x70] sm:$0xff]
    %v52 = vld [vmem:[#allocation2 + $0x78] sm:$0xff]
    %v53 = vld [vmem:[#allocation2 + $0x80] sm:$0xff]
    %v54 = vld [vmem:[#allocation2 + $0x88] sm:$0xff]
    %v55 = vld [vmem:[#allocation2 + $0x90] sm:$0xff]
    %v56 = vld [vmem:[#allocation2 + $0x98] sm:$0xff]
    %v57 = vld [vmem:[#allocation2 + $0xa0] sm:$0xff]
    %v58 = vld [vmem:[#allocation2 + $0xa8] sm:$0xff]
    %v59 = vld [vmem:[#allocation2 + $0xb0] sm:$0xff]
    %v60 = vld [vmem:[#allocation2 + $0xb8] sm:$0xff]
    %v61 = vld [vmem:[#allocation2 + $0xc0] sm:$0xff]
    %v62 = vld [vmem:[#allocation2 + $0xc8] sm:$0xff]
    %v63 = vld [vmem:[#allocation2 + $0xd0] sm:$0xff]
    %v64 = vld [vmem:[#allocation2 + $0xd8] sm:$0xff]
    %v65 = vld [vmem:[#allocation2 + $0xe0] sm:$0xff]
    %v66 = vld [vmem:[#allocation2 + $0xe8] sm:$0xff]
    %v67 = vld [vmem:[#allocation2 + $0xf0] sm:$0xff]
    %v68 = vld [vmem:[#allocation2 + $0xf8] sm:$0xff]
    %v69 = vld [vmem:[#allocation2 + $0x100] sm:$0xff]
    %v70 = vld [vmem:[#allocation2 + $0x108] sm:$0xff]
    %v71 = vld [vmem:[#allocation2 + $0x110] sm:$0xff]
    %v72 = vld [vmem:[#allocation2 + $0x118] sm:$0xff]
    %v73 = vld [vmem:[#allocation2 + $0x120] sm:$0xff]
    %v74 = vld [vmem:[#allocation2 + $0x128] sm:$0xff]
    %v75 = vld [vmem:[#allocation2 + $0x130] sm:$0xff]
    %v76 = vld [vmem:[#allocation2 + $0x138] sm:$0xff]
    %v77 = vld [vmem:[#allocation2 + $0x140] sm:$0xff]
    %v78 = vld [vmem:[#allocation2 + $0x148] sm:$0xff]
    %v79 = vld [vmem:[#allocation2 + $0x150] sm:$0xff]
    %v80 = vld [vmem:[#allocation2 + $0x158] sm:$0xff]
    %v81 = vld [vmem:[#allocation2 + $0x160] sm:$0xff]
    %v82 = vld [vmem:[#allocation2 + $0x168] sm:$0xff]
    %v83 = vld [vmem:[#allocation2 + $0x170] sm:$0xff]
    %v84 = vld [vmem:[#allocation2 + $0x178] sm:$0xff]
    %v85 = vld [vmem:[#allocation2 + $0x180] sm:$0xff]
    %v86 = vld [vmem:[#allocation2 + $0x188] sm:$0xff]
    %v87 = vld [vmem:[#allocation2 + $0x190] sm:$0xff]
    %v88 = vld [vmem:[#allocation2 + $0x198] sm:$0xff]
    %v89 = vld [vmem:[#allocation2 + $0x1a0] sm:$0xff]
    %v90 = vld [vmem:[#allocation2 + $0x1a8] sm:$0xff]
    %v91 = vld [vmem:[#allocation2 + $0x1b0] sm:$0xff]
    %v92 = vld [vmem:[#allocation2 + $0x1b8] sm:$0xff]
    %v93 = vld [vmem:[#allocation2 + $0x1c0] sm:$0xff]
    %v94 = vld [vmem:[#allocation2 + $0x1c8] sm:$0xff]
    %v95 = vld [vmem:[#allocation2 + $0x1d0] sm:$0xff]
    %v96 = vld [vmem:[#allocation2 + $0x1d8] sm:$0xff]
    %v97 = vld [vmem:[#allocation2 + $0x1e0] sm:$0xff]
    %v98 = vld [vmem:[#allocation2 + $0x1e8] sm:$0xff]
    %v99 = vld [vmem:[#allocation2 + $0x1f0] sm:$0xff]
    %v100 = vld [vmem:[#allocation2 + $0x1f8] sm:$0xff]
    %v101 = vld [vmem:[%s1] sm:$0xf]
    %v102 = vld [vmem:[%s1 + $0x4] sm:$0xf]
    %v103 = vld [vmem:[%s3] sm:$0xff]
    %v104 = vld [vmem:[%s3 + $0x8] sm:$0xff]
    %v105 = vld [vmem:[%s3 + $0x10] sm:$0xff]
    %v106 = vld [vmem:[%s3 + $0x18] sm:$0xff]
    %v107 = vld [vmem:[%s3 + $0x20] sm:$0xff]
    %v108 = vld [vmem:[%s3 + $0x28] sm:$0xff]
    %v109 = vld [vmem:[%s3 + $0x30] sm:$0xff]
    %v110 = vld [vmem:[%s3 + $0x38] sm:$0xff]
    %v111 = vld [vmem:[%s3 + $0x40] sm:$0xff]
    %v112 = vld [vmem:[%s3 + $0x48] sm:$0xff]
    %v113 = vld [vmem:[%s3 + $0x50] sm:$0xff]
    %v114 = vld [vmem:[%s3 + $0x58] sm:$0xff]
    %v115 = vld [vmem:[%s3 + $0x60] sm:$0xff]
    %v116 = vld [vmem:[%s3 + $0x68] sm:$0xff]
    %v117 = vld [vmem:[%s3 + $0x70] sm:$0xff]
    %v118 = vld [vmem:[%s3 + $0x78] sm:$0xff]
    %v119 = vld [vmem:[%s3 + $0x80] sm:$0xff]
    %v120 = vld [vmem:[%s3 + $0x88] sm:$0xff]
    %v121 = vld [vmem:[%s3 + $0x90] sm:$0xff]
    %v122 = vld [vmem:[%s3 + $0x98] sm:$0xff]
    %v123 = vld [vmem:[%s3 + $0xa0] sm:$0xff]
    %v124 = vld [vmem:[%s3 + $0xa8] sm:$0xff]
    %v125 = vld [vmem:[%s3 + $0xb0] sm:$0xff]
    %v126 = vld [vmem:[%s3 + $0xb8] sm:$0xff]
    %v127 = vld [vmem:[%s3 + $0xc0] sm:$0xff]
    %v128 = vld [vmem:[%s3 + $0xc8] sm:$0xff]
    %v129 = vld [vmem:[%s3 + $0xd0] sm:$0xff]
    %v130 = vld [vmem:[%s3 + $0xd8] sm:$0xff]
    %v131 = vld [vmem:[%s3 + $0xe0] sm:$0xff]
    %v132 = vld [vmem:[%s3 + $0xe8] sm:$0xff]
    %v133 = vld [vmem:[%s3 + $0xf0] sm:$0xff]
    %v134 = vld [vmem:[%s3 + $0xf8] sm:$0xff]
    %v135 = vld [vmem:[%s3 + $0x100] sm:$0xff]
    %v136 = vld [vmem:[%s3 + $0x108] sm:$0xff]
    %v137 = vld [vmem:[%s3 + $0x110] sm:$0xff]
    %v138 = vld [vmem:[%s3 + $0x118] sm:$0xff]
    %v139 = vld [vmem:[%s3 + $0x120] sm:$0xff]
    %v140 = vld [vmem:[%s3 + $0x128] sm:$0xff]
    %v141 = vld [vmem:[%s3 + $0x130] sm:$0xff]
    %v142 = vld [vmem:[%s3 + $0x138] sm:$0xff]
    %v143 = vld [vmem:[%s3 + $0x140] sm:$0xff]
    %v144 = vld [vmem:[%s3 + $0x148] sm:$0xff]
    %v145 = vld [vmem:[%s3 + $0x150] sm:$0xff]
    %v146 = vld [vmem:[%s3 + $0x158] sm:$0xff]
    %v147 = vld [vmem:[%s3 + $0x160] sm:$0xff]
    %v148 = vld [vmem:[%s3 + $0x168] sm:$0xff]
    %v149 = vld [vmem:[%s3 + $0x170] sm:$0xff]
    %v150 = vld [vmem:[%s3 + $0x178] sm:$0xff]
    %v151 = vld [vmem:[%s3 + $0x180] sm:$0xff]
    %v152 = vld [vmem:[%s3 + $0x188] sm:$0xff]
    %v153 = vld [vmem:[%s3 + $0x190] sm:$0xff]
    %v154 = vld [vmem:[%s3 + $0x198] sm:$0xff]
    %v155 = vld [vmem:[%s3 + $0x1a0] sm:$0xff]
    %v156 = vld [vmem:[%s3 + $0x1a8] sm:$0xff]
    %v157 = vld [vmem:[%s3 + $0x1b0] sm:$0xff]
    %v158 = vld [vmem:[%s3 + $0x1b8] sm:$0xff]
    %v159 = vld [vmem:[%s3 + $0x1c0] sm:$0xff]
    %v160 = vld [vmem:[%s3 + $0x1c8] sm:$0xff]
    %v161 = vld [vmem:[%s3 + $0x1d0] sm:$0xff]
    %v162 = vld [vmem:[%s3 + $0x1d8] sm:$0xff]
    %v163 = vld [vmem:[%s3 + $0x1e0] sm:$0xff]
    %v164 = vld [vmem:[%s3 + $0x1e8] sm:$0xff]
    %v165 = vld [vmem:[%s3 + $0x1f0] sm:$0xff]
    %v166 = vld [vmem:[%s3 + $0x1f8] sm:$0xff]
    %v169 = vunpack.c.l.b16 %v101
    %v170 = vunpack.c.l.b16 %v102
    %v171 = vpack.c.b16 %v170, %v169
    %v237 = vunpack.c.l.b16 %v103
    %v238 = vunpack.c.h.b16 %v103
    %v239 = vunpack.c.l.b16 %v104
    %v240 = vunpack.c.h.b16 %v104
    %v241 = vunpack.c.l.b16 %v105
    %v242 = vunpack.c.h.b16 %v105
    %v243 = vunpack.c.l.b16 %v106
    %v244 = vunpack.c.h.b16 %v106
    %v245 = vunpack.c.l.b16 %v107
    %v246 = vunpack.c.h.b16 %v107
    %v247 = vunpack.c.l.b16 %v108
    %v248 = vunpack.c.h.b16 %v108
    %v249 = vunpack.c.l.b16 %v109
    %v250 = vunpack.c.h.b16 %v109
    %v251 = vunpack.c.l.b16 %v110
    %v252 = vunpack.c.h.b16 %v110
    %v253 = vunpack.c.l.b16 %v111
    %v254 = vunpack.c.h.b16 %v111
    %v255 = vunpack.c.l.b16 %v112
    %v256 = vunpack.c.h.b16 %v112
    %v257 = vunpack.c.l.b16 %v113
    %v258 = vunpack.c.h.b16 %v113
    %v259 = vunpack.c.l.b16 %v114
    %v260 = vunpack.c.h.b16 %v114
    %v261 = vunpack.c.l.b16 %v115
    %v262 = vunpack.c.h.b16 %v115
    %v263 = vunpack.c.l.b16 %v116
    %v264 = vunpack.c.h.b16 %v116
    %v265 = vunpack.c.l.b16 %v117
    %v266 = vunpack.c.h.b16 %v117
    %v267 = vunpack.c.l.b16 %v118
    %v268 = vunpack.c.h.b16 %v118
    %v269 = vunpack.c.l.b16 %v119
    %v270 = vunpack.c.h.b16 %v119
    %v271 = vunpack.c.l.b16 %v120
    %v272 = vunpack.c.h.b16 %v120
    %v273 = vunpack.c.l.b16 %v121
    %v274 = vunpack.c.h.b16 %v121
    %v275 = vunpack.c.l.b16 %v122
    %v276 = vunpack.c.h.b16 %v122
    %v277 = vunpack.c.l.b16 %v123
    %v278 = vunpack.c.h.b16 %v123
    %v279 = vunpack.c.l.b16 %v124
    %v280 = vunpack.c.h.b16 %v124
    %v281 = vunpack.c.l.b16 %v125
    %v282 = vunpack.c.h.b16 %v125
    %v283 = vunpack.c.l.b16 %v126
    %v284 = vunpack.c.h.b16 %v126
    %v285 = vunpack.c.l.b16 %v127
    %v286 = vunpack.c.h.b16 %v127
    %v287 = vunpack.c.l.b16 %v128
    %v288 = vunpack.c.h.b16 %v128
    %v289 = vunpack.c.l.b16 %v129
    %v290 = vunpack.c.h.b16 %v129
    %v291 = vunpack.c.l.b16 %v130
    %v292 = vunpack.c.h.b16 %v130
    %v293 = vunpack.c.l.b16 %v131
    %v294 = vunpack.c.h.b16 %v131
    %v295 = vunpack.c.l.b16 %v132
    %v296 = vunpack.c.h.b16 %v132
    %v297 = vunpack.c.l.b16 %v133
    %v298 = vunpack.c.h.b16 %v133
    %v299 = vunpack.c.l.b16 %v134
    %v300 = vunpack.c.h.b16 %v134
    %v301 = vunpack.c.l.b16 %v135
    %v302 = vunpack.c.h.b16 %v135
    %v303 = vunpack.c.l.b16 %v136
    %v304 = vunpack.c.h.b16 %v136
    %v305 = vunpack.c.l.b16 %v137
    %v306 = vunpack.c.h.b16 %v137
    %v307 = vunpack.c.l.b16 %v138
    %v308 = vunpack.c.h.b16 %v138
    %v309 = vunpack.c.l.b16 %v139
    %v310 = vunpack.c.h.b16 %v139
    %v311 = vunpack.c.l.b16 %v140
    %v312 = vunpack.c.h.b16 %v140
    %v313 = vunpack.c.l.b16 %v141
    %v314 = vunpack.c.h.b16 %v141
    %v315 = vunpack.c.l.b16 %v142
    %v316 = vunpack.c.h.b16 %v142
    %v317 = vunpack.c.l.b16 %v143
    %v318 = vunpack.c.h.b16 %v143
    %v319 = vunpack.c.l.b16 %v144
    %v320 = vunpack.c.h.b16 %v144
    %v321 = vunpack.c.l.b16 %v145
    %v322 = vunpack.c.h.b16 %v145
    %v323 = vunpack.c.l.b16 %v146
    %v324 = vunpack.c.h.b16 %v146
    %v325 = vunpack.c.l.b16 %v147
    %v326 = vunpack.c.h.b16 %v147
    %v327 = vunpack.c.l.b16 %v148
    %v328 = vunpack.c.h.b16 %v148
    %v329 = vunpack.c.l.b16 %v149
    %v330 = vunpack.c.h.b16 %v149
    %v331 = vunpack.c.l.b16 %v150
    %v332 = vunpack.c.h.b16 %v150
    %v333 = vunpack.c.l.b16 %v151
    %v334 = vunpack.c.h.b16 %v151
    %v335 = vunpack.c.l.b16 %v152
    %v336 = vunpack.c.h.b16 %v152
    %v337 = vunpack.c.l.b16 %v153
    %v338 = vunpack.c.h.b16 %v153
    %v339 = vunpack.c.l.b16 %v154
    %v340 = vunpack.c.h.b16 %v154
    %v341 = vunpack.c.l.b16 %v155
    %v342 = vunpack.c.h.b16 %v155
    %v343 = vunpack.c.l.b16 %v156
    %v344 = vunpack.c.h.b16 %v156
    %v345 = vunpack.c.l.b16 %v157
    %v346 = vunpack.c.h.b16 %v157
    %v347 = vunpack.c.l.b16 %v158
    %v348 = vunpack.c.h.b16 %v158
    %v349 = vunpack.c.l.b16 %v159
    %v350 = vunpack.c.h.b16 %v159
    %v351 = vunpack.c.l.b16 %v160
    %v352 = vunpack.c.h.b16 %v160
    %v353 = vunpack.c.l.b16 %v161
    %v354 = vunpack.c.h.b16 %v161
    %v355 = vunpack.c.l.b16 %v162
    %v356 = vunpack.c.h.b16 %v162
    %v357 = vunpack.c.l.b16 %v163
    %v358 = vunpack.c.h.b16 %v163
    %v359 = vunpack.c.l.b16 %v164
    %v360 = vunpack.c.h.b16 %v164
    %v361 = vunpack.c.l.b16 %v165
    %v362 = vunpack.c.h.b16 %v165
    %v363 = vunpack.c.l.b16 %v166
    %v364 = vunpack.c.h.b16 %v166
    %v365 = vpack.c.b16 %v245, %v237
    %v366 = vpack.c.b16 %v246, %v238
    %v367 = vpack.c.b16 %v247, %v239
    %v368 = vpack.c.b16 %v248, %v240
    %v369 = vpack.c.b16 %v249, %v241
    %v370 = vpack.c.b16 %v250, %v242
    %v371 = vpack.c.b16 %v251, %v243
    %v372 = vpack.c.b16 %v252, %v244
    %v373 = vpack.c.b16 %v261, %v253
    %v374 = vpack.c.b16 %v262, %v254
    %v375 = vpack.c.b16 %v263, %v255
    %v376 = vpack.c.b16 %v264, %v256
    %v377 = vpack.c.b16 %v265, %v257
    %v378 = vpack.c.b16 %v266, %v258
    %v379 = vpack.c.b16 %v267, %v259
    %v380 = vpack.c.b16 %v268, %v260
    %v381 = vpack.c.b16 %v277, %v269
    %v382 = vpack.c.b16 %v278, %v270
    %v383 = vpack.c.b16 %v279, %v271
    %v384 = vpack.c.b16 %v280, %v272
    %v385 = vpack.c.b16 %v281, %v273
    %v386 = vpack.c.b16 %v282, %v274
    %v387 = vpack.c.b16 %v283, %v275
    %v388 = vpack.c.b16 %v284, %v276
    %v389 = vpack.c.b16 %v293, %v285
    %v390 = vpack.c.b16 %v294, %v286
    %v391 = vpack.c.b16 %v295, %v287
    %v392 = vpack.c.b16 %v296, %v288
    %v393 = vpack.c.b16 %v297, %v289
    %v394 = vpack.c.b16 %v298, %v290
    %v395 = vpack.c.b16 %v299, %v291
    %v396 = vpack.c.b16 %v300, %v292
    %v397 = vpack.c.b16 %v309, %v301
    %v398 = vpack.c.b16 %v310, %v302
    %v399 = vpack.c.b16 %v311, %v303
    %v400 = vpack.c.b16 %v312, %v304
    %v401 = vpack.c.b16 %v313, %v305
    %v402 = vpack.c.b16 %v314, %v306
    %v403 = vpack.c.b16 %v315, %v307
    %v404 = vpack.c.b16 %v316, %v308
    %v405 = vpack.c.b16 %v325, %v317
    %v406 = vpack.c.b16 %v326, %v318
    %v407 = vpack.c.b16 %v327, %v319
    %v408 = vpack.c.b16 %v328, %v320
    %v409 = vpack.c.b16 %v329, %v321
    %v410 = vpack.c.b16 %v330, %v322
    %v411 = vpack.c.b16 %v331, %v323
    %v412 = vpack.c.b16 %v332, %v324
    %v413 = vpack.c.b16 %v341, %v333
    %v414 = vpack.c.b16 %v342, %v334
    %v415 = vpack.c.b16 %v343, %v335
    %v416 = vpack.c.b16 %v344, %v336
    %v417 = vpack.c.b16 %v345, %v337
    %v418 = vpack.c.b16 %v346, %v338
    %v419 = vpack.c.b16 %v347, %v339
    %v420 = vpack.c.b16 %v348, %v340
    %v421 = vpack.c.b16 %v357, %v349
    %v422 = vpack.c.b16 %v358, %v350
    %v423 = vpack.c.b16 %v359, %v351
    %v424 = vpack.c.b16 %v360, %v352
    %v425 = vpack.c.b16 %v361, %v353
    %v426 = vpack.c.b16 %v362, %v354
    %v427 = vpack.c.b16 %v363, %v355
    %v428 = vpack.c.b16 %v364, %v356
    %493 = vmatprep.subr.bf16.mxu0 %v422
    %494 = vmatpush1.bf16.msra.mxu0 %v421
    %495 = vmatprep.subr.bf16.mxu0 %v414
    %496 = vmatpush1.bf16.msra.mxu0 %v413
    %497 = vmatprep.subr.bf16.mxu0 %v406
    %498 = vmatpush1.bf16.msra.mxu0 %v405
    %499 = vmatprep.subr.bf16.mxu0 %v398
    %500 = vmatpush1.bf16.msra.mxu0 %v397
    %501 = vmatprep.subr.bf16.mxu0 %v390
    %502 = vmatpush1.bf16.msra.mxu0 %v389
    %503 = vmatprep.subr.bf16.mxu0 %v382
    %504 = vmatpush1.bf16.msra.mxu0 %v381
    %505 = vmatprep.subr.bf16.mxu0 %v374
    %506 = vmatpush1.bf16.msra.mxu0 %v373
    %507 = vmatprep.subr.bf16.mxu0 %v366
    %508 = vmatpush1.bf16.msra.mxu0 %v365
    %509 = vmatprep.subr.bf16.mxu0 0
    %510 = vmatpush2.bf16.msra.mxu0 0
    %511 = vmatprep.subr.bf16.mxu0 0
    %512 = vmatpush2.bf16.msra.mxu0 0
    %513 = vmatprep.subr.bf16.mxu0 0
    %514 = vmatpush2.bf16.msra.mxu0 0
    %515 = vmatprep.subr.bf16.mxu0 0
    %516 = vmatpush2.bf16.msra.mxu0 0
    %517 = vmatprep.subr.bf16.mxu0 0
    %518 = vmatpush2.bf16.msra.mxu0 0
    %519 = vmatprep.subr.bf16.mxu0 0
    %520 = vmatpush2.bf16.msra.mxu0 0
    %521 = vmatprep.subr.bf16.mxu0 0
    %522 = vmatpush2.bf16.msra.mxu0 0
    %523 = vmatprep.subr.bf16.mxu0 0
    %524 = vmatpush2.bf16.msra.mxu0 0
    %525 = vmatprep.mubr.bf16.mxu0 0
    %526 = vmatmul.mubr.bf16.gmra.mxu0 %v171
    %v527 = vpop.f32.mrf.mxu0
    %v528 = vadd.f32 0.0, %v527
    %v529 = vpop.f32.mrf.mxu0
    %v530 = vadd.f32 0.0, %v529
    %v531 = vpop.f32.mrf.mxu0
    %v532 = vadd.f32 0.0, %v531
    %v533 = vpop.f32.mrf.mxu0
    %v534 = vadd.f32 0.0, %v533
    %535 = vdwg.mxu0
    %536 = vmatprep.subr.bf16.mxu0 %v424
    %537 = vmatpush1.bf16.msra.mxu0 %v423
    %538 = vmatprep.subr.bf16.mxu0 %v416
    %539 = vmatpush1.bf16.msra.mxu0 %v415
    %540 = vmatprep.subr.bf16.mxu0 %v408
    %541 = vmatpush1.bf16.msra.mxu0 %v407
    %542 = vmatprep.subr.bf16.mxu0 %v400
    %543 = vmatpush1.bf16.msra.mxu0 %v399
    %544 = vmatprep.subr.bf16.mxu0 %v392
    %545 = vmatpush1.bf16.msra.mxu0 %v391
    %546 = vmatprep.subr.bf16.mxu0 %v384
    %547 = vmatpush1.bf16.msra.mxu0 %v383
    %548 = vmatprep.subr.bf16.mxu0 %v376
    %549 = vmatpush1.bf16.msra.mxu0 %v375
    %550 = vmatprep.subr.bf16.mxu0 %v368
    %551 = vmatpush1.bf16.msra.mxu0 %v367
    %552 = vmatprep.subr.bf16.mxu0 0
    %553 = vmatpush2.bf16.msra.mxu0 0
    %554 = vmatprep.subr.bf16.mxu0 0
    %555 = vmatpush2.bf16.msra.mxu0 0
    %556 = vmatprep.subr.bf16.mxu0 0
    %557 = vmatpush2.bf16.msra.mxu0 0
    %558 = vmatprep.subr.bf16.mxu0 0
    %559 = vmatpush2.bf16.msra.mxu0 0
    %560 = vmatprep.subr.bf16.mxu0 0
    %561 = vmatpush2.bf16.msra.mxu0 0
    %562 = vmatprep.subr.bf16.mxu0 0
    %563 = vmatpush2.bf16.msra.mxu0 0
    %564 = vmatprep.subr.bf16.mxu0 0
    %565 = vmatpush2.bf16.msra.mxu0 0
    %566 = vmatprep.subr.bf16.mxu0 0
    %567 = vmatpush2.bf16.msra.mxu0 0
    %568 = vmatprep.mubr.bf16.mxu0 0
    %569 = vmatmul.mubr.bf16.gmra.mxu0 %v171
    %v570 = vpop.f32.mrf.mxu0
    %v571 = vadd.f32 0.0, %v570
    %v572 = vpop.f32.mrf.mxu0
    %v573 = vadd.f32 0.0, %v572
    %v574 = vpop.f32.mrf.mxu0
    %v575 = vadd.f32 0.0, %v574
    %v576 = vpop.f32.mrf.mxu0
    %v577 = vadd.f32 0.0, %v576
    %578 = vdwg.mxu0
    %579 = vmatprep.subr.bf16.mxu0 %v426
    %580 = vmatpush1.bf16.msra.mxu0 %v425
    %581 = vmatprep.subr.bf16.mxu0 %v418
    %582 = vmatpush1.bf16.msra.mxu0 %v417
    %583 = vmatprep.subr.bf16.mxu0 %v410
    %584 = vmatpush1.bf16.msra.mxu0 %v409
    %585 = vmatprep.subr.bf16.mxu0 %v402
    %586 = vmatpush1.bf16.msra.mxu0 %v401
    %587 = vmatprep.subr.bf16.mxu0 %v394
    %588 = vmatpush1.bf16.msra.mxu0 %v393
    %589 = vmatprep.subr.bf16.mxu0 %v386
    %590 = vmatpush1.bf16.msra.mxu0 %v385
    %591 = vmatprep.subr.bf16.mxu0 %v378
    %592 = vmatpush1.bf16.msra.mxu0 %v377
    %593 = vmatprep.subr.bf16.mxu0 %v370
    %594 = vmatpush1.bf16.msra.mxu0 %v369
    %595 = vmatprep.subr.bf16.mxu0 0
    %596 = vmatpush2.bf16.msra.mxu0 0
    %597 = vmatprep.subr.bf16.mxu0 0
    %598 = vmatpush2.bf16.msra.mxu0 0
    %599 = vmatprep.subr.bf16.mxu0 0
    %600 = vmatpush2.bf16.msra.mxu0 0
    %601 = vmatprep.subr.bf16.mxu0 0
    %602 = vmatpush2.bf16.msra.mxu0 0
    %603 = vmatprep.subr.bf16.mxu0 0
    %604 = vmatpush2.bf16.msra.mxu0 0
    %605 = vmatprep.subr.bf16.mxu0 0
    %606 = vmatpush2.bf16.msra.mxu0 0
    %607 = vmatprep.subr.bf16.mxu0 0
    %608 = vmatpush2.bf16.msra.mxu0 0
    %609 = vmatprep.subr.bf16.mxu0 0
    %610 = vmatpush2.bf16.msra.mxu0 0
    %611 = vmatprep.mubr.bf16.mxu0 0
    %612 = vmatmul.mubr.bf16.gmra.mxu0 %v171
    %v613 = vpop.f32.mrf.mxu0
    %v614 = vadd.f32 0.0, %v613
    %v615 = vpop.f32.mrf.mxu0
    %v616 = vadd.f32 0.0, %v615
    %v617 = vpop.f32.mrf.mxu0
    %v618 = vadd.f32 0.0, %v617
    %v619 = vpop.f32.mrf.mxu0
    %v620 = vadd.f32 0.0, %v619
    %621 = vdwg.mxu0
    %622 = vmatprep.subr.bf16.mxu0 %v428
    %623 = vmatpush1.bf16.msra.mxu0 %v427
    %624 = vmatprep.subr.bf16.mxu0 %v420
    %625 = vmatpush1.bf16.msra.mxu0 %v419
    %626 = vmatprep.subr.bf16.mxu0 %v412
    %627 = vmatpush1.bf16.msra.mxu0 %v411
    %628 = vmatprep.subr.bf16.mxu0 %v404
    %629 = vmatpush1.bf16.msra.mxu0 %v403
    %630 = vmatprep.subr.bf16.mxu0 %v396
    %631 = vmatpush1.bf16.msra.mxu0 %v395
    %632 = vmatprep.subr.bf16.mxu0 %v388
    %633 = vmatpush1.bf16.msra.mxu0 %v387
    %634 = vmatprep.subr.bf16.mxu0 %v380
    %635 = vmatpush1.bf16.msra.mxu0 %v379
    %636 = vmatprep.subr.bf16.mxu0 %v372
    %637 = vmatpush1.bf16.msra.mxu0 %v371
    %638 = vmatprep.subr.bf16.mxu0 0
    %639 = vmatpush2.bf16.msra.mxu0 0
    %640 = vmatprep.subr.bf16.mxu0 0
    %641 = vmatpush2.bf16.msra.mxu0 0
    %642 = vmatprep.subr.bf16.mxu0 0
    %643 = vmatpush2.bf16.msra.mxu0 0
    %644 = vmatprep.subr.bf16.mxu0 0
    %645 = vmatpush2.bf16.msra.mxu0 0
    %646 = vmatprep.subr.bf16.mxu0 0
    %647 = vmatpush2.bf16.msra.mxu0 0
    %648 = vmatprep.subr.bf16.mxu0 0
    %649 = vmatpush2.bf16.msra.mxu0 0
    %650 = vmatprep.subr.bf16.mxu0 0
    %651 = vmatpush2.bf16.msra.mxu0 0
    %652 = vmatprep.subr.bf16.mxu0 0
    %653 = vmatpush2.bf16.msra.mxu0 0
    %654 = vmatprep.mubr.bf16.mxu0 0
    %655 = vmatmul.mubr.bf16.gmra.mxu0 %v171
    %v656 = vpop.f32.mrf.mxu0
    %v657 = vadd.f32 0.0, %v656
    %v658 = vpop.f32.mrf.mxu0
    %v659 = vadd.f32 0.0, %v658
    %v660 = vpop.f32.mrf.mxu0
    %v661 = vadd.f32 0.0, %v660
    %v662 = vpop.f32.mrf.mxu0
    %v663 = vadd.f32 0.0, %v662
    %664 = vdwg.mxu0
    %v667 = vunpack.c.l.b16 %v35
    %v668 = vunpack.c.l.b16 %v36
    %v669 = vpack.c.b16 %v668, %v667
    %v735 = vunpack.c.l.b16 %v37
    %v736 = vunpack.c.h.b16 %v37
    %v737 = vunpack.c.l.b16 %v38
    %v738 = vunpack.c.h.b16 %v38
    %v739 = vunpack.c.l.b16 %v39
    %v740 = vunpack.c.h.b16 %v39
    %v741 = vunpack.c.l.b16 %v40
    %v742 = vunpack.c.h.b16 %v40
    %v743 = vunpack.c.l.b16 %v41
    %v744 = vunpack.c.h.b16 %v41
    %v745 = vunpack.c.l.b16 %v42
    %v746 = vunpack.c.h.b16 %v42
    %v747 = vunpack.c.l.b16 %v43
    %v748 = vunpack.c.h.b16 %v43
    %v749 = vunpack.c.l.b16 %v44
    %v750 = vunpack.c.h.b16 %v44
    %v751 = vunpack.c.l.b16 %v45
    %v752 = vunpack.c.h.b16 %v45
    %v753 = vunpack.c.l.b16 %v46
    %v754 = vunpack.c.h.b16 %v46
    %v755 = vunpack.c.l.b16 %v47
    %v756 = vunpack.c.h.b16 %v47
    %v757 = vunpack.c.l.b16 %v48
    %v758 = vunpack.c.h.b16 %v48
    %v759 = vunpack.c.l.b16 %v49
    %v760 = vunpack.c.h.b16 %v49
    %v761 = vunpack.c.l.b16 %v50
    %v762 = vunpack.c.h.b16 %v50
    %v763 = vunpack.c.l.b16 %v51
    %v764 = vunpack.c.h.b16 %v51
    %v765 = vunpack.c.l.b16 %v52
    %v766 = vunpack.c.h.b16 %v52
    %v767 = vunpack.c.l.b16 %v53
    %v768 = vunpack.c.h.b16 %v53
    %v769 = vunpack.c.l.b16 %v54
    %v770 = vunpack.c.h.b16 %v54
    %v771 = vunpack.c.l.b16 %v55
    %v772 = vunpack.c.h.b16 %v55
    %v773 = vunpack.c.l.b16 %v56
    %v774 = vunpack.c.h.b16 %v56
    %v775 = vunpack.c.l.b16 %v57
    %v776 = vunpack.c.h.b16 %v57
    %v777 = vunpack.c.l.b16 %v58
    %v778 = vunpack.c.h.b16 %v58
    %v779 = vunpack.c.l.b16 %v59
    %v780 = vunpack.c.h.b16 %v59
    %v781 = vunpack.c.l.b16 %v60
    %v782 = vunpack.c.h.b16 %v60
    %v783 = vunpack.c.l.b16 %v61
    %v784 = vunpack.c.h.b16 %v61
    %v785 = vunpack.c.l.b16 %v62
    %v786 = vunpack.c.h.b16 %v62
    %v787 = vunpack.c.l.b16 %v63
    %v788 = vunpack.c.h.b16 %v63
    %v789 = vunpack.c.l.b16 %v64
    %v790 = vunpack.c.h.b16 %v64
    %v791 = vunpack.c.l.b16 %v65
    %v792 = vunpack.c.h.b16 %v65
    %v793 = vunpack.c.l.b16 %v66
    %v794 = vunpack.c.h.b16 %v66
    %v795 = vunpack.c.l.b16 %v67
    %v796 = vunpack.c.h.b16 %v67
    %v797 = vunpack.c.l.b16 %v68
    %v798 = vunpack.c.h.b16 %v68
    %v799 = vunpack.c.l.b16 %v69
    %v800 = vunpack.c.h.b16 %v69
    %v801 = vunpack.c.l.b16 %v70
    %v802 = vunpack.c.h.b16 %v70
    %v803 = vunpack.c.l.b16 %v71
    %v804 = vunpack.c.h.b16 %v71
    %v805 = vunpack.c.l.b16 %v72
    %v806 = vunpack.c.h.b16 %v72
    %v807 = vunpack.c.l.b16 %v73
    %v808 = vunpack.c.h.b16 %v73
    %v809 = vunpack.c.l.b16 %v74
    %v810 = vunpack.c.h.b16 %v74
    %v811 = vunpack.c.l.b16 %v75
    %v812 = vunpack.c.h.b16 %v75
    %v813 = vunpack.c.l.b16 %v76
    %v814 = vunpack.c.h.b16 %v76
    %v815 = vunpack.c.l.b16 %v77
    %v816 = vunpack.c.h.b16 %v77
    %v817 = vunpack.c.l.b16 %v78
    %v818 = vunpack.c.h.b16 %v78
    %v819 = vunpack.c.l.b16 %v79
    %v820 = vunpack.c.h.b16 %v79
    %v821 = vunpack.c.l.b16 %v80
    %v822 = vunpack.c.h.b16 %v80
    %v823 = vunpack.c.l.b16 %v81
    %v824 = vunpack.c.h.b16 %v81
    %v825 = vunpack.c.l.b16 %v82
    %v826 = vunpack.c.h.b16 %v82
    %v827 = vunpack.c.l.b16 %v83
    %v828 = vunpack.c.h.b16 %v83
    %v829 = vunpack.c.l.b16 %v84
    %v830 = vunpack.c.h.b16 %v84
    %v831 = vunpack.c.l.b16 %v85
    %v832 = vunpack.c.h.b16 %v85
    %v833 = vunpack.c.l.b16 %v86
    %v834 = vunpack.c.h.b16 %v86
    %v835 = vunpack.c.l.b16 %v87
    %v836 = vunpack.c.h.b16 %v87
    %v837 = vunpack.c.l.b16 %v88
    %v838 = vunpack.c.h.b16 %v88
    %v839 = vunpack.c.l.b16 %v89
    %v840 = vunpack.c.h.b16 %v89
    %v841 = vunpack.c.l.b16 %v90
    %v842 = vunpack.c.h.b16 %v90
    %v843 = vunpack.c.l.b16 %v91
    %v844 = vunpack.c.h.b16 %v91
    %v845 = vunpack.c.l.b16 %v92
    %v846 = vunpack.c.h.b16 %v92
    %v847 = vunpack.c.l.b16 %v93
    %v848 = vunpack.c.h.b16 %v93
    %v849 = vunpack.c.l.b16 %v94
    %v850 = vunpack.c.h.b16 %v94
    %v851 = vunpack.c.l.b16 %v95
    %v852 = vunpack.c.h.b16 %v95
    %v853 = vunpack.c.l.b16 %v96
    %v854 = vunpack.c.h.b16 %v96
    %v855 = vunpack.c.l.b16 %v97
    %v856 = vunpack.c.h.b16 %v97
    %v857 = vunpack.c.l.b16 %v98
    %v858 = vunpack.c.h.b16 %v98
    %v859 = vunpack.c.l.b16 %v99
    %v860 = vunpack.c.h.b16 %v99
    %v861 = vunpack.c.l.b16 %v100
    %v862 = vunpack.c.h.b16 %v100
    %v863 = vpack.c.b16 %v743, %v735
    %v864 = vpack.c.b16 %v744, %v736
    %v865 = vpack.c.b16 %v745, %v737
    %v866 = vpack.c.b16 %v746, %v738
    %v867 = vpack.c.b16 %v747, %v739
    %v868 = vpack.c.b16 %v748, %v740
    %v869 = vpack.c.b16 %v749, %v741
    %v870 = vpack.c.b16 %v750, %v742
    %v871 = vpack.c.b16 %v759, %v751
    %v872 = vpack.c.b16 %v760, %v752
    %v873 = vpack.c.b16 %v761, %v753
    %v874 = vpack.c.b16 %v762, %v754
    %v875 = vpack.c.b16 %v763, %v755
    %v876 = vpack.c.b16 %v764, %v756
    %v877 = vpack.c.b16 %v765, %v757
    %v878 = vpack.c.b16 %v766, %v758
    %v879 = vpack.c.b16 %v775, %v767
    %v880 = vpack.c.b16 %v776, %v768
    %v881 = vpack.c.b16 %v777, %v769
    %v882 = vpack.c.b16 %v778, %v770
    %v883 = vpack.c.b16 %v779, %v771
    %v884 = vpack.c.b16 %v780, %v772
    %v885 = vpack.c.b16 %v781, %v773
    %v886 = vpack.c.b16 %v782, %v774
    %v887 = vpack.c.b16 %v791, %v783
    %v888 = vpack.c.b16 %v792, %v784
    %v889 = vpack.c.b16 %v793, %v785
    %v890 = vpack.c.b16 %v794, %v786
    %v891 = vpack.c.b16 %v795, %v787
    %v892 = vpack.c.b16 %v796, %v788
    %v893 = vpack.c.b16 %v797, %v789
    %v894 = vpack.c.b16 %v798, %v790
    %v895 = vpack.c.b16 %v807, %v799
    %v896 = vpack.c.b16 %v808, %v800
    %v897 = vpack.c.b16 %v809, %v801
    %v898 = vpack.c.b16 %v810, %v802
    %v899 = vpack.c.b16 %v811, %v803
    %v900 = vpack.c.b16 %v812, %v804
    %v901 = vpack.c.b16 %v813, %v805
    %v902 = vpack.c.b16 %v814, %v806
    %v903 = vpack.c.b16 %v823, %v815
    %v904 = vpack.c.b16 %v824, %v816
    %v905 = vpack.c.b16 %v825, %v817
    %v906 = vpack.c.b16 %v826, %v818
    %v907 = vpack.c.b16 %v827, %v819
    %v908 = vpack.c.b16 %v828, %v820
    %v909 = vpack.c.b16 %v829, %v821
    %v910 = vpack.c.b16 %v830, %v822
    %v911 = vpack.c.b16 %v839, %v831
    %v912 = vpack.c.b16 %v840, %v832
    %v913 = vpack.c.b16 %v841, %v833
    %v914 = vpack.c.b16 %v842, %v834
    %v915 = vpack.c.b16 %v843, %v835
    %v916 = vpack.c.b16 %v844, %v836
    %v917 = vpack.c.b16 %v845, %v837
    %v918 = vpack.c.b16 %v846, %v838
    %v919 = vpack.c.b16 %v855, %v847
    %v920 = vpack.c.b16 %v856, %v848
    %v921 = vpack.c.b16 %v857, %v849
    %v922 = vpack.c.b16 %v858, %v850
    %v923 = vpack.c.b16 %v859, %v851
    %v924 = vpack.c.b16 %v860, %v852
    %v925 = vpack.c.b16 %v861, %v853
    %v926 = vpack.c.b16 %v862, %v854
    %991 = vmatprep.subr.bf16.mxu0 %v920
    %992 = vmatpush1.bf16.msra.mxu0 %v919
    %993 = vmatprep.subr.bf16.mxu0 %v912
    %994 = vmatpush1.bf16.msra.mxu0 %v911
    %995 = vmatprep.subr.bf16.mxu0 %v904
    %996 = vmatpush1.bf16.msra.mxu0 %v903
    %997 = vmatprep.subr.bf16.mxu0 %v896
    %998 = vmatpush1.bf16.msra.mxu0 %v895
    %999 = vmatprep.subr.bf16.mxu0 %v888
    %1000 = vmatpush1.bf16.msra.mxu0 %v887
    %1001 = vmatprep.subr.bf16.mxu0 %v880
    %1002 = vmatpush1.bf16.msra.mxu0 %v879
    %1003 = vmatprep.subr.bf16.mxu0 %v872
    %1004 = vmatpush1.bf16.msra.mxu0 %v871
    %1005 = vmatprep.subr.bf16.mxu0 %v864
    %1006 = vmatpush1.bf16.msra.mxu0 %v863
    %1007 = vmatprep.subr.bf16.mxu0 0
    %1008 = vmatpush2.bf16.msra.mxu0 0
    %1009 = vmatprep.subr.bf16.mxu0 0
    %1010 = vmatpush2.bf16.msra.mxu0 0
    %1011 = vmatprep.subr.bf16.mxu0 0
    %1012 = vmatpush2.bf16.msra.mxu0 0
    %1013 = vmatprep.subr.bf16.mxu0 0
    %1014 = vmatpush2.bf16.msra.mxu0 0
    %1015 = vmatprep.subr.bf16.mxu0 0
    %1016 = vmatpush2.bf16.msra.mxu0 0
    %1017 = vmatprep.subr.bf16.mxu0 0
    %1018 = vmatpush2.bf16.msra.mxu0 0
    %1019 = vmatprep.subr.bf16.mxu0 0
    %1020 = vmatpush2.bf16.msra.mxu0 0
    %1021 = vmatprep.subr.bf16.mxu0 0
    %1022 = vmatpush2.bf16.msra.mxu0 0
    %1023 = vmatprep.mubr.bf16.mxu0 0
    %1024 = vmatmul.mubr.bf16.gmra.mxu0 %v669
    %v1025 = vpop.f32.mrf.mxu0
    %v1026 = vadd.f32 %v528, %v1025
    %v1027 = vpop.f32.mrf.mxu0
    %v1028 = vadd.f32 %v530, %v1027
    %v1029 = vpop.f32.mrf.mxu0
    %v1030 = vadd.f32 %v532, %v1029
    %v1031 = vpop.f32.mrf.mxu0
    %v1032 = vadd.f32 %v534, %v1031
    %1033 = vdwg.mxu0
    %1034 = vmatprep.subr.bf16.mxu0 %v922
    %1035 = vmatpush1.bf16.msra.mxu0 %v921
    %1036 = vmatprep.subr.bf16.mxu0 %v914
    %1037 = vmatpush1.bf16.msra.mxu0 %v913
    %1038 = vmatprep.subr.bf16.mxu0 %v906
    %1039 = vmatpush1.bf16.msra.mxu0 %v905
    %1040 = vmatprep.subr.bf16.mxu0 %v898
    %1041 = vmatpush1.bf16.msra.mxu0 %v897
    %1042 = vmatprep.subr.bf16.mxu0 %v890
    %1043 = vmatpush1.bf16.msra.mxu0 %v889
    %1044 = vmatprep.subr.bf16.mxu0 %v882
    %1045 = vmatpush1.bf16.msra.mxu0 %v881
    %1046 = vmatprep.subr.bf16.mxu0 %v874
    %1047 = vmatpush1.bf16.msra.mxu0 %v873
    %1048 = vmatprep.subr.bf16.mxu0 %v866
    %1049 = vmatpush1.bf16.msra.mxu0 %v865
    %1050 = vmatprep.subr.bf16.mxu0 0
    %1051 = vmatpush2.bf16.msra.mxu0 0
    %1052 = vmatprep.subr.bf16.mxu0 0
    %1053 = vmatpush2.bf16.msra.mxu0 0
    %1054 = vmatprep.subr.bf16.mxu0 0
    %1055 = vmatpush2.bf16.msra.mxu0 0
    %1056 = vmatprep.subr.bf16.mxu0 0
    %1057 = vmatpush2.bf16.msra.mxu0 0
    %1058 = vmatprep.subr.bf16.mxu0 0
    %1059 = vmatpush2.bf16.msra.mxu0 0
    %1060 = vmatprep.subr.bf16.mxu0 0
    %1061 = vmatpush2.bf16.msra.mxu0 0
    %1062 = vmatprep.subr.bf16.mxu0 0
    %1063 = vmatpush2.bf16.msra.mxu0 0
    %1064 = vmatprep.subr.bf16.mxu0 0
    %1065 = vmatpush2.bf16.msra.mxu0 0
    %1066 = vmatprep.mubr.bf16.mxu0 0
    %1067 = vmatmul.mubr.bf16.gmra.mxu0 %v669
    %v1068 = vpop.f32.mrf.mxu0
    %v1069 = vadd.f32 %v571, %v1068
    %v1070 = vpop.f32.mrf.mxu0
    %v1071 = vadd.f32 %v573, %v1070
    %v1072 = vpop.f32.mrf.mxu0
    %v1073 = vadd.f32 %v575, %v1072
    %v1074 = vpop.f32.mrf.mxu0
    %v1075 = vadd.f32 %v577, %v1074
    %1076 = vdwg.mxu0
    %1077 = vmatprep.subr.bf16.mxu0 %v924
    %1078 = vmatpush1.bf16.msra.mxu0 %v923
    %1079 = vmatprep.subr.bf16.mxu0 %v916
    %1080 = vmatpush1.bf16.msra.mxu0 %v915
    %1081 = vmatprep.subr.bf16.mxu0 %v908
    %1082 = vmatpush1.bf16.msra.mxu0 %v907
    %1083 = vmatprep.subr.bf16.mxu0 %v900
    %1084 = vmatpush1.bf16.msra.mxu0 %v899
    %1085 = vmatprep.subr.bf16.mxu0 %v892
    %1086 = vmatpush1.bf16.msra.mxu0 %v891
    %1087 = vmatprep.subr.bf16.mxu0 %v884
    %1088 = vmatpush1.bf16.msra.mxu0 %v883
    %1089 = vmatprep.subr.bf16.mxu0 %v876
    %1090 = vmatpush1.bf16.msra.mxu0 %v875
    %1091 = vmatprep.subr.bf16.mxu0 %v868
    %1092 = vmatpush1.bf16.msra.mxu0 %v867
    %1093 = vmatprep.subr.bf16.mxu0 0
    %1094 = vmatpush2.bf16.msra.mxu0 0
    %1095 = vmatprep.subr.bf16.mxu0 0
    %1096 = vmatpush2.bf16.msra.mxu0 0
    %1097 = vmatprep.subr.bf16.mxu0 0
    %1098 = vmatpush2.bf16.msra.mxu0 0
    %1099 = vmatprep.subr.bf16.mxu0 0
    %1100 = vmatpush2.bf16.msra.mxu0 0
    %1101 = vmatprep.subr.bf16.mxu0 0
    %1102 = vmatpush2.bf16.msra.mxu0 0
    %1103 = vmatprep.subr.bf16.mxu0 0
    %1104 = vmatpush2.bf16.msra.mxu0 0
    %1105 = vmatprep.subr.bf16.mxu0 0
    %1106 = vmatpush2.bf16.msra.mxu0 0
    %1107 = vmatprep.subr.bf16.mxu0 0
    %1108 = vmatpush2.bf16.msra.mxu0 0
    %1109 = vmatprep.mubr.bf16.mxu0 0
    %1110 = vmatmul.mubr.bf16.gmra.mxu0 %v669
    %v1111 = vpop.f32.mrf.mxu0
    %v1112 = vadd.f32 %v614, %v1111
    %v1113 = vpop.f32.mrf.mxu0
    %v1114 = vadd.f32 %v616, %v1113
    %v1115 = vpop.f32.mrf.mxu0
    %v1116 = vadd.f32 %v618, %v1115
    %v1117 = vpop.f32.mrf.mxu0
    %v1118 = vadd.f32 %v620, %v1117
    %1119 = vdwg.mxu0
    %1120 = vmatprep.subr.bf16.mxu0 %v926
    %1121 = vmatpush1.bf16.msra.mxu0 %v925
    %1122 = vmatprep.subr.bf16.mxu0 %v918
    %1123 = vmatpush1.bf16.msra.mxu0 %v917
    %1124 = vmatprep.subr.bf16.mxu0 %v910
    %1125 = vmatpush1.bf16.msra.mxu0 %v909
    %1126 = vmatprep.subr.bf16.mxu0 %v902
    %1127 = vmatpush1.bf16.msra.mxu0 %v901
    %1128 = vmatprep.subr.bf16.mxu0 %v894
    %1129 = vmatpush1.bf16.msra.mxu0 %v893
    %1130 = vmatprep.subr.bf16.mxu0 %v886
    %1131 = vmatpush1.bf16.msra.mxu0 %v885
    %1132 = vmatprep.subr.bf16.mxu0 %v878
    %1133 = vmatpush1.bf16.msra.mxu0 %v877
    %1134 = vmatprep.subr.bf16.mxu0 %v870
    %1135 = vmatpush1.bf16.msra.mxu0 %v869
    %1136 = vmatprep.subr.bf16.mxu0 0
    %1137 = vmatpush2.bf16.msra.mxu0 0
    %1138 = vmatprep.subr.bf16.mxu0 0
    %1139 = vmatpush2.bf16.msra.mxu0 0
    %1140 = vmatprep.subr.bf16.mxu0 0
    %1141 = vmatpush2.bf16.msra.mxu0 0
    %1142 = vmatprep.subr.bf16.mxu0 0
    %1143 = vmatpush2.bf16.msra.mxu0 0
    %1144 = vmatprep.subr.bf16.mxu0 0
    %1145 = vmatpush2.bf16.msra.mxu0 0
    %1146 = vmatprep.subr.bf16.mxu0 0
    %1147 = vmatpush2.bf16.msra.mxu0 0
    %1148 = vmatprep.subr.bf16.mxu0 0
    %1149 = vmatpush2.bf16.msra.mxu0 0
    %1150 = vmatprep.subr.bf16.mxu0 0
    %1151 = vmatpush2.bf16.msra.mxu0 0
    %1152 = vmatprep.mubr.bf16.mxu0 0
    %1153 = vmatmul.mubr.bf16.gmra.mxu0 %v669
    %v1154 = vpop.f32.mrf.mxu0
    %v1155 = vadd.f32 %v657, %v1154
    %v1156 = vpop.f32.mrf.mxu0
    %v1157 = vadd.f32 %v659, %v1156
    %v1158 = vpop.f32.mrf.mxu0
    %v1159 = vadd.f32 %v661, %v1158
    %v1160 = vpop.f32.mrf.mxu0
    %v1161 = vadd.f32 %v663, %v1160
    %1162 = vdwg.mxu0
    %v1163 = vld [vmem:[%s4] sm:$0xff]
    %v1165 = vlaneseq
    %v1166 = vshrl.u32 %v1165, 7
    %v1167 = vsub.s32 0, %v1166
    %v1168 = vrot.slane %v1163, %v1167
    %v1169 = vlaneseq
    %v1170 = vshrl.u32 %v1169, 7
    %v1171 = vsub.s32 1, %v1170
    %v1172 = vrot.slane %v1163, %v1171
    %v1173 = vlaneseq
    %v1174 = vshrl.u32 %v1173, 7
    %v1175 = vsub.s32 2, %v1174
    %v1176 = vrot.slane %v1163, %v1175
    %v1177 = vlaneseq
    %v1178 = vshrl.u32 %v1177, 7
    %v1179 = vsub.s32 3, %v1178
    %v1180 = vrot.slane %v1163, %v1179
    %v1181 = vlaneseq
    %v1182 = vshrl.u32 %v1181, 7
    %v1183 = vsub.s32 4, %v1182
    %v1184 = vrot.slane %v1163, %v1183
    %v1185 = vlaneseq
    %v1186 = vshrl.u32 %v1185, 7
    %v1187 = vsub.s32 5, %v1186
    %v1188 = vrot.slane %v1163, %v1187
    %v1189 = vlaneseq
    %v1190 = vshrl.u32 %v1189, 7
    %v1191 = vsub.s32 6, %v1190
    %v1192 = vrot.slane %v1163, %v1191
    %v1193 = vlaneseq
    %v1194 = vshrl.u32 %v1193, 7
    %v1195 = vsub.s32 7, %v1194
    %v1196 = vrot.slane %v1163, %v1195
    %v1205 = vadd.f32 %v1026, %v1168
    %v1206 = vadd.f32 %v1028, %v1172
    %v1207 = vadd.f32 %v1069, %v1176
    %v1208 = vadd.f32 %v1071, %v1180
    %v1209 = vadd.f32 %v1112, %v1184
    %v1210 = vadd.f32 %v1114, %v1188
    %v1211 = vadd.f32 %v1155, %v1192
    %v1212 = vadd.f32 %v1157, %v1196
    %v1213 = vadd.f32 %v1030, %v1168
    %v1214 = vadd.f32 %v1032, %v1172
    %v1215 = vadd.f32 %v1073, %v1176
    %v1216 = vadd.f32 %v1075, %v1180
    %v1217 = vadd.f32 %v1116, %v1184
    %v1218 = vadd.f32 %v1118, %v1188
    %v1219 = vadd.f32 %v1159, %v1192
    %v1220 = vadd.f32 %v1161, %v1196
    %v1221 = vpack.c.bf16 %v1213, %v1205
    %v1222 = vpack.c.bf16 %v1214, %v1206
    %v1223 = vpack.c.bf16 %v1215, %v1207
    %v1224 = vpack.c.bf16 %v1216, %v1208
    %v1225 = vpack.c.bf16 %v1217, %v1209
    %v1226 = vpack.c.bf16 %v1218, %v1210
    %v1227 = vpack.c.bf16 %v1219, %v1211
    %v1228 = vpack.c.bf16 %v1220, %v1212
    %v1237 = vunpack.c.l.b16 %v1221
    %v1238 = vunpack.c.l.b16 %v1222
    %v1239 = vunpack.c.l.b16 %v1223
    %v1240 = vunpack.c.l.b16 %v1224
    %v1241 = vunpack.c.l.b16 %v1225
    %v1242 = vunpack.c.l.b16 %v1226
    %v1243 = vunpack.c.l.b16 %v1227
    %v1244 = vunpack.c.l.b16 %v1228
    %v1245 = vunpack.c.h.b16 %v1221
    %v1246 = vunpack.c.h.b16 %v1222
    %v1247 = vunpack.c.h.b16 %v1223
    %v1248 = vunpack.c.h.b16 %v1224
    %v1249 = vunpack.c.h.b16 %v1225
    %v1250 = vunpack.c.h.b16 %v1226
    %v1251 = vunpack.c.h.b16 %v1227
    %v1252 = vunpack.c.h.b16 %v1228
    %v1253 = vpack.c.b16 %v1238, %v1237
    %v1254 = vpack.c.b16 %v1240, %v1239
    %v1255 = vpack.c.b16 %v1242, %v1241
    %v1256 = vpack.c.b16 %v1244, %v1243
    %v1257 = vpack.c.b16 %v1246, %v1245
    %v1258 = vpack.c.b16 %v1248, %v1247
    %v1259 = vpack.c.b16 %v1250, %v1249
    %v1260 = vpack.c.b16 %v1252, %v1251
    %1269 = vst [vmem:[%s5] sm:$0xff] %v1253
    %1270 = vst [vmem:[%s5 + $0x8] sm:$0xff] %v1254
    %1271 = vst [vmem:[%s5 + $0x10] sm:$0xff] %v1255
    %1272 = vst [vmem:[%s5 + $0x18] sm:$0xff] %v1256
    %1273 = vst [vmem:[%s5 + $0x20] sm:$0xff] %v1257
    %1274 = vst [vmem:[%s5 + $0x28] sm:$0xff] %v1258
    %1275 = vst [vmem:[%s5 + $0x30] sm:$0xff] %v1259
    %1276 = vst [vmem:[%s5 + $0x38] sm:$0xff] %v1260
    // Predicated region
    $region26: #{_lambda_.7} parent=1 // pred_check
      _
    $region27: #{_lambda_.7} parent=1 // pred_check_branch
      %1278 = sbr.rel (0) target = $region29
    $region28: #{_lambda_.7} parent=1 // pred_region
      _
    $region29: #{_lambda_.7} parent=1 // pred_fallthru
      _
    // Predicated region
    $region30: #{_lambda_.7} parent=1 // pred_check
      _
    $region31: #{_lambda_.7} parent=1 // pred_check_branch
      %1280 = sbr.rel (0) target = $region33
    $region32: #{_lambda_.7} parent=1 // pred_region
      _
    $region33: #{_lambda_.7} parent=1 // pred_fallthru
      _
    %1281 = vsyncpa [#allocation3], 1

// kernel: _lambda_.9
$region0: #{_lambda_.9}
  #allocation0 [shape = 'u32[]', space=smem, size = 0x4, offset = 0x4, fixed_abs, tag = 'smem constant byte address 0x4 - core index']
  #allocation1 [shape = 'u32[144,128]{1,0:T(1,128)}', space=vmem, size = 0x12000, scoped, tag = 'internal scratch']
  %s0 = inlined_call_operand.vmem [shape: bf16[16,128], index: 0, kind: input, shape index: {}]
  %s1 = inlined_call_operand.vmem [shape: bf16[16,128], index: 1, kind: input, shape index: {}]
  %s2 = inlined_call_operand.vmem [shape: bf16[128,128], index: 2, kind: input, shape index: {}]
  %s3 = inlined_call_operand.vmem [shape: bf16[128,128], index: 3, kind: input, shape index: {}]
  %s4 = inlined_call_operand.vmem [shape: f32[1,128], index: 4, kind: input, shape index: {}]
  %s5 = inlined_call_operand.vmem [shape: f32[16,128], index: 5, kind: output, shape index: {}]
  %s6 = sld [smem:[#allocation0]]
  $region30: #{_lambda_.9} parent=0
    _
  %s8 = ssub.s32 1, %s6
  %s9 = scalar_select 0, %s8, %s6
  // Predicated region
  $region2: #{_lambda_.9} parent=0 // pred_check
    _
  $region3: #{_lambda_.9} parent=0 // pred_check_branch
    %11 = sbr.rel (0) target = $region5
  $region4: #{_lambda_.9} parent=0 // pred_region
    _
  $region5: #{_lambda_.9} parent=0 // pred_fallthru
    _
  // Predicated region
  $region6: #{_lambda_.9} parent=0 // pred_check
    _
  $region7: #{_lambda_.9} parent=0 // pred_check_branch
    %13 = sbr.rel (0) target = $region9
  $region8: #{_lambda_.9} parent=0 // pred_region
    _
  $region9: #{_lambda_.9} parent=0 // pred_fallthru
    _
  // Predicated region
  $region10: #{_lambda_.9} parent=0 // pred_check
    _
  $region11: #{_lambda_.9} parent=0 // pred_check_branch
    %15 = sbr.rel (0) target = $region13
  $region12: #{_lambda_.9} parent=0 // pred_region
    _
  $region13: #{_lambda_.9} parent=0 // pred_fallthru
    _
  // Predicated region
  $region14: #{_lambda_.9} parent=0 // pred_check
    _
  $region15: #{_lambda_.9} parent=0 // pred_check_branch
    %17 = sbr.rel (0) target = $region17
  $region16: #{_lambda_.9} parent=0 // pred_region
    _
  $region17: #{_lambda_.9} parent=0 // pred_fallthru
    _
  // Predicated region
  $region18: #{_lambda_.9} parent=0 // pred_check
    _
  $region19: #{_lambda_.9} parent=0 // pred_check_branch
    %19 = sbr.rel (0) target = $region21
  $region20: #{_lambda_.9} parent=0 // pred_region
    _
  $region21: #{_lambda_.9} parent=0 // pred_fallthru
    _
  %v21 = vld [vmem:[%s0] sm:$0xf]
  %v22 = vld [vmem:[%s0 + $0x4] sm:$0xf]
  %v23 = vld [vmem:[%s2] sm:$0xf]
  %v24 = vld [vmem:[%s2 + $0x4] sm:$0xf]
  %v25 = vld [vmem:[%s2 + $0x8] sm:$0xf]
  %v26 = vld [vmem:[%s2 + $0xc] sm:$0xf]
  %v27 = vld [vmem:[%s2 + $0x10] sm:$0xf]
  %v28 = vld [vmem:[%s2 + $0x14] sm:$0xf]
  %v29 = vld [vmem:[%s2 + $0x18] sm:$0xf]
  %v30 = vld [vmem:[%s2 + $0x1c] sm:$0xf]
  %v31 = vld [vmem:[%s2 + $0x20] sm:$0xf]
  %v32 = vld [vmem:[%s2 + $0x24] sm:$0xf]
  %v33 = vld [vmem:[%s2 + $0x28] sm:$0xf]
  %v34 = vld [vmem:[%s2 + $0x2c] sm:$0xf]
  %v35 = vld [vmem:[%s2 + $0x30] sm:$0xf]
  %v36 = vld [vmem:[%s2 + $0x34] sm:$0xf]
  %v37 = vld [vmem:[%s2 + $0x38] sm:$0xf]
  %v38 = vld [vmem:[%s2 + $0x3c] sm:$0xf]
  %v39 = vld [vmem:[%s1] sm:$0xf]
  %v40 = vld [vmem:[%s1 + $0x4] sm:$0xf]
  %v41 = vld [vmem:[%s3] sm:$0xf]
  %v42 = vld [vmem:[%s3 + $0x4] sm:$0xf]
  %v43 = vld [vmem:[%s3 + $0x8] sm:$0xf]
  %v44 = vld [vmem:[%s3 + $0xc] sm:$0xf]
  %v45 = vld [vmem:[%s3 + $0x10] sm:$0xf]
  %v46 = vld [vmem:[%s3 + $0x14] sm:$0xf]
  %v47 = vld [vmem:[%s3 + $0x18] sm:$0xf]
  %v48 = vld [vmem:[%s3 + $0x1c] sm:$0xf]
  %v49 = vld [vmem:[%s3 + $0x20] sm:$0xf]
  %v50 = vld [vmem:[%s3 + $0x24] sm:$0xf]
  %v51 = vld [vmem:[%s3 + $0x28] sm:$0xf]
  %v52 = vld [vmem:[%s3 + $0x2c] sm:$0xf]
  %v53 = vld [vmem:[%s3 + $0x30] sm:$0xf]
  %v54 = vld [vmem:[%s3 + $0x34] sm:$0xf]
  %v55 = vld [vmem:[%s3 + $0x38] sm:$0xf]
  %v56 = vld [vmem:[%s3 + $0x3c] sm:$0xf]
  %v59 = vunpack.c.l.b16 %v39
  %v60 = vunpack.c.l.b16 %v40
  %v61 = vpack.c.b16 %v60, %v59
  %v79 = vunpack.c.l.b16 %v41
  %v80 = vunpack.c.l.b16 %v42
  %v81 = vunpack.c.l.b16 %v43
  %v82 = vunpack.c.l.b16 %v44
  %v83 = vunpack.c.l.b16 %v45
  %v84 = vunpack.c.l.b16 %v46
  %v85 = vunpack.c.l.b16 %v47
  %v86 = vunpack.c.l.b16 %v48
  %v87 = vunpack.c.l.b16 %v49
  %v88 = vunpack.c.l.b16 %v50
  %v89 = vunpack.c.l.b16 %v51
  %v90 = vunpack.c.l.b16 %v52
  %v91 = vunpack.c.l.b16 %v53
  %v92 = vunpack.c.l.b16 %v54
  %v93 = vunpack.c.l.b16 %v55
  %v94 = vunpack.c.l.b16 %v56
  %v95 = vpack.c.b16 %v80, %v79
  %v96 = vpack.c.b16 %v82, %v81
  %v97 = vpack.c.b16 %v84, %v83
  %v98 = vpack.c.b16 %v86, %v85
  %v99 = vpack.c.b16 %v88, %v87
  %v100 = vpack.c.b16 %v90, %v89
  %v101 = vpack.c.b16 %v92, %v91
  %v102 = vpack.c.b16 %v94, %v93
  %111 = vmatprep.subr.bf16.mxu0 0
  %112 = vmatpush1.bf16.msra.mxu0 %v102
  %113 = vmatprep.subr.bf16.mxu0 0
  %114 = vmatpush1.bf16.msra.mxu0 %v101
  %115 = vmatprep.subr.bf16.mxu0 0
  %116 = vmatpush1.bf16.msra.mxu0 %v100
  %117 = vmatprep.subr.bf16.mxu0 0
  %118 = vmatpush1.bf16.msra.mxu0 %v99
  %119 = vmatprep.subr.bf16.mxu0 0
  %120 = vmatpush1.bf16.msra.mxu0 %v98
  %121 = vmatprep.subr.bf16.mxu0 0
  %122 = vmatpush1.bf16.msra.mxu0 %v97
  %123 = vmatprep.subr.bf16.mxu0 0
  %124 = vmatpush1.bf16.msra.mxu0 %v96
  %125 = vmatprep.subr.bf16.mxu0 0
  %126 = vmatpush1.bf16.msra.mxu0 %v95
  %127 = vmatprep.subr.bf16.mxu0 0
  %128 = vmatpush2.bf16.msra.mxu0 0
  %129 = vmatprep.subr.bf16.mxu0 0
  %130 = vmatpush2.bf16.msra.mxu0 0
  %131 = vmatprep.subr.bf16.mxu0 0
  %132 = vmatpush2.bf16.msra.mxu0 0
  %133 = vmatprep.subr.bf16.mxu0 0
  %134 = vmatpush2.bf16.msra.mxu0 0
  %135 = vmatprep.subr.bf16.mxu0 0
  %136 = vmatpush2.bf16.msra.mxu0 0
  %137 = vmatprep.subr.bf16.mxu0 0
  %138 = vmatpush2.bf16.msra.mxu0 0
  %139 = vmatprep.subr.bf16.mxu0 0
  %140 = vmatpush2.bf16.msra.mxu0 0
  %141 = vmatprep.subr.bf16.mxu0 0
  %142 = vmatpush2.bf16.msra.mxu0 0
  %143 = vmatprep.mubr.bf16.mxu0 0
  %144 = vmatmul.mubr.bf16.gmra.mxu0 %v61
  %v145 = vpop.f32.mrf.mxu0
  %v146 = vadd.f32 0.0, %v145
  %v147 = vpop.f32.mrf.mxu0
  %v148 = vpop.f32.mrf.mxu0
  %v149 = vadd.f32 0.0, %v148
  %v150 = vpop.f32.mrf.mxu0
  %151 = vdwg.mxu0
  %v154 = vunpack.c.l.b16 %v21
  %v155 = vunpack.c.l.b16 %v22
  %v156 = vpack.c.b16 %v155, %v154
  %v174 = vunpack.c.l.b16 %v23
  %v175 = vunpack.c.l.b16 %v24
  %v176 = vunpack.c.l.b16 %v25
  %v177 = vunpack.c.l.b16 %v26
  %v178 = vunpack.c.l.b16 %v27
  %v179 = vunpack.c.l.b16 %v28
  %v180 = vunpack.c.l.b16 %v29
  %v181 = vunpack.c.l.b16 %v30
  %v182 = vunpack.c.l.b16 %v31
  %v183 = vunpack.c.l.b16 %v32
  %v184 = vunpack.c.l.b16 %v33
  %v185 = vunpack.c.l.b16 %v34
  %v186 = vunpack.c.l.b16 %v35
  %v187 = vunpack.c.l.b16 %v36
  %v188 = vunpack.c.l.b16 %v37
  %v189 = vunpack.c.l.b16 %v38
  %v190 = vpack.c.b16 %v175, %v174
  %v191 = vpack.c.b16 %v177, %v176
  %v192 = vpack.c.b16 %v179, %v178
  %v193 = vpack.c.b16 %v181, %v180
  %v194 = vpack.c.b16 %v183, %v182
  %v195 = vpack.c.b16 %v185, %v184
  %v196 = vpack.c.b16 %v187, %v186
  %v197 = vpack.c.b16 %v189, %v188
  %206 = vmatprep.subr.bf16.mxu0 0
  %207 = vmatpush1.bf16.msra.mxu0 %v197
  %208 = vmatprep.subr.bf16.mxu0 0
  %209 = vmatpush1.bf16.msra.mxu0 %v196
  %210 = vmatprep.subr.bf16.mxu0 0
  %211 = vmatpush1.bf16.msra.mxu0 %v195
  %212 = vmatprep.subr.bf16.mxu0 0
  %213 = vmatpush1.bf16.msra.mxu0 %v194
  %214 = vmatprep.subr.bf16.mxu0 0
  %215 = vmatpush1.bf16.msra.mxu0 %v193
  %216 = vmatprep.subr.bf16.mxu0 0
  %217 = vmatpush1.bf16.msra.mxu0 %v192
  %218 = vmatprep.subr.bf16.mxu0 0
  %219 = vmatpush1.bf16.msra.mxu0 %v191
  %220 = vmatprep.subr.bf16.mxu0 0
  %221 = vmatpush1.bf16.msra.mxu0 %v190
  %222 = vmatprep.subr.bf16.mxu0 0
  %223 = vmatpush2.bf16.msra.mxu0 0
  %224 = vmatprep.subr.bf16.mxu0 0
  %225 = vmatpush2.bf16.msra.mxu0 0
  %226 = vmatprep.subr.bf16.mxu0 0
  %227 = vmatpush2.bf16.msra.mxu0 0
  %228 = vmatprep.subr.bf16.mxu0 0
  %229 = vmatpush2.bf16.msra.mxu0 0
  %230 = vmatprep.subr.bf16.mxu0 0
  %231 = vmatpush2.bf16.msra.mxu0 0
  %232 = vmatprep.subr.bf16.mxu0 0
  %233 = vmatpush2.bf16.msra.mxu0 0
  %234 = vmatprep.subr.bf16.mxu0 0
  %235 = vmatpush2.bf16.msra.mxu0 0
  %236 = vmatprep.subr.bf16.mxu0 0
  %237 = vmatpush2.bf16.msra.mxu0 0
  %238 = vmatprep.mubr.bf16.mxu0 0
  %239 = vmatmul.mubr.bf16.gmra.mxu0 %v156
  %v240 = vpop.f32.mrf.mxu0
  %v241 = vadd.f32 %v146, %v240
  %v242 = vpop.f32.mrf.mxu0
  %v243 = vpop.f32.mrf.mxu0
  %v244 = vadd.f32 %v149, %v243
  %v245 = vpop.f32.mrf.mxu0
  %246 = vdwg.mxu0
  %v247 = vld [vmem:[%s4] sm:$0x1]
  %v249 = vlaneseq
  %v250 = vshrl.u32 %v249, 7
  %v251 = vsub.s32 0, %v250
  %v252 = vrot.slane %v247, %v251
  %v254 = vadd.f32 %v241, %v252
  %v255 = vadd.f32 %v244, %v252
  %256 = vst [vmem:[%s5] sm:$0xff] %v254
  %257 = vst [vmem:[%s5 + $0x8] sm:$0xff] %v255
  // Predicated region
  $region22: #{_lambda_.9} parent=0 // pred_check
    _
  $region23: #{_lambda_.9} parent=0 // pred_check_branch
    %259 = sbr.rel (0) target = $region25
  $region24: #{_lambda_.9} parent=0 // pred_region
    _
  $region25: #{_lambda_.9} parent=0 // pred_fallthru
    _
  // Predicated region
  $region26: #{_lambda_.9} parent=0 // pred_check
    _
  $region27: #{_lambda_.9} parent=0 // pred_check_branch
    %261 = sbr.rel (0) target = $region29
  $region28: #{_lambda_.9} parent=0 // pred_region
    _
  $region29: #{_lambda_.9} parent=0 // pred_fallthru
    _

// kernel: _lambda_.8
$region0: #{_lambda_.8}
  #allocation0 [shape = 'u32[]', space=smem, size = 0x4, offset = 0x4, fixed_abs, tag = 'smem constant byte address 0x4 - core index']
  #allocation1 [shape = 'u32[144,128]{1,0:T(1,128)}', space=vmem, size = 0x12000, scoped, tag = 'internal scratch']
  #allocation2 [shape = 'f32[2,128]{1,0:T(2,128)}', space=vmem, size = 0x400, scoped, tag = 'scratch operand']
  #allocation3 [shape = 'f32[2,128]{1,0:T(2,128)}', space=vmem, size = 0x400, scoped, tag = 'scratch operand']
  #allocation4 [shape = 'f32[2,128]{1,0:T(2,128)}', space=vmem, size = 0x400, scoped, tag = 'scratch operand']
  #allocation5 [shape = 'f32[2,128]{1,0:T(2,128)}', space=vmem, size = 0x400, scoped, tag = 'scratch operand']
  %s0 = inlined_call_operand.vmem [shape: bf16[8,2,1024], index: 0, kind: input, shape index: {}, may-alias: {0,1}]
  %s1 = inlined_call_operand.vmem [shape: bf16[8,2,1024], index: 1, kind: input, shape index: {}, may-alias: {0,1}]
  %s2 = inlined_call_operand.vmem [shape: bf16[2,128,512], index: 2, kind: input, shape index: {}]
  %s3 = inlined_call_operand.vmem [shape: bf16[8,2,128], index: 3, kind: output, shape index: {0}]
  %s4 = inlined_call_operand.vmem [shape: bf16[8,2,128], index: 4, kind: output, shape index: {1}]
  %5 = xla_tuple %s3, %s4
  %s6 = sld [smem:[#allocation0]]
  $region116: #{_lambda_.8} parent=0
    _
  %s8 = ssub.s32 1, %s6
  %s9 = scalar_select 0, %s8, %s6
  $region1: #{_lambda_.8} parent=0
    #allocation6 [shape = 'u8[16384]{0}', space=vmem, size = 0x4000, scoped, tag = 'input window, operand 0, single buffered']
    #allocation7 [shape = 'u8[16384]{0}', space=vmem, size = 0x4000, scoped, tag = 'input window, operand 1, single buffered']
    // Predicated region
    $region2: #{_lambda_.8} parent=1 // pred_check
      _
    $region3: #{_lambda_.8} parent=1 // pred_check_branch
      %11 = sbr.rel (0) target = $region5
    $region4: #{_lambda_.8} parent=1 // pred_region
      // Predicated region
      $region6: #{_lambda_.8} parent=4 // pred_check
        _
      $region7: #{_lambda_.8} parent=4 // pred_check_branch
        %13 = sbr.rel (0) target = $region9
      $region8: #{_lambda_.8} parent=4 // pred_region
        // Predicated region
        $region10: #{_lambda_.8} parent=8 // pred_check
          _
        $region11: #{_lambda_.8} parent=8 // pred_check_branch
          %15 = sbr.rel target = $region13
        $region12: #{_lambda_.8} parent=8 // pred_region
          // Predicated region
          $region25: #{_lambda_.8} parent=12 // pred_check
            _
          $region26: #{_lambda_.8} parent=12 // pred_check_branch
            %45 = sbr.rel (0) target = $region28
          $region27: #{_lambda_.8} parent=12 // pred_region
            loop: start=0, step=1, limit=1
            $region29: #{_lambda_.8} parent=27 // loop_pre_header
              _
            $region30: #{_lambda_.8} parent=27 // loop_header
              %s47 = sphi 0, %s51
              %p48 = scmp.ge.s32.totalorder %s47, 1
              %s52 = sphi %s0, %s0
              %s53 = sphi [#allocation6], [#allocation6]
            $region31: #{_lambda_.8} parent=27 // loop_header_branch
              %50 = sbr.rel (%p48) target = $region35
            $region32: #{_lambda_.8} parent=27 // loop_body
              _
            $region33: #{_lambda_.8} parent=27 // loop_footer
              %s51 = sadd.s32 1, %s47
            $region34: #{_lambda_.8} parent=27 // loop_footer_branch
              %46 = sbr.rel target = $region30
            $region35: #{_lambda_.8} parent=27 // loop_exit
              _
            %s55 = ssub.s32 16, 1
            loop: start=0, step=1, limit=1
            $region36: #{_lambda_.8} parent=27 // loop_pre_header
              _
            $region37: #{_lambda_.8} parent=27 // loop_header
              %s57 = sphi 0, %s61
              %p58 = scmp.ge.s32.totalorder %s57, 1
              %s62 = sphi %s0, %s0
              %s63 = sphi [#allocation6], [#allocation6]
            $region38: #{_lambda_.8} parent=27 // loop_header_branch
              %60 = sbr.rel (%p58) target = $region42
            $region39: #{_lambda_.8} parent=27 // loop_body
              %v64 = vld [vmem:[%s62] sm:%s55]
              %65 = vst [vmem:[%s63] sm:%s55] %v64
              %v66 = vld [vmem:[%s62 + $0x8] sm:%s55]
              %67 = vst [vmem:[%s63 + $0x4] sm:%s55] %v66
              %v68 = vld [vmem:[%s62 + $0x10] sm:%s55]
              %69 = vst [vmem:[%s63 + $0x8] sm:%s55] %v68
              %v70 = vld [vmem:[%s62 + $0x18] sm:%s55]
              %71 = vst [vmem:[%s63 + $0xc] sm:%s55] %v70
              %v72 = vld [vmem:[%s62 + $0x20] sm:%s55]
              %73 = vst [vmem:[%s63 + $0x10] sm:%s55] %v72
              %v74 = vld [vmem:[%s62 + $0x28] sm:%s55]
              %75 = vst [vmem:[%s63 + $0x14] sm:%s55] %v74
              %v76 = vld [vmem:[%s62 + $0x30] sm:%s55]
              %77 = vst [vmem:[%s63 + $0x18] sm:%s55] %v76
              %v78 = vld [vmem:[%s62 + $0x38] sm:%s55]
              %79 = vst [vmem:[%s63 + $0x1c] sm:%s55] %v78
            $region40: #{_lambda_.8} parent=27 // loop_footer
              %s61 = sadd.s32 1, %s57
            $region41: #{_lambda_.8} parent=27 // loop_footer_branch
              %56 = sbr.rel target = $region37
            $region42: #{_lambda_.8} parent=27 // loop_exit
              _
          $region28: #{_lambda_.8} parent=12 // pred_fallthru
            _
        $region13: #{_lambda_.8} parent=8 // pred_fallthru
          _
        // Predicated region
        $region14: #{_lambda_.8} parent=8 // pred_check
          _
        $region15: #{_lambda_.8} parent=8 // pred_check_branch
          %17 = sbr.rel (0) target = $region17
        $region16: #{_lambda_.8} parent=8 // pred_region
          %s19 = ssub.s32 16, 1
          loop: start=0, step=1, limit=1
          $region18: #{_lambda_.8} parent=16 // loop_pre_header
            _
          $region19: #{_lambda_.8} parent=16 // loop_header
            %s21 = sphi 0, %s25
            %p22 = scmp.ge.s32.totalorder %s21, 1
            %s26 = sphi %s0, %s0
            %s27 = sphi [#allocation6], [#allocation6]
          $region20: #{_lambda_.8} parent=16 // loop_header_branch
            %24 = sbr.rel (%p22) target = $region24
          $region21: #{_lambda_.8} parent=16 // loop_body
            %v28 = vld [vmem:[%s26] sm:%s19]
            %29 = vst [vmem:[%s27] sm:%s19] %v28
            %v30 = vld [vmem:[%s26 + $0x8] sm:%s19]
            %31 = vst [vmem:[%s27 + $0x4] sm:%s19] %v30
            %v32 = vld [vmem:[%s26 + $0x10] sm:%s19]
            %33 = vst [vmem:[%s27 + $0x8] sm:%s19] %v32
            %v34 = vld [vmem:[%s26 + $0x18] sm:%s19]
            %35 = vst [vmem:[%s27 + $0xc] sm:%s19] %v34
            %v36 = vld [vmem:[%s26 + $0x20] sm:%s19]
            %37 = vst [vmem:[%s27 + $0x10] sm:%s19] %v36
            %v38 = vld [vmem:[%s26 + $0x28] sm:%s19]
            %39 = vst [vmem:[%s27 + $0x14] sm:%s19] %v38
            %v40 = vld [vmem:[%s26 + $0x30] sm:%s19]
            %41 = vst [vmem:[%s27 + $0x18] sm:%s19] %v40
            %v42 = vld [vmem:[%s26 + $0x38] sm:%s19]
            %43 = vst [vmem:[%s27 + $0x1c] sm:%s19] %v42
          $region22: #{_lambda_.8} parent=16 // loop_footer
            %s25 = sadd.s32 1, %s21
          $region23: #{_lambda_.8} parent=16 // loop_footer_branch
            %20 = sbr.rel target = $region19
          $region24: #{_lambda_.8} parent=16 // loop_exit
            _
        $region17: #{_lambda_.8} parent=8 // pred_fallthru
          _
      $region9: #{_lambda_.8} parent=4 // pred_fallthru
        _
      %80 = vnop
    $region5: #{_lambda_.8} parent=1 // pred_fallthru
      _
    // Predicated region
    $region43: #{_lambda_.8} parent=1 // pred_check
      _
    $region44: #{_lambda_.8} parent=1 // pred_check_branch
      %82 = sbr.rel (0) target = $region46
    $region45: #{_lambda_.8} parent=1 // pred_region
      %s83 = ssub.s32 0, 0
      %s84 = smul.u32 8, %s83
      %s85 = smul.addr %s84, 8
      %s86 = sadd.s32 4, %s85
      %s87 = scalar_lea.vmem %s1, %s86
      // Predicated region
      $region47: #{_lambda_.8} parent=45 // pred_check
        _
      $region48: #{_lambda_.8} parent=45 // pred_check_branch
        %89 = sbr.rel (0) target = $region50
      $region49: #{_lambda_.8} parent=45 // pred_region
        // Predicated region
        $region51: #{_lambda_.8} parent=49 // pred_check
          _
        $region52: #{_lambda_.8} parent=49 // pred_check_branch
          %91 = sbr.rel target = $region54
        $region53: #{_lambda_.8} parent=49 // pred_region
          // Predicated region
          $region66: #{_lambda_.8} parent=53 // pred_check
            _
          $region67: #{_lambda_.8} parent=53 // pred_check_branch
            %121 = sbr.rel (0) target = $region69
          $region68: #{_lambda_.8} parent=53 // pred_region
            loop: start=0, step=1, limit=1
            $region70: #{_lambda_.8} parent=68 // loop_pre_header
              _
            $region71: #{_lambda_.8} parent=68 // loop_header
              %s123 = sphi 0, %s127
              %p124 = scmp.ge.s32.totalorder %s123, 1
              %s128 = sphi %s87, %s87
              %s129 = sphi [#allocation7], [#allocation7]
            $region72: #{_lambda_.8} parent=68 // loop_header_branch
              %126 = sbr.rel (%p124) target = $region76
            $region73: #{_lambda_.8} parent=68 // loop_body
              _
            $region74: #{_lambda_.8} parent=68 // loop_footer
              %s127 = sadd.s32 1, %s123
            $region75: #{_lambda_.8} parent=68 // loop_footer_branch
              %122 = sbr.rel target = $region71
            $region76: #{_lambda_.8} parent=68 // loop_exit
              _
            %s131 = ssub.s32 16, 1
            loop: start=0, step=1, limit=1
            $region77: #{_lambda_.8} parent=68 // loop_pre_header
              _
            $region78: #{_lambda_.8} parent=68 // loop_header
              %s133 = sphi 0, %s137
              %p134 = scmp.ge.s32.totalorder %s133, 1
              %s138 = sphi %s87, %s87
              %s139 = sphi [#allocation7], [#allocation7]
            $region79: #{_lambda_.8} parent=68 // loop_header_branch
              %136 = sbr.rel (%p134) target = $region83
            $region80: #{_lambda_.8} parent=68 // loop_body
              %v140 = vld [vmem:[%s138] sm:%s131]
              %141 = vst [vmem:[%s139] sm:%s131] %v140
              %v142 = vld [vmem:[%s138 + $0x8] sm:%s131]
              %143 = vst [vmem:[%s139 + $0x4] sm:%s131] %v142
              %v144 = vld [vmem:[%s138 + $0x10] sm:%s131]
              %145 = vst [vmem:[%s139 + $0x8] sm:%s131] %v144
              %v146 = vld [vmem:[%s138 + $0x18] sm:%s131]
              %147 = vst [vmem:[%s139 + $0xc] sm:%s131] %v146
              %v148 = vld [vmem:[%s138 + $0x20] sm:%s131]
              %149 = vst [vmem:[%s139 + $0x10] sm:%s131] %v148
              %v150 = vld [vmem:[%s138 + $0x28] sm:%s131]
              %151 = vst [vmem:[%s139 + $0x14] sm:%s131] %v150
              %v152 = vld [vmem:[%s138 + $0x30] sm:%s131]
              %153 = vst [vmem:[%s139 + $0x18] sm:%s131] %v152
              %v154 = vld [vmem:[%s138 + $0x38] sm:%s131]
              %155 = vst [vmem:[%s139 + $0x1c] sm:%s131] %v154
            $region81: #{_lambda_.8} parent=68 // loop_footer
              %s137 = sadd.s32 1, %s133
            $region82: #{_lambda_.8} parent=68 // loop_footer_branch
              %132 = sbr.rel target = $region78
            $region83: #{_lambda_.8} parent=68 // loop_exit
              _
          $region69: #{_lambda_.8} parent=53 // pred_fallthru
            _
        $region54: #{_lambda_.8} parent=49 // pred_fallthru
          _
        // Predicated region
        $region55: #{_lambda_.8} parent=49 // pred_check
          _
        $region56: #{_lambda_.8} parent=49 // pred_check_branch
          %93 = sbr.rel (0) target = $region58
        $region57: #{_lambda_.8} parent=49 // pred_region
          %s95 = ssub.s32 16, 1
          loop: start=0, step=1, limit=1
          $region59: #{_lambda_.8} parent=57 // loop_pre_header
            _
          $region60: #{_lambda_.8} parent=57 // loop_header
            %s97 = sphi 0, %s101
            %p98 = scmp.ge.s32.totalorder %s97, 1
            %s102 = sphi %s87, %s87
            %s103 = sphi [#allocation7], [#allocation7]
          $region61: #{_lambda_.8} parent=57 // loop_header_branch
            %100 = sbr.rel (%p98) target = $region65
          $region62: #{_lambda_.8} parent=57 // loop_body
            %v104 = vld [vmem:[%s102] sm:%s95]
            %105 = vst [vmem:[%s103] sm:%s95] %v104
            %v106 = vld [vmem:[%s102 + $0x8] sm:%s95]
            %107 = vst [vmem:[%s103 + $0x4] sm:%s95] %v106
            %v108 = vld [vmem:[%s102 + $0x10] sm:%s95]
            %109 = vst [vmem:[%s103 + $0x8] sm:%s95] %v108
            %v110 = vld [vmem:[%s102 + $0x18] sm:%s95]
            %111 = vst [vmem:[%s103 + $0xc] sm:%s95] %v110
            %v112 = vld [vmem:[%s102 + $0x20] sm:%s95]
            %113 = vst [vmem:[%s103 + $0x10] sm:%s95] %v112
            %v114 = vld [vmem:[%s102 + $0x28] sm:%s95]
            %115 = vst [vmem:[%s103 + $0x14] sm:%s95] %v114
            %v116 = vld [vmem:[%s102 + $0x30] sm:%s95]
            %117 = vst [vmem:[%s103 + $0x18] sm:%s95] %v116
            %v118 = vld [vmem:[%s102 + $0x38] sm:%s95]
            %119 = vst [vmem:[%s103 + $0x1c] sm:%s95] %v118
          $region63: #{_lambda_.8} parent=57 // loop_footer
            %s101 = sadd.s32 1, %s97
          $region64: #{_lambda_.8} parent=57 // loop_footer_branch
            %96 = sbr.rel target = $region60
          $region65: #{_lambda_.8} parent=57 // loop_exit
            _
        $region58: #{_lambda_.8} parent=49 // pred_fallthru
          _
      $region50: #{_lambda_.8} parent=45 // pred_fallthru
        _
      %156 = vnop
    $region46: #{_lambda_.8} parent=1 // pred_fallthru
      _
    // Predicated region
    $region84: #{_lambda_.8} parent=1 // pred_check
      _
    $region85: #{_lambda_.8} parent=1 // pred_check_branch
      %158 = sbr.rel (0) target = $region87
    $region86: #{_lambda_.8} parent=1 // pred_region
      _
    $region87: #{_lambda_.8} parent=1 // pred_fallthru
      _
    // Predicated region
    $region88: #{_lambda_.8} parent=1 // pred_check
      _
    $region89: #{_lambda_.8} parent=1 // pred_check_branch
      %160 = sbr.rel (0) target = $region91
    $region90: #{_lambda_.8} parent=1 // pred_region
      _
    $region91: #{_lambda_.8} parent=1 // pred_fallthru
      _
    // Predicated region
    $region92: #{_lambda_.8} parent=1 // pred_check
      _
    $region93: #{_lambda_.8} parent=1 // pred_check_branch
      %162 = sbr.rel (0) target = $region95
    $region94: #{_lambda_.8} parent=1 // pred_region
      _
    $region95: #{_lambda_.8} parent=1 // pred_fallthru
      _
    %s163 = ssub.s32 0, 0
    %s164 = smul.u32 8, %s163
    %p165 = scmp.lt.s32.totalorder %s164, 7
    %s166 = scalar_select %p165, %s164, 7
    %s167 = scalar_lea.vmem %s4, %s166
    %s168 = ssub.s32 0, 0
    %s169 = smul.u32 8, %s168
    %s170 = ssub.s32 0, 0
    %s171 = smul.u32 8, %s170
    %p172 = scmp.lt.s32.totalorder %s171, 7
    %s173 = scalar_select %p172, %s171, 7
    %s174 = scalar_lea.vmem %s4, %s173
    %s175 = ssub.s32 0, 0
    %s176 = smul.u32 8, %s175
    %p178 = scmp.eq.s32.totalorder 0, 0
    // Predicated region
    $region96: #{_lambda_.8} parent=1 // pred_check
      %p179 = pneg %p178
    $region97: #{_lambda_.8} parent=1 // pred_check_branch
      %181 = sbr.rel (%p179) target = $region99
    $region98: #{_lambda_.8} parent=1 // pred_region
      %182 = vst [vmem:[#allocation2] sm:$0x3] 0.0
      %183 = vst [vmem:[#allocation3] sm:$0x3] 0.0
      %184 = vst [vmem:[#allocation4] sm:$0x3] 0.0
      %185 = vst [vmem:[#allocation5] sm:$0x3] 0.0
    $region99: #{_lambda_.8} parent=1 // pred_fallthru
      _
    %v186 = vld [vmem:[%s2] sm:$0xff]
    %v187 = vld [vmem:[%s2 + $0x8] sm:$0xff]
    %v188 = vld [vmem:[%s2 + $0x10] sm:$0xff]
    %v189 = vld [vmem:[%s2 + $0x18] sm:$0xff]
    %v190 = vld [vmem:[%s2 + $0x20] sm:$0xff]
    %v191 = vld [vmem:[%s2 + $0x28] sm:$0xff]
    %v192 = vld [vmem:[%s2 + $0x30] sm:$0xff]
    %v193 = vld [vmem:[%s2 + $0x38] sm:$0xff]
    %v194 = vld [vmem:[%s2 + $0x40] sm:$0xff]
    %v195 = vld [vmem:[%s2 + $0x48] sm:$0xff]
    %v196 = vld [vmem:[%s2 + $0x50] sm:$0xff]
    %v197 = vld [vmem:[%s2 + $0x58] sm:$0xff]
    %v198 = vld [vmem:[%s2 + $0x60] sm:$0xff]
    %v199 = vld [vmem:[%s2 + $0x68] sm:$0xff]
    %v200 = vld [vmem:[%s2 + $0x70] sm:$0xff]
    %v201 = vld [vmem:[%s2 + $0x78] sm:$0xff]
    %v202 = vld [vmem:[%s2 + $0x80] sm:$0xff]
    %v203 = vld [vmem:[%s2 + $0x88] sm:$0xff]
    %v204 = vld [vmem:[%s2 + $0x90] sm:$0xff]
    %v205 = vld [vmem:[%s2 + $0x98] sm:$0xff]
    %v206 = vld [vmem:[%s2 + $0xa0] sm:$0xff]
    %v207 = vld [vmem:[%s2 + $0xa8] sm:$0xff]
    %v208 = vld [vmem:[%s2 + $0xb0] sm:$0xff]
    %v209 = vld [vmem:[%s2 + $0xb8] sm:$0xff]
    %v210 = vld [vmem:[%s2 + $0xc0] sm:$0xff]
    %v211 = vld [vmem:[%s2 + $0xc8] sm:$0xff]
    %v212 = vld [vmem:[%s2 + $0xd0] sm:$0xff]
    %v213 = vld [vmem:[%s2 + $0xd8] sm:$0xff]
    %v214 = vld [vmem:[%s2 + $0xe0] sm:$0xff]
    %v215 = vld [vmem:[%s2 + $0xe8] sm:$0xff]
    %v216 = vld [vmem:[%s2 + $0xf0] sm:$0xff]
    %v217 = vld [vmem:[%s2 + $0xf8] sm:$0xff]
    %s218 = scalar_lea.vmem %s2, 256
    %v219 = vld [vmem:[%s218] sm:$0xff]
    %v220 = vld [vmem:[%s218 + $0x8] sm:$0xff]
    %v221 = vld [vmem:[%s218 + $0x10] sm:$0xff]
    %v222 = vld [vmem:[%s218 + $0x18] sm:$0xff]
    %v223 = vld [vmem:[%s218 + $0x20] sm:$0xff]
    %v224 = vld [vmem:[%s218 + $0x28] sm:$0xff]
    %v225 = vld [vmem:[%s218 + $0x30] sm:$0xff]
    %v226 = vld [vmem:[%s218 + $0x38] sm:$0xff]
    %v227 = vld [vmem:[%s218 + $0x40] sm:$0xff]
    %v228 = vld [vmem:[%s218 + $0x48] sm:$0xff]
    %v229 = vld [vmem:[%s218 + $0x50] sm:$0xff]
    %v230 = vld [vmem:[%s218 + $0x58] sm:$0xff]
    %v231 = vld [vmem:[%s218 + $0x60] sm:$0xff]
    %v232 = vld [vmem:[%s218 + $0x68] sm:$0xff]
    %v233 = vld [vmem:[%s218 + $0x70] sm:$0xff]
    %v234 = vld [vmem:[%s218 + $0x78] sm:$0xff]
    %v235 = vld [vmem:[%s218 + $0x80] sm:$0xff]
    %v236 = vld [vmem:[%s218 + $0x88] sm:$0xff]
    %v237 = vld [vmem:[%s218 + $0x90] sm:$0xff]
    %v238 = vld [vmem:[%s218 + $0x98] sm:$0xff]
    %v239 = vld [vmem:[%s218 + $0xa0] sm:$0xff]
    %v240 = vld [vmem:[%s218 + $0xa8] sm:$0xff]
    %v241 = vld [vmem:[%s218 + $0xb0] sm:$0xff]
    %v242 = vld [vmem:[%s218 + $0xb8] sm:$0xff]
    %v243 = vld [vmem:[%s218 + $0xc0] sm:$0xff]
    %v244 = vld [vmem:[%s218 + $0xc8] sm:$0xff]
    %v245 = vld [vmem:[%s218 + $0xd0] sm:$0xff]
    %v246 = vld [vmem:[%s218 + $0xd8] sm:$0xff]
    %v247 = vld [vmem:[%s218 + $0xe0] sm:$0xff]
    %v248 = vld [vmem:[%s218 + $0xe8] sm:$0xff]
    %v249 = vld [vmem:[%s218 + $0xf0] sm:$0xff]
    %v250 = vld [vmem:[%s218 + $0xf8] sm:$0xff]
    %v251 = vld [vmem:[#allocation6] sm:$0xf]
    %v252 = vunpack.c.l.bf16 %v251
    %v253 = vld [vmem:[#allocation2] sm:$0x3]
    %v254 = vpack.c.bf16 %v253, %v253
    %v287 = vunpack.c.l.b16 %v186
    %v288 = vunpack.c.h.b16 %v186
    %v289 = vunpack.c.l.b16 %v187
    %v290 = vunpack.c.h.b16 %v187
    %v291 = vunpack.c.l.b16 %v188
    %v292 = vunpack.c.h.b16 %v188
    %v293 = vunpack.c.l.b16 %v189
    %v294 = vunpack.c.h.b16 %v189
    %v295 = vunpack.c.l.b16 %v190
    %v296 = vunpack.c.h.b16 %v190
    %v297 = vunpack.c.l.b16 %v191
    %v298 = vunpack.c.h.b16 %v191
    %v299 = vunpack.c.l.b16 %v192
    %v300 = vunpack.c.h.b16 %v192
    %v301 = vunpack.c.l.b16 %v193
    %v302 = vunpack.c.h.b16 %v193
    %v303 = vunpack.c.l.b16 %v194
    %v304 = vunpack.c.h.b16 %v194
    %v305 = vunpack.c.l.b16 %v195
    %v306 = vunpack.c.h.b16 %v195
    %v307 = vunpack.c.l.b16 %v196
    %v308 = vunpack.c.h.b16 %v196
    %v309 = vunpack.c.l.b16 %v197
    %v310 = vunpack.c.h.b16 %v197
    %v311 = vunpack.c.l.b16 %v198
    %v312 = vunpack.c.h.b16 %v198
    %v313 = vunpack.c.l.b16 %v199
    %v314 = vunpack.c.h.b16 %v199
    %v315 = vunpack.c.l.b16 %v200
    %v316 = vunpack.c.h.b16 %v200
    %v317 = vunpack.c.l.b16 %v201
    %v318 = vunpack.c.h.b16 %v201
    %v319 = vunpack.c.l.b16 %v202
    %v320 = vunpack.c.h.b16 %v202
    %v321 = vunpack.c.l.b16 %v203
    %v322 = vunpack.c.h.b16 %v203
    %v323 = vunpack.c.l.b16 %v204
    %v324 = vunpack.c.h.b16 %v204
    %v325 = vunpack.c.l.b16 %v205
    %v326 = vunpack.c.h.b16 %v205
    %v327 = vunpack.c.l.b16 %v206
    %v328 = vunpack.c.h.b16 %v206
    %v329 = vunpack.c.l.b16 %v207
    %v330 = vunpack.c.h.b16 %v207
    %v331 = vunpack.c.l.b16 %v208
    %v332 = vunpack.c.h.b16 %v208
    %v333 = vunpack.c.l.b16 %v209
    %v334 = vunpack.c.h.b16 %v209
    %v335 = vunpack.c.l.b16 %v210
    %v336 = vunpack.c.h.b16 %v210
    %v337 = vunpack.c.l.b16 %v211
    %v338 = vunpack.c.h.b16 %v211
    %v339 = vunpack.c.l.b16 %v212
    %v340 = vunpack.c.h.b16 %v212
    %v341 = vunpack.c.l.b16 %v213
    %v342 = vunpack.c.h.b16 %v213
    %v343 = vunpack.c.l.b16 %v214
    %v344 = vunpack.c.h.b16 %v214
    %v345 = vunpack.c.l.b16 %v215
    %v346 = vunpack.c.h.b16 %v215
    %v347 = vunpack.c.l.b16 %v216
    %v348 = vunpack.c.h.b16 %v216
    %v349 = vunpack.c.l.b16 %v217
    %v350 = vunpack.c.h.b16 %v217
    %v351 = vpack.c.b16 %v291, %v287
    %v352 = vpack.c.b16 %v292, %v288
    %v353 = vpack.c.b16 %v293, %v289
    %v354 = vpack.c.b16 %v294, %v290
    %v355 = vpack.c.b16 %v299, %v295
    %v356 = vpack.c.b16 %v300, %v296
    %v357 = vpack.c.b16 %v301, %v297
    %v358 = vpack.c.b16 %v302, %v298
    %v359 = vpack.c.b16 %v307, %v303
    %v360 = vpack.c.b16 %v308, %v304
    %v361 = vpack.c.b16 %v309, %v305
    %v362 = vpack.c.b16 %v310, %v306
    %v363 = vpack.c.b16 %v315, %v311
    %v364 = vpack.c.b16 %v316, %v312
    %v365 = vpack.c.b16 %v317, %v313
    %v366 = vpack.c.b16 %v318, %v314
    %v367 = vpack.c.b16 %v323, %v319
    %v368 = vpack.c.b16 %v324, %v320
    %v369 = vpack.c.b16 %v325, %v321
    %v370 = vpack.c.b16 %v326, %v322
    %v371 = vpack.c.b16 %v331, %v327
    %v372 = vpack.c.b16 %v332, %v328
    %v373 = vpack.c.b16 %v333, %v329
    %v374 = vpack.c.b16 %v334, %v330
    %v375 = vpack.c.b16 %v339, %v335
    %v376 = vpack.c.b16 %v340, %v336
    %v377 = vpack.c.b16 %v341, %v337
    %v378 = vpack.c.b16 %v342, %v338
    %v379 = vpack.c.b16 %v347, %v343
    %v380 = vpack.c.b16 %v348, %v344
    %v381 = vpack.c.b16 %v349, %v345
    %v382 = vpack.c.b16 %v350, %v346
    %415 = vmatprep.subr.bf16.mxu0 %v380
    %416 = vmatpush1.bf16.msra.mxu0 %v379
    %417 = vmatprep.subr.bf16.mxu0 %v376
    %418 = vmatpush1.bf16.msra.mxu0 %v375
    %419 = vmatprep.subr.bf16.mxu0 %v372
    %420 = vmatpush1.bf16.msra.mxu0 %v371
    %421 = vmatprep.subr.bf16.mxu0 %v368
    %422 = vmatpush1.bf16.msra.mxu0 %v367
    %423 = vmatprep.subr.bf16.mxu0 %v364
    %424 = vmatpush1.bf16.msra.mxu0 %v363
    %425 = vmatprep.subr.bf16.mxu0 %v360
    %426 = vmatpush1.bf16.msra.mxu0 %v359
    %427 = vmatprep.subr.bf16.mxu0 %v356
    %428 = vmatpush1.bf16.msra.mxu0 %v355
    %429 = vmatprep.subr.bf16.mxu0 %v352
    %430 = vmatpush1.bf16.msra.mxu0 %v351
    %431 = vmatprep.subr.bf16.mxu0 0
    %432 = vmatpush2.bf16.msra.mxu0 0
    %433 = vmatprep.subr.bf16.mxu0 0
    %434 = vmatpush2.bf16.msra.mxu0 0
    %435 = vmatprep.subr.bf16.mxu0 0
    %436 = vmatpush2.bf16.msra.mxu0 0
    %437 = vmatprep.subr.bf16.mxu0 0
    %438 = vmatpush2.bf16.msra.mxu0 0
    %439 = vmatprep.subr.bf16.mxu0 0
    %440 = vmatpush2.bf16.msra.mxu0 0
    %441 = vmatprep.subr.bf16.mxu0 0
    %442 = vmatpush2.bf16.msra.mxu0 0
    %443 = vmatprep.subr.bf16.mxu0 0
    %444 = vmatpush2.bf16.msra.mxu0 0
    %445 = vmatprep.subr.bf16.mxu0 0
    %446 = vmatpush2.bf16.msra.mxu0 0
    %447 = vmatprep.mubr.bf16.mxu0 0
    %448 = vmatmul.mubr.bf16.gmra.mxu0 %v254
    %v449 = vpop.f32.mrf.mxu0
    %v450 = vadd.f32 0.0, %v449
    %v451 = vpop.f32.mrf.mxu0
    %v452 = vadd.f32 0.0, %v451
    %v453 = vpop.f32.mrf.mxu0
    %v454 = vpop.f32.mrf.mxu0
    %455 = vdwg.mxu0
    %456 = vmatprep.subr.bf16.mxu0 %v382
    %457 = vmatpush1.bf16.msra.mxu0 %v381
    %458 = vmatprep.subr.bf16.mxu0 %v378
    %459 = vmatpush1.bf16.msra.mxu0 %v377
    %460 = vmatprep.subr.bf16.mxu0 %v374
    %461 = vmatpush1.bf16.msra.mxu0 %v373
    %462 = vmatprep.subr.bf16.mxu0 %v370
    %463 = vmatpush1.bf16.msra.mxu0 %v369
    %464 = vmatprep.subr.bf16.mxu0 %v366
    %465 = vmatpush1.bf16.msra.mxu0 %v365
    %466 = vmatprep.subr.bf16.mxu0 %v362
    %467 = vmatpush1.bf16.msra.mxu0 %v361
    %468 = vmatprep.subr.bf16.mxu0 %v358
    %469 = vmatpush1.bf16.msra.mxu0 %v357
    %470 = vmatprep.subr.bf16.mxu0 %v354
    %471 = vmatpush1.bf16.msra.mxu0 %v353
    %472 = vmatprep.subr.bf16.mxu0 0
    %473 = vmatpush2.bf16.msra.mxu0 0
    %474 = vmatprep.subr.bf16.mxu0 0
    %475 = vmatpush2.bf16.msra.mxu0 0
    %476 = vmatprep.subr.bf16.mxu0 0
    %477 = vmatpush2.bf16.msra.mxu0 0
    %478 = vmatprep.subr.bf16.mxu0 0
    %479 = vmatpush2.bf16.msra.mxu0 0
    %480 = vmatprep.subr.bf16.mxu0 0
    %481 = vmatpush2.bf16.msra.mxu0 0
    %482 = vmatprep.subr.bf16.mxu0 0
    %483 = vmatpush2.bf16.msra.mxu0 0
    %484 = vmatprep.subr.bf16.mxu0 0
    %485 = vmatpush2.bf16.msra.mxu0 0
    %486 = vmatprep.subr.bf16.mxu0 0
    %487 = vmatpush2.bf16.msra.mxu0 0
    %488 = vmatprep.mubr.bf16.mxu0 0
    %489 = vmatmul.mubr.bf16.gmra.mxu0 %v254
    %v490 = vpop.f32.mrf.mxu0
    %v491 = vadd.f32 0.0, %v490
    %v492 = vpop.f32.mrf.mxu0
    %v493 = vadd.f32 0.0, %v492
    %v494 = vpop.f32.mrf.mxu0
    %v495 = vpop.f32.mrf.mxu0
    %496 = vdwg.mxu0
    %v501 = vcombine.low %v450, %v452
    %v502 = vcombine.low %v491, %v493
    %v504 = vunpack.c.l.s4 1983009808
    %v505 = vunpack.c.0.s8 %v504
    %v506 = vlaneseq
    %v507 = vshrl.u32 %v506, 7
    %v508 = vsub.s32 %v505, %v507
    %v509 = vrot.slane %v501, %v508
    %v511 = vunpack.c.l.s4 1983009808
    %v512 = vunpack.c.0.s8 %v511
    %v513 = vlaneseq
    %v514 = vshrl.u32 %v513, 7
    %v515 = vsub.s32 %v512, %v514
    %v516 = vrot.slane %v502, %v515
    %v517 = vcombine.low %v509, %v516
    %v519 = vadd.f32 %v252, %v517
    %s520 = scalar_lea.vmem [#allocation7], 28
    %v521 = vld [vmem:[%s520] sm:$0xf]
    %v522 = vunpack.c.l.bf16 %v521
    %v523 = vld [vmem:[#allocation4] sm:$0x3]
    %v524 = vpack.c.bf16 %v523, %v523
    %v557 = vunpack.c.l.b16 %v219
    %v558 = vunpack.c.h.b16 %v219
    %v559 = vunpack.c.l.b16 %v220
    %v560 = vunpack.c.h.b16 %v220
    %v561 = vunpack.c.l.b16 %v221
    %v562 = vunpack.c.h.b16 %v221
    %v563 = vunpack.c.l.b16 %v222
    %v564 = vunpack.c.h.b16 %v222
    %v565 = vunpack.c.l.b16 %v223
    %v566 = vunpack.c.h.b16 %v223
    %v567 = vunpack.c.l.b16 %v224
    %v568 = vunpack.c.h.b16 %v224
    %v569 = vunpack.c.l.b16 %v225
    %v570 = vunpack.c.h.b16 %v225
    %v571 = vunpack.c.l.b16 %v226
    %v572 = vunpack.c.h.b16 %v226
    %v573 = vunpack.c.l.b16 %v227
    %v574 = vunpack.c.h.b16 %v227
    %v575 = vunpack.c.l.b16 %v228
    %v576 = vunpack.c.h.b16 %v228
    %v577 = vunpack.c.l.b16 %v229
    %v578 = vunpack.c.h.b16 %v229
    %v579 = vunpack.c.l.b16 %v230
    %v580 = vunpack.c.h.b16 %v230
    %v581 = vunpack.c.l.b16 %v231
    %v582 = vunpack.c.h.b16 %v231
    %v583 = vunpack.c.l.b16 %v232
    %v584 = vunpack.c.h.b16 %v232
    %v585 = vunpack.c.l.b16 %v233
    %v586 = vunpack.c.h.b16 %v233
    %v587 = vunpack.c.l.b16 %v234
    %v588 = vunpack.c.h.b16 %v234
    %v589 = vunpack.c.l.b16 %v235
    %v590 = vunpack.c.h.b16 %v235
    %v591 = vunpack.c.l.b16 %v236
    %v592 = vunpack.c.h.b16 %v236
    %v593 = vunpack.c.l.b16 %v237
    %v594 = vunpack.c.h.b16 %v237
    %v595 = vunpack.c.l.b16 %v238
    %v596 = vunpack.c.h.b16 %v238
    %v597 = vunpack.c.l.b16 %v239
    %v598 = vunpack.c.h.b16 %v239
    %v599 = vunpack.c.l.b16 %v240
    %v600 = vunpack.c.h.b16 %v240
    %v601 = vunpack.c.l.b16 %v241
    %v602 = vunpack.c.h.b16 %v241
    %v603 = vunpack.c.l.b16 %v242
    %v604 = vunpack.c.h.b16 %v242
    %v605 = vunpack.c.l.b16 %v243
    %v606 = vunpack.c.h.b16 %v243
    %v607 = vunpack.c.l.b16 %v244
    %v608 = vunpack.c.h.b16 %v244
    %v609 = vunpack.c.l.b16 %v245
    %v610 = vunpack.c.h.b16 %v245
    %v611 = vunpack.c.l.b16 %v246
    %v612 = vunpack.c.h.b16 %v246
    %v613 = vunpack.c.l.b16 %v247
    %v614 = vunpack.c.h.b16 %v247
    %v615 = vunpack.c.l.b16 %v248
    %v616 = vunpack.c.h.b16 %v248
    %v617 = vunpack.c.l.b16 %v249
    %v618 = vunpack.c.h.b16 %v249
    %v619 = vunpack.c.l.b16 %v250
    %v620 = vunpack.c.h.b16 %v250
    %v621 = vpack.c.b16 %v561, %v557
    %v622 = vpack.c.b16 %v562, %v558
    %v623 = vpack.c.b16 %v563, %v559
    %v624 = vpack.c.b16 %v564, %v560
    %v625 = vpack.c.b16 %v569, %v565
    %v626 = vpack.c.b16 %v570, %v566
    %v627 = vpack.c.b16 %v571, %v567
    %v628 = vpack.c.b16 %v572, %v568
    %v629 = vpack.c.b16 %v577, %v573
    %v630 = vpack.c.b16 %v578, %v574
    %v631 = vpack.c.b16 %v579, %v575
    %v632 = vpack.c.b16 %v580, %v576
    %v633 = vpack.c.b16 %v585, %v581
    %v634 = vpack.c.b16 %v586, %v582
    %v635 = vpack.c.b16 %v587, %v583
    %v636 = vpack.c.b16 %v588, %v584
    %v637 = vpack.c.b16 %v593, %v589
    %v638 = vpack.c.b16 %v594, %v590
    %v639 = vpack.c.b16 %v595, %v591
    %v640 = vpack.c.b16 %v596, %v592
    %v641 = vpack.c.b16 %v601, %v597
    %v642 = vpack.c.b16 %v602, %v598
    %v643 = vpack.c.b16 %v603, %v599
    %v644 = vpack.c.b16 %v604, %v600
    %v645 = vpack.c.b16 %v609, %v605
    %v646 = vpack.c.b16 %v610, %v606
    %v647 = vpack.c.b16 %v611, %v607
    %v648 = vpack.c.b16 %v612, %v608
    %v649 = vpack.c.b16 %v617, %v613
    %v650 = vpack.c.b16 %v618, %v614
    %v651 = vpack.c.b16 %v619, %v615
    %v652 = vpack.c.b16 %v620, %v616
    %685 = vmatprep.subr.bf16.mxu0 %v650
    %686 = vmatpush1.bf16.msra.mxu0 %v649
    %687 = vmatprep.subr.bf16.mxu0 %v646
    %688 = vmatpush1.bf16.msra.mxu0 %v645
    %689 = vmatprep.subr.bf16.mxu0 %v642
    %690 = vmatpush1.bf16.msra.mxu0 %v641
    %691 = vmatprep.subr.bf16.mxu0 %v638
    %692 = vmatpush1.bf16.msra.mxu0 %v637
    %693 = vmatprep.subr.bf16.mxu0 %v634
    %694 = vmatpush1.bf16.msra.mxu0 %v633
    %695 = vmatprep.subr.bf16.mxu0 %v630
    %696 = vmatpush1.bf16.msra.mxu0 %v629
    %697 = vmatprep.subr.bf16.mxu0 %v626
    %698 = vmatpush1.bf16.msra.mxu0 %v625
    %699 = vmatprep.subr.bf16.mxu0 %v622
    %700 = vmatpush1.bf16.msra.mxu0 %v621
    %701 = vmatprep.subr.bf16.mxu0 0
    %702 = vmatpush2.bf16.msra.mxu0 0
    %703 = vmatprep.subr.bf16.mxu0 0
    %704 = vmatpush2.bf16.msra.mxu0 0
    %705 = vmatprep.subr.bf16.mxu0 0
    %706 = vmatpush2.bf16.msra.mxu0 0
    %707 = vmatprep.subr.bf16.mxu0 0
    %708 = vmatpush2.bf16.msra.mxu0 0
    %709 = vmatprep.subr.bf16.mxu0 0
    %710 = vmatpush2.bf16.msra.mxu0 0
    %711 = vmatprep.subr.bf16.mxu0 0
    %712 = vmatpush2.bf16.msra.mxu0 0
    %713 = vmatprep.subr.bf16.mxu0 0
    %714 = vmatpush2.bf16.msra.mxu0 0
    %715 = vmatprep.subr.bf16.mxu0 0
    %716 = vmatpush2.bf16.msra.mxu0 0
    %717 = vmatprep.mubr.bf16.mxu0 0
    %718 = vmatmul.mubr.bf16.gmra.mxu0 %v524
    %v719 = vpop.f32.mrf.mxu0
    %v720 = vadd.f32 0.0, %v719
    %v721 = vpop.f32.mrf.mxu0
    %v722 = vadd.f32 0.0, %v721
    %v723 = vpop.f32.mrf.mxu0
    %v724 = vpop.f32.mrf.mxu0
    %725 = vdwg.mxu0
    %726 = vmatprep.subr.bf16.mxu0 %v652
    %727 = vmatpush1.bf16.msra.mxu0 %v651
    %728 = vmatprep.subr.bf16.mxu0 %v648
    %729 = vmatpush1.bf16.msra.mxu0 %v647
    %730 = vmatprep.subr.bf16.mxu0 %v644
    %731 = vmatpush1.bf16.msra.mxu0 %v643
    %732 = vmatprep.subr.bf16.mxu0 %v640
    %733 = vmatpush1.bf16.msra.mxu0 %v639
    %734 = vmatprep.subr.bf16.mxu0 %v636
    %735 = vmatpush1.bf16.msra.mxu0 %v635
    %736 = vmatprep.subr.bf16.mxu0 %v632
    %737 = vmatpush1.bf16.msra.mxu0 %v631
    %738 = vmatprep.subr.bf16.mxu0 %v628
    %739 = vmatpush1.bf16.msra.mxu0 %v627
    %740 = vmatprep.subr.bf16.mxu0 %v624
    %741 = vmatpush1.bf16.msra.mxu0 %v623
    %742 = vmatprep.subr.bf16.mxu0 0
    %743 = vmatpush2.bf16.msra.mxu0 0
    %744 = vmatprep.subr.bf16.mxu0 0
    %745 = vmatpush2.bf16.msra.mxu0 0
    %746 = vmatprep.subr.bf16.mxu0 0
    %747 = vmatpush2.bf16.msra.mxu0 0
    %748 = vmatprep.subr.bf16.mxu0 0
    %749 = vmatpush2.bf16.msra.mxu0 0
    %750 = vmatprep.subr.bf16.mxu0 0
    %751 = vmatpush2.bf16.msra.mxu0 0
    %752 = vmatprep.subr.bf16.mxu0 0
    %753 = vmatpush2.bf16.msra.mxu0 0
    %754 = vmatprep.subr.bf16.mxu0 0
    %755 = vmatpush2.bf16.msra.mxu0 0
    %756 = vmatprep.subr.bf16.mxu0 0
    %757 = vmatpush2.bf16.msra.mxu0 0
    %758 = vmatprep.mubr.bf16.mxu0 0
    %759 = vmatmul.mubr.bf16.gmra.mxu0 %v524
    %v760 = vpop.f32.mrf.mxu0
    %v761 = vadd.f32 0.0, %v760
    %v762 = vpop.f32.mrf.mxu0
    %v763 = vadd.f32 0.0, %v762
    %v764 = vpop.f32.mrf.mxu0
    %v765 = vpop.f32.mrf.mxu0
    %766 = vdwg.mxu0
    %v771 = vcombine.low %v720, %v722
    %v772 = vcombine.low %v761, %v763
    %v774 = vunpack.c.l.s4 1983009808
    %v775 = vunpack.c.0.s8 %v774
    %v776 = vlaneseq
    %v777 = vshrl.u32 %v776, 7
    %v778 = vsub.s32 %v775, %v777
    %v779 = vrot.slane %v771, %v778
    %v781 = vunpack.c.l.s4 1983009808
    %v782 = vunpack.c.0.s8 %v781
    %v783 = vlaneseq
    %v784 = vshrl.u32 %v783, 7
    %v785 = vsub.s32 %v782, %v784
    %v786 = vrot.slane %v772, %v785
    %v787 = vcombine.low %v779, %v786
    %v789 = vadd.f32 %v522, %v787
    %v790 = vld [vmem:[#allocation3] sm:$0x3]
    %v791 = vxor.u32 %v519, 2147483648
    %v792 = vmul.f32 %v791, 1.442695
    %v793 = vpow.pop %v792
    %v794 = vadd.f32 %v793, 1.0
    %v795 = vrcp.pop %v794
    %v796 = vmul.f32 1.0, %v795
    %v798 = vrot.slane %v519, 2
    %v800 = vxor.u32 %v798, 2147483648
    %v801 = vmul.f32 %v800, 1.442695
    %v802 = vpow.pop %v801
    %v803 = vadd.f32 %v802, 1.0
    %v804 = vrcp.pop %v803
    %v805 = vmul.f32 1.0, %v804
    %v806 = vrot.slane %v519, 4
    %v808 = vtanh.pop %v806
    %v809 = vrot.slane %v519, 6
    %v811 = vxor.u32 %v809, 2147483648
    %v812 = vmul.f32 %v811, 1.442695
    %v813 = vpow.pop %v812
    %v814 = vadd.f32 %v813, 1.0
    %v815 = vrcp.pop %v814
    %v816 = vmul.f32 1.0, %v815
    %v817 = vmul.f32 %v805, %v790
    %v818 = vmul.f32 %v796, %v808
    %v819 = vadd.f32 %v817, %v818
    %v820 = vtanh.pop %v819
    %v821 = vmul.f32 %v816, %v820
    %v822 = vld [vmem:[#allocation5] sm:$0x3]
    %v823 = vxor.u32 %v789, 2147483648
    %v824 = vmul.f32 %v823, 1.442695
    %v825 = vpow.pop %v824
    %v826 = vadd.f32 %v825, 1.0
    %v827 = vrcp.pop %v826
    %v828 = vmul.f32 1.0, %v827
    %v830 = vrot.slane %v789, 2
    %v832 = vxor.u32 %v830, 2147483648
    %v833 = vmul.f32 %v832, 1.442695
    %v834 = vpow.pop %v833
    %v835 = vadd.f32 %v834, 1.0
    %v836 = vrcp.pop %v835
    %v837 = vmul.f32 1.0, %v836
    %v838 = vrot.slane %v789, 4
    %v840 = vtanh.pop %v838
    %v841 = vrot.slane %v789, 6
    %v843 = vxor.u32 %v841, 2147483648
    %v844 = vmul.f32 %v843, 1.442695
    %v845 = vpow.pop %v844
    %v846 = vadd.f32 %v845, 1.0
    %v847 = vrcp.pop %v846
    %v848 = vmul.f32 1.0, %v847
    %v849 = vmul.f32 %v837, %v822
    %v850 = vmul.f32 %v828, %v840
    %v851 = vadd.f32 %v849, %v850
    %v852 = vtanh.pop %v851
    %v853 = vmul.f32 %v848, %v852
    %854 = vst [vmem:[#allocation2] sm:$0x3] %v821
    %855 = vst [vmem:[#allocation3] sm:$0x3] %v819
    %856 = vst [vmem:[#allocation4] sm:$0x3] %v853
    %857 = vst [vmem:[#allocation5] sm:$0x3] %v851
    %v858 = vpack.c.bf16 %v821, %v821
    %859 = vst [vmem:[%s3] sm:$0x1] %v858
    %v860 = vpack.c.bf16 %v853, %v853
    %s861 = scalar_lea.vmem %s174, 7
    %862 = vst [vmem:[%s861] sm:$0x1] %v860
    %s863 = scalar_lea.vmem [#allocation6], 4
    %v864 = vld [vmem:[%s863] sm:$0xf]
    %v865 = vunpack.c.l.bf16 %v864
    %v866 = vld [vmem:[#allocation2] sm:$0x3]
    %v867 = vpack.c.bf16 %v866, %v866
    %868 = vmatprep.subr.bf16.mxu0 %v380
    %869 = vmatpush1.bf16.msra.mxu0 %v379
    %870 = vmatprep.subr.bf16.mxu0 %v376
    %871 = vmatpush1.bf16.msra.mxu0 %v375
    %872 = vmatprep.subr.bf16.mxu0 %v372
    %873 = vmatpush1.bf16.msra.mxu0 %v371
    %874 = vmatprep.subr.bf16.mxu0 %v368
    %875 = vmatpush1.bf16.msra.mxu0 %v367
    %876 = vmatprep.subr.bf16.mxu0 %v364
    %877 = vmatpush1.bf16.msra.mxu0 %v363
    %878 = vmatprep.subr.bf16.mxu0 %v360
    %879 = vmatpush1.bf16.msra.mxu0 %v359
    %880 = vmatprep.subr.bf16.mxu0 %v356
    %881 = vmatpush1.bf16.msra.mxu0 %v355
    %882 = vmatprep.subr.bf16.mxu0 %v352
    %883 = vmatpush1.bf16.msra.mxu0 %v351
    %884 = vmatprep.subr.bf16.mxu0 0
    %885 = vmatpush2.bf16.msra.mxu0 0
    %886 = vmatprep.subr.bf16.mxu0 0
    %887 = vmatpush2.bf16.msra.mxu0 0
    %888 = vmatprep.subr.bf16.mxu0 0
    %889 = vmatpush2.bf16.msra.mxu0 0
    %890 = vmatprep.subr.bf16.mxu0 0
    %891 = vmatpush2.bf16.msra.mxu0 0
    %892 = vmatprep.subr.bf16.mxu0 0
    %893 = vmatpush2.bf16.msra.mxu0 0
    %894 = vmatprep.subr.bf16.mxu0 0
    %895 = vmatpush2.bf16.msra.mxu0 0
    %896 = vmatprep.subr.bf16.mxu0 0
    %897 = vmatpush2.bf16.msra.mxu0 0
    %898 = vmatprep.subr.bf16.mxu0 0
    %899 = vmatpush2.bf16.msra.mxu0 0
    %900 = vmatprep.mubr.bf16.mxu0 0
    %901 = vmatmul.mubr.bf16.gmra.mxu0 %v867
    %v902 = vpop.f32.mrf.mxu0
    %v903 = vadd.f32 0.0, %v902
    %v904 = vpop.f32.mrf.mxu0
    %v905 = vadd.f32 0.0, %v904
    %v906 = vpop.f32.mrf.mxu0
    %v907 = vpop.f32.mrf.mxu0
    %908 = vdwg.mxu0
    %909 = vmatprep.subr.bf16.mxu0 %v382
    %910 = vmatpush1.bf16.msra.mxu0 %v381
    %911 = vmatprep.subr.bf16.mxu0 %v378
    %912 = vmatpush1.bf16.msra.mxu0 %v377
    %913 = vmatprep.subr.bf16.mxu0 %v374
    %914 = vmatpush1.bf16.msra.mxu0 %v373
    %915 = vmatprep.subr.bf16.mxu0 %v370
    %916 = vmatpush1.bf16.msra.mxu0 %v369
    %917 = vmatprep.subr.bf16.mxu0 %v366
    %918 = vmatpush1.bf16.msra.mxu0 %v365
    %919 = vmatprep.subr.bf16.mxu0 %v362
    %920 = vmatpush1.bf16.msra.mxu0 %v361
    %921 = vmatprep.subr.bf16.mxu0 %v358
    %922 = vmatpush1.bf16.msra.mxu0 %v357
    %923 = vmatprep.subr.bf16.mxu0 %v354
    %924 = vmatpush1.bf16.msra.mxu0 %v353
    %925 = vmatprep.subr.bf16.mxu0 0
    %926 = vmatpush2.bf16.msra.mxu0 0
    %927 = vmatprep.subr.bf16.mxu0 0
    %928 = vmatpush2.bf16.msra.mxu0 0
    %929 = vmatprep.subr.bf16.mxu0 0
    %930 = vmatpush2.bf16.msra.mxu0 0
    %931 = vmatprep.subr.bf16.mxu0 0
    %932 = vmatpush2.bf16.msra.mxu0 0
    %933 = vmatprep.subr.bf16.mxu0 0
    %934 = vmatpush2.bf16.msra.mxu0 0
    %935 = vmatprep.subr.bf16.mxu0 0
    %936 = vmatpush2.bf16.msra.mxu0 0
    %937 = vmatprep.subr.bf16.mxu0 0
    %938 = vmatpush2.bf16.msra.mxu0 0
    %939 = vmatprep.subr.bf16.mxu0 0
    %940 = vmatpush2.bf16.msra.mxu0 0
    %941 = vmatprep.mubr.bf16.mxu0 0
    %942 = vmatmul.mubr.bf16.gmra.mxu0 %v867
    %v943 = vpop.f32.mrf.mxu0
    %v944 = vadd.f32 0.0, %v943
    %v945 = vpop.f32.mrf.mxu0
    %v946 = vadd.f32 0.0, %v945
    %v947 = vpop.f32.mrf.mxu0
    %v948 = vpop.f32.mrf.mxu0
    %949 = vdwg.mxu0
    %v954 = vcombine.low %v903, %v905
    %v955 = vcombine.low %v944, %v946
    %v957 = vunpack.c.l.s4 1983009808
    %v958 = vunpack.c.0.s8 %v957
    %v959 = vlaneseq
    %v960 = vshrl.u32 %v959, 7
    %v961 = vsub.s32 %v958, %v960
    %v962 = vrot.slane %v954, %v961
    %v964 = vunpack.c.l.s4 1983009808
    %v965 = vunpack.c.0.s8 %v964
    %v966 = vlaneseq
    %v967 = vshrl.u32 %v966, 7
    %v968 = vsub.s32 %v965, %v967
    %v969 = vrot.slane %v955, %v968
    %v970 = vcombine.low %v962, %v969
    %v972 = vadd.f32 %v865, %v970
    %s973 = scalar_lea.vmem [#allocation7], 24
    %v974 = vld [vmem:[%s973] sm:$0xf]
    %v975 = vunpack.c.l.bf16 %v974
    %v976 = vld [vmem:[#allocation4] sm:$0x3]
    %v977 = vpack.c.bf16 %v976, %v976
    %978 = vmatprep.subr.bf16.mxu0 %v650
    %979 = vmatpush1.bf16.msra.mxu0 %v649
    %980 = vmatprep.subr.bf16.mxu0 %v646
    %981 = vmatpush1.bf16.msra.mxu0 %v645
    %982 = vmatprep.subr.bf16.mxu0 %v642
    %983 = vmatpush1.bf16.msra.mxu0 %v641
    %984 = vmatprep.subr.bf16.mxu0 %v638
    %985 = vmatpush1.bf16.msra.mxu0 %v637
    %986 = vmatprep.subr.bf16.mxu0 %v634
    %987 = vmatpush1.bf16.msra.mxu0 %v633
    %988 = vmatprep.subr.bf16.mxu0 %v630
    %989 = vmatpush1.bf16.msra.mxu0 %v629
    %990 = vmatprep.subr.bf16.mxu0 %v626
    %991 = vmatpush1.bf16.msra.mxu0 %v625
    %992 = vmatprep.subr.bf16.mxu0 %v622
    %993 = vmatpush1.bf16.msra.mxu0 %v621
    %994 = vmatprep.subr.bf16.mxu0 0
    %995 = vmatpush2.bf16.msra.mxu0 0
    %996 = vmatprep.subr.bf16.mxu0 0
    %997 = vmatpush2.bf16.msra.mxu0 0
    %998 = vmatprep.subr.bf16.mxu0 0
    %999 = vmatpush2.bf16.msra.mxu0 0
    %1000 = vmatprep.subr.bf16.mxu0 0
    %1001 = vmatpush2.bf16.msra.mxu0 0
    %1002 = vmatprep.subr.bf16.mxu0 0
    %1003 = vmatpush2.bf16.msra.mxu0 0
    %1004 = vmatprep.subr.bf16.mxu0 0
    %1005 = vmatpush2.bf16.msra.mxu0 0
    %1006 = vmatprep.subr.bf16.mxu0 0
    %1007 = vmatpush2.bf16.msra.mxu0 0
    %1008 = vmatprep.subr.bf16.mxu0 0
    %1009 = vmatpush2.bf16.msra.mxu0 0
    %1010 = vmatprep.mubr.bf16.mxu0 0
    %1011 = vmatmul.mubr.bf16.gmra.mxu0 %v977
    %v1012 = vpop.f32.mrf.mxu0
    %v1013 = vadd.f32 0.0, %v1012
    %v1014 = vpop.f32.mrf.mxu0
    %v1015 = vadd.f32 0.0, %v1014
    %v1016 = vpop.f32.mrf.mxu0
    %v1017 = vpop.f32.mrf.mxu0
    %1018 = vdwg.mxu0
    %1019 = vmatprep.subr.bf16.mxu0 %v652
    %1020 = vmatpush1.bf16.msra.mxu0 %v651
    %1021 = vmatprep.subr.bf16.mxu0 %v648
    %1022 = vmatpush1.bf16.msra.mxu0 %v647
    %1023 = vmatprep.subr.bf16.mxu0 %v644
    %1024 = vmatpush1.bf16.msra.mxu0 %v643
    %1025 = vmatprep.subr.bf16.mxu0 %v640
    %1026 = vmatpush1.bf16.msra.mxu0 %v639
    %1027 = vmatprep.subr.bf16.mxu0 %v636
    %1028 = vmatpush1.bf16.msra.mxu0 %v635
    %1029 = vmatprep.subr.bf16.mxu0 %v632
    %1030 = vmatpush1.bf16.msra.mxu0 %v631
    %1031 = vmatprep.subr.bf16.mxu0 %v628
    %1032 = vmatpush1.bf16.msra.mxu0 %v627
    %1033 = vmatprep.subr.bf16.mxu0 %v624
    %1034 = vmatpush1.bf16.msra.mxu0 %v623
    %1035 = vmatprep.subr.bf16.mxu0 0
    %1036 = vmatpush2.bf16.msra.mxu0 0
    %1037 = vmatprep.subr.bf16.mxu0 0
    %1038 = vmatpush2.bf16.msra.mxu0 0
    %1039 = vmatprep.subr.bf16.mxu0 0
    %1040 = vmatpush2.bf16.msra.mxu0 0
    %1041 = vmatprep.subr.bf16.mxu0 0
    %1042 = vmatpush2.bf16.msra.mxu0 0
    %1043 = vmatprep.subr.bf16.mxu0 0
    %1044 = vmatpush2.bf16.msra.mxu0 0
    %1045 = vmatprep.subr.bf16.mxu0 0
    %1046 = vmatpush2.bf16.msra.mxu0 0
    %1047 = vmatprep.subr.bf16.mxu0 0
    %1048 = vmatpush2.bf16.msra.mxu0 0
    %1049 = vmatprep.subr.bf16.mxu0 0
    %1050 = vmatpush2.bf16.msra.mxu0 0
    %1051 = vmatprep.mubr.bf16.mxu0 0
    %1052 = vmatmul.mubr.bf16.gmra.mxu0 %v977
    %v1053 = vpop.f32.mrf.mxu0
    %v1054 = vadd.f32 0.0, %v1053
    %v1055 = vpop.f32.mrf.mxu0
    %v1056 = vadd.f32 0.0, %v1055
    %v1057 = vpop.f32.mrf.mxu0
    %v1058 = vpop.f32.mrf.mxu0
    %1059 = vdwg.mxu0
    %v1064 = vcombine.low %v1013, %v1015
    %v1065 = vcombine.low %v1054, %v1056
    %v1067 = vunpack.c.l.s4 1983009808
    %v1068 = vunpack.c.0.s8 %v1067
    %v1069 = vlaneseq
    %v1070 = vshrl.u32 %v1069, 7
    %v1071 = vsub.s32 %v1068, %v1070
    %v1072 = vrot.slane %v1064, %v1071
    %v1074 = vunpack.c.l.s4 1983009808
    %v1075 = vunpack.c.0.s8 %v1074
    %v1076 = vlaneseq
    %v1077 = vshrl.u32 %v1076, 7
    %v1078 = vsub.s32 %v1075, %v1077
    %v1079 = vrot.slane %v1065, %v1078
    %v1080 = vcombine.low %v1072, %v1079
    %v1082 = vadd.f32 %v975, %v1080
    %v1083 = vld [vmem:[#allocation3] sm:$0x3]
    %v1084 = vxor.u32 %v972, 2147483648
    %v1085 = vmul.f32 %v1084, 1.442695
    %v1086 = vpow.pop %v1085
    %v1087 = vadd.f32 %v1086, 1.0
    %v1088 = vrcp.pop %v1087
    %v1089 = vmul.f32 1.0, %v1088
    %v1091 = vrot.slane %v972, 2
    %v1093 = vxor.u32 %v1091, 2147483648
    %v1094 = vmul.f32 %v1093, 1.442695
    %v1095 = vpow.pop %v1094
    %v1096 = vadd.f32 %v1095, 1.0
    %v1097 = vrcp.pop %v1096
    %v1098 = vmul.f32 1.0, %v1097
    %v1099 = vrot.slane %v972, 4
    %v1101 = vtanh.pop %v1099
    %v1102 = vrot.slane %v972, 6
    %v1104 = vxor.u32 %v1102, 2147483648
    %v1105 = vmul.f32 %v1104, 1.442695
    %v1106 = vpow.pop %v1105
    %v1107 = vadd.f32 %v1106, 1.0
    %v1108 = vrcp.pop %v1107
    %v1109 = vmul.f32 1.0, %v1108
    %v1110 = vmul.f32 %v1098, %v1083
    %v1111 = vmul.f32 %v1089, %v1101
    %v1112 = vadd.f32 %v1110, %v1111
    %v1113 = vtanh.pop %v1112
    %v1114 = vmul.f32 %v1109, %v1113
    %v1115 = vld [vmem:[#allocation5] sm:$0x3]
    %v1116 = vxor.u32 %v1082, 2147483648
    %v1117 = vmul.f32 %v1116, 1.442695
    %v1118 = vpow.pop %v1117
    %v1119 = vadd.f32 %v1118, 1.0
    %v1120 = vrcp.pop %v1119
    %v1121 = vmul.f32 1.0, %v1120
    %v1123 = vrot.slane %v1082, 2
    %v1125 = vxor.u32 %v1123, 2147483648
    %v1126 = vmul.f32 %v1125, 1.442695
    %v1127 = vpow.pop %v1126
    %v1128 = vadd.f32 %v1127, 1.0
    %v1129 = vrcp.pop %v1128
    %v1130 = vmul.f32 1.0, %v1129
    %v1131 = vrot.slane %v1082, 4
    %v1133 = vtanh.pop %v1131
    %v1134 = vrot.slane %v1082, 6
    %v1136 = vxor.u32 %v1134, 2147483648
    %v1137 = vmul.f32 %v1136, 1.442695
    %v1138 = vpow.pop %v1137
    %v1139 = vadd.f32 %v1138, 1.0
    %v1140 = vrcp.pop %v1139
    %v1141 = vmul.f32 1.0, %v1140
    %v1142 = vmul.f32 %v1130, %v1115
    %v1143 = vmul.f32 %v1121, %v1133
    %v1144 = vadd.f32 %v1142, %v1143
    %v1145 = vtanh.pop %v1144
    %v1146 = vmul.f32 %v1141, %v1145
    %1147 = vst [vmem:[#allocation2] sm:$0x3] %v1114
    %1148 = vst [vmem:[#allocation3] sm:$0x3] %v1112
    %1149 = vst [vmem:[#allocation4] sm:$0x3] %v1146
    %1150 = vst [vmem:[#allocation5] sm:$0x3] %v1144
    %v1151 = vpack.c.bf16 %v1114, %v1114
    %s1152 = scalar_lea.vmem %s3, 1
    %1153 = vst [vmem:[%s1152] sm:$0x1] %v1151
    %v1154 = vpack.c.bf16 %v1146, %v1146
    %s1155 = scalar_lea.vmem %s174, 6
    %1156 = vst [vmem:[%s1155] sm:$0x1] %v1154
    %s1157 = scalar_lea.vmem [#allocation6], 8
    %v1158 = vld [vmem:[%s1157] sm:$0xf]
    %v1159 = vunpack.c.l.bf16 %v1158
    %v1160 = vld [vmem:[#allocation2] sm:$0x3]
    %v1161 = vpack.c.bf16 %v1160, %v1160
    %1162 = vmatprep.subr.bf16.mxu0 %v380
    %1163 = vmatpush1.bf16.msra.mxu0 %v379
    %1164 = vmatprep.subr.bf16.mxu0 %v376
    %1165 = vmatpush1.bf16.msra.mxu0 %v375
    %1166 = vmatprep.subr.bf16.mxu0 %v372
    %1167 = vmatpush1.bf16.msra.mxu0 %v371
    %1168 = vmatprep.subr.bf16.mxu0 %v368
    %1169 = vmatpush1.bf16.msra.mxu0 %v367
    %1170 = vmatprep.subr.bf16.mxu0 %v364
    %1171 = vmatpush1.bf16.msra.mxu0 %v363
    %1172 = vmatprep.subr.bf16.mxu0 %v360
    %1173 = vmatpush1.bf16.msra.mxu0 %v359
    %1174 = vmatprep.subr.bf16.mxu0 %v356
    %1175 = vmatpush1.bf16.msra.mxu0 %v355
    %1176 = vmatprep.subr.bf16.mxu0 %v352
    %1177 = vmatpush1.bf16.msra.mxu0 %v351
    %1178 = vmatprep.subr.bf16.mxu0 0
    %1179 = vmatpush2.bf16.msra.mxu0 0
    %1180 = vmatprep.subr.bf16.mxu0 0
    %1181 = vmatpush2.bf16.msra.mxu0 0
    %1182 = vmatprep.subr.bf16.mxu0 0
    %1183 = vmatpush2.bf16.msra.mxu0 0
    %1184 = vmatprep.subr.bf16.mxu0 0
    %1185 = vmatpush2.bf16.msra.mxu0 0
    %1186 = vmatprep.subr.bf16.mxu0 0
    %1187 = vmatpush2.bf16.msra.mxu0 0
    %1188 = vmatprep.subr.bf16.mxu0 0
    %1189 = vmatpush2.bf16.msra.mxu0 0
    %1190 = vmatprep.subr.bf16.mxu0 0
    %1191 = vmatpush2.bf16.msra.mxu0 0
    %1192 = vmatprep.subr.bf16.mxu0 0
    %1193 = vmatpush2.bf16.msra.mxu0 0
    %1194 = vmatprep.mubr.bf16.mxu0 0
    %1195 = vmatmul.mubr.bf16.gmra.mxu0 %v1161
    %v1196 = vpop.f32.mrf.mxu0
    %v1197 = vadd.f32 0.0, %v1196
    %v1198 = vpop.f32.mrf.mxu0
    %v1199 = vadd.f32 0.0, %v1198
    %v1200 = vpop.f32.mrf.mxu0
    %v1201 = vpop.f32.mrf.mxu0
    %1202 = vdwg.mxu0
    %1203 = vmatprep.subr.bf16.mxu0 %v382
    %1204 = vmatpush1.bf16.msra.mxu0 %v381
    %1205 = vmatprep.subr.bf16.mxu0 %v378
    %1206 = vmatpush1.bf16.msra.mxu0 %v377
    %1207 = vmatprep.subr.bf16.mxu0 %v374
    %1208 = vmatpush1.bf16.msra.mxu0 %v373
    %1209 = vmatprep.subr.bf16.mxu0 %v370
    %1210 = vmatpush1.bf16.msra.mxu0 %v369
    %1211 = vmatprep.subr.bf16.mxu0 %v366
    %1212 = vmatpush1.bf16.msra.mxu0 %v365
    %1213 = vmatprep.subr.bf16.mxu0 %v362
    %1214 = vmatpush1.bf16.msra.mxu0 %v361
    %1215 = vmatprep.subr.bf16.mxu0 %v358
    %1216 = vmatpush1.bf16.msra.mxu0 %v357
    %1217 = vmatprep.subr.bf16.mxu0 %v354
    %1218 = vmatpush1.bf16.msra.mxu0 %v353
    %1219 = vmatprep.subr.bf16.mxu0 0
    %1220 = vmatpush2.bf16.msra.mxu0 0
    %1221 = vmatprep.subr.bf16.mxu0 0
    %1222 = vmatpush2.bf16.msra.mxu0 0
    %1223 = vmatprep.subr.bf16.mxu0 0
    %1224 = vmatpush2.bf16.msra.mxu0 0
    %1225 = vmatprep.subr.bf16.mxu0 0
    %1226 = vmatpush2.bf16.msra.mxu0 0
    %1227 = vmatprep.subr.bf16.mxu0 0
    %1228 = vmatpush2.bf16.msra.mxu0 0
    %1229 = vmatprep.subr.bf16.mxu0 0
    %1230 = vmatpush2.bf16.msra.mxu0 0
    %1231 = vmatprep.subr.bf16.mxu0 0
    %1232 = vmatpush2.bf16.msra.mxu0 0
    %1233 = vmatprep.subr.bf16.mxu0 0
    %1234 = vmatpush2.bf16.msra.mxu0 0
    %1235 = vmatprep.mubr.bf16.mxu0 0
    %1236 = vmatmul.mubr.bf16.gmra.mxu0 %v1161
    %v1237 = vpop.f32.mrf.mxu0
    %v1238 = vadd.f32 0.0, %v1237
    %v1239 = vpop.f32.mrf.mxu0
    %v1240 = vadd.f32 0.0, %v1239
    %v1241 = vpop.f32.mrf.mxu0
    %v1242 = vpop.f32.mrf.mxu0
    %1243 = vdwg.mxu0
    %v1248 = vcombine.low %v1197, %v1199
    %v1249 = vcombine.low %v1238, %v1240
    %v1251 = vunpack.c.l.s4 1983009808
    %v1252 = vunpack.c.0.s8 %v1251
    %v1253 = vlaneseq
    %v1254 = vshrl.u32 %v1253, 7
    %v1255 = vsub.s32 %v1252, %v1254
    %v1256 = vrot.slane %v1248, %v1255
    %v1258 = vunpack.c.l.s4 1983009808
    %v1259 = vunpack.c.0.s8 %v1258
    %v1260 = vlaneseq
    %v1261 = vshrl.u32 %v1260, 7
    %v1262 = vsub.s32 %v1259, %v1261
    %v1263 = vrot.slane %v1249, %v1262
    %v1264 = vcombine.low %v1256, %v1263
    %v1266 = vadd.f32 %v1159, %v1264
    %s1267 = scalar_lea.vmem [#allocation7], 20
    %v1268 = vld [vmem:[%s1267] sm:$0xf]
    %v1269 = vunpack.c.l.bf16 %v1268
    %v1270 = vld [vmem:[#allocation4] sm:$0x3]
    %v1271 = vpack.c.bf16 %v1270, %v1270
    %1272 = vmatprep.subr.bf16.mxu0 %v650
    %1273 = vmatpush1.bf16.msra.mxu0 %v649
    %1274 = vmatprep.subr.bf16.mxu0 %v646
    %1275 = vmatpush1.bf16.msra.mxu0 %v645
    %1276 = vmatprep.subr.bf16.mxu0 %v642
    %1277 = vmatpush1.bf16.msra.mxu0 %v641
    %1278 = vmatprep.subr.bf16.mxu0 %v638
    %1279 = vmatpush1.bf16.msra.mxu0 %v637
    %1280 = vmatprep.subr.bf16.mxu0 %v634
    %1281 = vmatpush1.bf16.msra.mxu0 %v633
    %1282 = vmatprep.subr.bf16.mxu0 %v630
    %1283 = vmatpush1.bf16.msra.mxu0 %v629
    %1284 = vmatprep.subr.bf16.mxu0 %v626
    %1285 = vmatpush1.bf16.msra.mxu0 %v625
    %1286 = vmatprep.subr.bf16.mxu0 %v622
    %1287 = vmatpush1.bf16.msra.mxu0 %v621
    %1288 = vmatprep.subr.bf16.mxu0 0
    %1289 = vmatpush2.bf16.msra.mxu0 0
    %1290 = vmatprep.subr.bf16.mxu0 0
    %1291 = vmatpush2.bf16.msra.mxu0 0
    %1292 = vmatprep.subr.bf16.mxu0 0
    %1293 = vmatpush2.bf16.msra.mxu0 0
    %1294 = vmatprep.subr.bf16.mxu0 0
    %1295 = vmatpush2.bf16.msra.mxu0 0
    %1296 = vmatprep.subr.bf16.mxu0 0
    %1297 = vmatpush2.bf16.msra.mxu0 0
    %1298 = vmatprep.subr.bf16.mxu0 0
    %1299 = vmatpush2.bf16.msra.mxu0 0
    %1300 = vmatprep.subr.bf16.mxu0 0
    %1301 = vmatpush2.bf16.msra.mxu0 0
    %1302 = vmatprep.subr.bf16.mxu0 0
    %1303 = vmatpush2.bf16.msra.mxu0 0
    %1304 = vmatprep.mubr.bf16.mxu0 0
    %1305 = vmatmul.mubr.bf16.gmra.mxu0 %v1271
    %v1306 = vpop.f32.mrf.mxu0
    %v1307 = vadd.f32 0.0, %v1306
    %v1308 = vpop.f32.mrf.mxu0
    %v1309 = vadd.f32 0.0, %v1308
    %v1310 = vpop.f32.mrf.mxu0
    %v1311 = vpop.f32.mrf.mxu0
    %1312 = vdwg.mxu0
    %1313 = vmatprep.subr.bf16.mxu0 %v652
    %1314 = vmatpush1.bf16.msra.mxu0 %v651
    %1315 = vmatprep.subr.bf16.mxu0 %v648
    %1316 = vmatpush1.bf16.msra.mxu0 %v647
    %1317 = vmatprep.subr.bf16.mxu0 %v644
    %1318 = vmatpush1.bf16.msra.mxu0 %v643
    %1319 = vmatprep.subr.bf16.mxu0 %v640
    %1320 = vmatpush1.bf16.msra.mxu0 %v639
    %1321 = vmatprep.subr.bf16.mxu0 %v636
    %1322 = vmatpush1.bf16.msra.mxu0 %v635
    %1323 = vmatprep.subr.bf16.mxu0 %v632
    %1324 = vmatpush1.bf16.msra.mxu0 %v631
    %1325 = vmatprep.subr.bf16.mxu0 %v628
    %1326 = vmatpush1.bf16.msra.mxu0 %v627
    %1327 = vmatprep.subr.bf16.mxu0 %v624
    %1328 = vmatpush1.bf16.msra.mxu0 %v623
    %1329 = vmatprep.subr.bf16.mxu0 0
    %1330 = vmatpush2.bf16.msra.mxu0 0
    %1331 = vmatprep.subr.bf16.mxu0 0
    %1332 = vmatpush2.bf16.msra.mxu0 0
    %1333 = vmatprep.subr.bf16.mxu0 0
    %1334 = vmatpush2.bf16.msra.mxu0 0
    %1335 = vmatprep.subr.bf16.mxu0 0
    %1336 = vmatpush2.bf16.msra.mxu0 0
    %1337 = vmatprep.subr.bf16.mxu0 0
    %1338 = vmatpush2.bf16.msra.mxu0 0
    %1339 = vmatprep.subr.bf16.mxu0 0
    %1340 = vmatpush2.bf16.msra.mxu0 0
    %1341 = vmatprep.subr.bf16.mxu0 0
    %1342 = vmatpush2.bf16.msra.mxu0 0
    %1343 = vmatprep.subr.bf16.mxu0 0
    %1344 = vmatpush2.bf16.msra.mxu0 0
    %1345 = vmatprep.mubr.bf16.mxu0 0
    %1346 = vmatmul.mubr.bf16.gmra.mxu0 %v1271
    %v1347 = vpop.f32.mrf.mxu0
    %v1348 = vadd.f32 0.0, %v1347
    %v1349 = vpop.f32.mrf.mxu0
    %v1350 = vadd.f32 0.0, %v1349
    %v1351 = vpop.f32.mrf.mxu0
    %v1352 = vpop.f32.mrf.mxu0
    %1353 = vdwg.mxu0
    %v1358 = vcombine.low %v1307, %v1309
    %v1359 = vcombine.low %v1348, %v1350
    %v1361 = vunpack.c.l.s4 1983009808
    %v1362 = vunpack.c.0.s8 %v1361
    %v1363 = vlaneseq
    %v1364 = vshrl.u32 %v1363, 7
    %v1365 = vsub.s32 %v1362, %v1364
    %v1366 = vrot.slane %v1358, %v1365
    %v1368 = vunpack.c.l.s4 1983009808
    %v1369 = vunpack.c.0.s8 %v1368
    %v1370 = vlaneseq
    %v1371 = vshrl.u32 %v1370, 7
    %v1372 = vsub.s32 %v1369, %v1371
    %v1373 = vrot.slane %v1359, %v1372
    %v1374 = vcombine.low %v1366, %v1373
    %v1376 = vadd.f32 %v1269, %v1374
    %v1377 = vld [vmem:[#allocation3] sm:$0x3]
    %v1378 = vxor.u32 %v1266, 2147483648
    %v1379 = vmul.f32 %v1378, 1.442695
    %v1380 = vpow.pop %v1379
    %v1381 = vadd.f32 %v1380, 1.0
    %v1382 = vrcp.pop %v1381
    %v1383 = vmul.f32 1.0, %v1382
    %v1385 = vrot.slane %v1266, 2
    %v1387 = vxor.u32 %v1385, 2147483648
    %v1388 = vmul.f32 %v1387, 1.442695
    %v1389 = vpow.pop %v1388
    %v1390 = vadd.f32 %v1389, 1.0
    %v1391 = vrcp.pop %v1390
    %v1392 = vmul.f32 1.0, %v1391
    %v1393 = vrot.slane %v1266, 4
    %v1395 = vtanh.pop %v1393
    %v1396 = vrot.slane %v1266, 6
    %v1398 = vxor.u32 %v1396, 2147483648
    %v1399 = vmul.f32 %v1398, 1.442695
    %v1400 = vpow.pop %v1399
    %v1401 = vadd.f32 %v1400, 1.0
    %v1402 = vrcp.pop %v1401
    %v1403 = vmul.f32 1.0, %v1402
    %v1404 = vmul.f32 %v1392, %v1377
    %v1405 = vmul.f32 %v1383, %v1395
    %v1406 = vadd.f32 %v1404, %v1405
    %v1407 = vtanh.pop %v1406
    %v1408 = vmul.f32 %v1403, %v1407
    %v1409 = vld [vmem:[#allocation5] sm:$0x3]
    %v1410 = vxor.u32 %v1376, 2147483648
    %v1411 = vmul.f32 %v1410, 1.442695
    %v1412 = vpow.pop %v1411
    %v1413 = vadd.f32 %v1412, 1.0
    %v1414 = vrcp.pop %v1413
    %v1415 = vmul.f32 1.0, %v1414
    %v1417 = vrot.slane %v1376, 2
    %v1419 = vxor.u32 %v1417, 2147483648
    %v1420 = vmul.f32 %v1419, 1.442695
    %v1421 = vpow.pop %v1420
    %v1422 = vadd.f32 %v1421, 1.0
    %v1423 = vrcp.pop %v1422
    %v1424 = vmul.f32 1.0, %v1423
    %v1425 = vrot.slane %v1376, 4
    %v1427 = vtanh.pop %v1425
    %v1428 = vrot.slane %v1376, 6
    %v1430 = vxor.u32 %v1428, 2147483648
    %v1431 = vmul.f32 %v1430, 1.442695
    %v1432 = vpow.pop %v1431
    %v1433 = vadd.f32 %v1432, 1.0
    %v1434 = vrcp.pop %v1433
    %v1435 = vmul.f32 1.0, %v1434
    %v1436 = vmul.f32 %v1424, %v1409
    %v1437 = vmul.f32 %v1415, %v1427
    %v1438 = vadd.f32 %v1436, %v1437
    %v1439 = vtanh.pop %v1438
    %v1440 = vmul.f32 %v1435, %v1439
    %1441 = vst [vmem:[#allocation2] sm:$0x3] %v1408
    %1442 = vst [vmem:[#allocation3] sm:$0x3] %v1406
    %1443 = vst [vmem:[#allocation4] sm:$0x3] %v1440
    %1444 = vst [vmem:[#allocation5] sm:$0x3] %v1438
    %v1445 = vpack.c.bf16 %v1408, %v1408
    %s1446 = scalar_lea.vmem %s3, 2
    %1447 = vst [vmem:[%s1446] sm:$0x1] %v1445
    %v1448 = vpack.c.bf16 %v1440, %v1440
    %s1449 = scalar_lea.vmem %s174, 5
    %1450 = vst [vmem:[%s1449] sm:$0x1] %v1448
    %s1451 = scalar_lea.vmem [#allocation6], 12
    %v1452 = vld [vmem:[%s1451] sm:$0xf]
    %v1453 = vunpack.c.l.bf16 %v1452
    %v1454 = vld [vmem:[#allocation2] sm:$0x3]
    %v1455 = vpack.c.bf16 %v1454, %v1454
    %1456 = vmatprep.subr.bf16.mxu0 %v380
    %1457 = vmatpush1.bf16.msra.mxu0 %v379
    %1458 = vmatprep.subr.bf16.mxu0 %v376
    %1459 = vmatpush1.bf16.msra.mxu0 %v375
    %1460 = vmatprep.subr.bf16.mxu0 %v372
    %1461 = vmatpush1.bf16.msra.mxu0 %v371
    %1462 = vmatprep.subr.bf16.mxu0 %v368
    %1463 = vmatpush1.bf16.msra.mxu0 %v367
    %1464 = vmatprep.subr.bf16.mxu0 %v364
    %1465 = vmatpush1.bf16.msra.mxu0 %v363
    %1466 = vmatprep.subr.bf16.mxu0 %v360
    %1467 = vmatpush1.bf16.msra.mxu0 %v359
    %1468 = vmatprep.subr.bf16.mxu0 %v356
    %1469 = vmatpush1.bf16.msra.mxu0 %v355
    %1470 = vmatprep.subr.bf16.mxu0 %v352
    %1471 = vmatpush1.bf16.msra.mxu0 %v351
    %1472 = vmatprep.subr.bf16.mxu0 0
    %1473 = vmatpush2.bf16.msra.mxu0 0
    %1474 = vmatprep.subr.bf16.mxu0 0
    %1475 = vmatpush2.bf16.msra.mxu0 0
    %1476 = vmatprep.subr.bf16.mxu0 0
    %1477 = vmatpush2.bf16.msra.mxu0 0
    %1478 = vmatprep.subr.bf16.mxu0 0
    %1479 = vmatpush2.bf16.msra.mxu0 0
    %1480 = vmatprep.subr.bf16.mxu0 0
    %1481 = vmatpush2.bf16.msra.mxu0 0
    %1482 = vmatprep.subr.bf16.mxu0 0
    %1483 = vmatpush2.bf16.msra.mxu0 0
    %1484 = vmatprep.subr.bf16.mxu0 0
    %1485 = vmatpush2.bf16.msra.mxu0 0
    %1486 = vmatprep.subr.bf16.mxu0 0
    %1487 = vmatpush2.bf16.msra.mxu0 0
    %1488 = vmatprep.mubr.bf16.mxu0 0
    %1489 = vmatmul.mubr.bf16.gmra.mxu0 %v1455
    %v1490 = vpop.f32.mrf.mxu0
    %v1491 = vadd.f32 0.0, %v1490
    %v1492 = vpop.f32.mrf.mxu0
    %v1493 = vadd.f32 0.0, %v1492
    %v1494 = vpop.f32.mrf.mxu0
    %v1495 = vpop.f32.mrf.mxu0
    %1496 = vdwg.mxu0
    %1497 = vmatprep.subr.bf16.mxu0 %v382
    %1498 = vmatpush1.bf16.msra.mxu0 %v381
    %1499 = vmatprep.subr.bf16.mxu0 %v378
    %1500 = vmatpush1.bf16.msra.mxu0 %v377
    %1501 = vmatprep.subr.bf16.mxu0 %v374
    %1502 = vmatpush1.bf16.msra.mxu0 %v373
    %1503 = vmatprep.subr.bf16.mxu0 %v370
    %1504 = vmatpush1.bf16.msra.mxu0 %v369
    %1505 = vmatprep.subr.bf16.mxu0 %v366
    %1506 = vmatpush1.bf16.msra.mxu0 %v365
    %1507 = vmatprep.subr.bf16.mxu0 %v362
    %1508 = vmatpush1.bf16.msra.mxu0 %v361
    %1509 = vmatprep.subr.bf16.mxu0 %v358
    %1510 = vmatpush1.bf16.msra.mxu0 %v357
    %1511 = vmatprep.subr.bf16.mxu0 %v354
    %1512 = vmatpush1.bf16.msra.mxu0 %v353
    %1513 = vmatprep.subr.bf16.mxu0 0
    %1514 = vmatpush2.bf16.msra.mxu0 0
    %1515 = vmatprep.subr.bf16.mxu0 0
    %1516 = vmatpush2.bf16.msra.mxu0 0
    %1517 = vmatprep.subr.bf16.mxu0 0
    %1518 = vmatpush2.bf16.msra.mxu0 0
    %1519 = vmatprep.subr.bf16.mxu0 0
    %1520 = vmatpush2.bf16.msra.mxu0 0
    %1521 = vmatprep.subr.bf16.mxu0 0
    %1522 = vmatpush2.bf16.msra.mxu0 0
    %1523 = vmatprep.subr.bf16.mxu0 0
    %1524 = vmatpush2.bf16.msra.mxu0 0
    %1525 = vmatprep.subr.bf16.mxu0 0
    %1526 = vmatpush2.bf16.msra.mxu0 0
    %1527 = vmatprep.subr.bf16.mxu0 0
    %1528 = vmatpush2.bf16.msra.mxu0 0
    %1529 = vmatprep.mubr.bf16.mxu0 0
    %1530 = vmatmul.mubr.bf16.gmra.mxu0 %v1455
    %v1531 = vpop.f32.mrf.mxu0
    %v1532 = vadd.f32 0.0, %v1531
    %v1533 = vpop.f32.mrf.mxu0
    %v1534 = vadd.f32 0.0, %v1533
    %v1535 = vpop.f32.mrf.mxu0
    %v1536 = vpop.f32.mrf.mxu0
    %1537 = vdwg.mxu0
    %v1542 = vcombine.low %v1491, %v1493
    %v1543 = vcombine.low %v1532, %v1534
    %v1545 = vunpack.c.l.s4 1983009808
    %v1546 = vunpack.c.0.s8 %v1545
    %v1547 = vlaneseq
    %v1548 = vshrl.u32 %v1547, 7
    %v1549 = vsub.s32 %v1546, %v1548
    %v1550 = vrot.slane %v1542, %v1549
    %v1552 = vunpack.c.l.s4 1983009808
    %v1553 = vunpack.c.0.s8 %v1552
    %v1554 = vlaneseq
    %v1555 = vshrl.u32 %v1554, 7
    %v1556 = vsub.s32 %v1553, %v1555
    %v1557 = vrot.slane %v1543, %v1556
    %v1558 = vcombine.low %v1550, %v1557
    %v1560 = vadd.f32 %v1453, %v1558
    %s1561 = scalar_lea.vmem [#allocation7], 16
    %v1562 = vld [vmem:[%s1561] sm:$0xf]
    %v1563 = vunpack.c.l.bf16 %v1562
    %v1564 = vld [vmem:[#allocation4] sm:$0x3]
    %v1565 = vpack.c.bf16 %v1564, %v1564
    %1566 = vmatprep.subr.bf16.mxu0 %v650
    %1567 = vmatpush1.bf16.msra.mxu0 %v649
    %1568 = vmatprep.subr.bf16.mxu0 %v646
    %1569 = vmatpush1.bf16.msra.mxu0 %v645
    %1570 = vmatprep.subr.bf16.mxu0 %v642
    %1571 = vmatpush1.bf16.msra.mxu0 %v641
    %1572 = vmatprep.subr.bf16.mxu0 %v638
    %1573 = vmatpush1.bf16.msra.mxu0 %v637
    %1574 = vmatprep.subr.bf16.mxu0 %v634
    %1575 = vmatpush1.bf16.msra.mxu0 %v633
    %1576 = vmatprep.subr.bf16.mxu0 %v630
    %1577 = vmatpush1.bf16.msra.mxu0 %v629
    %1578 = vmatprep.subr.bf16.mxu0 %v626
    %1579 = vmatpush1.bf16.msra.mxu0 %v625
    %1580 = vmatprep.subr.bf16.mxu0 %v622
    %1581 = vmatpush1.bf16.msra.mxu0 %v621
    %1582 = vmatprep.subr.bf16.mxu0 0
    %1583 = vmatpush2.bf16.msra.mxu0 0
    %1584 = vmatprep.subr.bf16.mxu0 0
    %1585 = vmatpush2.bf16.msra.mxu0 0
    %1586 = vmatprep.subr.bf16.mxu0 0
    %1587 = vmatpush2.bf16.msra.mxu0 0
    %1588 = vmatprep.subr.bf16.mxu0 0
    %1589 = vmatpush2.bf16.msra.mxu0 0
    %1590 = vmatprep.subr.bf16.mxu0 0
    %1591 = vmatpush2.bf16.msra.mxu0 0
    %1592 = vmatprep.subr.bf16.mxu0 0
    %1593 = vmatpush2.bf16.msra.mxu0 0
    %1594 = vmatprep.subr.bf16.mxu0 0
    %1595 = vmatpush2.bf16.msra.mxu0 0
    %1596 = vmatprep.subr.bf16.mxu0 0
    %1597 = vmatpush2.bf16.msra.mxu0 0
    %1598 = vmatprep.mubr.bf16.mxu0 0
    %1599 = vmatmul.mubr.bf16.gmra.mxu0 %v1565
    %v1600 = vpop.f32.mrf.mxu0
    %v1601 = vadd.f32 0.0, %v1600
    %v1602 = vpop.f32.mrf.mxu0
    %v1603 = vadd.f32 0.0, %v1602
    %v1604 = vpop.f32.mrf.mxu0
    %v1605 = vpop.f32.mrf.mxu0
    %1606 = vdwg.mxu0
    %1607 = vmatprep.subr.bf16.mxu0 %v652
    %1608 = vmatpush1.bf16.msra.mxu0 %v651
    %1609 = vmatprep.subr.bf16.mxu0 %v648
    %1610 = vmatpush1.bf16.msra.mxu0 %v647
    %1611 = vmatprep.subr.bf16.mxu0 %v644
    %1612 = vmatpush1.bf16.msra.mxu0 %v643
    %1613 = vmatprep.subr.bf16.mxu0 %v640
    %1614 = vmatpush1.bf16.msra.mxu0 %v639
    %1615 = vmatprep.subr.bf16.mxu0 %v636
    %1616 = vmatpush1.bf16.msra.mxu0 %v635
    %1617 = vmatprep.subr.bf16.mxu0 %v632
    %1618 = vmatpush1.bf16.msra.mxu0 %v631
    %1619 = vmatprep.subr.bf16.mxu0 %v628
    %1620 = vmatpush1.bf16.msra.mxu0 %v627
    %1621 = vmatprep.subr.bf16.mxu0 %v624
    %1622 = vmatpush1.bf16.msra.mxu0 %v623
    %1623 = vmatprep.subr.bf16.mxu0 0
    %1624 = vmatpush2.bf16.msra.mxu0 0
    %1625 = vmatprep.subr.bf16.mxu0 0
    %1626 = vmatpush2.bf16.msra.mxu0 0
    %1627 = vmatprep.subr.bf16.mxu0 0
    %1628 = vmatpush2.bf16.msra.mxu0 0
    %1629 = vmatprep.subr.bf16.mxu0 0
    %1630 = vmatpush2.bf16.msra.mxu0 0
    %1631 = vmatprep.subr.bf16.mxu0 0
    %1632 = vmatpush2.bf16.msra.mxu0 0
    %1633 = vmatprep.subr.bf16.mxu0 0
    %1634 = vmatpush2.bf16.msra.mxu0 0
    %1635 = vmatprep.subr.bf16.mxu0 0
    %1636 = vmatpush2.bf16.msra.mxu0 0
    %1637 = vmatprep.subr.bf16.mxu0 0
    %1638 = vmatpush2.bf16.msra.mxu0 0
    %1639 = vmatprep.mubr.bf16.mxu0 0
    %1640 = vmatmul.mubr.bf16.gmra.mxu0 %v1565
    %v1641 = vpop.f32.mrf.mxu0
    %v1642 = vadd.f32 0.0, %v1641
    %v1643 = vpop.f32.mrf.mxu0
    %v1644 = vadd.f32 0.0, %v1643
    %v1645 = vpop.f32.mrf.mxu0
    %v1646 = vpop.f32.mrf.mxu0
    %1647 = vdwg.mxu0
    %v1652 = vcombine.low %v1601, %v1603
    %v1653 = vcombine.low %v1642, %v1644
    %v1655 = vunpack.c.l.s4 1983009808
    %v1656 = vunpack.c.0.s8 %v1655
    %v1657 = vlaneseq
    %v1658 = vshrl.u32 %v1657, 7
    %v1659 = vsub.s32 %v1656, %v1658
    %v1660 = vrot.slane %v1652, %v1659
    %v1662 = vunpack.c.l.s4 1983009808
    %v1663 = vunpack.c.0.s8 %v1662
    %v1664 = vlaneseq
    %v1665 = vshrl.u32 %v1664, 7
    %v1666 = vsub.s32 %v1663, %v1665
    %v1667 = vrot.slane %v1653, %v1666
    %v1668 = vcombine.low %v1660, %v1667
    %v1670 = vadd.f32 %v1563, %v1668
    %v1671 = vld [vmem:[#allocation3] sm:$0x3]
    %v1672 = vxor.u32 %v1560, 2147483648
    %v1673 = vmul.f32 %v1672, 1.442695
    %v1674 = vpow.pop %v1673
    %v1675 = vadd.f32 %v1674, 1.0
    %v1676 = vrcp.pop %v1675
    %v1677 = vmul.f32 1.0, %v1676
    %v1679 = vrot.slane %v1560, 2
    %v1681 = vxor.u32 %v1679, 2147483648
    %v1682 = vmul.f32 %v1681, 1.442695
    %v1683 = vpow.pop %v1682
    %v1684 = vadd.f32 %v1683, 1.0
    %v1685 = vrcp.pop %v1684
    %v1686 = vmul.f32 1.0, %v1685
    %v1687 = vrot.slane %v1560, 4
    %v1689 = vtanh.pop %v1687
    %v1690 = vrot.slane %v1560, 6
    %v1692 = vxor.u32 %v1690, 2147483648
    %v1693 = vmul.f32 %v1692, 1.442695
    %v1694 = vpow.pop %v1693
    %v1695 = vadd.f32 %v1694, 1.0
    %v1696 = vrcp.pop %v1695
    %v1697 = vmul.f32 1.0, %v1696
    %v1698 = vmul.f32 %v1686, %v1671
    %v1699 = vmul.f32 %v1677, %v1689
    %v1700 = vadd.f32 %v1698, %v1699
    %v1701 = vtanh.pop %v1700
    %v1702 = vmul.f32 %v1697, %v1701
    %v1703 = vld [vmem:[#allocation5] sm:$0x3]
    %v1704 = vxor.u32 %v1670, 2147483648
    %v1705 = vmul.f32 %v1704, 1.442695
    %v1706 = vpow.pop %v1705
    %v1707 = vadd.f32 %v1706, 1.0
    %v1708 = vrcp.pop %v1707
    %v1709 = vmul.f32 1.0, %v1708
    %v1711 = vrot.slane %v1670, 2
    %v1713 = vxor.u32 %v1711, 2147483648
    %v1714 = vmul.f32 %v1713, 1.442695
    %v1715 = vpow.pop %v1714
    %v1716 = vadd.f32 %v1715, 1.0
    %v1717 = vrcp.pop %v1716
    %v1718 = vmul.f32 1.0, %v1717
    %v1719 = vrot.slane %v1670, 4
    %v1721 = vtanh.pop %v1719
    %v1722 = vrot.slane %v1670, 6
    %v1724 = vxor.u32 %v1722, 2147483648
    %v1725 = vmul.f32 %v1724, 1.442695
    %v1726 = vpow.pop %v1725
    %v1727 = vadd.f32 %v1726, 1.0
    %v1728 = vrcp.pop %v1727
    %v1729 = vmul.f32 1.0, %v1728
    %v1730 = vmul.f32 %v1718, %v1703
    %v1731 = vmul.f32 %v1709, %v1721
    %v1732 = vadd.f32 %v1730, %v1731
    %v1733 = vtanh.pop %v1732
    %v1734 = vmul.f32 %v1729, %v1733
    %1735 = vst [vmem:[#allocation2] sm:$0x3] %v1702
    %1736 = vst [vmem:[#allocation3] sm:$0x3] %v1700
    %1737 = vst [vmem:[#allocation4] sm:$0x3] %v1734
    %1738 = vst [vmem:[#allocation5] sm:$0x3] %v1732
    %v1739 = vpack.c.bf16 %v1702, %v1702
    %s1740 = scalar_lea.vmem %s3, 3
    %1741 = vst [vmem:[%s1740] sm:$0x1] %v1739
    %v1742 = vpack.c.bf16 %v1734, %v1734
    %s1743 = scalar_lea.vmem %s174, 4
    %1744 = vst [vmem:[%s1743] sm:$0x1] %v1742
    %s1745 = scalar_lea.vmem [#allocation6], 16
    %v1746 = vld [vmem:[%s1745] sm:$0xf]
    %v1747 = vunpack.c.l.bf16 %v1746
    %v1748 = vld [vmem:[#allocation2] sm:$0x3]
    %v1749 = vpack.c.bf16 %v1748, %v1748
    %1750 = vmatprep.subr.bf16.mxu0 %v380
    %1751 = vmatpush1.bf16.msra.mxu0 %v379
    %1752 = vmatprep.subr.bf16.mxu0 %v376
    %1753 = vmatpush1.bf16.msra.mxu0 %v375
    %1754 = vmatprep.subr.bf16.mxu0 %v372
    %1755 = vmatpush1.bf16.msra.mxu0 %v371
    %1756 = vmatprep.subr.bf16.mxu0 %v368
    %1757 = vmatpush1.bf16.msra.mxu0 %v367
    %1758 = vmatprep.subr.bf16.mxu0 %v364
    %1759 = vmatpush1.bf16.msra.mxu0 %v363
    %1760 = vmatprep.subr.bf16.mxu0 %v360
    %1761 = vmatpush1.bf16.msra.mxu0 %v359
    %1762 = vmatprep.subr.bf16.mxu0 %v356
    %1763 = vmatpush1.bf16.msra.mxu0 %v355
    %1764 = vmatprep.subr.bf16.mxu0 %v352
    %1765 = vmatpush1.bf16.msra.mxu0 %v351
    %1766 = vmatprep.subr.bf16.mxu0 0
    %1767 = vmatpush2.bf16.msra.mxu0 0
    %1768 = vmatprep.subr.bf16.mxu0 0
    %1769 = vmatpush2.bf16.msra.mxu0 0
    %1770 = vmatprep.subr.bf16.mxu0 0
    %1771 = vmatpush2.bf16.msra.mxu0 0
    %1772 = vmatprep.subr.bf16.mxu0 0
    %1773 = vmatpush2.bf16.msra.mxu0 0
    %1774 = vmatprep.subr.bf16.mxu0 0
    %1775 = vmatpush2.bf16.msra.mxu0 0
    %1776 = vmatprep.subr.bf16.mxu0 0
    %1777 = vmatpush2.bf16.msra.mxu0 0
    %1778 = vmatprep.subr.bf16.mxu0 0
    %1779 = vmatpush2.bf16.msra.mxu0 0
    %1780 = vmatprep.subr.bf16.mxu0 0
    %1781 = vmatpush2.bf16.msra.mxu0 0
    %1782 = vmatprep.mubr.bf16.mxu0 0
    %1783 = vmatmul.mubr.bf16.gmra.mxu0 %v1749
    %v1784 = vpop.f32.mrf.mxu0
    %v1785 = vadd.f32 0.0, %v1784
    %v1786 = vpop.f32.mrf.mxu0
    %v1787 = vadd.f32 0.0, %v1786
    %v1788 = vpop.f32.mrf.mxu0
    %v1789 = vpop.f32.mrf.mxu0
    %1790 = vdwg.mxu0
    %1791 = vmatprep.subr.bf16.mxu0 %v382
    %1792 = vmatpush1.bf16.msra.mxu0 %v381
    %1793 = vmatprep.subr.bf16.mxu0 %v378
    %1794 = vmatpush1.bf16.msra.mxu0 %v377
    %1795 = vmatprep.subr.bf16.mxu0 %v374
    %1796 = vmatpush1.bf16.msra.mxu0 %v373
    %1797 = vmatprep.subr.bf16.mxu0 %v370
    %1798 = vmatpush1.bf16.msra.mxu0 %v369
    %1799 = vmatprep.subr.bf16.mxu0 %v366
    %1800 = vmatpush1.bf16.msra.mxu0 %v365
    %1801 = vmatprep.subr.bf16.mxu0 %v362
    %1802 = vmatpush1.bf16.msra.mxu0 %v361
    %1803 = vmatprep.subr.bf16.mxu0 %v358
    %1804 = vmatpush1.bf16.msra.mxu0 %v357
    %1805 = vmatprep.subr.bf16.mxu0 %v354
    %1806 = vmatpush1.bf16.msra.mxu0 %v353
    %1807 = vmatprep.subr.bf16.mxu0 0
    %1808 = vmatpush2.bf16.msra.mxu0 0
    %1809 = vmatprep.subr.bf16.mxu0 0
    %1810 = vmatpush2.bf16.msra.mxu0 0
    %1811 = vmatprep.subr.bf16.mxu0 0
    %1812 = vmatpush2.bf16.msra.mxu0 0
    %1813 = vmatprep.subr.bf16.mxu0 0
    %1814 = vmatpush2.bf16.msra.mxu0 0
    %1815 = vmatprep.subr.bf16.mxu0 0
    %1816 = vmatpush2.bf16.msra.mxu0 0
    %1817 = vmatprep.subr.bf16.mxu0 0
    %1818 = vmatpush2.bf16.msra.mxu0 0
    %1819 = vmatprep.subr.bf16.mxu0 0
    %1820 = vmatpush2.bf16.msra.mxu0 0
    %1821 = vmatprep.subr.bf16.mxu0 0
    %1822 = vmatpush2.bf16.msra.mxu0 0
    %1823 = vmatprep.mubr.bf16.mxu0 0
    %1824 = vmatmul.mubr.bf16.gmra.mxu0 %v1749
    %v1825 = vpop.f32.mrf.mxu0
    %v1826 = vadd.f32 0.0, %v1825
    %v1827 = vpop.f32.mrf.mxu0
    %v1828 = vadd.f32 0.0, %v1827
    %v1829 = vpop.f32.mrf.mxu0
    %v1830 = vpop.f32.mrf.mxu0
    %1831 = vdwg.mxu0
    %v1836 = vcombine.low %v1785, %v1787
    %v1837 = vcombine.low %v1826, %v1828
    %v1839 = vunpack.c.l.s4 1983009808
    %v1840 = vunpack.c.0.s8 %v1839
    %v1841 = vlaneseq
    %v1842 = vshrl.u32 %v1841, 7
    %v1843 = vsub.s32 %v1840, %v1842
    %v1844 = vrot.slane %v1836, %v1843
    %v1846 = vunpack.c.l.s4 1983009808
    %v1847 = vunpack.c.0.s8 %v1846
    %v1848 = vlaneseq
    %v1849 = vshrl.u32 %v1848, 7
    %v1850 = vsub.s32 %v1847, %v1849
    %v1851 = vrot.slane %v1837, %v1850
    %v1852 = vcombine.low %v1844, %v1851
    %v1854 = vadd.f32 %v1747, %v1852
    %s1855 = scalar_lea.vmem [#allocation7], 12
    %v1856 = vld [vmem:[%s1855] sm:$0xf]
    %v1857 = vunpack.c.l.bf16 %v1856
    %v1858 = vld [vmem:[#allocation4] sm:$0x3]
    %v1859 = vpack.c.bf16 %v1858, %v1858
    %1860 = vmatprep.subr.bf16.mxu0 %v650
    %1861 = vmatpush1.bf16.msra.mxu0 %v649
    %1862 = vmatprep.subr.bf16.mxu0 %v646
    %1863 = vmatpush1.bf16.msra.mxu0 %v645
    %1864 = vmatprep.subr.bf16.mxu0 %v642
    %1865 = vmatpush1.bf16.msra.mxu0 %v641
    %1866 = vmatprep.subr.bf16.mxu0 %v638
    %1867 = vmatpush1.bf16.msra.mxu0 %v637
    %1868 = vmatprep.subr.bf16.mxu0 %v634
    %1869 = vmatpush1.bf16.msra.mxu0 %v633
    %1870 = vmatprep.subr.bf16.mxu0 %v630
    %1871 = vmatpush1.bf16.msra.mxu0 %v629
    %1872 = vmatprep.subr.bf16.mxu0 %v626
    %1873 = vmatpush1.bf16.msra.mxu0 %v625
    %1874 = vmatprep.subr.bf16.mxu0 %v622
    %1875 = vmatpush1.bf16.msra.mxu0 %v621
    %1876 = vmatprep.subr.bf16.mxu0 0
    %1877 = vmatpush2.bf16.msra.mxu0 0
    %1878 = vmatprep.subr.bf16.mxu0 0
    %1879 = vmatpush2.bf16.msra.mxu0 0
    %1880 = vmatprep.subr.bf16.mxu0 0
    %1881 = vmatpush2.bf16.msra.mxu0 0
    %1882 = vmatprep.subr.bf16.mxu0 0
    %1883 = vmatpush2.bf16.msra.mxu0 0
    %1884 = vmatprep.subr.bf16.mxu0 0
    %1885 = vmatpush2.bf16.msra.mxu0 0
    %1886 = vmatprep.subr.bf16.mxu0 0
    %1887 = vmatpush2.bf16.msra.mxu0 0
    %1888 = vmatprep.subr.bf16.mxu0 0
    %1889 = vmatpush2.bf16.msra.mxu0 0
    %1890 = vmatprep.subr.bf16.mxu0 0
    %1891 = vmatpush2.bf16.msra.mxu0 0
    %1892 = vmatprep.mubr.bf16.mxu0 0
    %1893 = vmatmul.mubr.bf16.gmra.mxu0 %v1859
    %v1894 = vpop.f32.mrf.mxu0
    %v1895 = vadd.f32 0.0, %v1894
    %v1896 = vpop.f32.mrf.mxu0
    %v1897 = vadd.f32 0.0, %v1896
    %v1898 = vpop.f32.mrf.mxu0
    %v1899 = vpop.f32.mrf.mxu0
    %1900 = vdwg.mxu0
    %1901 = vmatprep.subr.bf16.mxu0 %v652
    %1902 = vmatpush1.bf16.msra.mxu0 %v651
    %1903 = vmatprep.subr.bf16.mxu0 %v648
    %1904 = vmatpush1.bf16.msra.mxu0 %v647
    %1905 = vmatprep.subr.bf16.mxu0 %v644
    %1906 = vmatpush1.bf16.msra.mxu0 %v643
    %1907 = vmatprep.subr.bf16.mxu0 %v640
    %1908 = vmatpush1.bf16.msra.mxu0 %v639
    %1909 = vmatprep.subr.bf16.mxu0 %v636
    %1910 = vmatpush1.bf16.msra.mxu0 %v635
    %1911 = vmatprep.subr.bf16.mxu0 %v632
    %1912 = vmatpush1.bf16.msra.mxu0 %v631
    %1913 = vmatprep.subr.bf16.mxu0 %v628
    %1914 = vmatpush1.bf16.msra.mxu0 %v627
    %1915 = vmatprep.subr.bf16.mxu0 %v624
    %1916 = vmatpush1.bf16.msra.mxu0 %v623
    %1917 = vmatprep.subr.bf16.mxu0 0
    %1918 = vmatpush2.bf16.msra.mxu0 0
    %1919 = vmatprep.subr.bf16.mxu0 0
    %1920 = vmatpush2.bf16.msra.mxu0 0
    %1921 = vmatprep.subr.bf16.mxu0 0
    %1922 = vmatpush2.bf16.msra.mxu0 0
    %1923 = vmatprep.subr.bf16.mxu0 0
    %1924 = vmatpush2.bf16.msra.mxu0 0
    %1925 = vmatprep.subr.bf16.mxu0 0
    %1926 = vmatpush2.bf16.msra.mxu0 0
    %1927 = vmatprep.subr.bf16.mxu0 0
    %1928 = vmatpush2.bf16.msra.mxu0 0
    %1929 = vmatprep.subr.bf16.mxu0 0
    %1930 = vmatpush2.bf16.msra.mxu0 0
    %1931 = vmatprep.subr.bf16.mxu0 0
    %1932 = vmatpush2.bf16.msra.mxu0 0
    %1933 = vmatprep.mubr.bf16.mxu0 0
    %1934 = vmatmul.mubr.bf16.gmra.mxu0 %v1859
    %v1935 = vpop.f32.mrf.mxu0
    %v1936 = vadd.f32 0.0, %v1935
    %v1937 = vpop.f32.mrf.mxu0
    %v1938 = vadd.f32 0.0, %v1937
    %v1939 = vpop.f32.mrf.mxu0
    %v1940 = vpop.f32.mrf.mxu0
    %1941 = vdwg.mxu0
    %v1946 = vcombine.low %v1895, %v1897
    %v1947 = vcombine.low %v1936, %v1938
    %v1949 = vunpack.c.l.s4 1983009808
    %v1950 = vunpack.c.0.s8 %v1949
    %v1951 = vlaneseq
    %v1952 = vshrl.u32 %v1951, 7
    %v1953 = vsub.s32 %v1950, %v1952
    %v1954 = vrot.slane %v1946, %v1953
    %v1956 = vunpack.c.l.s4 1983009808
    %v1957 = vunpack.c.0.s8 %v1956
    %v1958 = vlaneseq
    %v1959 = vshrl.u32 %v1958, 7
    %v1960 = vsub.s32 %v1957, %v1959
    %v1961 = vrot.slane %v1947, %v1960
    %v1962 = vcombine.low %v1954, %v1961
    %v1964 = vadd.f32 %v1857, %v1962
    %v1965 = vld [vmem:[#allocation3] sm:$0x3]
    %v1966 = vxor.u32 %v1854, 2147483648
    %v1967 = vmul.f32 %v1966, 1.442695
    %v1968 = vpow.pop %v1967
    %v1969 = vadd.f32 %v1968, 1.0
    %v1970 = vrcp.pop %v1969
    %v1971 = vmul.f32 1.0, %v1970
    %v1973 = vrot.slane %v1854, 2
    %v1975 = vxor.u32 %v1973, 2147483648
    %v1976 = vmul.f32 %v1975, 1.442695
    %v1977 = vpow.pop %v1976
    %v1978 = vadd.f32 %v1977, 1.0
    %v1979 = vrcp.pop %v1978
    %v1980 = vmul.f32 1.0, %v1979
    %v1981 = vrot.slane %v1854, 4
    %v1983 = vtanh.pop %v1981
    %v1984 = vrot.slane %v1854, 6
    %v1986 = vxor.u32 %v1984, 2147483648
    %v1987 = vmul.f32 %v1986, 1.442695
    %v1988 = vpow.pop %v1987
    %v1989 = vadd.f32 %v1988, 1.0
    %v1990 = vrcp.pop %v1989
    %v1991 = vmul.f32 1.0, %v1990
    %v1992 = vmul.f32 %v1980, %v1965
    %v1993 = vmul.f32 %v1971, %v1983
    %v1994 = vadd.f32 %v1992, %v1993
    %v1995 = vtanh.pop %v1994
    %v1996 = vmul.f32 %v1991, %v1995
    %v1997 = vld [vmem:[#allocation5] sm:$0x3]
    %v1998 = vxor.u32 %v1964, 2147483648
    %v1999 = vmul.f32 %v1998, 1.442695
    %v2000 = vpow.pop %v1999
    %v2001 = vadd.f32 %v2000, 1.0
    %v2002 = vrcp.pop %v2001
    %v2003 = vmul.f32 1.0, %v2002
    %v2005 = vrot.slane %v1964, 2
    %v2007 = vxor.u32 %v2005, 2147483648
    %v2008 = vmul.f32 %v2007, 1.442695
    %v2009 = vpow.pop %v2008
    %v2010 = vadd.f32 %v2009, 1.0
    %v2011 = vrcp.pop %v2010
    %v2012 = vmul.f32 1.0, %v2011
    %v2013 = vrot.slane %v1964, 4
    %v2015 = vtanh.pop %v2013
    %v2016 = vrot.slane %v1964, 6
    %v2018 = vxor.u32 %v2016, 2147483648
    %v2019 = vmul.f32 %v2018, 1.442695
    %v2020 = vpow.pop %v2019
    %v2021 = vadd.f32 %v2020, 1.0
    %v2022 = vrcp.pop %v2021
    %v2023 = vmul.f32 1.0, %v2022
    %v2024 = vmul.f32 %v2012, %v1997
    %v2025 = vmul.f32 %v2003, %v2015
    %v2026 = vadd.f32 %v2024, %v2025
    %v2027 = vtanh.pop %v2026
    %v2028 = vmul.f32 %v2023, %v2027
    %2029 = vst [vmem:[#allocation2] sm:$0x3] %v1996
    %2030 = vst [vmem:[#allocation3] sm:$0x3] %v1994
    %2031 = vst [vmem:[#allocation4] sm:$0x3] %v2028
    %2032 = vst [vmem:[#allocation5] sm:$0x3] %v2026
    %v2033 = vpack.c.bf16 %v1996, %v1996
    %s2034 = scalar_lea.vmem %s3, 4
    %2035 = vst [vmem:[%s2034] sm:$0x1] %v2033
    %v2036 = vpack.c.bf16 %v2028, %v2028
    %s2037 = scalar_lea.vmem %s174, 3
    %2038 = vst [vmem:[%s2037] sm:$0x1] %v2036
    %s2039 = scalar_lea.vmem [#allocation6], 20
    %v2040 = vld [vmem:[%s2039] sm:$0xf]
    %v2041 = vunpack.c.l.bf16 %v2040
    %v2042 = vld [vmem:[#allocation2] sm:$0x3]
    %v2043 = vpack.c.bf16 %v2042, %v2042
    %2044 = vmatprep.subr.bf16.mxu0 %v380
    %2045 = vmatpush1.bf16.msra.mxu0 %v379
    %2046 = vmatprep.subr.bf16.mxu0 %v376
    %2047 = vmatpush1.bf16.msra.mxu0 %v375
    %2048 = vmatprep.subr.bf16.mxu0 %v372
    %2049 = vmatpush1.bf16.msra.mxu0 %v371
    %2050 = vmatprep.subr.bf16.mxu0 %v368
    %2051 = vmatpush1.bf16.msra.mxu0 %v367
    %2052 = vmatprep.subr.bf16.mxu0 %v364
    %2053 = vmatpush1.bf16.msra.mxu0 %v363
    %2054 = vmatprep.subr.bf16.mxu0 %v360
    %2055 = vmatpush1.bf16.msra.mxu0 %v359
    %2056 = vmatprep.subr.bf16.mxu0 %v356
    %2057 = vmatpush1.bf16.msra.mxu0 %v355
    %2058 = vmatprep.subr.bf16.mxu0 %v352
    %2059 = vmatpush1.bf16.msra.mxu0 %v351
    %2060 = vmatprep.subr.bf16.mxu0 0
    %2061 = vmatpush2.bf16.msra.mxu0 0
    %2062 = vmatprep.subr.bf16.mxu0 0
    %2063 = vmatpush2.bf16.msra.mxu0 0
    %2064 = vmatprep.subr.bf16.mxu0 0
    %2065 = vmatpush2.bf16.msra.mxu0 0
    %2066 = vmatprep.subr.bf16.mxu0 0
    %2067 = vmatpush2.bf16.msra.mxu0 0
    %2068 = vmatprep.subr.bf16.mxu0 0
    %2069 = vmatpush2.bf16.msra.mxu0 0
    %2070 = vmatprep.subr.bf16.mxu0 0
    %2071 = vmatpush2.bf16.msra.mxu0 0
    %2072 = vmatprep.subr.bf16.mxu0 0
    %2073 = vmatpush2.bf16.msra.mxu0 0
    %2074 = vmatprep.subr.bf16.mxu0 0
    %2075 = vmatpush2.bf16.msra.mxu0 0
    %2076 = vmatprep.mubr.bf16.mxu0 0
    %2077 = vmatmul.mubr.bf16.gmra.mxu0 %v2043
    %v2078 = vpop.f32.mrf.mxu0
    %v2079 = vadd.f32 0.0, %v2078
    %v2080 = vpop.f32.mrf.mxu0
    %v2081 = vadd.f32 0.0, %v2080
    %v2082 = vpop.f32.mrf.mxu0
    %v2083 = vpop.f32.mrf.mxu0
    %2084 = vdwg.mxu0
    %2085 = vmatprep.subr.bf16.mxu0 %v382
    %2086 = vmatpush1.bf16.msra.mxu0 %v381
    %2087 = vmatprep.subr.bf16.mxu0 %v378
    %2088 = vmatpush1.bf16.msra.mxu0 %v377
    %2089 = vmatprep.subr.bf16.mxu0 %v374
    %2090 = vmatpush1.bf16.msra.mxu0 %v373
    %2091 = vmatprep.subr.bf16.mxu0 %v370
    %2092 = vmatpush1.bf16.msra.mxu0 %v369
    %2093 = vmatprep.subr.bf16.mxu0 %v366
    %2094 = vmatpush1.bf16.msra.mxu0 %v365
    %2095 = vmatprep.subr.bf16.mxu0 %v362
    %2096 = vmatpush1.bf16.msra.mxu0 %v361
    %2097 = vmatprep.subr.bf16.mxu0 %v358
    %2098 = vmatpush1.bf16.msra.mxu0 %v357
    %2099 = vmatprep.subr.bf16.mxu0 %v354
    %2100 = vmatpush1.bf16.msra.mxu0 %v353
    %2101 = vmatprep.subr.bf16.mxu0 0
    %2102 = vmatpush2.bf16.msra.mxu0 0
    %2103 = vmatprep.subr.bf16.mxu0 0
    %2104 = vmatpush2.bf16.msra.mxu0 0
    %2105 = vmatprep.subr.bf16.mxu0 0
    %2106 = vmatpush2.bf16.msra.mxu0 0
    %2107 = vmatprep.subr.bf16.mxu0 0
    %2108 = vmatpush2.bf16.msra.mxu0 0
    %2109 = vmatprep.subr.bf16.mxu0 0
    %2110 = vmatpush2.bf16.msra.mxu0 0
    %2111 = vmatprep.subr.bf16.mxu0 0
    %2112 = vmatpush2.bf16.msra.mxu0 0
    %2113 = vmatprep.subr.bf16.mxu0 0
    %2114 = vmatpush2.bf16.msra.mxu0 0
    %2115 = vmatprep.subr.bf16.mxu0 0
    %2116 = vmatpush2.bf16.msra.mxu0 0
    %2117 = vmatprep.mubr.bf16.mxu0 0
    %2118 = vmatmul.mubr.bf16.gmra.mxu0 %v2043
    %v2119 = vpop.f32.mrf.mxu0
    %v2120 = vadd.f32 0.0, %v2119
    %v2121 = vpop.f32.mrf.mxu0
    %v2122 = vadd.f32 0.0, %v2121
    %v2123 = vpop.f32.mrf.mxu0
    %v2124 = vpop.f32.mrf.mxu0
    %2125 = vdwg.mxu0
    %v2130 = vcombine.low %v2079, %v2081
    %v2131 = vcombine.low %v2120, %v2122
    %v2133 = vunpack.c.l.s4 1983009808
    %v2134 = vunpack.c.0.s8 %v2133
    %v2135 = vlaneseq
    %v2136 = vshrl.u32 %v2135, 7
    %v2137 = vsub.s32 %v2134, %v2136
    %v2138 = vrot.slane %v2130, %v2137
    %v2140 = vunpack.c.l.s4 1983009808
    %v2141 = vunpack.c.0.s8 %v2140
    %v2142 = vlaneseq
    %v2143 = vshrl.u32 %v2142, 7
    %v2144 = vsub.s32 %v2141, %v2143
    %v2145 = vrot.slane %v2131, %v2144
    %v2146 = vcombine.low %v2138, %v2145
    %v2148 = vadd.f32 %v2041, %v2146
    %s2149 = scalar_lea.vmem [#allocation7], 8
    %v2150 = vld [vmem:[%s2149] sm:$0xf]
    %v2151 = vunpack.c.l.bf16 %v2150
    %v2152 = vld [vmem:[#allocation4] sm:$0x3]
    %v2153 = vpack.c.bf16 %v2152, %v2152
    %2154 = vmatprep.subr.bf16.mxu0 %v650
    %2155 = vmatpush1.bf16.msra.mxu0 %v649
    %2156 = vmatprep.subr.bf16.mxu0 %v646
    %2157 = vmatpush1.bf16.msra.mxu0 %v645
    %2158 = vmatprep.subr.bf16.mxu0 %v642
    %2159 = vmatpush1.bf16.msra.mxu0 %v641
    %2160 = vmatprep.subr.bf16.mxu0 %v638
    %2161 = vmatpush1.bf16.msra.mxu0 %v637
    %2162 = vmatprep.subr.bf16.mxu0 %v634
    %2163 = vmatpush1.bf16.msra.mxu0 %v633
    %2164 = vmatprep.subr.bf16.mxu0 %v630
    %2165 = vmatpush1.bf16.msra.mxu0 %v629
    %2166 = vmatprep.subr.bf16.mxu0 %v626
    %2167 = vmatpush1.bf16.msra.mxu0 %v625
    %2168 = vmatprep.subr.bf16.mxu0 %v622
    %2169 = vmatpush1.bf16.msra.mxu0 %v621
    %2170 = vmatprep.subr.bf16.mxu0 0
    %2171 = vmatpush2.bf16.msra.mxu0 0
    %2172 = vmatprep.subr.bf16.mxu0 0
    %2173 = vmatpush2.bf16.msra.mxu0 0
    %2174 = vmatprep.subr.bf16.mxu0 0
    %2175 = vmatpush2.bf16.msra.mxu0 0
    %2176 = vmatprep.subr.bf16.mxu0 0
    %2177 = vmatpush2.bf16.msra.mxu0 0
    %2178 = vmatprep.subr.bf16.mxu0 0
    %2179 = vmatpush2.bf16.msra.mxu0 0
    %2180 = vmatprep.subr.bf16.mxu0 0
    %2181 = vmatpush2.bf16.msra.mxu0 0
    %2182 = vmatprep.subr.bf16.mxu0 0
    %2183 = vmatpush2.bf16.msra.mxu0 0
    %2184 = vmatprep.subr.bf16.mxu0 0
    %2185 = vmatpush2.bf16.msra.mxu0 0
    %2186 = vmatprep.mubr.bf16.mxu0 0
    %2187 = vmatmul.mubr.bf16.gmra.mxu0 %v2153
    %v2188 = vpop.f32.mrf.mxu0
    %v2189 = vadd.f32 0.0, %v2188
    %v2190 = vpop.f32.mrf.mxu0
    %v2191 = vadd.f32 0.0, %v2190
    %v2192 = vpop.f32.mrf.mxu0
    %v2193 = vpop.f32.mrf.mxu0
    %2194 = vdwg.mxu0
    %2195 = vmatprep.subr.bf16.mxu0 %v652
    %2196 = vmatpush1.bf16.msra.mxu0 %v651
    %2197 = vmatprep.subr.bf16.mxu0 %v648
    %2198 = vmatpush1.bf16.msra.mxu0 %v647
    %2199 = vmatprep.subr.bf16.mxu0 %v644
    %2200 = vmatpush1.bf16.msra.mxu0 %v643
    %2201 = vmatprep.subr.bf16.mxu0 %v640
    %2202 = vmatpush1.bf16.msra.mxu0 %v639
    %2203 = vmatprep.subr.bf16.mxu0 %v636
    %2204 = vmatpush1.bf16.msra.mxu0 %v635
    %2205 = vmatprep.subr.bf16.mxu0 %v632
    %2206 = vmatpush1.bf16.msra.mxu0 %v631
    %2207 = vmatprep.subr.bf16.mxu0 %v628
    %2208 = vmatpush1.bf16.msra.mxu0 %v627
    %2209 = vmatprep.subr.bf16.mxu0 %v624
    %2210 = vmatpush1.bf16.msra.mxu0 %v623
    %2211 = vmatprep.subr.bf16.mxu0 0
    %2212 = vmatpush2.bf16.msra.mxu0 0
    %2213 = vmatprep.subr.bf16.mxu0 0
    %2214 = vmatpush2.bf16.msra.mxu0 0
    %2215 = vmatprep.subr.bf16.mxu0 0
    %2216 = vmatpush2.bf16.msra.mxu0 0
    %2217 = vmatprep.subr.bf16.mxu0 0
    %2218 = vmatpush2.bf16.msra.mxu0 0
    %2219 = vmatprep.subr.bf16.mxu0 0
    %2220 = vmatpush2.bf16.msra.mxu0 0
    %2221 = vmatprep.subr.bf16.mxu0 0
    %2222 = vmatpush2.bf16.msra.mxu0 0
    %2223 = vmatprep.subr.bf16.mxu0 0
    %2224 = vmatpush2.bf16.msra.mxu0 0
    %2225 = vmatprep.subr.bf16.mxu0 0
    %2226 = vmatpush2.bf16.msra.mxu0 0
    %2227 = vmatprep.mubr.bf16.mxu0 0
    %2228 = vmatmul.mubr.bf16.gmra.mxu0 %v2153
    %v2229 = vpop.f32.mrf.mxu0
    %v2230 = vadd.f32 0.0, %v2229
    %v2231 = vpop.f32.mrf.mxu0
    %v2232 = vadd.f32 0.0, %v2231
    %v2233 = vpop.f32.mrf.mxu0
    %v2234 = vpop.f32.mrf.mxu0
    %2235 = vdwg.mxu0
    %v2240 = vcombine.low %v2189, %v2191
    %v2241 = vcombine.low %v2230, %v2232
    %v2243 = vunpack.c.l.s4 1983009808
    %v2244 = vunpack.c.0.s8 %v2243
    %v2245 = vlaneseq
    %v2246 = vshrl.u32 %v2245, 7
    %v2247 = vsub.s32 %v2244, %v2246
    %v2248 = vrot.slane %v2240, %v2247
    %v2250 = vunpack.c.l.s4 1983009808
    %v2251 = vunpack.c.0.s8 %v2250
    %v2252 = vlaneseq
    %v2253 = vshrl.u32 %v2252, 7
    %v2254 = vsub.s32 %v2251, %v2253
    %v2255 = vrot.slane %v2241, %v2254
    %v2256 = vcombine.low %v2248, %v2255
    %v2258 = vadd.f32 %v2151, %v2256
    %v2259 = vld [vmem:[#allocation3] sm:$0x3]
    %v2260 = vxor.u32 %v2148, 2147483648
    %v2261 = vmul.f32 %v2260, 1.442695
    %v2262 = vpow.pop %v2261
    %v2263 = vadd.f32 %v2262, 1.0
    %v2264 = vrcp.pop %v2263
    %v2265 = vmul.f32 1.0, %v2264
    %v2267 = vrot.slane %v2148, 2
    %v2269 = vxor.u32 %v2267, 2147483648
    %v2270 = vmul.f32 %v2269, 1.442695
    %v2271 = vpow.pop %v2270
    %v2272 = vadd.f32 %v2271, 1.0
    %v2273 = vrcp.pop %v2272
    %v2274 = vmul.f32 1.0, %v2273
    %v2275 = vrot.slane %v2148, 4
    %v2277 = vtanh.pop %v2275
    %v2278 = vrot.slane %v2148, 6
    %v2280 = vxor.u32 %v2278, 2147483648
    %v2281 = vmul.f32 %v2280, 1.442695
    %v2282 = vpow.pop %v2281
    %v2283 = vadd.f32 %v2282, 1.0
    %v2284 = vrcp.pop %v2283
    %v2285 = vmul.f32 1.0, %v2284
    %v2286 = vmul.f32 %v2274, %v2259
    %v2287 = vmul.f32 %v2265, %v2277
    %v2288 = vadd.f32 %v2286, %v2287
    %v2289 = vtanh.pop %v2288
    %v2290 = vmul.f32 %v2285, %v2289
    %v2291 = vld [vmem:[#allocation5] sm:$0x3]
    %v2292 = vxor.u32 %v2258, 2147483648
    %v2293 = vmul.f32 %v2292, 1.442695
    %v2294 = vpow.pop %v2293
    %v2295 = vadd.f32 %v2294, 1.0
    %v2296 = vrcp.pop %v2295
    %v2297 = vmul.f32 1.0, %v2296
    %v2299 = vrot.slane %v2258, 2
    %v2301 = vxor.u32 %v2299, 2147483648
    %v2302 = vmul.f32 %v2301, 1.442695
    %v2303 = vpow.pop %v2302
    %v2304 = vadd.f32 %v2303, 1.0
    %v2305 = vrcp.pop %v2304
    %v2306 = vmul.f32 1.0, %v2305
    %v2307 = vrot.slane %v2258, 4
    %v2309 = vtanh.pop %v2307
    %v2310 = vrot.slane %v2258, 6
    %v2312 = vxor.u32 %v2310, 2147483648
    %v2313 = vmul.f32 %v2312, 1.442695
    %v2314 = vpow.pop %v2313
    %v2315 = vadd.f32 %v2314, 1.0
    %v2316 = vrcp.pop %v2315
    %v2317 = vmul.f32 1.0, %v2316
    %v2318 = vmul.f32 %v2306, %v2291
    %v2319 = vmul.f32 %v2297, %v2309
    %v2320 = vadd.f32 %v2318, %v2319
    %v2321 = vtanh.pop %v2320
    %v2322 = vmul.f32 %v2317, %v2321
    %2323 = vst [vmem:[#allocation2] sm:$0x3] %v2290
    %2324 = vst [vmem:[#allocation3] sm:$0x3] %v2288
    %2325 = vst [vmem:[#allocation4] sm:$0x3] %v2322
    %2326 = vst [vmem:[#allocation5] sm:$0x3] %v2320
    %v2327 = vpack.c.bf16 %v2290, %v2290
    %s2328 = scalar_lea.vmem %s3, 5
    %2329 = vst [vmem:[%s2328] sm:$0x1] %v2327
    %v2330 = vpack.c.bf16 %v2322, %v2322
    %s2331 = scalar_lea.vmem %s174, 2
    %2332 = vst [vmem:[%s2331] sm:$0x1] %v2330
    %s2333 = scalar_lea.vmem [#allocation6], 24
    %v2334 = vld [vmem:[%s2333] sm:$0xf]
    %v2335 = vunpack.c.l.bf16 %v2334
    %v2336 = vld [vmem:[#allocation2] sm:$0x3]
    %v2337 = vpack.c.bf16 %v2336, %v2336
    %2338 = vmatprep.subr.bf16.mxu0 %v380
    %2339 = vmatpush1.bf16.msra.mxu0 %v379
    %2340 = vmatprep.subr.bf16.mxu0 %v376
    %2341 = vmatpush1.bf16.msra.mxu0 %v375
    %2342 = vmatprep.subr.bf16.mxu0 %v372
    %2343 = vmatpush1.bf16.msra.mxu0 %v371
    %2344 = vmatprep.subr.bf16.mxu0 %v368
    %2345 = vmatpush1.bf16.msra.mxu0 %v367
    %2346 = vmatprep.subr.bf16.mxu0 %v364
    %2347 = vmatpush1.bf16.msra.mxu0 %v363
    %2348 = vmatprep.subr.bf16.mxu0 %v360
    %2349 = vmatpush1.bf16.msra.mxu0 %v359
    %2350 = vmatprep.subr.bf16.mxu0 %v356
    %2351 = vmatpush1.bf16.msra.mxu0 %v355
    %2352 = vmatprep.subr.bf16.mxu0 %v352
    %2353 = vmatpush1.bf16.msra.mxu0 %v351
    %2354 = vmatprep.subr.bf16.mxu0 0
    %2355 = vmatpush2.bf16.msra.mxu0 0
    %2356 = vmatprep.subr.bf16.mxu0 0
    %2357 = vmatpush2.bf16.msra.mxu0 0
    %2358 = vmatprep.subr.bf16.mxu0 0
    %2359 = vmatpush2.bf16.msra.mxu0 0
    %2360 = vmatprep.subr.bf16.mxu0 0
    %2361 = vmatpush2.bf16.msra.mxu0 0
    %2362 = vmatprep.subr.bf16.mxu0 0
    %2363 = vmatpush2.bf16.msra.mxu0 0
    %2364 = vmatprep.subr.bf16.mxu0 0
    %2365 = vmatpush2.bf16.msra.mxu0 0
    %2366 = vmatprep.subr.bf16.mxu0 0
    %2367 = vmatpush2.bf16.msra.mxu0 0
    %2368 = vmatprep.subr.bf16.mxu0 0
    %2369 = vmatpush2.bf16.msra.mxu0 0
    %2370 = vmatprep.mubr.bf16.mxu0 0
    %2371 = vmatmul.mubr.bf16.gmra.mxu0 %v2337
    %v2372 = vpop.f32.mrf.mxu0
    %v2373 = vadd.f32 0.0, %v2372
    %v2374 = vpop.f32.mrf.mxu0
    %v2375 = vadd.f32 0.0, %v2374
    %v2376 = vpop.f32.mrf.mxu0
    %v2377 = vpop.f32.mrf.mxu0
    %2378 = vdwg.mxu0
    %2379 = vmatprep.subr.bf16.mxu0 %v382
    %2380 = vmatpush1.bf16.msra.mxu0 %v381
    %2381 = vmatprep.subr.bf16.mxu0 %v378
    %2382 = vmatpush1.bf16.msra.mxu0 %v377
    %2383 = vmatprep.subr.bf16.mxu0 %v374
    %2384 = vmatpush1.bf16.msra.mxu0 %v373
    %2385 = vmatprep.subr.bf16.mxu0 %v370
    %2386 = vmatpush1.bf16.msra.mxu0 %v369
    %2387 = vmatprep.subr.bf16.mxu0 %v366
    %2388 = vmatpush1.bf16.msra.mxu0 %v365
    %2389 = vmatprep.subr.bf16.mxu0 %v362
    %2390 = vmatpush1.bf16.msra.mxu0 %v361
    %2391 = vmatprep.subr.bf16.mxu0 %v358
    %2392 = vmatpush1.bf16.msra.mxu0 %v357
    %2393 = vmatprep.subr.bf16.mxu0 %v354
    %2394 = vmatpush1.bf16.msra.mxu0 %v353
    %2395 = vmatprep.subr.bf16.mxu0 0
    %2396 = vmatpush2.bf16.msra.mxu0 0
    %2397 = vmatprep.subr.bf16.mxu0 0
    %2398 = vmatpush2.bf16.msra.mxu0 0
    %2399 = vmatprep.subr.bf16.mxu0 0
    %2400 = vmatpush2.bf16.msra.mxu0 0
    %2401 = vmatprep.subr.bf16.mxu0 0
    %2402 = vmatpush2.bf16.msra.mxu0 0
    %2403 = vmatprep.subr.bf16.mxu0 0
    %2404 = vmatpush2.bf16.msra.mxu0 0
    %2405 = vmatprep.subr.bf16.mxu0 0
    %2406 = vmatpush2.bf16.msra.mxu0 0
    %2407 = vmatprep.subr.bf16.mxu0 0
    %2408 = vmatpush2.bf16.msra.mxu0 0
    %2409 = vmatprep.subr.bf16.mxu0 0
    %2410 = vmatpush2.bf16.msra.mxu0 0
    %2411 = vmatprep.mubr.bf16.mxu0 0
    %2412 = vmatmul.mubr.bf16.gmra.mxu0 %v2337
    %v2413 = vpop.f32.mrf.mxu0
    %v2414 = vadd.f32 0.0, %v2413
    %v2415 = vpop.f32.mrf.mxu0
    %v2416 = vadd.f32 0.0, %v2415
    %v2417 = vpop.f32.mrf.mxu0
    %v2418 = vpop.f32.mrf.mxu0
    %2419 = vdwg.mxu0
    %v2424 = vcombine.low %v2373, %v2375
    %v2425 = vcombine.low %v2414, %v2416
    %v2427 = vunpack.c.l.s4 1983009808
    %v2428 = vunpack.c.0.s8 %v2427
    %v2429 = vlaneseq
    %v2430 = vshrl.u32 %v2429, 7
    %v2431 = vsub.s32 %v2428, %v2430
    %v2432 = vrot.slane %v2424, %v2431
    %v2434 = vunpack.c.l.s4 1983009808
    %v2435 = vunpack.c.0.s8 %v2434
    %v2436 = vlaneseq
    %v2437 = vshrl.u32 %v2436, 7
    %v2438 = vsub.s32 %v2435, %v2437
    %v2439 = vrot.slane %v2425, %v2438
    %v2440 = vcombine.low %v2432, %v2439
    %v2442 = vadd.f32 %v2335, %v2440
    %s2443 = scalar_lea.vmem [#allocation7], 4
    %v2444 = vld [vmem:[%s2443] sm:$0xf]
    %v2445 = vunpack.c.l.bf16 %v2444
    %v2446 = vld [vmem:[#allocation4] sm:$0x3]
    %v2447 = vpack.c.bf16 %v2446, %v2446
    %2448 = vmatprep.subr.bf16.mxu0 %v650
    %2449 = vmatpush1.bf16.msra.mxu0 %v649
    %2450 = vmatprep.subr.bf16.mxu0 %v646
    %2451 = vmatpush1.bf16.msra.mxu0 %v645
    %2452 = vmatprep.subr.bf16.mxu0 %v642
    %2453 = vmatpush1.bf16.msra.mxu0 %v641
    %2454 = vmatprep.subr.bf16.mxu0 %v638
    %2455 = vmatpush1.bf16.msra.mxu0 %v637
    %2456 = vmatprep.subr.bf16.mxu0 %v634
    %2457 = vmatpush1.bf16.msra.mxu0 %v633
    %2458 = vmatprep.subr.bf16.mxu0 %v630
    %2459 = vmatpush1.bf16.msra.mxu0 %v629
    %2460 = vmatprep.subr.bf16.mxu0 %v626
    %2461 = vmatpush1.bf16.msra.mxu0 %v625
    %2462 = vmatprep.subr.bf16.mxu0 %v622
    %2463 = vmatpush1.bf16.msra.mxu0 %v621
    %2464 = vmatprep.subr.bf16.mxu0 0
    %2465 = vmatpush2.bf16.msra.mxu0 0
    %2466 = vmatprep.subr.bf16.mxu0 0
    %2467 = vmatpush2.bf16.msra.mxu0 0
    %2468 = vmatprep.subr.bf16.mxu0 0
    %2469 = vmatpush2.bf16.msra.mxu0 0
    %2470 = vmatprep.subr.bf16.mxu0 0
    %2471 = vmatpush2.bf16.msra.mxu0 0
    %2472 = vmatprep.subr.bf16.mxu0 0
    %2473 = vmatpush2.bf16.msra.mxu0 0
    %2474 = vmatprep.subr.bf16.mxu0 0
    %2475 = vmatpush2.bf16.msra.mxu0 0
    %2476 = vmatprep.subr.bf16.mxu0 0
    %2477 = vmatpush2.bf16.msra.mxu0 0
    %2478 = vmatprep.subr.bf16.mxu0 0
    %2479 = vmatpush2.bf16.msra.mxu0 0
    %2480 = vmatprep.mubr.bf16.mxu0 0
    %2481 = vmatmul.mubr.bf16.gmra.mxu0 %v2447
    %v2482 = vpop.f32.mrf.mxu0
    %v2483 = vadd.f32 0.0, %v2482
    %v2484 = vpop.f32.mrf.mxu0
    %v2485 = vadd.f32 0.0, %v2484
    %v2486 = vpop.f32.mrf.mxu0
    %v2487 = vpop.f32.mrf.mxu0
    %2488 = vdwg.mxu0
    %2489 = vmatprep.subr.bf16.mxu0 %v652
    %2490 = vmatpush1.bf16.msra.mxu0 %v651
    %2491 = vmatprep.subr.bf16.mxu0 %v648
    %2492 = vmatpush1.bf16.msra.mxu0 %v647
    %2493 = vmatprep.subr.bf16.mxu0 %v644
    %2494 = vmatpush1.bf16.msra.mxu0 %v643
    %2495 = vmatprep.subr.bf16.mxu0 %v640
    %2496 = vmatpush1.bf16.msra.mxu0 %v639
    %2497 = vmatprep.subr.bf16.mxu0 %v636
    %2498 = vmatpush1.bf16.msra.mxu0 %v635
    %2499 = vmatprep.subr.bf16.mxu0 %v632
    %2500 = vmatpush1.bf16.msra.mxu0 %v631
    %2501 = vmatprep.subr.bf16.mxu0 %v628
    %2502 = vmatpush1.bf16.msra.mxu0 %v627
    %2503 = vmatprep.subr.bf16.mxu0 %v624
    %2504 = vmatpush1.bf16.msra.mxu0 %v623
    %2505 = vmatprep.subr.bf16.mxu0 0
    %2506 = vmatpush2.bf16.msra.mxu0 0
    %2507 = vmatprep.subr.bf16.mxu0 0
    %2508 = vmatpush2.bf16.msra.mxu0 0
    %2509 = vmatprep.subr.bf16.mxu0 0
    %2510 = vmatpush2.bf16.msra.mxu0 0
    %2511 = vmatprep.subr.bf16.mxu0 0
    %2512 = vmatpush2.bf16.msra.mxu0 0
    %2513 = vmatprep.subr.bf16.mxu0 0
    %2514 = vmatpush2.bf16.msra.mxu0 0
    %2515 = vmatprep.subr.bf16.mxu0 0
    %2516 = vmatpush2.bf16.msra.mxu0 0
    %2517 = vmatprep.subr.bf16.mxu0 0
    %2518 = vmatpush2.bf16.msra.mxu0 0
    %2519 = vmatprep.subr.bf16.mxu0 0
    %2520 = vmatpush2.bf16.msra.mxu0 0
    %2521 = vmatprep.mubr.bf16.mxu0 0
    %2522 = vmatmul.mubr.bf16.gmra.mxu0 %v2447
    %v2523 = vpop.f32.mrf.mxu0
    %v2524 = vadd.f32 0.0, %v2523
    %v2525 = vpop.f32.mrf.mxu0
    %v2526 = vadd.f32 0.0, %v2525
    %v2527 = vpop.f32.mrf.mxu0
    %v2528 = vpop.f32.mrf.mxu0
    %2529 = vdwg.mxu0
    %v2534 = vcombine.low %v2483, %v2485
    %v2535 = vcombine.low %v2524, %v2526
    %v2537 = vunpack.c.l.s4 1983009808
    %v2538 = vunpack.c.0.s8 %v2537
    %v2539 = vlaneseq
    %v2540 = vshrl.u32 %v2539, 7
    %v2541 = vsub.s32 %v2538, %v2540
    %v2542 = vrot.slane %v2534, %v2541
    %v2544 = vunpack.c.l.s4 1983009808
    %v2545 = vunpack.c.0.s8 %v2544
    %v2546 = vlaneseq
    %v2547 = vshrl.u32 %v2546, 7
    %v2548 = vsub.s32 %v2545, %v2547
    %v2549 = vrot.slane %v2535, %v2548
    %v2550 = vcombine.low %v2542, %v2549
    %v2552 = vadd.f32 %v2445, %v2550
    %v2553 = vld [vmem:[#allocation3] sm:$0x3]
    %v2554 = vxor.u32 %v2442, 2147483648
    %v2555 = vmul.f32 %v2554, 1.442695
    %v2556 = vpow.pop %v2555
    %v2557 = vadd.f32 %v2556, 1.0
    %v2558 = vrcp.pop %v2557
    %v2559 = vmul.f32 1.0, %v2558
    %v2561 = vrot.slane %v2442, 2
    %v2563 = vxor.u32 %v2561, 2147483648
    %v2564 = vmul.f32 %v2563, 1.442695
    %v2565 = vpow.pop %v2564
    %v2566 = vadd.f32 %v2565, 1.0
    %v2567 = vrcp.pop %v2566
    %v2568 = vmul.f32 1.0, %v2567
    %v2569 = vrot.slane %v2442, 4
    %v2571 = vtanh.pop %v2569
    %v2572 = vrot.slane %v2442, 6
    %v2574 = vxor.u32 %v2572, 2147483648
    %v2575 = vmul.f32 %v2574, 1.442695
    %v2576 = vpow.pop %v2575
    %v2577 = vadd.f32 %v2576, 1.0
    %v2578 = vrcp.pop %v2577
    %v2579 = vmul.f32 1.0, %v2578
    %v2580 = vmul.f32 %v2568, %v2553
    %v2581 = vmul.f32 %v2559, %v2571
    %v2582 = vadd.f32 %v2580, %v2581
    %v2583 = vtanh.pop %v2582
    %v2584 = vmul.f32 %v2579, %v2583
    %v2585 = vld [vmem:[#allocation5] sm:$0x3]
    %v2586 = vxor.u32 %v2552, 2147483648
    %v2587 = vmul.f32 %v2586, 1.442695
    %v2588 = vpow.pop %v2587
    %v2589 = vadd.f32 %v2588, 1.0
    %v2590 = vrcp.pop %v2589
    %v2591 = vmul.f32 1.0, %v2590
    %v2593 = vrot.slane %v2552, 2
    %v2595 = vxor.u32 %v2593, 2147483648
    %v2596 = vmul.f32 %v2595, 1.442695
    %v2597 = vpow.pop %v2596
    %v2598 = vadd.f32 %v2597, 1.0
    %v2599 = vrcp.pop %v2598
    %v2600 = vmul.f32 1.0, %v2599
    %v2601 = vrot.slane %v2552, 4
    %v2603 = vtanh.pop %v2601
    %v2604 = vrot.slane %v2552, 6
    %v2606 = vxor.u32 %v2604, 2147483648
    %v2607 = vmul.f32 %v2606, 1.442695
    %v2608 = vpow.pop %v2607
    %v2609 = vadd.f32 %v2608, 1.0
    %v2610 = vrcp.pop %v2609
    %v2611 = vmul.f32 1.0, %v2610
    %v2612 = vmul.f32 %v2600, %v2585
    %v2613 = vmul.f32 %v2591, %v2603
    %v2614 = vadd.f32 %v2612, %v2613
    %v2615 = vtanh.pop %v2614
    %v2616 = vmul.f32 %v2611, %v2615
    %2617 = vst [vmem:[#allocation2] sm:$0x3] %v2584
    %2618 = vst [vmem:[#allocation3] sm:$0x3] %v2582
    %2619 = vst [vmem:[#allocation4] sm:$0x3] %v2616
    %2620 = vst [vmem:[#allocation5] sm:$0x3] %v2614
    %v2621 = vpack.c.bf16 %v2584, %v2584
    %s2622 = scalar_lea.vmem %s3, 6
    %2623 = vst [vmem:[%s2622] sm:$0x1] %v2621
    %v2624 = vpack.c.bf16 %v2616, %v2616
    %s2625 = scalar_lea.vmem %s174, 1
    %2626 = vst [vmem:[%s2625] sm:$0x1] %v2624
    %s2627 = scalar_lea.vmem [#allocation6], 28
    %v2628 = vld [vmem:[%s2627] sm:$0xf]
    %v2629 = vunpack.c.l.bf16 %v2628
    %v2630 = vld [vmem:[#allocation2] sm:$0x3]
    %v2631 = vpack.c.bf16 %v2630, %v2630
    %2632 = vmatprep.subr.bf16.mxu0 %v380
    %2633 = vmatpush1.bf16.msra.mxu0 %v379
    %2634 = vmatprep.subr.bf16.mxu0 %v376
    %2635 = vmatpush1.bf16.msra.mxu0 %v375
    %2636 = vmatprep.subr.bf16.mxu0 %v372
    %2637 = vmatpush1.bf16.msra.mxu0 %v371
    %2638 = vmatprep.subr.bf16.mxu0 %v368
    %2639 = vmatpush1.bf16.msra.mxu0 %v367
    %2640 = vmatprep.subr.bf16.mxu0 %v364
    %2641 = vmatpush1.bf16.msra.mxu0 %v363
    %2642 = vmatprep.subr.bf16.mxu0 %v360
    %2643 = vmatpush1.bf16.msra.mxu0 %v359
    %2644 = vmatprep.subr.bf16.mxu0 %v356
    %2645 = vmatpush1.bf16.msra.mxu0 %v355
    %2646 = vmatprep.subr.bf16.mxu0 %v352
    %2647 = vmatpush1.bf16.msra.mxu0 %v351
    %2648 = vmatprep.subr.bf16.mxu0 0
    %2649 = vmatpush2.bf16.msra.mxu0 0
    %2650 = vmatprep.subr.bf16.mxu0 0
    %2651 = vmatpush2.bf16.msra.mxu0 0
    %2652 = vmatprep.subr.bf16.mxu0 0
    %2653 = vmatpush2.bf16.msra.mxu0 0
    %2654 = vmatprep.subr.bf16.mxu0 0
    %2655 = vmatpush2.bf16.msra.mxu0 0
    %2656 = vmatprep.subr.bf16.mxu0 0
    %2657 = vmatpush2.bf16.msra.mxu0 0
    %2658 = vmatprep.subr.bf16.mxu0 0
    %2659 = vmatpush2.bf16.msra.mxu0 0
    %2660 = vmatprep.subr.bf16.mxu0 0
    %2661 = vmatpush2.bf16.msra.mxu0 0
    %2662 = vmatprep.subr.bf16.mxu0 0
    %2663 = vmatpush2.bf16.msra.mxu0 0
    %2664 = vmatprep.mubr.bf16.mxu0 0
    %2665 = vmatmul.mubr.bf16.gmra.mxu0 %v2631
    %v2666 = vpop.f32.mrf.mxu0
    %v2667 = vadd.f32 0.0, %v2666
    %v2668 = vpop.f32.mrf.mxu0
    %v2669 = vadd.f32 0.0, %v2668
    %v2670 = vpop.f32.mrf.mxu0
    %v2671 = vpop.f32.mrf.mxu0
    %2672 = vdwg.mxu0
    %2673 = vmatprep.subr.bf16.mxu0 %v382
    %2674 = vmatpush1.bf16.msra.mxu0 %v381
    %2675 = vmatprep.subr.bf16.mxu0 %v378
    %2676 = vmatpush1.bf16.msra.mxu0 %v377
    %2677 = vmatprep.subr.bf16.mxu0 %v374
    %2678 = vmatpush1.bf16.msra.mxu0 %v373
    %2679 = vmatprep.subr.bf16.mxu0 %v370
    %2680 = vmatpush1.bf16.msra.mxu0 %v369
    %2681 = vmatprep.subr.bf16.mxu0 %v366
    %2682 = vmatpush1.bf16.msra.mxu0 %v365
    %2683 = vmatprep.subr.bf16.mxu0 %v362
    %2684 = vmatpush1.bf16.msra.mxu0 %v361
    %2685 = vmatprep.subr.bf16.mxu0 %v358
    %2686 = vmatpush1.bf16.msra.mxu0 %v357
    %2687 = vmatprep.subr.bf16.mxu0 %v354
    %2688 = vmatpush1.bf16.msra.mxu0 %v353
    %2689 = vmatprep.subr.bf16.mxu0 0
    %2690 = vmatpush2.bf16.msra.mxu0 0
    %2691 = vmatprep.subr.bf16.mxu0 0
    %2692 = vmatpush2.bf16.msra.mxu0 0
    %2693 = vmatprep.subr.bf16.mxu0 0
    %2694 = vmatpush2.bf16.msra.mxu0 0
    %2695 = vmatprep.subr.bf16.mxu0 0
    %2696 = vmatpush2.bf16.msra.mxu0 0
    %2697 = vmatprep.subr.bf16.mxu0 0
    %2698 = vmatpush2.bf16.msra.mxu0 0
    %2699 = vmatprep.subr.bf16.mxu0 0
    %2700 = vmatpush2.bf16.msra.mxu0 0
    %2701 = vmatprep.subr.bf16.mxu0 0
    %2702 = vmatpush2.bf16.msra.mxu0 0
    %2703 = vmatprep.subr.bf16.mxu0 0
    %2704 = vmatpush2.bf16.msra.mxu0 0
    %2705 = vmatprep.mubr.bf16.mxu0 0
    %2706 = vmatmul.mubr.bf16.gmra.mxu0 %v2631
    %v2707 = vpop.f32.mrf.mxu0
    %v2708 = vadd.f32 0.0, %v2707
    %v2709 = vpop.f32.mrf.mxu0
    %v2710 = vadd.f32 0.0, %v2709
    %v2711 = vpop.f32.mrf.mxu0
    %v2712 = vpop.f32.mrf.mxu0
    %2713 = vdwg.mxu0
    %v2718 = vcombine.low %v2667, %v2669
    %v2719 = vcombine.low %v2708, %v2710
    %v2721 = vunpack.c.l.s4 1983009808
    %v2722 = vunpack.c.0.s8 %v2721
    %v2723 = vlaneseq
    %v2724 = vshrl.u32 %v2723, 7
    %v2725 = vsub.s32 %v2722, %v2724
    %v2726 = vrot.slane %v2718, %v2725
    %v2728 = vunpack.c.l.s4 1983009808
    %v2729 = vunpack.c.0.s8 %v2728
    %v2730 = vlaneseq
    %v2731 = vshrl.u32 %v2730, 7
    %v2732 = vsub.s32 %v2729, %v2731
    %v2733 = vrot.slane %v2719, %v2732
    %v2734 = vcombine.low %v2726, %v2733
    %v2736 = vadd.f32 %v2629, %v2734
    %v2737 = vld [vmem:[#allocation7] sm:$0xf]
    %v2738 = vunpack.c.l.bf16 %v2737
    %v2739 = vld [vmem:[#allocation4] sm:$0x3]
    %v2740 = vpack.c.bf16 %v2739, %v2739
    %2741 = vmatprep.subr.bf16.mxu0 %v650
    %2742 = vmatpush1.bf16.msra.mxu0 %v649
    %2743 = vmatprep.subr.bf16.mxu0 %v646
    %2744 = vmatpush1.bf16.msra.mxu0 %v645
    %2745 = vmatprep.subr.bf16.mxu0 %v642
    %2746 = vmatpush1.bf16.msra.mxu0 %v641
    %2747 = vmatprep.subr.bf16.mxu0 %v638
    %2748 = vmatpush1.bf16.msra.mxu0 %v637
    %2749 = vmatprep.subr.bf16.mxu0 %v634
    %2750 = vmatpush1.bf16.msra.mxu0 %v633
    %2751 = vmatprep.subr.bf16.mxu0 %v630
    %2752 = vmatpush1.bf16.msra.mxu0 %v629
    %2753 = vmatprep.subr.bf16.mxu0 %v626
    %2754 = vmatpush1.bf16.msra.mxu0 %v625
    %2755 = vmatprep.subr.bf16.mxu0 %v622
    %2756 = vmatpush1.bf16.msra.mxu0 %v621
    %2757 = vmatprep.subr.bf16.mxu0 0
    %2758 = vmatpush2.bf16.msra.mxu0 0
    %2759 = vmatprep.subr.bf16.mxu0 0
    %2760 = vmatpush2.bf16.msra.mxu0 0
    %2761 = vmatprep.subr.bf16.mxu0 0
    %2762 = vmatpush2.bf16.msra.mxu0 0
    %2763 = vmatprep.subr.bf16.mxu0 0
    %2764 = vmatpush2.bf16.msra.mxu0 0
    %2765 = vmatprep.subr.bf16.mxu0 0
    %2766 = vmatpush2.bf16.msra.mxu0 0
    %2767 = vmatprep.subr.bf16.mxu0 0
    %2768 = vmatpush2.bf16.msra.mxu0 0
    %2769 = vmatprep.subr.bf16.mxu0 0
    %2770 = vmatpush2.bf16.msra.mxu0 0
    %2771 = vmatprep.subr.bf16.mxu0 0
    %2772 = vmatpush2.bf16.msra.mxu0 0
    %2773 = vmatprep.mubr.bf16.mxu0 0
    %2774 = vmatmul.mubr.bf16.gmra.mxu0 %v2740
    %v2775 = vpop.f32.mrf.mxu0
    %v2776 = vadd.f32 0.0, %v2775
    %v2777 = vpop.f32.mrf.mxu0
    %v2778 = vadd.f32 0.0, %v2777
    %v2779 = vpop.f32.mrf.mxu0
    %v2780 = vpop.f32.mrf.mxu0
    %2781 = vdwg.mxu0
    %2782 = vmatprep.subr.bf16.mxu0 %v652
    %2783 = vmatpush1.bf16.msra.mxu0 %v651
    %2784 = vmatprep.subr.bf16.mxu0 %v648
    %2785 = vmatpush1.bf16.msra.mxu0 %v647
    %2786 = vmatprep.subr.bf16.mxu0 %v644
    %2787 = vmatpush1.bf16.msra.mxu0 %v643
    %2788 = vmatprep.subr.bf16.mxu0 %v640
    %2789 = vmatpush1.bf16.msra.mxu0 %v639
    %2790 = vmatprep.subr.bf16.mxu0 %v636
    %2791 = vmatpush1.bf16.msra.mxu0 %v635
    %2792 = vmatprep.subr.bf16.mxu0 %v632
    %2793 = vmatpush1.bf16.msra.mxu0 %v631
    %2794 = vmatprep.subr.bf16.mxu0 %v628
    %2795 = vmatpush1.bf16.msra.mxu0 %v627
    %2796 = vmatprep.subr.bf16.mxu0 %v624
    %2797 = vmatpush1.bf16.msra.mxu0 %v623
    %2798 = vmatprep.subr.bf16.mxu0 0
    %2799 = vmatpush2.bf16.msra.mxu0 0
    %2800 = vmatprep.subr.bf16.mxu0 0
    %2801 = vmatpush2.bf16.msra.mxu0 0
    %2802 = vmatprep.subr.bf16.mxu0 0
    %2803 = vmatpush2.bf16.msra.mxu0 0
    %2804 = vmatprep.subr.bf16.mxu0 0
    %2805 = vmatpush2.bf16.msra.mxu0 0
    %2806 = vmatprep.subr.bf16.mxu0 0
    %2807 = vmatpush2.bf16.msra.mxu0 0
    %2808 = vmatprep.subr.bf16.mxu0 0
    %2809 = vmatpush2.bf16.msra.mxu0 0
    %2810 = vmatprep.subr.bf16.mxu0 0
    %2811 = vmatpush2.bf16.msra.mxu0 0
    %2812 = vmatprep.subr.bf16.mxu0 0
    %2813 = vmatpush2.bf16.msra.mxu0 0
    %2814 = vmatprep.mubr.bf16.mxu0 0
    %2815 = vmatmul.mubr.bf16.gmra.mxu0 %v2740
    %v2816 = vpop.f32.mrf.mxu0
    %v2817 = vadd.f32 0.0, %v2816
    %v2818 = vpop.f32.mrf.mxu0
    %v2819 = vadd.f32 0.0, %v2818
    %v2820 = vpop.f32.mrf.mxu0
    %v2821 = vpop.f32.mrf.mxu0
    %2822 = vdwg.mxu0
    %v2827 = vcombine.low %v2776, %v2778
    %v2828 = vcombine.low %v2817, %v2819
    %v2830 = vunpack.c.l.s4 1983009808
    %v2831 = vunpack.c.0.s8 %v2830
    %v2832 = vlaneseq
    %v2833 = vshrl.u32 %v2832, 7
    %v2834 = vsub.s32 %v2831, %v2833
    %v2835 = vrot.slane %v2827, %v2834
    %v2837 = vunpack.c.l.s4 1983009808
    %v2838 = vunpack.c.0.s8 %v2837
    %v2839 = vlaneseq
    %v2840 = vshrl.u32 %v2839, 7
    %v2841 = vsub.s32 %v2838, %v2840
    %v2842 = vrot.slane %v2828, %v2841
    %v2843 = vcombine.low %v2835, %v2842
    %v2845 = vadd.f32 %v2738, %v2843
    %v2846 = vld [vmem:[#allocation3] sm:$0x3]
    %v2847 = vxor.u32 %v2736, 2147483648
    %v2848 = vmul.f32 %v2847, 1.442695
    %v2849 = vpow.pop %v2848
    %v2850 = vadd.f32 %v2849, 1.0
    %v2851 = vrcp.pop %v2850
    %v2852 = vmul.f32 1.0, %v2851
    %v2854 = vrot.slane %v2736, 2
    %v2856 = vxor.u32 %v2854, 2147483648
    %v2857 = vmul.f32 %v2856, 1.442695
    %v2858 = vpow.pop %v2857
    %v2859 = vadd.f32 %v2858, 1.0
    %v2860 = vrcp.pop %v2859
    %v2861 = vmul.f32 1.0, %v2860
    %v2862 = vrot.slane %v2736, 4
    %v2864 = vtanh.pop %v2862
    %v2865 = vrot.slane %v2736, 6
    %v2867 = vxor.u32 %v2865, 2147483648
    %v2868 = vmul.f32 %v2867, 1.442695
    %v2869 = vpow.pop %v2868
    %v2870 = vadd.f32 %v2869, 1.0
    %v2871 = vrcp.pop %v2870
    %v2872 = vmul.f32 1.0, %v2871
    %v2873 = vmul.f32 %v2861, %v2846
    %v2874 = vmul.f32 %v2852, %v2864
    %v2875 = vadd.f32 %v2873, %v2874
    %v2876 = vtanh.pop %v2875
    %v2877 = vmul.f32 %v2872, %v2876
    %v2878 = vld [vmem:[#allocation5] sm:$0x3]
    %v2879 = vxor.u32 %v2845, 2147483648
    %v2880 = vmul.f32 %v2879, 1.442695
    %v2881 = vpow.pop %v2880
    %v2882 = vadd.f32 %v2881, 1.0
    %v2883 = vrcp.pop %v2882
    %v2884 = vmul.f32 1.0, %v2883
    %v2886 = vrot.slane %v2845, 2
    %v2888 = vxor.u32 %v2886, 2147483648
    %v2889 = vmul.f32 %v2888, 1.442695
    %v2890 = vpow.pop %v2889
    %v2891 = vadd.f32 %v2890, 1.0
    %v2892 = vrcp.pop %v2891
    %v2893 = vmul.f32 1.0, %v2892
    %v2894 = vrot.slane %v2845, 4
    %v2896 = vtanh.pop %v2894
    %v2897 = vrot.slane %v2845, 6
    %v2899 = vxor.u32 %v2897, 2147483648
    %v2900 = vmul.f32 %v2899, 1.442695
    %v2901 = vpow.pop %v2900
    %v2902 = vadd.f32 %v2901, 1.0
    %v2903 = vrcp.pop %v2902
    %v2904 = vmul.f32 1.0, %v2903
    %v2905 = vmul.f32 %v2893, %v2878
    %v2906 = vmul.f32 %v2884, %v2896
    %v2907 = vadd.f32 %v2905, %v2906
    %v2908 = vtanh.pop %v2907
    %v2909 = vmul.f32 %v2904, %v2908
    %2910 = vst [vmem:[#allocation2] sm:$0x3] %v2877
    %2911 = vst [vmem:[#allocation3] sm:$0x3] %v2875
    %2912 = vst [vmem:[#allocation4] sm:$0x3] %v2909
    %2913 = vst [vmem:[#allocation5] sm:$0x3] %v2907
    %v2914 = vpack.c.bf16 %v2877, %v2877
    %s2915 = scalar_lea.vmem %s3, 7
    %2916 = vst [vmem:[%s2915] sm:$0x1] %v2914
    %v2917 = vpack.c.bf16 %v2909, %v2909
    %2918 = vst [vmem:[%s174] sm:$0x1] %v2917
    %s2919 = ssub.s32 0, 0
    %s2920 = smul.u32 8, %s2919
    %p2921 = scmp.lt.s32.totalorder %s2920, 7
    %s2922 = scalar_select %p2921, %s2920, 7
    %s2923 = scalar_lea.vmem %s4, %s2922
    // Predicated region
    $region100: #{_lambda_.8} parent=1 // pred_check
      _
    $region101: #{_lambda_.8} parent=1 // pred_check_branch
      %2925 = sbr.rel (0) target = $region103
    $region102: #{_lambda_.8} parent=1 // pred_region
      _
    $region103: #{_lambda_.8} parent=1 // pred_fallthru
      _
    // Predicated region
    $region104: #{_lambda_.8} parent=1 // pred_check
      _
    $region105: #{_lambda_.8} parent=1 // pred_check_branch
      %2927 = sbr.rel (0) target = $region107
    $region106: #{_lambda_.8} parent=1 // pred_region
      %s2928 = ssub.s32 0, 0
      %s2929 = smul.u32 8, %s2928
    $region107: #{_lambda_.8} parent=1 // pred_fallthru
      _
    // Predicated region
    $region108: #{_lambda_.8} parent=1 // pred_check
      _
    $region109: #{_lambda_.8} parent=1 // pred_check_branch
      %2931 = sbr.rel (0) target = $region111
    $region110: #{_lambda_.8} parent=1 // pred_region
      _
    $region111: #{_lambda_.8} parent=1 // pred_fallthru
      _
    // Predicated region
    $region112: #{_lambda_.8} parent=1 // pred_check
      _
    $region113: #{_lambda_.8} parent=1 // pred_check_branch
      %2933 = sbr.rel (0) target = $region115
    $region114: #{_lambda_.8} parent=1 // pred_region
      %s2934 = ssub.s32 0, 0
      %s2935 = smul.u32 8, %s2934
      %p2936 = scmp.lt.s32.totalorder %s2935, 7
      %s2937 = scalar_select %p2936, %s2935, 7
      %s2938 = scalar_lea.vmem %s4, %s2937
    $region115: #{_lambda_.8} parent=1 // pred_fallthru
      _

// kernel: _lambda_.6
$region0: #{_lambda_.6}
  #allocation0 [shape = 'u32[]', space=smem, size = 0x4, offset = 0x4, fixed_abs, tag = 'smem constant byte address 0x4 - core index']
  #allocation1 [shape = 'u32[144,128]{1,0:T(1,128)}', space=vmem, size = 0x12000, scoped, tag = 'internal scratch']
  #allocation2 [shape = 'f32[2,128]{1,0:T(2,128)}', space=vmem, size = 0x400, scoped, tag = 'scratch operand']
  #allocation3 [shape = 'f32[2,128]{1,0:T(2,128)}', space=vmem, size = 0x400, scoped, tag = 'scratch operand']
  #allocation4 [shape = 'f32[2,128]{1,0:T(2,128)}', space=vmem, size = 0x400, scoped, tag = 'scratch operand']
  #allocation5 [shape = 'f32[2,128]{1,0:T(2,128)}', space=vmem, size = 0x400, scoped, tag = 'scratch operand']
  %s0 = inlined_call_operand.vmem [shape: bf16[8,2,1024], index: 0, kind: input, shape index: {}, may-alias: {0,1}]
  %s1 = inlined_call_operand.vmem [shape: bf16[8,2,1024], index: 1, kind: input, shape index: {}, may-alias: {0,1}]
  %s2 = inlined_call_operand.hbm [shape: bf16[2,128,512], index: 2, kind: input, shape index: {}]
  %s3 = inlined_call_operand.vmem [shape: bf16[8,2,128], index: 3, kind: output, shape index: {0}]
  %s4 = inlined_call_operand.vmem [shape: bf16[8,2,128], index: 4, kind: output, shape index: {1}]
  %5 = xla_tuple %s3, %s4
  %s6 = sld [smem:[#allocation0]]
  $region120: #{_lambda_.6} parent=0
    _
  %s8 = ssub.s32 1, %s6
  %s9 = scalar_select 0, %s8, %s6
  $region1: #{_lambda_.6} parent=0
    #allocation6 [shape = 'u8[16384]{0}', space=vmem, size = 0x4000, scoped, tag = 'input window, operand 0, single buffered']
    #allocation7 [shape = 'u8[16384]{0}', space=vmem, size = 0x4000, scoped, tag = 'input window, operand 1, single buffered']
    #allocation8 [shape = 'u8[262144]{0}', space=vmem, size = 0x40000, scoped, tag = 'input window, operand 2, single buffered']
    #allocation9 [shape = 's32[1]{0}', space=sflag, size = 0x4, scoped, tag = 'scoped memory for _lambda_.6']
    %10 = vsyncpa [#allocation9], 0
    // Predicated region
    $region2: #{_lambda_.6} parent=1 // pred_check
      _
    $region3: #{_lambda_.6} parent=1 // pred_check_branch
      %12 = sbr.rel (0) target = $region5
    $region4: #{_lambda_.6} parent=1 // pred_region
      // Predicated region
      $region6: #{_lambda_.6} parent=4 // pred_check
        _
      $region7: #{_lambda_.6} parent=4 // pred_check_branch
        %14 = sbr.rel (0) target = $region9
      $region8: #{_lambda_.6} parent=4 // pred_region
        // Predicated region
        $region10: #{_lambda_.6} parent=8 // pred_check
          _
        $region11: #{_lambda_.6} parent=8 // pred_check_branch
          %16 = sbr.rel target = $region13
        $region12: #{_lambda_.6} parent=8 // pred_region
          // Predicated region
          $region25: #{_lambda_.6} parent=12 // pred_check
            _
          $region26: #{_lambda_.6} parent=12 // pred_check_branch
            %46 = sbr.rel (0) target = $region28
          $region27: #{_lambda_.6} parent=12 // pred_region
            loop: start=0, step=1, limit=1
            $region29: #{_lambda_.6} parent=27 // loop_pre_header
              _
            $region30: #{_lambda_.6} parent=27 // loop_header
              %s48 = sphi 0, %s52
              %p49 = scmp.ge.s32.totalorder %s48, 1
              %s53 = sphi %s0, %s0
              %s54 = sphi [#allocation6], [#allocation6]
            $region31: #{_lambda_.6} parent=27 // loop_header_branch
              %51 = sbr.rel (%p49) target = $region35
            $region32: #{_lambda_.6} parent=27 // loop_body
              _
            $region33: #{_lambda_.6} parent=27 // loop_footer
              %s52 = sadd.s32 1, %s48
            $region34: #{_lambda_.6} parent=27 // loop_footer_branch
              %47 = sbr.rel target = $region30
            $region35: #{_lambda_.6} parent=27 // loop_exit
              _
            %s56 = ssub.s32 16, 1
            loop: start=0, step=1, limit=1
            $region36: #{_lambda_.6} parent=27 // loop_pre_header
              _
            $region37: #{_lambda_.6} parent=27 // loop_header
              %s58 = sphi 0, %s62
              %p59 = scmp.ge.s32.totalorder %s58, 1
              %s63 = sphi %s0, %s0
              %s64 = sphi [#allocation6], [#allocation6]
            $region38: #{_lambda_.6} parent=27 // loop_header_branch
              %61 = sbr.rel (%p59) target = $region42
            $region39: #{_lambda_.6} parent=27 // loop_body
              %v65 = vld [vmem:[%s63] sm:%s56]
              %66 = vst [vmem:[%s64] sm:%s56] %v65
              %v67 = vld [vmem:[%s63 + $0x8] sm:%s56]
              %68 = vst [vmem:[%s64 + $0x4] sm:%s56] %v67
              %v69 = vld [vmem:[%s63 + $0x10] sm:%s56]
              %70 = vst [vmem:[%s64 + $0x8] sm:%s56] %v69
              %v71 = vld [vmem:[%s63 + $0x18] sm:%s56]
              %72 = vst [vmem:[%s64 + $0xc] sm:%s56] %v71
              %v73 = vld [vmem:[%s63 + $0x20] sm:%s56]
              %74 = vst [vmem:[%s64 + $0x10] sm:%s56] %v73
              %v75 = vld [vmem:[%s63 + $0x28] sm:%s56]
              %76 = vst [vmem:[%s64 + $0x14] sm:%s56] %v75
              %v77 = vld [vmem:[%s63 + $0x30] sm:%s56]
              %78 = vst [vmem:[%s64 + $0x18] sm:%s56] %v77
              %v79 = vld [vmem:[%s63 + $0x38] sm:%s56]
              %80 = vst [vmem:[%s64 + $0x1c] sm:%s56] %v79
            $region40: #{_lambda_.6} parent=27 // loop_footer
              %s62 = sadd.s32 1, %s58
            $region41: #{_lambda_.6} parent=27 // loop_footer_branch
              %57 = sbr.rel target = $region37
            $region42: #{_lambda_.6} parent=27 // loop_exit
              _
          $region28: #{_lambda_.6} parent=12 // pred_fallthru
            _
        $region13: #{_lambda_.6} parent=8 // pred_fallthru
          _
        // Predicated region
        $region14: #{_lambda_.6} parent=8 // pred_check
          _
        $region15: #{_lambda_.6} parent=8 // pred_check_branch
          %18 = sbr.rel (0) target = $region17
        $region16: #{_lambda_.6} parent=8 // pred_region
          %s20 = ssub.s32 16, 1
          loop: start=0, step=1, limit=1
          $region18: #{_lambda_.6} parent=16 // loop_pre_header
            _
          $region19: #{_lambda_.6} parent=16 // loop_header
            %s22 = sphi 0, %s26
            %p23 = scmp.ge.s32.totalorder %s22, 1
            %s27 = sphi %s0, %s0
            %s28 = sphi [#allocation6], [#allocation6]
          $region20: #{_lambda_.6} parent=16 // loop_header_branch
            %25 = sbr.rel (%p23) target = $region24
          $region21: #{_lambda_.6} parent=16 // loop_body
            %v29 = vld [vmem:[%s27] sm:%s20]
            %30 = vst [vmem:[%s28] sm:%s20] %v29
            %v31 = vld [vmem:[%s27 + $0x8] sm:%s20]
            %32 = vst [vmem:[%s28 + $0x4] sm:%s20] %v31
            %v33 = vld [vmem:[%s27 + $0x10] sm:%s20]
            %34 = vst [vmem:[%s28 + $0x8] sm:%s20] %v33
            %v35 = vld [vmem:[%s27 + $0x18] sm:%s20]
            %36 = vst [vmem:[%s28 + $0xc] sm:%s20] %v35
            %v37 = vld [vmem:[%s27 + $0x20] sm:%s20]
            %38 = vst [vmem:[%s28 + $0x10] sm:%s20] %v37
            %v39 = vld [vmem:[%s27 + $0x28] sm:%s20]
            %40 = vst [vmem:[%s28 + $0x14] sm:%s20] %v39
            %v41 = vld [vmem:[%s27 + $0x30] sm:%s20]
            %42 = vst [vmem:[%s28 + $0x18] sm:%s20] %v41
            %v43 = vld [vmem:[%s27 + $0x38] sm:%s20]
            %44 = vst [vmem:[%s28 + $0x1c] sm:%s20] %v43
          $region22: #{_lambda_.6} parent=16 // loop_footer
            %s26 = sadd.s32 1, %s22
          $region23: #{_lambda_.6} parent=16 // loop_footer_branch
            %21 = sbr.rel target = $region19
          $region24: #{_lambda_.6} parent=16 // loop_exit
            _
        $region17: #{_lambda_.6} parent=8 // pred_fallthru
          _
      $region9: #{_lambda_.6} parent=4 // pred_fallthru
        _
      %81 = vnop
    $region5: #{_lambda_.6} parent=1 // pred_fallthru
      _
    // Predicated region
    $region43: #{_lambda_.6} parent=1 // pred_check
      _
    $region44: #{_lambda_.6} parent=1 // pred_check_branch
      %83 = sbr.rel (0) target = $region46
    $region45: #{_lambda_.6} parent=1 // pred_region
      %s84 = ssub.s32 0, 0
      %s85 = smul.u32 8, %s84
      %s86 = smul.addr %s85, 8
      %s87 = sadd.s32 4, %s86
      %s88 = scalar_lea.vmem %s1, %s87
      // Predicated region
      $region47: #{_lambda_.6} parent=45 // pred_check
        _
      $region48: #{_lambda_.6} parent=45 // pred_check_branch
        %90 = sbr.rel (0) target = $region50
      $region49: #{_lambda_.6} parent=45 // pred_region
        // Predicated region
        $region51: #{_lambda_.6} parent=49 // pred_check
          _
        $region52: #{_lambda_.6} parent=49 // pred_check_branch
          %92 = sbr.rel target = $region54
        $region53: #{_lambda_.6} parent=49 // pred_region
          // Predicated region
          $region66: #{_lambda_.6} parent=53 // pred_check
            _
          $region67: #{_lambda_.6} parent=53 // pred_check_branch
            %122 = sbr.rel (0) target = $region69
          $region68: #{_lambda_.6} parent=53 // pred_region
            loop: start=0, step=1, limit=1
            $region70: #{_lambda_.6} parent=68 // loop_pre_header
              _
            $region71: #{_lambda_.6} parent=68 // loop_header
              %s124 = sphi 0, %s128
              %p125 = scmp.ge.s32.totalorder %s124, 1
              %s129 = sphi %s88, %s88
              %s130 = sphi [#allocation7], [#allocation7]
            $region72: #{_lambda_.6} parent=68 // loop_header_branch
              %127 = sbr.rel (%p125) target = $region76
            $region73: #{_lambda_.6} parent=68 // loop_body
              _
            $region74: #{_lambda_.6} parent=68 // loop_footer
              %s128 = sadd.s32 1, %s124
            $region75: #{_lambda_.6} parent=68 // loop_footer_branch
              %123 = sbr.rel target = $region71
            $region76: #{_lambda_.6} parent=68 // loop_exit
              _
            %s132 = ssub.s32 16, 1
            loop: start=0, step=1, limit=1
            $region77: #{_lambda_.6} parent=68 // loop_pre_header
              _
            $region78: #{_lambda_.6} parent=68 // loop_header
              %s134 = sphi 0, %s138
              %p135 = scmp.ge.s32.totalorder %s134, 1
              %s139 = sphi %s88, %s88
              %s140 = sphi [#allocation7], [#allocation7]
            $region79: #{_lambda_.6} parent=68 // loop_header_branch
              %137 = sbr.rel (%p135) target = $region83
            $region80: #{_lambda_.6} parent=68 // loop_body
              %v141 = vld [vmem:[%s139] sm:%s132]
              %142 = vst [vmem:[%s140] sm:%s132] %v141
              %v143 = vld [vmem:[%s139 + $0x8] sm:%s132]
              %144 = vst [vmem:[%s140 + $0x4] sm:%s132] %v143
              %v145 = vld [vmem:[%s139 + $0x10] sm:%s132]
              %146 = vst [vmem:[%s140 + $0x8] sm:%s132] %v145
              %v147 = vld [vmem:[%s139 + $0x18] sm:%s132]
              %148 = vst [vmem:[%s140 + $0xc] sm:%s132] %v147
              %v149 = vld [vmem:[%s139 + $0x20] sm:%s132]
              %150 = vst [vmem:[%s140 + $0x10] sm:%s132] %v149
              %v151 = vld [vmem:[%s139 + $0x28] sm:%s132]
              %152 = vst [vmem:[%s140 + $0x14] sm:%s132] %v151
              %v153 = vld [vmem:[%s139 + $0x30] sm:%s132]
              %154 = vst [vmem:[%s140 + $0x18] sm:%s132] %v153
              %v155 = vld [vmem:[%s139 + $0x38] sm:%s132]
              %156 = vst [vmem:[%s140 + $0x1c] sm:%s132] %v155
            $region81: #{_lambda_.6} parent=68 // loop_footer
              %s138 = sadd.s32 1, %s134
            $region82: #{_lambda_.6} parent=68 // loop_footer_branch
              %133 = sbr.rel target = $region78
            $region83: #{_lambda_.6} parent=68 // loop_exit
              _
          $region69: #{_lambda_.6} parent=53 // pred_fallthru
            _
        $region54: #{_lambda_.6} parent=49 // pred_fallthru
          _
        // Predicated region
        $region55: #{_lambda_.6} parent=49 // pred_check
          _
        $region56: #{_lambda_.6} parent=49 // pred_check_branch
          %94 = sbr.rel (0) target = $region58
        $region57: #{_lambda_.6} parent=49 // pred_region
          %s96 = ssub.s32 16, 1
          loop: start=0, step=1, limit=1
          $region59: #{_lambda_.6} parent=57 // loop_pre_header
            _
          $region60: #{_lambda_.6} parent=57 // loop_header
            %s98 = sphi 0, %s102
            %p99 = scmp.ge.s32.totalorder %s98, 1
            %s103 = sphi %s88, %s88
            %s104 = sphi [#allocation7], [#allocation7]
          $region61: #{_lambda_.6} parent=57 // loop_header_branch
            %101 = sbr.rel (%p99) target = $region65
          $region62: #{_lambda_.6} parent=57 // loop_body
            %v105 = vld [vmem:[%s103] sm:%s96]
            %106 = vst [vmem:[%s104] sm:%s96] %v105
            %v107 = vld [vmem:[%s103 + $0x8] sm:%s96]
            %108 = vst [vmem:[%s104 + $0x4] sm:%s96] %v107
            %v109 = vld [vmem:[%s103 + $0x10] sm:%s96]
            %110 = vst [vmem:[%s104 + $0x8] sm:%s96] %v109
            %v111 = vld [vmem:[%s103 + $0x18] sm:%s96]
            %112 = vst [vmem:[%s104 + $0xc] sm:%s96] %v111
            %v113 = vld [vmem:[%s103 + $0x20] sm:%s96]
            %114 = vst [vmem:[%s104 + $0x10] sm:%s96] %v113
            %v115 = vld [vmem:[%s103 + $0x28] sm:%s96]
            %116 = vst [vmem:[%s104 + $0x14] sm:%s96] %v115
            %v117 = vld [vmem:[%s103 + $0x30] sm:%s96]
            %118 = vst [vmem:[%s104 + $0x18] sm:%s96] %v117
            %v119 = vld [vmem:[%s103 + $0x38] sm:%s96]
            %120 = vst [vmem:[%s104 + $0x1c] sm:%s96] %v119
          $region63: #{_lambda_.6} parent=57 // loop_footer
            %s102 = sadd.s32 1, %s98
          $region64: #{_lambda_.6} parent=57 // loop_footer_branch
            %97 = sbr.rel target = $region60
          $region65: #{_lambda_.6} parent=57 // loop_exit
            _
        $region58: #{_lambda_.6} parent=49 // pred_fallthru
          _
      $region50: #{_lambda_.6} parent=45 // pred_fallthru
        _
      %157 = vnop
    $region46: #{_lambda_.6} parent=1 // pred_fallthru
      _
    // Predicated region
    $region84: #{_lambda_.6} parent=1 // pred_check
      _
    $region85: #{_lambda_.6} parent=1 // pred_check_branch
      %159 = sbr.rel (0) target = $region87
    $region86: #{_lambda_.6} parent=1 // pred_region
      %s161 = ssub.s32 8192, 8192
      %162 = vsyncadd [#allocation9], %s161
      %s163 = sshll.u32 [#allocation8], 4
      %s164 = int_to_ptr.vmem [resolvable:$true] %s163
      %169 = dma.hbm_to_vmem [thread:$0]  %s2, 8192, %s164, [#allocation9], 256, 256, 16
    $region87: #{_lambda_.6} parent=1 // pred_fallthru
      _
    // Predicated region
    $region88: #{_lambda_.6} parent=1 // pred_check
      _
    $region89: #{_lambda_.6} parent=1 // pred_check_branch
      %171 = sbr.rel (0) target = $region91
    $region90: #{_lambda_.6} parent=1 // pred_region
      _
    $region91: #{_lambda_.6} parent=1 // pred_fallthru
      _
    // Predicated region
    $region92: #{_lambda_.6} parent=1 // pred_check
      _
    $region93: #{_lambda_.6} parent=1 // pred_check_branch
      %173 = sbr.rel (0) target = $region95
    $region94: #{_lambda_.6} parent=1 // pred_region
      _
    $region95: #{_lambda_.6} parent=1 // pred_fallthru
      _
    // Predicated region
    $region96: #{_lambda_.6} parent=1 // pred_check
      _
    $region97: #{_lambda_.6} parent=1 // pred_check_branch
      %175 = sbr.rel (0) target = $region99
    $region98: #{_lambda_.6} parent=1 // pred_region
      %176 = dma.done [#allocation9], 8192
    $region99: #{_lambda_.6} parent=1 // pred_fallthru
      _
    %s177 = ssub.s32 0, 0
    %s178 = smul.u32 8, %s177
    %p179 = scmp.lt.s32.totalorder %s178, 7
    %s180 = scalar_select %p179, %s178, 7
    %s181 = scalar_lea.vmem %s4, %s180
    %s182 = ssub.s32 0, 0
    %s183 = smul.u32 8, %s182
    %s184 = ssub.s32 0, 0
    %s185 = smul.u32 8, %s184
    %p186 = scmp.lt.s32.totalorder %s185, 7
    %s187 = scalar_select %p186, %s185, 7
    %s188 = scalar_lea.vmem %s4, %s187
    %s189 = ssub.s32 0, 0
    %s190 = smul.u32 8, %s189
    %p192 = scmp.eq.s32.totalorder 0, 0
    // Predicated region
    $region100: #{_lambda_.6} parent=1 // pred_check
      %p193 = pneg %p192
    $region101: #{_lambda_.6} parent=1 // pred_check_branch
      %195 = sbr.rel (%p193) target = $region103
    $region102: #{_lambda_.6} parent=1 // pred_region
      %196 = vst [vmem:[#allocation2] sm:$0x3] 0.0
      %197 = vst [vmem:[#allocation3] sm:$0x3] 0.0
      %198 = vst [vmem:[#allocation4] sm:$0x3] 0.0
      %199 = vst [vmem:[#allocation5] sm:$0x3] 0.0
    $region103: #{_lambda_.6} parent=1 // pred_fallthru
      _
    %v200 = vld [vmem:[#allocation8] sm:$0xff]
    %v201 = vld [vmem:[#allocation8 + $0x8] sm:$0xff]
    %v202 = vld [vmem:[#allocation8 + $0x10] sm:$0xff]
    %v203 = vld [vmem:[#allocation8 + $0x18] sm:$0xff]
    %v204 = vld [vmem:[#allocation8 + $0x20] sm:$0xff]
    %v205 = vld [vmem:[#allocation8 + $0x28] sm:$0xff]
    %v206 = vld [vmem:[#allocation8 + $0x30] sm:$0xff]
    %v207 = vld [vmem:[#allocation8 + $0x38] sm:$0xff]
    %v208 = vld [vmem:[#allocation8 + $0x40] sm:$0xff]
    %v209 = vld [vmem:[#allocation8 + $0x48] sm:$0xff]
    %v210 = vld [vmem:[#allocation8 + $0x50] sm:$0xff]
    %v211 = vld [vmem:[#allocation8 + $0x58] sm:$0xff]
    %v212 = vld [vmem:[#allocation8 + $0x60] sm:$0xff]
    %v213 = vld [vmem:[#allocation8 + $0x68] sm:$0xff]
    %v214 = vld [vmem:[#allocation8 + $0x70] sm:$0xff]
    %v215 = vld [vmem:[#allocation8 + $0x78] sm:$0xff]
    %v216 = vld [vmem:[#allocation8 + $0x80] sm:$0xff]
    %v217 = vld [vmem:[#allocation8 + $0x88] sm:$0xff]
    %v218 = vld [vmem:[#allocation8 + $0x90] sm:$0xff]
    %v219 = vld [vmem:[#allocation8 + $0x98] sm:$0xff]
    %v220 = vld [vmem:[#allocation8 + $0xa0] sm:$0xff]
    %v221 = vld [vmem:[#allocation8 + $0xa8] sm:$0xff]
    %v222 = vld [vmem:[#allocation8 + $0xb0] sm:$0xff]
    %v223 = vld [vmem:[#allocation8 + $0xb8] sm:$0xff]
    %v224 = vld [vmem:[#allocation8 + $0xc0] sm:$0xff]
    %v225 = vld [vmem:[#allocation8 + $0xc8] sm:$0xff]
    %v226 = vld [vmem:[#allocation8 + $0xd0] sm:$0xff]
    %v227 = vld [vmem:[#allocation8 + $0xd8] sm:$0xff]
    %v228 = vld [vmem:[#allocation8 + $0xe0] sm:$0xff]
    %v229 = vld [vmem:[#allocation8 + $0xe8] sm:$0xff]
    %v230 = vld [vmem:[#allocation8 + $0xf0] sm:$0xff]
    %v231 = vld [vmem:[#allocation8 + $0xf8] sm:$0xff]
    %s232 = scalar_lea.vmem [#allocation8], 256
    %v233 = vld [vmem:[%s232] sm:$0xff]
    %v234 = vld [vmem:[%s232 + $0x8] sm:$0xff]
    %v235 = vld [vmem:[%s232 + $0x10] sm:$0xff]
    %v236 = vld [vmem:[%s232 + $0x18] sm:$0xff]
    %v237 = vld [vmem:[%s232 + $0x20] sm:$0xff]
    %v238 = vld [vmem:[%s232 + $0x28] sm:$0xff]
    %v239 = vld [vmem:[%s232 + $0x30] sm:$0xff]
    %v240 = vld [vmem:[%s232 + $0x38] sm:$0xff]
    %v241 = vld [vmem:[%s232 + $0x40] sm:$0xff]
    %v242 = vld [vmem:[%s232 + $0x48] sm:$0xff]
    %v243 = vld [vmem:[%s232 + $0x50] sm:$0xff]
    %v244 = vld [vmem:[%s232 + $0x58] sm:$0xff]
    %v245 = vld [vmem:[%s232 + $0x60] sm:$0xff]
    %v246 = vld [vmem:[%s232 + $0x68] sm:$0xff]
    %v247 = vld [vmem:[%s232 + $0x70] sm:$0xff]
    %v248 = vld [vmem:[%s232 + $0x78] sm:$0xff]
    %v249 = vld [vmem:[%s232 + $0x80] sm:$0xff]
    %v250 = vld [vmem:[%s232 + $0x88] sm:$0xff]
    %v251 = vld [vmem:[%s232 + $0x90] sm:$0xff]
    %v252 = vld [vmem:[%s232 + $0x98] sm:$0xff]
    %v253 = vld [vmem:[%s232 + $0xa0] sm:$0xff]
    %v254 = vld [vmem:[%s232 + $0xa8] sm:$0xff]
    %v255 = vld [vmem:[%s232 + $0xb0] sm:$0xff]
    %v256 = vld [vmem:[%s232 + $0xb8] sm:$0xff]
    %v257 = vld [vmem:[%s232 + $0xc0] sm:$0xff]
    %v258 = vld [vmem:[%s232 + $0xc8] sm:$0xff]
    %v259 = vld [vmem:[%s232 + $0xd0] sm:$0xff]
    %v260 = vld [vmem:[%s232 + $0xd8] sm:$0xff]
    %v261 = vld [vmem:[%s232 + $0xe0] sm:$0xff]
    %v262 = vld [vmem:[%s232 + $0xe8] sm:$0xff]
    %v263 = vld [vmem:[%s232 + $0xf0] sm:$0xff]
    %v264 = vld [vmem:[%s232 + $0xf8] sm:$0xff]
    %v265 = vld [vmem:[#allocation6] sm:$0xf]
    %v266 = vunpack.c.l.bf16 %v265
    %v267 = vld [vmem:[#allocation2] sm:$0x3]
    %v268 = vpack.c.bf16 %v267, %v267
    %v301 = vunpack.c.l.b16 %v200
    %v302 = vunpack.c.h.b16 %v200
    %v303 = vunpack.c.l.b16 %v201
    %v304 = vunpack.c.h.b16 %v201
    %v305 = vunpack.c.l.b16 %v202
    %v306 = vunpack.c.h.b16 %v202
    %v307 = vunpack.c.l.b16 %v203
    %v308 = vunpack.c.h.b16 %v203
    %v309 = vunpack.c.l.b16 %v204
    %v310 = vunpack.c.h.b16 %v204
    %v311 = vunpack.c.l.b16 %v205
    %v312 = vunpack.c.h.b16 %v205
    %v313 = vunpack.c.l.b16 %v206
    %v314 = vunpack.c.h.b16 %v206
    %v315 = vunpack.c.l.b16 %v207
    %v316 = vunpack.c.h.b16 %v207
    %v317 = vunpack.c.l.b16 %v208
    %v318 = vunpack.c.h.b16 %v208
    %v319 = vunpack.c.l.b16 %v209
    %v320 = vunpack.c.h.b16 %v209
    %v321 = vunpack.c.l.b16 %v210
    %v322 = vunpack.c.h.b16 %v210
    %v323 = vunpack.c.l.b16 %v211
    %v324 = vunpack.c.h.b16 %v211
    %v325 = vunpack.c.l.b16 %v212
    %v326 = vunpack.c.h.b16 %v212
    %v327 = vunpack.c.l.b16 %v213
    %v328 = vunpack.c.h.b16 %v213
    %v329 = vunpack.c.l.b16 %v214
    %v330 = vunpack.c.h.b16 %v214
    %v331 = vunpack.c.l.b16 %v215
    %v332 = vunpack.c.h.b16 %v215
    %v333 = vunpack.c.l.b16 %v216
    %v334 = vunpack.c.h.b16 %v216
    %v335 = vunpack.c.l.b16 %v217
    %v336 = vunpack.c.h.b16 %v217
    %v337 = vunpack.c.l.b16 %v218
    %v338 = vunpack.c.h.b16 %v218
    %v339 = vunpack.c.l.b16 %v219
    %v340 = vunpack.c.h.b16 %v219
    %v341 = vunpack.c.l.b16 %v220
    %v342 = vunpack.c.h.b16 %v220
    %v343 = vunpack.c.l.b16 %v221
    %v344 = vunpack.c.h.b16 %v221
    %v345 = vunpack.c.l.b16 %v222
    %v346 = vunpack.c.h.b16 %v222
    %v347 = vunpack.c.l.b16 %v223
    %v348 = vunpack.c.h.b16 %v223
    %v349 = vunpack.c.l.b16 %v224
    %v350 = vunpack.c.h.b16 %v224
    %v351 = vunpack.c.l.b16 %v225
    %v352 = vunpack.c.h.b16 %v225
    %v353 = vunpack.c.l.b16 %v226
    %v354 = vunpack.c.h.b16 %v226
    %v355 = vunpack.c.l.b16 %v227
    %v356 = vunpack.c.h.b16 %v227
    %v357 = vunpack.c.l.b16 %v228
    %v358 = vunpack.c.h.b16 %v228
    %v359 = vunpack.c.l.b16 %v229
    %v360 = vunpack.c.h.b16 %v229
    %v361 = vunpack.c.l.b16 %v230
    %v362 = vunpack.c.h.b16 %v230
    %v363 = vunpack.c.l.b16 %v231
    %v364 = vunpack.c.h.b16 %v231
    %v365 = vpack.c.b16 %v305, %v301
    %v366 = vpack.c.b16 %v306, %v302
    %v367 = vpack.c.b16 %v307, %v303
    %v368 = vpack.c.b16 %v308, %v304
    %v369 = vpack.c.b16 %v313, %v309
    %v370 = vpack.c.b16 %v314, %v310
    %v371 = vpack.c.b16 %v315, %v311
    %v372 = vpack.c.b16 %v316, %v312
    %v373 = vpack.c.b16 %v321, %v317
    %v374 = vpack.c.b16 %v322, %v318
    %v375 = vpack.c.b16 %v323, %v319
    %v376 = vpack.c.b16 %v324, %v320
    %v377 = vpack.c.b16 %v329, %v325
    %v378 = vpack.c.b16 %v330, %v326
    %v379 = vpack.c.b16 %v331, %v327
    %v380 = vpack.c.b16 %v332, %v328
    %v381 = vpack.c.b16 %v337, %v333
    %v382 = vpack.c.b16 %v338, %v334
    %v383 = vpack.c.b16 %v339, %v335
    %v384 = vpack.c.b16 %v340, %v336
    %v385 = vpack.c.b16 %v345, %v341
    %v386 = vpack.c.b16 %v346, %v342
    %v387 = vpack.c.b16 %v347, %v343
    %v388 = vpack.c.b16 %v348, %v344
    %v389 = vpack.c.b16 %v353, %v349
    %v390 = vpack.c.b16 %v354, %v350
    %v391 = vpack.c.b16 %v355, %v351
    %v392 = vpack.c.b16 %v356, %v352
    %v393 = vpack.c.b16 %v361, %v357
    %v394 = vpack.c.b16 %v362, %v358
    %v395 = vpack.c.b16 %v363, %v359
    %v396 = vpack.c.b16 %v364, %v360
    %429 = vmatprep.subr.bf16.mxu0 %v394
    %430 = vmatpush1.bf16.msra.mxu0 %v393
    %431 = vmatprep.subr.bf16.mxu0 %v390
    %432 = vmatpush1.bf16.msra.mxu0 %v389
    %433 = vmatprep.subr.bf16.mxu0 %v386
    %434 = vmatpush1.bf16.msra.mxu0 %v385
    %435 = vmatprep.subr.bf16.mxu0 %v382
    %436 = vmatpush1.bf16.msra.mxu0 %v381
    %437 = vmatprep.subr.bf16.mxu0 %v378
    %438 = vmatpush1.bf16.msra.mxu0 %v377
    %439 = vmatprep.subr.bf16.mxu0 %v374
    %440 = vmatpush1.bf16.msra.mxu0 %v373
    %441 = vmatprep.subr.bf16.mxu0 %v370
    %442 = vmatpush1.bf16.msra.mxu0 %v369
    %443 = vmatprep.subr.bf16.mxu0 %v366
    %444 = vmatpush1.bf16.msra.mxu0 %v365
    %445 = vmatprep.subr.bf16.mxu0 0
    %446 = vmatpush2.bf16.msra.mxu0 0
    %447 = vmatprep.subr.bf16.mxu0 0
    %448 = vmatpush2.bf16.msra.mxu0 0
    %449 = vmatprep.subr.bf16.mxu0 0
    %450 = vmatpush2.bf16.msra.mxu0 0
    %451 = vmatprep.subr.bf16.mxu0 0
    %452 = vmatpush2.bf16.msra.mxu0 0
    %453 = vmatprep.subr.bf16.mxu0 0
    %454 = vmatpush2.bf16.msra.mxu0 0
    %455 = vmatprep.subr.bf16.mxu0 0
    %456 = vmatpush2.bf16.msra.mxu0 0
    %457 = vmatprep.subr.bf16.mxu0 0
    %458 = vmatpush2.bf16.msra.mxu0 0
    %459 = vmatprep.subr.bf16.mxu0 0
    %460 = vmatpush2.bf16.msra.mxu0 0
    %461 = vmatprep.mubr.bf16.mxu0 0
    %462 = vmatmul.mubr.bf16.gmra.mxu0 %v268
    %v463 = vpop.f32.mrf.mxu0
    %v464 = vadd.f32 0.0, %v463
    %v465 = vpop.f32.mrf.mxu0
    %v466 = vadd.f32 0.0, %v465
    %v467 = vpop.f32.mrf.mxu0
    %v468 = vpop.f32.mrf.mxu0
    %469 = vdwg.mxu0
    %470 = vmatprep.subr.bf16.mxu0 %v396
    %471 = vmatpush1.bf16.msra.mxu0 %v395
    %472 = vmatprep.subr.bf16.mxu0 %v392
    %473 = vmatpush1.bf16.msra.mxu0 %v391
    %474 = vmatprep.subr.bf16.mxu0 %v388
    %475 = vmatpush1.bf16.msra.mxu0 %v387
    %476 = vmatprep.subr.bf16.mxu0 %v384
    %477 = vmatpush1.bf16.msra.mxu0 %v383
    %478 = vmatprep.subr.bf16.mxu0 %v380
    %479 = vmatpush1.bf16.msra.mxu0 %v379
    %480 = vmatprep.subr.bf16.mxu0 %v376
    %481 = vmatpush1.bf16.msra.mxu0 %v375
    %482 = vmatprep.subr.bf16.mxu0 %v372
    %483 = vmatpush1.bf16.msra.mxu0 %v371
    %484 = vmatprep.subr.bf16.mxu0 %v368
    %485 = vmatpush1.bf16.msra.mxu0 %v367
    %486 = vmatprep.subr.bf16.mxu0 0
    %487 = vmatpush2.bf16.msra.mxu0 0
    %488 = vmatprep.subr.bf16.mxu0 0
    %489 = vmatpush2.bf16.msra.mxu0 0
    %490 = vmatprep.subr.bf16.mxu0 0
    %491 = vmatpush2.bf16.msra.mxu0 0
    %492 = vmatprep.subr.bf16.mxu0 0
    %493 = vmatpush2.bf16.msra.mxu0 0
    %494 = vmatprep.subr.bf16.mxu0 0
    %495 = vmatpush2.bf16.msra.mxu0 0
    %496 = vmatprep.subr.bf16.mxu0 0
    %497 = vmatpush2.bf16.msra.mxu0 0
    %498 = vmatprep.subr.bf16.mxu0 0
    %499 = vmatpush2.bf16.msra.mxu0 0
    %500 = vmatprep.subr.bf16.mxu0 0
    %501 = vmatpush2.bf16.msra.mxu0 0
    %502 = vmatprep.mubr.bf16.mxu0 0
    %503 = vmatmul.mubr.bf16.gmra.mxu0 %v268
    %v504 = vpop.f32.mrf.mxu0
    %v505 = vadd.f32 0.0, %v504
    %v506 = vpop.f32.mrf.mxu0
    %v507 = vadd.f32 0.0, %v506
    %v508 = vpop.f32.mrf.mxu0
    %v509 = vpop.f32.mrf.mxu0
    %510 = vdwg.mxu0
    %v515 = vcombine.low %v464, %v466
    %v516 = vcombine.low %v505, %v507
    %v518 = vunpack.c.l.s4 1983009808
    %v519 = vunpack.c.0.s8 %v518
    %v520 = vlaneseq
    %v521 = vshrl.u32 %v520, 7
    %v522 = vsub.s32 %v519, %v521
    %v523 = vrot.slane %v515, %v522
    %v525 = vunpack.c.l.s4 1983009808
    %v526 = vunpack.c.0.s8 %v525
    %v527 = vlaneseq
    %v528 = vshrl.u32 %v527, 7
    %v529 = vsub.s32 %v526, %v528
    %v530 = vrot.slane %v516, %v529
    %v531 = vcombine.low %v523, %v530
    %v533 = vadd.f32 %v266, %v531
    %s534 = scalar_lea.vmem [#allocation7], 28
    %v535 = vld [vmem:[%s534] sm:$0xf]
    %v536 = vunpack.c.l.bf16 %v535
    %v537 = vld [vmem:[#allocation4] sm:$0x3]
    %v538 = vpack.c.bf16 %v537, %v537
    %v571 = vunpack.c.l.b16 %v233
    %v572 = vunpack.c.h.b16 %v233
    %v573 = vunpack.c.l.b16 %v234
    %v574 = vunpack.c.h.b16 %v234
    %v575 = vunpack.c.l.b16 %v235
    %v576 = vunpack.c.h.b16 %v235
    %v577 = vunpack.c.l.b16 %v236
    %v578 = vunpack.c.h.b16 %v236
    %v579 = vunpack.c.l.b16 %v237
    %v580 = vunpack.c.h.b16 %v237
    %v581 = vunpack.c.l.b16 %v238
    %v582 = vunpack.c.h.b16 %v238
    %v583 = vunpack.c.l.b16 %v239
    %v584 = vunpack.c.h.b16 %v239
    %v585 = vunpack.c.l.b16 %v240
    %v586 = vunpack.c.h.b16 %v240
    %v587 = vunpack.c.l.b16 %v241
    %v588 = vunpack.c.h.b16 %v241
    %v589 = vunpack.c.l.b16 %v242
    %v590 = vunpack.c.h.b16 %v242
    %v591 = vunpack.c.l.b16 %v243
    %v592 = vunpack.c.h.b16 %v243
    %v593 = vunpack.c.l.b16 %v244
    %v594 = vunpack.c.h.b16 %v244
    %v595 = vunpack.c.l.b16 %v245
    %v596 = vunpack.c.h.b16 %v245
    %v597 = vunpack.c.l.b16 %v246
    %v598 = vunpack.c.h.b16 %v246
    %v599 = vunpack.c.l.b16 %v247
    %v600 = vunpack.c.h.b16 %v247
    %v601 = vunpack.c.l.b16 %v248
    %v602 = vunpack.c.h.b16 %v248
    %v603 = vunpack.c.l.b16 %v249
    %v604 = vunpack.c.h.b16 %v249
    %v605 = vunpack.c.l.b16 %v250
    %v606 = vunpack.c.h.b16 %v250
    %v607 = vunpack.c.l.b16 %v251
    %v608 = vunpack.c.h.b16 %v251
    %v609 = vunpack.c.l.b16 %v252
    %v610 = vunpack.c.h.b16 %v252
    %v611 = vunpack.c.l.b16 %v253
    %v612 = vunpack.c.h.b16 %v253
    %v613 = vunpack.c.l.b16 %v254
    %v614 = vunpack.c.h.b16 %v254
    %v615 = vunpack.c.l.b16 %v255
    %v616 = vunpack.c.h.b16 %v255
    %v617 = vunpack.c.l.b16 %v256
    %v618 = vunpack.c.h.b16 %v256
    %v619 = vunpack.c.l.b16 %v257
    %v620 = vunpack.c.h.b16 %v257
    %v621 = vunpack.c.l.b16 %v258
    %v622 = vunpack.c.h.b16 %v258
    %v623 = vunpack.c.l.b16 %v259
    %v624 = vunpack.c.h.b16 %v259
    %v625 = vunpack.c.l.b16 %v260
    %v626 = vunpack.c.h.b16 %v260
    %v627 = vunpack.c.l.b16 %v261
    %v628 = vunpack.c.h.b16 %v261
    %v629 = vunpack.c.l.b16 %v262
    %v630 = vunpack.c.h.b16 %v262
    %v631 = vunpack.c.l.b16 %v263
    %v632 = vunpack.c.h.b16 %v263
    %v633 = vunpack.c.l.b16 %v264
    %v634 = vunpack.c.h.b16 %v264
    %v635 = vpack.c.b16 %v575, %v571
    %v636 = vpack.c.b16 %v576, %v572
    %v637 = vpack.c.b16 %v577, %v573
    %v638 = vpack.c.b16 %v578, %v574
    %v639 = vpack.c.b16 %v583, %v579
    %v640 = vpack.c.b16 %v584, %v580
    %v641 = vpack.c.b16 %v585, %v581
    %v642 = vpack.c.b16 %v586, %v582
    %v643 = vpack.c.b16 %v591, %v587
    %v644 = vpack.c.b16 %v592, %v588
    %v645 = vpack.c.b16 %v593, %v589
    %v646 = vpack.c.b16 %v594, %v590
    %v647 = vpack.c.b16 %v599, %v595
    %v648 = vpack.c.b16 %v600, %v596
    %v649 = vpack.c.b16 %v601, %v597
    %v650 = vpack.c.b16 %v602, %v598
    %v651 = vpack.c.b16 %v607, %v603
    %v652 = vpack.c.b16 %v608, %v604
    %v653 = vpack.c.b16 %v609, %v605
    %v654 = vpack.c.b16 %v610, %v606
    %v655 = vpack.c.b16 %v615, %v611
    %v656 = vpack.c.b16 %v616, %v612
    %v657 = vpack.c.b16 %v617, %v613
    %v658 = vpack.c.b16 %v618, %v614
    %v659 = vpack.c.b16 %v623, %v619
    %v660 = vpack.c.b16 %v624, %v620
    %v661 = vpack.c.b16 %v625, %v621
    %v662 = vpack.c.b16 %v626, %v622
    %v663 = vpack.c.b16 %v631, %v627
    %v664 = vpack.c.b16 %v632, %v628
    %v665 = vpack.c.b16 %v633, %v629
    %v666 = vpack.c.b16 %v634, %v630
    %699 = vmatprep.subr.bf16.mxu0 %v664
    %700 = vmatpush1.bf16.msra.mxu0 %v663
    %701 = vmatprep.subr.bf16.mxu0 %v660
    %702 = vmatpush1.bf16.msra.mxu0 %v659
    %703 = vmatprep.subr.bf16.mxu0 %v656
    %704 = vmatpush1.bf16.msra.mxu0 %v655
    %705 = vmatprep.subr.bf16.mxu0 %v652
    %706 = vmatpush1.bf16.msra.mxu0 %v651
    %707 = vmatprep.subr.bf16.mxu0 %v648
    %708 = vmatpush1.bf16.msra.mxu0 %v647
    %709 = vmatprep.subr.bf16.mxu0 %v644
    %710 = vmatpush1.bf16.msra.mxu0 %v643
    %711 = vmatprep.subr.bf16.mxu0 %v640
    %712 = vmatpush1.bf16.msra.mxu0 %v639
    %713 = vmatprep.subr.bf16.mxu0 %v636
    %714 = vmatpush1.bf16.msra.mxu0 %v635
    %715 = vmatprep.subr.bf16.mxu0 0
    %716 = vmatpush2.bf16.msra.mxu0 0
    %717 = vmatprep.subr.bf16.mxu0 0
    %718 = vmatpush2.bf16.msra.mxu0 0
    %719 = vmatprep.subr.bf16.mxu0 0
    %720 = vmatpush2.bf16.msra.mxu0 0
    %721 = vmatprep.subr.bf16.mxu0 0
    %722 = vmatpush2.bf16.msra.mxu0 0
    %723 = vmatprep.subr.bf16.mxu0 0
    %724 = vmatpush2.bf16.msra.mxu0 0
    %725 = vmatprep.subr.bf16.mxu0 0
    %726 = vmatpush2.bf16.msra.mxu0 0
    %727 = vmatprep.subr.bf16.mxu0 0
    %728 = vmatpush2.bf16.msra.mxu0 0
    %729 = vmatprep.subr.bf16.mxu0 0
    %730 = vmatpush2.bf16.msra.mxu0 0
    %731 = vmatprep.mubr.bf16.mxu0 0
    %732 = vmatmul.mubr.bf16.gmra.mxu0 %v538
    %v733 = vpop.f32.mrf.mxu0
    %v734 = vadd.f32 0.0, %v733
    %v735 = vpop.f32.mrf.mxu0
    %v736 = vadd.f32 0.0, %v735
    %v737 = vpop.f32.mrf.mxu0
    %v738 = vpop.f32.mrf.mxu0
    %739 = vdwg.mxu0
    %740 = vmatprep.subr.bf16.mxu0 %v666
    %741 = vmatpush1.bf16.msra.mxu0 %v665
    %742 = vmatprep.subr.bf16.mxu0 %v662
    %743 = vmatpush1.bf16.msra.mxu0 %v661
    %744 = vmatprep.subr.bf16.mxu0 %v658
    %745 = vmatpush1.bf16.msra.mxu0 %v657
    %746 = vmatprep.subr.bf16.mxu0 %v654
    %747 = vmatpush1.bf16.msra.mxu0 %v653
    %748 = vmatprep.subr.bf16.mxu0 %v650
    %749 = vmatpush1.bf16.msra.mxu0 %v649
    %750 = vmatprep.subr.bf16.mxu0 %v646
    %751 = vmatpush1.bf16.msra.mxu0 %v645
    %752 = vmatprep.subr.bf16.mxu0 %v642
    %753 = vmatpush1.bf16.msra.mxu0 %v641
    %754 = vmatprep.subr.bf16.mxu0 %v638
    %755 = vmatpush1.bf16.msra.mxu0 %v637
    %756 = vmatprep.subr.bf16.mxu0 0
    %757 = vmatpush2.bf16.msra.mxu0 0
    %758 = vmatprep.subr.bf16.mxu0 0
    %759 = vmatpush2.bf16.msra.mxu0 0
    %760 = vmatprep.subr.bf16.mxu0 0
    %761 = vmatpush2.bf16.msra.mxu0 0
    %762 = vmatprep.subr.bf16.mxu0 0
    %763 = vmatpush2.bf16.msra.mxu0 0
    %764 = vmatprep.subr.bf16.mxu0 0
    %765 = vmatpush2.bf16.msra.mxu0 0
    %766 = vmatprep.subr.bf16.mxu0 0
    %767 = vmatpush2.bf16.msra.mxu0 0
    %768 = vmatprep.subr.bf16.mxu0 0
    %769 = vmatpush2.bf16.msra.mxu0 0
    %770 = vmatprep.subr.bf16.mxu0 0
    %771 = vmatpush2.bf16.msra.mxu0 0
    %772 = vmatprep.mubr.bf16.mxu0 0
    %773 = vmatmul.mubr.bf16.gmra.mxu0 %v538
    %v774 = vpop.f32.mrf.mxu0
    %v775 = vadd.f32 0.0, %v774
    %v776 = vpop.f32.mrf.mxu0
    %v777 = vadd.f32 0.0, %v776
    %v778 = vpop.f32.mrf.mxu0
    %v779 = vpop.f32.mrf.mxu0
    %780 = vdwg.mxu0
    %v785 = vcombine.low %v734, %v736
    %v786 = vcombine.low %v775, %v777
    %v788 = vunpack.c.l.s4 1983009808
    %v789 = vunpack.c.0.s8 %v788
    %v790 = vlaneseq
    %v791 = vshrl.u32 %v790, 7
    %v792 = vsub.s32 %v789, %v791
    %v793 = vrot.slane %v785, %v792
    %v795 = vunpack.c.l.s4 1983009808
    %v796 = vunpack.c.0.s8 %v795
    %v797 = vlaneseq
    %v798 = vshrl.u32 %v797, 7
    %v799 = vsub.s32 %v796, %v798
    %v800 = vrot.slane %v786, %v799
    %v801 = vcombine.low %v793, %v800
    %v803 = vadd.f32 %v536, %v801
    %v804 = vld [vmem:[#allocation3] sm:$0x3]
    %v805 = vxor.u32 %v533, 2147483648
    %v806 = vmul.f32 %v805, 1.442695
    %v807 = vpow.pop %v806
    %v808 = vadd.f32 %v807, 1.0
    %v809 = vrcp.pop %v808
    %v810 = vmul.f32 1.0, %v809
    %v812 = vrot.slane %v533, 2
    %v814 = vxor.u32 %v812, 2147483648
    %v815 = vmul.f32 %v814, 1.442695
    %v816 = vpow.pop %v815
    %v817 = vadd.f32 %v816, 1.0
    %v818 = vrcp.pop %v817
    %v819 = vmul.f32 1.0, %v818
    %v820 = vrot.slane %v533, 4
    %v822 = vtanh.pop %v820
    %v823 = vrot.slane %v533, 6
    %v825 = vxor.u32 %v823, 2147483648
    %v826 = vmul.f32 %v825, 1.442695
    %v827 = vpow.pop %v826
    %v828 = vadd.f32 %v827, 1.0
    %v829 = vrcp.pop %v828
    %v830 = vmul.f32 1.0, %v829
    %v831 = vmul.f32 %v819, %v804
    %v832 = vmul.f32 %v810, %v822
    %v833 = vadd.f32 %v831, %v832
    %v834 = vtanh.pop %v833
    %v835 = vmul.f32 %v830, %v834
    %v836 = vld [vmem:[#allocation5] sm:$0x3]
    %v837 = vxor.u32 %v803, 2147483648
    %v838 = vmul.f32 %v837, 1.442695
    %v839 = vpow.pop %v838
    %v840 = vadd.f32 %v839, 1.0
    %v841 = vrcp.pop %v840
    %v842 = vmul.f32 1.0, %v841
    %v844 = vrot.slane %v803, 2
    %v846 = vxor.u32 %v844, 2147483648
    %v847 = vmul.f32 %v846, 1.442695
    %v848 = vpow.pop %v847
    %v849 = vadd.f32 %v848, 1.0
    %v850 = vrcp.pop %v849
    %v851 = vmul.f32 1.0, %v850
    %v852 = vrot.slane %v803, 4
    %v854 = vtanh.pop %v852
    %v855 = vrot.slane %v803, 6
    %v857 = vxor.u32 %v855, 2147483648
    %v858 = vmul.f32 %v857, 1.442695
    %v859 = vpow.pop %v858
    %v860 = vadd.f32 %v859, 1.0
    %v861 = vrcp.pop %v860
    %v862 = vmul.f32 1.0, %v861
    %v863 = vmul.f32 %v851, %v836
    %v864 = vmul.f32 %v842, %v854
    %v865 = vadd.f32 %v863, %v864
    %v866 = vtanh.pop %v865
    %v867 = vmul.f32 %v862, %v866
    %868 = vst [vmem:[#allocation2] sm:$0x3] %v835
    %869 = vst [vmem:[#allocation3] sm:$0x3] %v833
    %870 = vst [vmem:[#allocation4] sm:$0x3] %v867
    %871 = vst [vmem:[#allocation5] sm:$0x3] %v865
    %v872 = vpack.c.bf16 %v835, %v835
    %873 = vst [vmem:[%s3] sm:$0x1] %v872
    %v874 = vpack.c.bf16 %v867, %v867
    %s875 = scalar_lea.vmem %s188, 7
    %876 = vst [vmem:[%s875] sm:$0x1] %v874
    %s877 = scalar_lea.vmem [#allocation6], 4
    %v878 = vld [vmem:[%s877] sm:$0xf]
    %v879 = vunpack.c.l.bf16 %v878
    %v880 = vld [vmem:[#allocation2] sm:$0x3]
    %v881 = vpack.c.bf16 %v880, %v880
    %882 = vmatprep.subr.bf16.mxu0 %v394
    %883 = vmatpush1.bf16.msra.mxu0 %v393
    %884 = vmatprep.subr.bf16.mxu0 %v390
    %885 = vmatpush1.bf16.msra.mxu0 %v389
    %886 = vmatprep.subr.bf16.mxu0 %v386
    %887 = vmatpush1.bf16.msra.mxu0 %v385
    %888 = vmatprep.subr.bf16.mxu0 %v382
    %889 = vmatpush1.bf16.msra.mxu0 %v381
    %890 = vmatprep.subr.bf16.mxu0 %v378
    %891 = vmatpush1.bf16.msra.mxu0 %v377
    %892 = vmatprep.subr.bf16.mxu0 %v374
    %893 = vmatpush1.bf16.msra.mxu0 %v373
    %894 = vmatprep.subr.bf16.mxu0 %v370
    %895 = vmatpush1.bf16.msra.mxu0 %v369
    %896 = vmatprep.subr.bf16.mxu0 %v366
    %897 = vmatpush1.bf16.msra.mxu0 %v365
    %898 = vmatprep.subr.bf16.mxu0 0
    %899 = vmatpush2.bf16.msra.mxu0 0
    %900 = vmatprep.subr.bf16.mxu0 0
    %901 = vmatpush2.bf16.msra.mxu0 0
    %902 = vmatprep.subr.bf16.mxu0 0
    %903 = vmatpush2.bf16.msra.mxu0 0
    %904 = vmatprep.subr.bf16.mxu0 0
    %905 = vmatpush2.bf16.msra.mxu0 0
    %906 = vmatprep.subr.bf16.mxu0 0
    %907 = vmatpush2.bf16.msra.mxu0 0
    %908 = vmatprep.subr.bf16.mxu0 0
    %909 = vmatpush2.bf16.msra.mxu0 0
    %910 = vmatprep.subr.bf16.mxu0 0
    %911 = vmatpush2.bf16.msra.mxu0 0
    %912 = vmatprep.subr.bf16.mxu0 0
    %913 = vmatpush2.bf16.msra.mxu0 0
    %914 = vmatprep.mubr.bf16.mxu0 0
    %915 = vmatmul.mubr.bf16.gmra.mxu0 %v881
    %v916 = vpop.f32.mrf.mxu0
    %v917 = vadd.f32 0.0, %v916
    %v918 = vpop.f32.mrf.mxu0
    %v919 = vadd.f32 0.0, %v918
    %v920 = vpop.f32.mrf.mxu0
    %v921 = vpop.f32.mrf.mxu0
    %922 = vdwg.mxu0
    %923 = vmatprep.subr.bf16.mxu0 %v396
    %924 = vmatpush1.bf16.msra.mxu0 %v395
    %925 = vmatprep.subr.bf16.mxu0 %v392
    %926 = vmatpush1.bf16.msra.mxu0 %v391
    %927 = vmatprep.subr.bf16.mxu0 %v388
    %928 = vmatpush1.bf16.msra.mxu0 %v387
    %929 = vmatprep.subr.bf16.mxu0 %v384
    %930 = vmatpush1.bf16.msra.mxu0 %v383
    %931 = vmatprep.subr.bf16.mxu0 %v380
    %932 = vmatpush1.bf16.msra.mxu0 %v379
    %933 = vmatprep.subr.bf16.mxu0 %v376
    %934 = vmatpush1.bf16.msra.mxu0 %v375
    %935 = vmatprep.subr.bf16.mxu0 %v372
    %936 = vmatpush1.bf16.msra.mxu0 %v371
    %937 = vmatprep.subr.bf16.mxu0 %v368
    %938 = vmatpush1.bf16.msra.mxu0 %v367
    %939 = vmatprep.subr.bf16.mxu0 0
    %940 = vmatpush2.bf16.msra.mxu0 0
    %941 = vmatprep.subr.bf16.mxu0 0
    %942 = vmatpush2.bf16.msra.mxu0 0
    %943 = vmatprep.subr.bf16.mxu0 0
    %944 = vmatpush2.bf16.msra.mxu0 0
    %945 = vmatprep.subr.bf16.mxu0 0
    %946 = vmatpush2.bf16.msra.mxu0 0
    %947 = vmatprep.subr.bf16.mxu0 0
    %948 = vmatpush2.bf16.msra.mxu0 0
    %949 = vmatprep.subr.bf16.mxu0 0
    %950 = vmatpush2.bf16.msra.mxu0 0
    %951 = vmatprep.subr.bf16.mxu0 0
    %952 = vmatpush2.bf16.msra.mxu0 0
    %953 = vmatprep.subr.bf16.mxu0 0
    %954 = vmatpush2.bf16.msra.mxu0 0
    %955 = vmatprep.mubr.bf16.mxu0 0
    %956 = vmatmul.mubr.bf16.gmra.mxu0 %v881
    %v957 = vpop.f32.mrf.mxu0
    %v958 = vadd.f32 0.0, %v957
    %v959 = vpop.f32.mrf.mxu0
    %v960 = vadd.f32 0.0, %v959
    %v961 = vpop.f32.mrf.mxu0
    %v962 = vpop.f32.mrf.mxu0
    %963 = vdwg.mxu0
    %v968 = vcombine.low %v917, %v919
    %v969 = vcombine.low %v958, %v960
    %v971 = vunpack.c.l.s4 1983009808
    %v972 = vunpack.c.0.s8 %v971
    %v973 = vlaneseq
    %v974 = vshrl.u32 %v973, 7
    %v975 = vsub.s32 %v972, %v974
    %v976 = vrot.slane %v968, %v975
    %v978 = vunpack.c.l.s4 1983009808
    %v979 = vunpack.c.0.s8 %v978
    %v980 = vlaneseq
    %v981 = vshrl.u32 %v980, 7
    %v982 = vsub.s32 %v979, %v981
    %v983 = vrot.slane %v969, %v982
    %v984 = vcombine.low %v976, %v983
    %v986 = vadd.f32 %v879, %v984
    %s987 = scalar_lea.vmem [#allocation7], 24
    %v988 = vld [vmem:[%s987] sm:$0xf]
    %v989 = vunpack.c.l.bf16 %v988
    %v990 = vld [vmem:[#allocation4] sm:$0x3]
    %v991 = vpack.c.bf16 %v990, %v990
    %992 = vmatprep.subr.bf16.mxu0 %v664
    %993 = vmatpush1.bf16.msra.mxu0 %v663
    %994 = vmatprep.subr.bf16.mxu0 %v660
    %995 = vmatpush1.bf16.msra.mxu0 %v659
    %996 = vmatprep.subr.bf16.mxu0 %v656
    %997 = vmatpush1.bf16.msra.mxu0 %v655
    %998 = vmatprep.subr.bf16.mxu0 %v652
    %999 = vmatpush1.bf16.msra.mxu0 %v651
    %1000 = vmatprep.subr.bf16.mxu0 %v648
    %1001 = vmatpush1.bf16.msra.mxu0 %v647
    %1002 = vmatprep.subr.bf16.mxu0 %v644
    %1003 = vmatpush1.bf16.msra.mxu0 %v643
    %1004 = vmatprep.subr.bf16.mxu0 %v640
    %1005 = vmatpush1.bf16.msra.mxu0 %v639
    %1006 = vmatprep.subr.bf16.mxu0 %v636
    %1007 = vmatpush1.bf16.msra.mxu0 %v635
    %1008 = vmatprep.subr.bf16.mxu0 0
    %1009 = vmatpush2.bf16.msra.mxu0 0
    %1010 = vmatprep.subr.bf16.mxu0 0
    %1011 = vmatpush2.bf16.msra.mxu0 0
    %1012 = vmatprep.subr.bf16.mxu0 0
    %1013 = vmatpush2.bf16.msra.mxu0 0
    %1014 = vmatprep.subr.bf16.mxu0 0
    %1015 = vmatpush2.bf16.msra.mxu0 0
    %1016 = vmatprep.subr.bf16.mxu0 0
    %1017 = vmatpush2.bf16.msra.mxu0 0
    %1018 = vmatprep.subr.bf16.mxu0 0
    %1019 = vmatpush2.bf16.msra.mxu0 0
    %1020 = vmatprep.subr.bf16.mxu0 0
    %1021 = vmatpush2.bf16.msra.mxu0 0
    %1022 = vmatprep.subr.bf16.mxu0 0
    %1023 = vmatpush2.bf16.msra.mxu0 0
    %1024 = vmatprep.mubr.bf16.mxu0 0
    %1025 = vmatmul.mubr.bf16.gmra.mxu0 %v991
    %v1026 = vpop.f32.mrf.mxu0
    %v1027 = vadd.f32 0.0, %v1026
    %v1028 = vpop.f32.mrf.mxu0
    %v1029 = vadd.f32 0.0, %v1028
    %v1030 = vpop.f32.mrf.mxu0
    %v1031 = vpop.f32.mrf.mxu0
    %1032 = vdwg.mxu0
    %1033 = vmatprep.subr.bf16.mxu0 %v666
    %1034 = vmatpush1.bf16.msra.mxu0 %v665
    %1035 = vmatprep.subr.bf16.mxu0 %v662
    %1036 = vmatpush1.bf16.msra.mxu0 %v661
    %1037 = vmatprep.subr.bf16.mxu0 %v658
    %1038 = vmatpush1.bf16.msra.mxu0 %v657
    %1039 = vmatprep.subr.bf16.mxu0 %v654
    %1040 = vmatpush1.bf16.msra.mxu0 %v653
    %1041 = vmatprep.subr.bf16.mxu0 %v650
    %1042 = vmatpush1.bf16.msra.mxu0 %v649
    %1043 = vmatprep.subr.bf16.mxu0 %v646
    %1044 = vmatpush1.bf16.msra.mxu0 %v645
    %1045 = vmatprep.subr.bf16.mxu0 %v642
    %1046 = vmatpush1.bf16.msra.mxu0 %v641
    %1047 = vmatprep.subr.bf16.mxu0 %v638
    %1048 = vmatpush1.bf16.msra.mxu0 %v637
    %1049 = vmatprep.subr.bf16.mxu0 0
    %1050 = vmatpush2.bf16.msra.mxu0 0
    %1051 = vmatprep.subr.bf16.mxu0 0
    %1052 = vmatpush2.bf16.msra.mxu0 0
    %1053 = vmatprep.subr.bf16.mxu0 0
    %1054 = vmatpush2.bf16.msra.mxu0 0
    %1055 = vmatprep.subr.bf16.mxu0 0
    %1056 = vmatpush2.bf16.msra.mxu0 0
    %1057 = vmatprep.subr.bf16.mxu0 0
    %1058 = vmatpush2.bf16.msra.mxu0 0
    %1059 = vmatprep.subr.bf16.mxu0 0
    %1060 = vmatpush2.bf16.msra.mxu0 0
    %1061 = vmatprep.subr.bf16.mxu0 0
    %1062 = vmatpush2.bf16.msra.mxu0 0
    %1063 = vmatprep.subr.bf16.mxu0 0
    %1064 = vmatpush2.bf16.msra.mxu0 0
    %1065 = vmatprep.mubr.bf16.mxu0 0
    %1066 = vmatmul.mubr.bf16.gmra.mxu0 %v991
    %v1067 = vpop.f32.mrf.mxu0
    %v1068 = vadd.f32 0.0, %v1067
    %v1069 = vpop.f32.mrf.mxu0
    %v1070 = vadd.f32 0.0, %v1069
    %v1071 = vpop.f32.mrf.mxu0
    %v1072 = vpop.f32.mrf.mxu0
    %1073 = vdwg.mxu0
    %v1078 = vcombine.low %v1027, %v1029
    %v1079 = vcombine.low %v1068, %v1070
    %v1081 = vunpack.c.l.s4 1983009808
    %v1082 = vunpack.c.0.s8 %v1081
    %v1083 = vlaneseq
    %v1084 = vshrl.u32 %v1083, 7
    %v1085 = vsub.s32 %v1082, %v1084
    %v1086 = vrot.slane %v1078, %v1085
    %v1088 = vunpack.c.l.s4 1983009808
    %v1089 = vunpack.c.0.s8 %v1088
    %v1090 = vlaneseq
    %v1091 = vshrl.u32 %v1090, 7
    %v1092 = vsub.s32 %v1089, %v1091
    %v1093 = vrot.slane %v1079, %v1092
    %v1094 = vcombine.low %v1086, %v1093
    %v1096 = vadd.f32 %v989, %v1094
    %v1097 = vld [vmem:[#allocation3] sm:$0x3]
    %v1098 = vxor.u32 %v986, 2147483648
    %v1099 = vmul.f32 %v1098, 1.442695
    %v1100 = vpow.pop %v1099
    %v1101 = vadd.f32 %v1100, 1.0
    %v1102 = vrcp.pop %v1101
    %v1103 = vmul.f32 1.0, %v1102
    %v1105 = vrot.slane %v986, 2
    %v1107 = vxor.u32 %v1105, 2147483648
    %v1108 = vmul.f32 %v1107, 1.442695
    %v1109 = vpow.pop %v1108
    %v1110 = vadd.f32 %v1109, 1.0
    %v1111 = vrcp.pop %v1110
    %v1112 = vmul.f32 1.0, %v1111
    %v1113 = vrot.slane %v986, 4
    %v1115 = vtanh.pop %v1113
    %v1116 = vrot.slane %v986, 6
    %v1118 = vxor.u32 %v1116, 2147483648
    %v1119 = vmul.f32 %v1118, 1.442695
    %v1120 = vpow.pop %v1119
    %v1121 = vadd.f32 %v1120, 1.0
    %v1122 = vrcp.pop %v1121
    %v1123 = vmul.f32 1.0, %v1122
    %v1124 = vmul.f32 %v1112, %v1097
    %v1125 = vmul.f32 %v1103, %v1115
    %v1126 = vadd.f32 %v1124, %v1125
    %v1127 = vtanh.pop %v1126
    %v1128 = vmul.f32 %v1123, %v1127
    %v1129 = vld [vmem:[#allocation5] sm:$0x3]
    %v1130 = vxor.u32 %v1096, 2147483648
    %v1131 = vmul.f32 %v1130, 1.442695
    %v1132 = vpow.pop %v1131
    %v1133 = vadd.f32 %v1132, 1.0
    %v1134 = vrcp.pop %v1133
    %v1135 = vmul.f32 1.0, %v1134
    %v1137 = vrot.slane %v1096, 2
    %v1139 = vxor.u32 %v1137, 2147483648
    %v1140 = vmul.f32 %v1139, 1.442695
    %v1141 = vpow.pop %v1140
    %v1142 = vadd.f32 %v1141, 1.0
    %v1143 = vrcp.pop %v1142
    %v1144 = vmul.f32 1.0, %v1143
    %v1145 = vrot.slane %v1096, 4
    %v1147 = vtanh.pop %v1145
    %v1148 = vrot.slane %v1096, 6
    %v1150 = vxor.u32 %v1148, 2147483648
    %v1151 = vmul.f32 %v1150, 1.442695
    %v1152 = vpow.pop %v1151
    %v1153 = vadd.f32 %v1152, 1.0
    %v1154 = vrcp.pop %v1153
    %v1155 = vmul.f32 1.0, %v1154
    %v1156 = vmul.f32 %v1144, %v1129
    %v1157 = vmul.f32 %v1135, %v1147
    %v1158 = vadd.f32 %v1156, %v1157
    %v1159 = vtanh.pop %v1158
    %v1160 = vmul.f32 %v1155, %v1159
    %1161 = vst [vmem:[#allocation2] sm:$0x3] %v1128
    %1162 = vst [vmem:[#allocation3] sm:$0x3] %v1126
    %1163 = vst [vmem:[#allocation4] sm:$0x3] %v1160
    %1164 = vst [vmem:[#allocation5] sm:$0x3] %v1158
    %v1165 = vpack.c.bf16 %v1128, %v1128
    %s1166 = scalar_lea.vmem %s3, 1
    %1167 = vst [vmem:[%s1166] sm:$0x1] %v1165
    %v1168 = vpack.c.bf16 %v1160, %v1160
    %s1169 = scalar_lea.vmem %s188, 6
    %1170 = vst [vmem:[%s1169] sm:$0x1] %v1168
    %s1171 = scalar_lea.vmem [#allocation6], 8
    %v1172 = vld [vmem:[%s1171] sm:$0xf]
    %v1173 = vunpack.c.l.bf16 %v1172
    %v1174 = vld [vmem:[#allocation2] sm:$0x3]
    %v1175 = vpack.c.bf16 %v1174, %v1174
    %1176 = vmatprep.subr.bf16.mxu0 %v394
    %1177 = vmatpush1.bf16.msra.mxu0 %v393
    %1178 = vmatprep.subr.bf16.mxu0 %v390
    %1179 = vmatpush1.bf16.msra.mxu0 %v389
    %1180 = vmatprep.subr.bf16.mxu0 %v386
    %1181 = vmatpush1.bf16.msra.mxu0 %v385
    %1182 = vmatprep.subr.bf16.mxu0 %v382
    %1183 = vmatpush1.bf16.msra.mxu0 %v381
    %1184 = vmatprep.subr.bf16.mxu0 %v378
    %1185 = vmatpush1.bf16.msra.mxu0 %v377
    %1186 = vmatprep.subr.bf16.mxu0 %v374
    %1187 = vmatpush1.bf16.msra.mxu0 %v373
    %1188 = vmatprep.subr.bf16.mxu0 %v370
    %1189 = vmatpush1.bf16.msra.mxu0 %v369
    %1190 = vmatprep.subr.bf16.mxu0 %v366
    %1191 = vmatpush1.bf16.msra.mxu0 %v365
    %1192 = vmatprep.subr.bf16.mxu0 0
    %1193 = vmatpush2.bf16.msra.mxu0 0
    %1194 = vmatprep.subr.bf16.mxu0 0
    %1195 = vmatpush2.bf16.msra.mxu0 0
    %1196 = vmatprep.subr.bf16.mxu0 0
    %1197 = vmatpush2.bf16.msra.mxu0 0
    %1198 = vmatprep.subr.bf16.mxu0 0
    %1199 = vmatpush2.bf16.msra.mxu0 0
    %1200 = vmatprep.subr.bf16.mxu0 0
    %1201 = vmatpush2.bf16.msra.mxu0 0
    %1202 = vmatprep.subr.bf16.mxu0 0
    %1203 = vmatpush2.bf16.msra.mxu0 0
    %1204 = vmatprep.subr.bf16.mxu0 0
    %1205 = vmatpush2.bf16.msra.mxu0 0
    %1206 = vmatprep.subr.bf16.mxu0 0
    %1207 = vmatpush2.bf16.msra.mxu0 0
    %1208 = vmatprep.mubr.bf16.mxu0 0
    %1209 = vmatmul.mubr.bf16.gmra.mxu0 %v1175
    %v1210 = vpop.f32.mrf.mxu0
    %v1211 = vadd.f32 0.0, %v1210
    %v1212 = vpop.f32.mrf.mxu0
    %v1213 = vadd.f32 0.0, %v1212
    %v1214 = vpop.f32.mrf.mxu0
    %v1215 = vpop.f32.mrf.mxu0
    %1216 = vdwg.mxu0
    %1217 = vmatprep.subr.bf16.mxu0 %v396
    %1218 = vmatpush1.bf16.msra.mxu0 %v395
    %1219 = vmatprep.subr.bf16.mxu0 %v392
    %1220 = vmatpush1.bf16.msra.mxu0 %v391
    %1221 = vmatprep.subr.bf16.mxu0 %v388
    %1222 = vmatpush1.bf16.msra.mxu0 %v387
    %1223 = vmatprep.subr.bf16.mxu0 %v384
    %1224 = vmatpush1.bf16.msra.mxu0 %v383
    %1225 = vmatprep.subr.bf16.mxu0 %v380
    %1226 = vmatpush1.bf16.msra.mxu0 %v379
    %1227 = vmatprep.subr.bf16.mxu0 %v376
    %1228 = vmatpush1.bf16.msra.mxu0 %v375
    %1229 = vmatprep.subr.bf16.mxu0 %v372
    %1230 = vmatpush1.bf16.msra.mxu0 %v371
    %1231 = vmatprep.subr.bf16.mxu0 %v368
    %1232 = vmatpush1.bf16.msra.mxu0 %v367
    %1233 = vmatprep.subr.bf16.mxu0 0
    %1234 = vmatpush2.bf16.msra.mxu0 0
    %1235 = vmatprep.subr.bf16.mxu0 0
    %1236 = vmatpush2.bf16.msra.mxu0 0
    %1237 = vmatprep.subr.bf16.mxu0 0
    %1238 = vmatpush2.bf16.msra.mxu0 0
    %1239 = vmatprep.subr.bf16.mxu0 0
    %1240 = vmatpush2.bf16.msra.mxu0 0
    %1241 = vmatprep.subr.bf16.mxu0 0
    %1242 = vmatpush2.bf16.msra.mxu0 0
    %1243 = vmatprep.subr.bf16.mxu0 0
    %1244 = vmatpush2.bf16.msra.mxu0 0
    %1245 = vmatprep.subr.bf16.mxu0 0
    %1246 = vmatpush2.bf16.msra.mxu0 0
    %1247 = vmatprep.subr.bf16.mxu0 0
    %1248 = vmatpush2.bf16.msra.mxu0 0
    %1249 = vmatprep.mubr.bf16.mxu0 0
    %1250 = vmatmul.mubr.bf16.gmra.mxu0 %v1175
    %v1251 = vpop.f32.mrf.mxu0
    %v1252 = vadd.f32 0.0, %v1251
    %v1253 = vpop.f32.mrf.mxu0
    %v1254 = vadd.f32 0.0, %v1253
    %v1255 = vpop.f32.mrf.mxu0
    %v1256 = vpop.f32.mrf.mxu0
    %1257 = vdwg.mxu0
    %v1262 = vcombine.low %v1211, %v1213
    %v1263 = vcombine.low %v1252, %v1254
    %v1265 = vunpack.c.l.s4 1983009808
    %v1266 = vunpack.c.0.s8 %v1265
    %v1267 = vlaneseq
    %v1268 = vshrl.u32 %v1267, 7
    %v1269 = vsub.s32 %v1266, %v1268
    %v1270 = vrot.slane %v1262, %v1269
    %v1272 = vunpack.c.l.s4 1983009808
    %v1273 = vunpack.c.0.s8 %v1272
    %v1274 = vlaneseq
    %v1275 = vshrl.u32 %v1274, 7
    %v1276 = vsub.s32 %v1273, %v1275
    %v1277 = vrot.slane %v1263, %v1276
    %v1278 = vcombine.low %v1270, %v1277
    %v1280 = vadd.f32 %v1173, %v1278
    %s1281 = scalar_lea.vmem [#allocation7], 20
    %v1282 = vld [vmem:[%s1281] sm:$0xf]
    %v1283 = vunpack.c.l.bf16 %v1282
    %v1284 = vld [vmem:[#allocation4] sm:$0x3]
    %v1285 = vpack.c.bf16 %v1284, %v1284
    %1286 = vmatprep.subr.bf16.mxu0 %v664
    %1287 = vmatpush1.bf16.msra.mxu0 %v663
    %1288 = vmatprep.subr.bf16.mxu0 %v660
    %1289 = vmatpush1.bf16.msra.mxu0 %v659
    %1290 = vmatprep.subr.bf16.mxu0 %v656
    %1291 = vmatpush1.bf16.msra.mxu0 %v655
    %1292 = vmatprep.subr.bf16.mxu0 %v652
    %1293 = vmatpush1.bf16.msra.mxu0 %v651
    %1294 = vmatprep.subr.bf16.mxu0 %v648
    %1295 = vmatpush1.bf16.msra.mxu0 %v647
    %1296 = vmatprep.subr.bf16.mxu0 %v644
    %1297 = vmatpush1.bf16.msra.mxu0 %v643
    %1298 = vmatprep.subr.bf16.mxu0 %v640
    %1299 = vmatpush1.bf16.msra.mxu0 %v639
    %1300 = vmatprep.subr.bf16.mxu0 %v636
    %1301 = vmatpush1.bf16.msra.mxu0 %v635
    %1302 = vmatprep.subr.bf16.mxu0 0
    %1303 = vmatpush2.bf16.msra.mxu0 0
    %1304 = vmatprep.subr.bf16.mxu0 0
    %1305 = vmatpush2.bf16.msra.mxu0 0
    %1306 = vmatprep.subr.bf16.mxu0 0
    %1307 = vmatpush2.bf16.msra.mxu0 0
    %1308 = vmatprep.subr.bf16.mxu0 0
    %1309 = vmatpush2.bf16.msra.mxu0 0
    %1310 = vmatprep.subr.bf16.mxu0 0
    %1311 = vmatpush2.bf16.msra.mxu0 0
    %1312 = vmatprep.subr.bf16.mxu0 0
    %1313 = vmatpush2.bf16.msra.mxu0 0
    %1314 = vmatprep.subr.bf16.mxu0 0
    %1315 = vmatpush2.bf16.msra.mxu0 0
    %1316 = vmatprep.subr.bf16.mxu0 0
    %1317 = vmatpush2.bf16.msra.mxu0 0
    %1318 = vmatprep.mubr.bf16.mxu0 0
    %1319 = vmatmul.mubr.bf16.gmra.mxu0 %v1285
    %v1320 = vpop.f32.mrf.mxu0
    %v1321 = vadd.f32 0.0, %v1320
    %v1322 = vpop.f32.mrf.mxu0
    %v1323 = vadd.f32 0.0, %v1322
    %v1324 = vpop.f32.mrf.mxu0
    %v1325 = vpop.f32.mrf.mxu0
    %1326 = vdwg.mxu0
    %1327 = vmatprep.subr.bf16.mxu0 %v666
    %1328 = vmatpush1.bf16.msra.mxu0 %v665
    %1329 = vmatprep.subr.bf16.mxu0 %v662
    %1330 = vmatpush1.bf16.msra.mxu0 %v661
    %1331 = vmatprep.subr.bf16.mxu0 %v658
    %1332 = vmatpush1.bf16.msra.mxu0 %v657
    %1333 = vmatprep.subr.bf16.mxu0 %v654
    %1334 = vmatpush1.bf16.msra.mxu0 %v653
    %1335 = vmatprep.subr.bf16.mxu0 %v650
    %1336 = vmatpush1.bf16.msra.mxu0 %v649
    %1337 = vmatprep.subr.bf16.mxu0 %v646
    %1338 = vmatpush1.bf16.msra.mxu0 %v645
    %1339 = vmatprep.subr.bf16.mxu0 %v642
    %1340 = vmatpush1.bf16.msra.mxu0 %v641
    %1341 = vmatprep.subr.bf16.mxu0 %v638
    %1342 = vmatpush1.bf16.msra.mxu0 %v637
    %1343 = vmatprep.subr.bf16.mxu0 0
    %1344 = vmatpush2.bf16.msra.mxu0 0
    %1345 = vmatprep.subr.bf16.mxu0 0
    %1346 = vmatpush2.bf16.msra.mxu0 0
    %1347 = vmatprep.subr.bf16.mxu0 0
    %1348 = vmatpush2.bf16.msra.mxu0 0
    %1349 = vmatprep.subr.bf16.mxu0 0
    %1350 = vmatpush2.bf16.msra.mxu0 0
    %1351 = vmatprep.subr.bf16.mxu0 0
    %1352 = vmatpush2.bf16.msra.mxu0 0
    %1353 = vmatprep.subr.bf16.mxu0 0
    %1354 = vmatpush2.bf16.msra.mxu0 0
    %1355 = vmatprep.subr.bf16.mxu0 0
    %1356 = vmatpush2.bf16.msra.mxu0 0
    %1357 = vmatprep.subr.bf16.mxu0 0
    %1358 = vmatpush2.bf16.msra.mxu0 0
    %1359 = vmatprep.mubr.bf16.mxu0 0
    %1360 = vmatmul.mubr.bf16.gmra.mxu0 %v1285
    %v1361 = vpop.f32.mrf.mxu0
    %v1362 = vadd.f32 0.0, %v1361
    %v1363 = vpop.f32.mrf.mxu0
    %v1364 = vadd.f32 0.0, %v1363
    %v1365 = vpop.f32.mrf.mxu0
    %v1366 = vpop.f32.mrf.mxu0
    %1367 = vdwg.mxu0
    %v1372 = vcombine.low %v1321, %v1323
    %v1373 = vcombine.low %v1362, %v1364
    %v1375 = vunpack.c.l.s4 1983009808
    %v1376 = vunpack.c.0.s8 %v1375
    %v1377 = vlaneseq
    %v1378 = vshrl.u32 %v1377, 7
    %v1379 = vsub.s32 %v1376, %v1378
    %v1380 = vrot.slane %v1372, %v1379
    %v1382 = vunpack.c.l.s4 1983009808
    %v1383 = vunpack.c.0.s8 %v1382
    %v1384 = vlaneseq
    %v1385 = vshrl.u32 %v1384, 7
    %v1386 = vsub.s32 %v1383, %v1385
    %v1387 = vrot.slane %v1373, %v1386
    %v1388 = vcombine.low %v1380, %v1387
    %v1390 = vadd.f32 %v1283, %v1388
    %v1391 = vld [vmem:[#allocation3] sm:$0x3]
    %v1392 = vxor.u32 %v1280, 2147483648
    %v1393 = vmul.f32 %v1392, 1.442695
    %v1394 = vpow.pop %v1393
    %v1395 = vadd.f32 %v1394, 1.0
    %v1396 = vrcp.pop %v1395
    %v1397 = vmul.f32 1.0, %v1396
    %v1399 = vrot.slane %v1280, 2
    %v1401 = vxor.u32 %v1399, 2147483648
    %v1402 = vmul.f32 %v1401, 1.442695
    %v1403 = vpow.pop %v1402
    %v1404 = vadd.f32 %v1403, 1.0
    %v1405 = vrcp.pop %v1404
    %v1406 = vmul.f32 1.0, %v1405
    %v1407 = vrot.slane %v1280, 4
    %v1409 = vtanh.pop %v1407
    %v1410 = vrot.slane %v1280, 6
    %v1412 = vxor.u32 %v1410, 2147483648
    %v1413 = vmul.f32 %v1412, 1.442695
    %v1414 = vpow.pop %v1413
    %v1415 = vadd.f32 %v1414, 1.0
    %v1416 = vrcp.pop %v1415
    %v1417 = vmul.f32 1.0, %v1416
    %v1418 = vmul.f32 %v1406, %v1391
    %v1419 = vmul.f32 %v1397, %v1409
    %v1420 = vadd.f32 %v1418, %v1419
    %v1421 = vtanh.pop %v1420
    %v1422 = vmul.f32 %v1417, %v1421
    %v1423 = vld [vmem:[#allocation5] sm:$0x3]
    %v1424 = vxor.u32 %v1390, 2147483648
    %v1425 = vmul.f32 %v1424, 1.442695
    %v1426 = vpow.pop %v1425
    %v1427 = vadd.f32 %v1426, 1.0
    %v1428 = vrcp.pop %v1427
    %v1429 = vmul.f32 1.0, %v1428
    %v1431 = vrot.slane %v1390, 2
    %v1433 = vxor.u32 %v1431, 2147483648
    %v1434 = vmul.f32 %v1433, 1.442695
    %v1435 = vpow.pop %v1434
    %v1436 = vadd.f32 %v1435, 1.0
    %v1437 = vrcp.pop %v1436
    %v1438 = vmul.f32 1.0, %v1437
    %v1439 = vrot.slane %v1390, 4
    %v1441 = vtanh.pop %v1439
    %v1442 = vrot.slane %v1390, 6
    %v1444 = vxor.u32 %v1442, 2147483648
    %v1445 = vmul.f32 %v1444, 1.442695
    %v1446 = vpow.pop %v1445
    %v1447 = vadd.f32 %v1446, 1.0
    %v1448 = vrcp.pop %v1447
    %v1449 = vmul.f32 1.0, %v1448
    %v1450 = vmul.f32 %v1438, %v1423
    %v1451 = vmul.f32 %v1429, %v1441
    %v1452 = vadd.f32 %v1450, %v1451
    %v1453 = vtanh.pop %v1452
    %v1454 = vmul.f32 %v1449, %v1453
    %1455 = vst [vmem:[#allocation2] sm:$0x3] %v1422
    %1456 = vst [vmem:[#allocation3] sm:$0x3] %v1420
    %1457 = vst [vmem:[#allocation4] sm:$0x3] %v1454
    %1458 = vst [vmem:[#allocation5] sm:$0x3] %v1452
    %v1459 = vpack.c.bf16 %v1422, %v1422
    %s1460 = scalar_lea.vmem %s3, 2
    %1461 = vst [vmem:[%s1460] sm:$0x1] %v1459
    %v1462 = vpack.c.bf16 %v1454, %v1454
    %s1463 = scalar_lea.vmem %s188, 5
    %1464 = vst [vmem:[%s1463] sm:$0x1] %v1462
    %s1465 = scalar_lea.vmem [#allocation6], 12
    %v1466 = vld [vmem:[%s1465] sm:$0xf]
    %v1467 = vunpack.c.l.bf16 %v1466
    %v1468 = vld [vmem:[#allocation2] sm:$0x3]
    %v1469 = vpack.c.bf16 %v1468, %v1468
    %1470 = vmatprep.subr.bf16.mxu0 %v394
    %1471 = vmatpush1.bf16.msra.mxu0 %v393
    %1472 = vmatprep.subr.bf16.mxu0 %v390
    %1473 = vmatpush1.bf16.msra.mxu0 %v389
    %1474 = vmatprep.subr.bf16.mxu0 %v386
    %1475 = vmatpush1.bf16.msra.mxu0 %v385
    %1476 = vmatprep.subr.bf16.mxu0 %v382
    %1477 = vmatpush1.bf16.msra.mxu0 %v381
    %1478 = vmatprep.subr.bf16.mxu0 %v378
    %1479 = vmatpush1.bf16.msra.mxu0 %v377
    %1480 = vmatprep.subr.bf16.mxu0 %v374
    %1481 = vmatpush1.bf16.msra.mxu0 %v373
    %1482 = vmatprep.subr.bf16.mxu0 %v370
    %1483 = vmatpush1.bf16.msra.mxu0 %v369
    %1484 = vmatprep.subr.bf16.mxu0 %v366
    %1485 = vmatpush1.bf16.msra.mxu0 %v365
    %1486 = vmatprep.subr.bf16.mxu0 0
    %1487 = vmatpush2.bf16.msra.mxu0 0
    %1488 = vmatprep.subr.bf16.mxu0 0
    %1489 = vmatpush2.bf16.msra.mxu0 0
    %1490 = vmatprep.subr.bf16.mxu0 0
    %1491 = vmatpush2.bf16.msra.mxu0 0
    %1492 = vmatprep.subr.bf16.mxu0 0
    %1493 = vmatpush2.bf16.msra.mxu0 0
    %1494 = vmatprep.subr.bf16.mxu0 0
    %1495 = vmatpush2.bf16.msra.mxu0 0
    %1496 = vmatprep.subr.bf16.mxu0 0
    %1497 = vmatpush2.bf16.msra.mxu0 0
    %1498 = vmatprep.subr.bf16.mxu0 0
    %1499 = vmatpush2.bf16.msra.mxu0 0
    %1500 = vmatprep.subr.bf16.mxu0 0
    %1501 = vmatpush2.bf16.msra.mxu0 0
    %1502 = vmatprep.mubr.bf16.mxu0 0
    %1503 = vmatmul.mubr.bf16.gmra.mxu0 %v1469
    %v1504 = vpop.f32.mrf.mxu0
    %v1505 = vadd.f32 0.0, %v1504
    %v1506 = vpop.f32.mrf.mxu0
    %v1507 = vadd.f32 0.0, %v1506
    %v1508 = vpop.f32.mrf.mxu0
    %v1509 = vpop.f32.mrf.mxu0
    %1510 = vdwg.mxu0
    %1511 = vmatprep.subr.bf16.mxu0 %v396
    %1512 = vmatpush1.bf16.msra.mxu0 %v395
    %1513 = vmatprep.subr.bf16.mxu0 %v392
    %1514 = vmatpush1.bf16.msra.mxu0 %v391
    %1515 = vmatprep.subr.bf16.mxu0 %v388
    %1516 = vmatpush1.bf16.msra.mxu0 %v387
    %1517 = vmatprep.subr.bf16.mxu0 %v384
    %1518 = vmatpush1.bf16.msra.mxu0 %v383
    %1519 = vmatprep.subr.bf16.mxu0 %v380
    %1520 = vmatpush1.bf16.msra.mxu0 %v379
    %1521 = vmatprep.subr.bf16.mxu0 %v376
    %1522 = vmatpush1.bf16.msra.mxu0 %v375
    %1523 = vmatprep.subr.bf16.mxu0 %v372
    %1524 = vmatpush1.bf16.msra.mxu0 %v371
    %1525 = vmatprep.subr.bf16.mxu0 %v368
    %1526 = vmatpush1.bf16.msra.mxu0 %v367
    %1527 = vmatprep.subr.bf16.mxu0 0
    %1528 = vmatpush2.bf16.msra.mxu0 0
    %1529 = vmatprep.subr.bf16.mxu0 0
    %1530 = vmatpush2.bf16.msra.mxu0 0
    %1531 = vmatprep.subr.bf16.mxu0 0
    %1532 = vmatpush2.bf16.msra.mxu0 0
    %1533 = vmatprep.subr.bf16.mxu0 0
    %1534 = vmatpush2.bf16.msra.mxu0 0
    %1535 = vmatprep.subr.bf16.mxu0 0
    %1536 = vmatpush2.bf16.msra.mxu0 0
    %1537 = vmatprep.subr.bf16.mxu0 0
    %1538 = vmatpush2.bf16.msra.mxu0 0
    %1539 = vmatprep.subr.bf16.mxu0 0
    %1540 = vmatpush2.bf16.msra.mxu0 0
    %1541 = vmatprep.subr.bf16.mxu0 0
    %1542 = vmatpush2.bf16.msra.mxu0 0
    %1543 = vmatprep.mubr.bf16.mxu0 0
    %1544 = vmatmul.mubr.bf16.gmra.mxu0 %v1469
    %v1545 = vpop.f32.mrf.mxu0
    %v1546 = vadd.f32 0.0, %v1545
    %v1547 = vpop.f32.mrf.mxu0
    %v1548 = vadd.f32 0.0, %v1547
    %v1549 = vpop.f32.mrf.mxu0
    %v1550 = vpop.f32.mrf.mxu0
    %1551 = vdwg.mxu0
    %v1556 = vcombine.low %v1505, %v1507
    %v1557 = vcombine.low %v1546, %v1548
    %v1559 = vunpack.c.l.s4 1983009808
    %v1560 = vunpack.c.0.s8 %v1559
    %v1561 = vlaneseq
    %v1562 = vshrl.u32 %v1561, 7
    %v1563 = vsub.s32 %v1560, %v1562
    %v1564 = vrot.slane %v1556, %v1563
    %v1566 = vunpack.c.l.s4 1983009808
    %v1567 = vunpack.c.0.s8 %v1566
    %v1568 = vlaneseq
    %v1569 = vshrl.u32 %v1568, 7
    %v1570 = vsub.s32 %v1567, %v1569
    %v1571 = vrot.slane %v1557, %v1570
    %v1572 = vcombine.low %v1564, %v1571
    %v1574 = vadd.f32 %v1467, %v1572
    %s1575 = scalar_lea.vmem [#allocation7], 16
    %v1576 = vld [vmem:[%s1575] sm:$0xf]
    %v1577 = vunpack.c.l.bf16 %v1576
    %v1578 = vld [vmem:[#allocation4] sm:$0x3]
    %v1579 = vpack.c.bf16 %v1578, %v1578
    %1580 = vmatprep.subr.bf16.mxu0 %v664
    %1581 = vmatpush1.bf16.msra.mxu0 %v663
    %1582 = vmatprep.subr.bf16.mxu0 %v660
    %1583 = vmatpush1.bf16.msra.mxu0 %v659
    %1584 = vmatprep.subr.bf16.mxu0 %v656
    %1585 = vmatpush1.bf16.msra.mxu0 %v655
    %1586 = vmatprep.subr.bf16.mxu0 %v652
    %1587 = vmatpush1.bf16.msra.mxu0 %v651
    %1588 = vmatprep.subr.bf16.mxu0 %v648
    %1589 = vmatpush1.bf16.msra.mxu0 %v647
    %1590 = vmatprep.subr.bf16.mxu0 %v644
    %1591 = vmatpush1.bf16.msra.mxu0 %v643
    %1592 = vmatprep.subr.bf16.mxu0 %v640
    %1593 = vmatpush1.bf16.msra.mxu0 %v639
    %1594 = vmatprep.subr.bf16.mxu0 %v636
    %1595 = vmatpush1.bf16.msra.mxu0 %v635
    %1596 = vmatprep.subr.bf16.mxu0 0
    %1597 = vmatpush2.bf16.msra.mxu0 0
    %1598 = vmatprep.subr.bf16.mxu0 0
    %1599 = vmatpush2.bf16.msra.mxu0 0
    %1600 = vmatprep.subr.bf16.mxu0 0
    %1601 = vmatpush2.bf16.msra.mxu0 0
    %1602 = vmatprep.subr.bf16.mxu0 0
    %1603 = vmatpush2.bf16.msra.mxu0 0
    %1604 = vmatprep.subr.bf16.mxu0 0
    %1605 = vmatpush2.bf16.msra.mxu0 0
    %1606 = vmatprep.subr.bf16.mxu0 0
    %1607 = vmatpush2.bf16.msra.mxu0 0
    %1608 = vmatprep.subr.bf16.mxu0 0
    %1609 = vmatpush2.bf16.msra.mxu0 0
    %1610 = vmatprep.subr.bf16.mxu0 0
    %1611 = vmatpush2.bf16.msra.mxu0 0
    %1612 = vmatprep.mubr.bf16.mxu0 0
    %1613 = vmatmul.mubr.bf16.gmra.mxu0 %v1579
    %v1614 = vpop.f32.mrf.mxu0
    %v1615 = vadd.f32 0.0, %v1614
    %v1616 = vpop.f32.mrf.mxu0
    %v1617 = vadd.f32 0.0, %v1616
    %v1618 = vpop.f32.mrf.mxu0
    %v1619 = vpop.f32.mrf.mxu0
    %1620 = vdwg.mxu0
    %1621 = vmatprep.subr.bf16.mxu0 %v666
    %1622 = vmatpush1.bf16.msra.mxu0 %v665
    %1623 = vmatprep.subr.bf16.mxu0 %v662
    %1624 = vmatpush1.bf16.msra.mxu0 %v661
    %1625 = vmatprep.subr.bf16.mxu0 %v658
    %1626 = vmatpush1.bf16.msra.mxu0 %v657
    %1627 = vmatprep.subr.bf16.mxu0 %v654
    %1628 = vmatpush1.bf16.msra.mxu0 %v653
    %1629 = vmatprep.subr.bf16.mxu0 %v650
    %1630 = vmatpush1.bf16.msra.mxu0 %v649
    %1631 = vmatprep.subr.bf16.mxu0 %v646
    %1632 = vmatpush1.bf16.msra.mxu0 %v645
    %1633 = vmatprep.subr.bf16.mxu0 %v642
    %1634 = vmatpush1.bf16.msra.mxu0 %v641
    %1635 = vmatprep.subr.bf16.mxu0 %v638
    %1636 = vmatpush1.bf16.msra.mxu0 %v637
    %1637 = vmatprep.subr.bf16.mxu0 0
    %1638 = vmatpush2.bf16.msra.mxu0 0
    %1639 = vmatprep.subr.bf16.mxu0 0
    %1640 = vmatpush2.bf16.msra.mxu0 0
    %1641 = vmatprep.subr.bf16.mxu0 0
    %1642 = vmatpush2.bf16.msra.mxu0 0
    %1643 = vmatprep.subr.bf16.mxu0 0
    %1644 = vmatpush2.bf16.msra.mxu0 0
    %1645 = vmatprep.subr.bf16.mxu0 0
    %1646 = vmatpush2.bf16.msra.mxu0 0
    %1647 = vmatprep.subr.bf16.mxu0 0
    %1648 = vmatpush2.bf16.msra.mxu0 0
    %1649 = vmatprep.subr.bf16.mxu0 0
    %1650 = vmatpush2.bf16.msra.mxu0 0
    %1651 = vmatprep.subr.bf16.mxu0 0
    %1652 = vmatpush2.bf16.msra.mxu0 0
    %1653 = vmatprep.mubr.bf16.mxu0 0
    %1654 = vmatmul.mubr.bf16.gmra.mxu0 %v1579
    %v1655 = vpop.f32.mrf.mxu0
    %v1656 = vadd.f32 0.0, %v1655
    %v1657 = vpop.f32.mrf.mxu0
    %v1658 = vadd.f32 0.0, %v1657
    %v1659 = vpop.f32.mrf.mxu0
    %v1660 = vpop.f32.mrf.mxu0
    %1661 = vdwg.mxu0
    %v1666 = vcombine.low %v1615, %v1617
    %v1667 = vcombine.low %v1656, %v1658
    %v1669 = vunpack.c.l.s4 1983009808
    %v1670 = vunpack.c.0.s8 %v1669
    %v1671 = vlaneseq
    %v1672 = vshrl.u32 %v1671, 7
    %v1673 = vsub.s32 %v1670, %v1672
    %v1674 = vrot.slane %v1666, %v1673
    %v1676 = vunpack.c.l.s4 1983009808
    %v1677 = vunpack.c.0.s8 %v1676
    %v1678 = vlaneseq
    %v1679 = vshrl.u32 %v1678, 7
    %v1680 = vsub.s32 %v1677, %v1679
    %v1681 = vrot.slane %v1667, %v1680
    %v1682 = vcombine.low %v1674, %v1681
    %v1684 = vadd.f32 %v1577, %v1682
    %v1685 = vld [vmem:[#allocation3] sm:$0x3]
    %v1686 = vxor.u32 %v1574, 2147483648
    %v1687 = vmul.f32 %v1686, 1.442695
    %v1688 = vpow.pop %v1687
    %v1689 = vadd.f32 %v1688, 1.0
    %v1690 = vrcp.pop %v1689
    %v1691 = vmul.f32 1.0, %v1690
    %v1693 = vrot.slane %v1574, 2
    %v1695 = vxor.u32 %v1693, 2147483648
    %v1696 = vmul.f32 %v1695, 1.442695
    %v1697 = vpow.pop %v1696
    %v1698 = vadd.f32 %v1697, 1.0
    %v1699 = vrcp.pop %v1698
    %v1700 = vmul.f32 1.0, %v1699
    %v1701 = vrot.slane %v1574, 4
    %v1703 = vtanh.pop %v1701
    %v1704 = vrot.slane %v1574, 6
    %v1706 = vxor.u32 %v1704, 2147483648
    %v1707 = vmul.f32 %v1706, 1.442695
    %v1708 = vpow.pop %v1707
    %v1709 = vadd.f32 %v1708, 1.0
    %v1710 = vrcp.pop %v1709
    %v1711 = vmul.f32 1.0, %v1710
    %v1712 = vmul.f32 %v1700, %v1685
    %v1713 = vmul.f32 %v1691, %v1703
    %v1714 = vadd.f32 %v1712, %v1713
    %v1715 = vtanh.pop %v1714
    %v1716 = vmul.f32 %v1711, %v1715
    %v1717 = vld [vmem:[#allocation5] sm:$0x3]
    %v1718 = vxor.u32 %v1684, 2147483648
    %v1719 = vmul.f32 %v1718, 1.442695
    %v1720 = vpow.pop %v1719
    %v1721 = vadd.f32 %v1720, 1.0
    %v1722 = vrcp.pop %v1721
    %v1723 = vmul.f32 1.0, %v1722
    %v1725 = vrot.slane %v1684, 2
    %v1727 = vxor.u32 %v1725, 2147483648
    %v1728 = vmul.f32 %v1727, 1.442695
    %v1729 = vpow.pop %v1728
    %v1730 = vadd.f32 %v1729, 1.0
    %v1731 = vrcp.pop %v1730
    %v1732 = vmul.f32 1.0, %v1731
    %v1733 = vrot.slane %v1684, 4
    %v1735 = vtanh.pop %v1733
    %v1736 = vrot.slane %v1684, 6
    %v1738 = vxor.u32 %v1736, 2147483648
    %v1739 = vmul.f32 %v1738, 1.442695
    %v1740 = vpow.pop %v1739
    %v1741 = vadd.f32 %v1740, 1.0
    %v1742 = vrcp.pop %v1741
    %v1743 = vmul.f32 1.0, %v1742
    %v1744 = vmul.f32 %v1732, %v1717
    %v1745 = vmul.f32 %v1723, %v1735
    %v1746 = vadd.f32 %v1744, %v1745
    %v1747 = vtanh.pop %v1746
    %v1748 = vmul.f32 %v1743, %v1747
    %1749 = vst [vmem:[#allocation2] sm:$0x3] %v1716
    %1750 = vst [vmem:[#allocation3] sm:$0x3] %v1714
    %1751 = vst [vmem:[#allocation4] sm:$0x3] %v1748
    %1752 = vst [vmem:[#allocation5] sm:$0x3] %v1746
    %v1753 = vpack.c.bf16 %v1716, %v1716
    %s1754 = scalar_lea.vmem %s3, 3
    %1755 = vst [vmem:[%s1754] sm:$0x1] %v1753
    %v1756 = vpack.c.bf16 %v1748, %v1748
    %s1757 = scalar_lea.vmem %s188, 4
    %1758 = vst [vmem:[%s1757] sm:$0x1] %v1756
    %s1759 = scalar_lea.vmem [#allocation6], 16
    %v1760 = vld [vmem:[%s1759] sm:$0xf]
    %v1761 = vunpack.c.l.bf16 %v1760
    %v1762 = vld [vmem:[#allocation2] sm:$0x3]
    %v1763 = vpack.c.bf16 %v1762, %v1762
    %1764 = vmatprep.subr.bf16.mxu0 %v394
    %1765 = vmatpush1.bf16.msra.mxu0 %v393
    %1766 = vmatprep.subr.bf16.mxu0 %v390
    %1767 = vmatpush1.bf16.msra.mxu0 %v389
    %1768 = vmatprep.subr.bf16.mxu0 %v386
    %1769 = vmatpush1.bf16.msra.mxu0 %v385
    %1770 = vmatprep.subr.bf16.mxu0 %v382
    %1771 = vmatpush1.bf16.msra.mxu0 %v381
    %1772 = vmatprep.subr.bf16.mxu0 %v378
    %1773 = vmatpush1.bf16.msra.mxu0 %v377
    %1774 = vmatprep.subr.bf16.mxu0 %v374
    %1775 = vmatpush1.bf16.msra.mxu0 %v373
    %1776 = vmatprep.subr.bf16.mxu0 %v370
    %1777 = vmatpush1.bf16.msra.mxu0 %v369
    %1778 = vmatprep.subr.bf16.mxu0 %v366
    %1779 = vmatpush1.bf16.msra.mxu0 %v365
    %1780 = vmatprep.subr.bf16.mxu0 0
    %1781 = vmatpush2.bf16.msra.mxu0 0
    %1782 = vmatprep.subr.bf16.mxu0 0
    %1783 = vmatpush2.bf16.msra.mxu0 0
    %1784 = vmatprep.subr.bf16.mxu0 0
    %1785 = vmatpush2.bf16.msra.mxu0 0
    %1786 = vmatprep.subr.bf16.mxu0 0
    %1787 = vmatpush2.bf16.msra.mxu0 0
    %1788 = vmatprep.subr.bf16.mxu0 0
    %1789 = vmatpush2.bf16.msra.mxu0 0
    %1790 = vmatprep.subr.bf16.mxu0 0
    %1791 = vmatpush2.bf16.msra.mxu0 0
    %1792 = vmatprep.subr.bf16.mxu0 0
    %1793 = vmatpush2.bf16.msra.mxu0 0
    %1794 = vmatprep.subr.bf16.mxu0 0
    %1795 = vmatpush2.bf16.msra.mxu0 0
    %1796 = vmatprep.mubr.bf16.mxu0 0
    %1797 = vmatmul.mubr.bf16.gmra.mxu0 %v1763
    %v1798 = vpop.f32.mrf.mxu0
    %v1799 = vadd.f32 0.0, %v1798
    %v1800 = vpop.f32.mrf.mxu0
    %v1801 = vadd.f32 0.0, %v1800
    %v1802 = vpop.f32.mrf.mxu0
    %v1803 = vpop.f32.mrf.mxu0
    %1804 = vdwg.mxu0
    %1805 = vmatprep.subr.bf16.mxu0 %v396
    %1806 = vmatpush1.bf16.msra.mxu0 %v395
    %1807 = vmatprep.subr.bf16.mxu0 %v392
    %1808 = vmatpush1.bf16.msra.mxu0 %v391
    %1809 = vmatprep.subr.bf16.mxu0 %v388
    %1810 = vmatpush1.bf16.msra.mxu0 %v387
    %1811 = vmatprep.subr.bf16.mxu0 %v384
    %1812 = vmatpush1.bf16.msra.mxu0 %v383
    %1813 = vmatprep.subr.bf16.mxu0 %v380
    %1814 = vmatpush1.bf16.msra.mxu0 %v379
    %1815 = vmatprep.subr.bf16.mxu0 %v376
    %1816 = vmatpush1.bf16.msra.mxu0 %v375
    %1817 = vmatprep.subr.bf16.mxu0 %v372
    %1818 = vmatpush1.bf16.msra.mxu0 %v371
    %1819 = vmatprep.subr.bf16.mxu0 %v368
    %1820 = vmatpush1.bf16.msra.mxu0 %v367
    %1821 = vmatprep.subr.bf16.mxu0 0
    %1822 = vmatpush2.bf16.msra.mxu0 0
    %1823 = vmatprep.subr.bf16.mxu0 0
    %1824 = vmatpush2.bf16.msra.mxu0 0
    %1825 = vmatprep.subr.bf16.mxu0 0
    %1826 = vmatpush2.bf16.msra.mxu0 0
    %1827 = vmatprep.subr.bf16.mxu0 0
    %1828 = vmatpush2.bf16.msra.mxu0 0
    %1829 = vmatprep.subr.bf16.mxu0 0
    %1830 = vmatpush2.bf16.msra.mxu0 0
    %1831 = vmatprep.subr.bf16.mxu0 0
    %1832 = vmatpush2.bf16.msra.mxu0 0
    %1833 = vmatprep.subr.bf16.mxu0 0
    %1834 = vmatpush2.bf16.msra.mxu0 0
    %1835 = vmatprep.subr.bf16.mxu0 0
    %1836 = vmatpush2.bf16.msra.mxu0 0
    %1837 = vmatprep.mubr.bf16.mxu0 0
    %1838 = vmatmul.mubr.bf16.gmra.mxu0 %v1763
    %v1839 = vpop.f32.mrf.mxu0
    %v1840 = vadd.f32 0.0, %v1839
    %v1841 = vpop.f32.mrf.mxu0
    %v1842 = vadd.f32 0.0, %v1841
    %v1843 = vpop.f32.mrf.mxu0
    %v1844 = vpop.f32.mrf.mxu0
    %1845 = vdwg.mxu0
    %v1850 = vcombine.low %v1799, %v1801
    %v1851 = vcombine.low %v1840, %v1842
    %v1853 = vunpack.c.l.s4 1983009808
    %v1854 = vunpack.c.0.s8 %v1853
    %v1855 = vlaneseq
    %v1856 = vshrl.u32 %v1855, 7
    %v1857 = vsub.s32 %v1854, %v1856
    %v1858 = vrot.slane %v1850, %v1857
    %v1860 = vunpack.c.l.s4 1983009808
    %v1861 = vunpack.c.0.s8 %v1860
    %v1862 = vlaneseq
    %v1863 = vshrl.u32 %v1862, 7
    %v1864 = vsub.s32 %v1861, %v1863
    %v1865 = vrot.slane %v1851, %v1864
    %v1866 = vcombine.low %v1858, %v1865
    %v1868 = vadd.f32 %v1761, %v1866
    %s1869 = scalar_lea.vmem [#allocation7], 12
    %v1870 = vld [vmem:[%s1869] sm:$0xf]
    %v1871 = vunpack.c.l.bf16 %v1870
    %v1872 = vld [vmem:[#allocation4] sm:$0x3]
    %v1873 = vpack.c.bf16 %v1872, %v1872
    %1874 = vmatprep.subr.bf16.mxu0 %v664
    %1875 = vmatpush1.bf16.msra.mxu0 %v663
    %1876 = vmatprep.subr.bf16.mxu0 %v660
    %1877 = vmatpush1.bf16.msra.mxu0 %v659
    %1878 = vmatprep.subr.bf16.mxu0 %v656
    %1879 = vmatpush1.bf16.msra.mxu0 %v655
    %1880 = vmatprep.subr.bf16.mxu0 %v652
    %1881 = vmatpush1.bf16.msra.mxu0 %v651
    %1882 = vmatprep.subr.bf16.mxu0 %v648
    %1883 = vmatpush1.bf16.msra.mxu0 %v647
    %1884 = vmatprep.subr.bf16.mxu0 %v644
    %1885 = vmatpush1.bf16.msra.mxu0 %v643
    %1886 = vmatprep.subr.bf16.mxu0 %v640
    %1887 = vmatpush1.bf16.msra.mxu0 %v639
    %1888 = vmatprep.subr.bf16.mxu0 %v636
    %1889 = vmatpush1.bf16.msra.mxu0 %v635
    %1890 = vmatprep.subr.bf16.mxu0 0
    %1891 = vmatpush2.bf16.msra.mxu0 0
    %1892 = vmatprep.subr.bf16.mxu0 0
    %1893 = vmatpush2.bf16.msra.mxu0 0
    %1894 = vmatprep.subr.bf16.mxu0 0
    %1895 = vmatpush2.bf16.msra.mxu0 0
    %1896 = vmatprep.subr.bf16.mxu0 0
    %1897 = vmatpush2.bf16.msra.mxu0 0
    %1898 = vmatprep.subr.bf16.mxu0 0
    %1899 = vmatpush2.bf16.msra.mxu0 0
    %1900 = vmatprep.subr.bf16.mxu0 0
    %1901 = vmatpush2.bf16.msra.mxu0 0
    %1902 = vmatprep.subr.bf16.mxu0 0
    %1903 = vmatpush2.bf16.msra.mxu0 0
    %1904 = vmatprep.subr.bf16.mxu0 0
    %1905 = vmatpush2.bf16.msra.mxu0 0
    %1906 = vmatprep.mubr.bf16.mxu0 0
    %1907 = vmatmul.mubr.bf16.gmra.mxu0 %v1873
    %v1908 = vpop.f32.mrf.mxu0
    %v1909 = vadd.f32 0.0, %v1908
    %v1910 = vpop.f32.mrf.mxu0
    %v1911 = vadd.f32 0.0, %v1910
    %v1912 = vpop.f32.mrf.mxu0
    %v1913 = vpop.f32.mrf.mxu0
    %1914 = vdwg.mxu0
    %1915 = vmatprep.subr.bf16.mxu0 %v666
    %1916 = vmatpush1.bf16.msra.mxu0 %v665
    %1917 = vmatprep.subr.bf16.mxu0 %v662
    %1918 = vmatpush1.bf16.msra.mxu0 %v661
    %1919 = vmatprep.subr.bf16.mxu0 %v658
    %1920 = vmatpush1.bf16.msra.mxu0 %v657
    %1921 = vmatprep.subr.bf16.mxu0 %v654
    %1922 = vmatpush1.bf16.msra.mxu0 %v653
    %1923 = vmatprep.subr.bf16.mxu0 %v650
    %1924 = vmatpush1.bf16.msra.mxu0 %v649
    %1925 = vmatprep.subr.bf16.mxu0 %v646
    %1926 = vmatpush1.bf16.msra.mxu0 %v645
    %1927 = vmatprep.subr.bf16.mxu0 %v642
    %1928 = vmatpush1.bf16.msra.mxu0 %v641
    %1929 = vmatprep.subr.bf16.mxu0 %v638
    %1930 = vmatpush1.bf16.msra.mxu0 %v637
    %1931 = vmatprep.subr.bf16.mxu0 0
    %1932 = vmatpush2.bf16.msra.mxu0 0
    %1933 = vmatprep.subr.bf16.mxu0 0
    %1934 = vmatpush2.bf16.msra.mxu0 0
    %1935 = vmatprep.subr.bf16.mxu0 0
    %1936 = vmatpush2.bf16.msra.mxu0 0
    %1937 = vmatprep.subr.bf16.mxu0 0
    %1938 = vmatpush2.bf16.msra.mxu0 0
    %1939 = vmatprep.subr.bf16.mxu0 0
    %1940 = vmatpush2.bf16.msra.mxu0 0
    %1941 = vmatprep.subr.bf16.mxu0 0
    %1942 = vmatpush2.bf16.msra.mxu0 0
    %1943 = vmatprep.subr.bf16.mxu0 0
    %1944 = vmatpush2.bf16.msra.mxu0 0
    %1945 = vmatprep.subr.bf16.mxu0 0
    %1946 = vmatpush2.bf16.msra.mxu0 0
    %1947 = vmatprep.mubr.bf16.mxu0 0
    %1948 = vmatmul.mubr.bf16.gmra.mxu0 %v1873
    %v1949 = vpop.f32.mrf.mxu0
    %v1950 = vadd.f32 0.0, %v1949
    %v1951 = vpop.f32.mrf.mxu0
    %v1952 = vadd.f32 0.0, %v1951
    %v1953 = vpop.f32.mrf.mxu0
    %v1954 = vpop.f32.mrf.mxu0
    %1955 = vdwg.mxu0
    %v1960 = vcombine.low %v1909, %v1911
    %v1961 = vcombine.low %v1950, %v1952
    %v1963 = vunpack.c.l.s4 1983009808
    %v1964 = vunpack.c.0.s8 %v1963
    %v1965 = vlaneseq
    %v1966 = vshrl.u32 %v1965, 7
    %v1967 = vsub.s32 %v1964, %v1966
    %v1968 = vrot.slane %v1960, %v1967
    %v1970 = vunpack.c.l.s4 1983009808
    %v1971 = vunpack.c.0.s8 %v1970
    %v1972 = vlaneseq
    %v1973 = vshrl.u32 %v1972, 7
    %v1974 = vsub.s32 %v1971, %v1973
    %v1975 = vrot.slane %v1961, %v1974
    %v1976 = vcombine.low %v1968, %v1975
    %v1978 = vadd.f32 %v1871, %v1976
    %v1979 = vld [vmem:[#allocation3] sm:$0x3]
    %v1980 = vxor.u32 %v1868, 2147483648
    %v1981 = vmul.f32 %v1980, 1.442695
    %v1982 = vpow.pop %v1981
    %v1983 = vadd.f32 %v1982, 1.0
    %v1984 = vrcp.pop %v1983
    %v1985 = vmul.f32 1.0, %v1984
    %v1987 = vrot.slane %v1868, 2
    %v1989 = vxor.u32 %v1987, 2147483648
    %v1990 = vmul.f32 %v1989, 1.442695
    %v1991 = vpow.pop %v1990
    %v1992 = vadd.f32 %v1991, 1.0
    %v1993 = vrcp.pop %v1992
    %v1994 = vmul.f32 1.0, %v1993
    %v1995 = vrot.slane %v1868, 4
    %v1997 = vtanh.pop %v1995
    %v1998 = vrot.slane %v1868, 6
    %v2000 = vxor.u32 %v1998, 2147483648
    %v2001 = vmul.f32 %v2000, 1.442695
    %v2002 = vpow.pop %v2001
    %v2003 = vadd.f32 %v2002, 1.0
    %v2004 = vrcp.pop %v2003
    %v2005 = vmul.f32 1.0, %v2004
    %v2006 = vmul.f32 %v1994, %v1979
    %v2007 = vmul.f32 %v1985, %v1997
    %v2008 = vadd.f32 %v2006, %v2007
    %v2009 = vtanh.pop %v2008
    %v2010 = vmul.f32 %v2005, %v2009
    %v2011 = vld [vmem:[#allocation5] sm:$0x3]
    %v2012 = vxor.u32 %v1978, 2147483648
    %v2013 = vmul.f32 %v2012, 1.442695
    %v2014 = vpow.pop %v2013
    %v2015 = vadd.f32 %v2014, 1.0
    %v2016 = vrcp.pop %v2015
    %v2017 = vmul.f32 1.0, %v2016
    %v2019 = vrot.slane %v1978, 2
    %v2021 = vxor.u32 %v2019, 2147483648
    %v2022 = vmul.f32 %v2021, 1.442695
    %v2023 = vpow.pop %v2022
    %v2024 = vadd.f32 %v2023, 1.0
    %v2025 = vrcp.pop %v2024
    %v2026 = vmul.f32 1.0, %v2025
    %v2027 = vrot.slane %v1978, 4
    %v2029 = vtanh.pop %v2027
    %v2030 = vrot.slane %v1978, 6
    %v2032 = vxor.u32 %v2030, 2147483648
    %v2033 = vmul.f32 %v2032, 1.442695
    %v2034 = vpow.pop %v2033
    %v2035 = vadd.f32 %v2034, 1.0
    %v2036 = vrcp.pop %v2035
    %v2037 = vmul.f32 1.0, %v2036
    %v2038 = vmul.f32 %v2026, %v2011
    %v2039 = vmul.f32 %v2017, %v2029
    %v2040 = vadd.f32 %v2038, %v2039
    %v2041 = vtanh.pop %v2040
    %v2042 = vmul.f32 %v2037, %v2041
    %2043 = vst [vmem:[#allocation2] sm:$0x3] %v2010
    %2044 = vst [vmem:[#allocation3] sm:$0x3] %v2008
    %2045 = vst [vmem:[#allocation4] sm:$0x3] %v2042
    %2046 = vst [vmem:[#allocation5] sm:$0x3] %v2040
    %v2047 = vpack.c.bf16 %v2010, %v2010
    %s2048 = scalar_lea.vmem %s3, 4
    %2049 = vst [vmem:[%s2048] sm:$0x1] %v2047
    %v2050 = vpack.c.bf16 %v2042, %v2042
    %s2051 = scalar_lea.vmem %s188, 3
    %2052 = vst [vmem:[%s2051] sm:$0x1] %v2050
    %s2053 = scalar_lea.vmem [#allocation6], 20
    %v2054 = vld [vmem:[%s2053] sm:$0xf]
    %v2055 = vunpack.c.l.bf16 %v2054
    %v2056 = vld [vmem:[#allocation2] sm:$0x3]
    %v2057 = vpack.c.bf16 %v2056, %v2056
    %2058 = vmatprep.subr.bf16.mxu0 %v394
    %2059 = vmatpush1.bf16.msra.mxu0 %v393
    %2060 = vmatprep.subr.bf16.mxu0 %v390
    %2061 = vmatpush1.bf16.msra.mxu0 %v389
    %2062 = vmatprep.subr.bf16.mxu0 %v386
    %2063 = vmatpush1.bf16.msra.mxu0 %v385
    %2064 = vmatprep.subr.bf16.mxu0 %v382
    %2065 = vmatpush1.bf16.msra.mxu0 %v381
    %2066 = vmatprep.subr.bf16.mxu0 %v378
    %2067 = vmatpush1.bf16.msra.mxu0 %v377
    %2068 = vmatprep.subr.bf16.mxu0 %v374
    %2069 = vmatpush1.bf16.msra.mxu0 %v373
    %2070 = vmatprep.subr.bf16.mxu0 %v370
    %2071 = vmatpush1.bf16.msra.mxu0 %v369
    %2072 = vmatprep.subr.bf16.mxu0 %v366
    %2073 = vmatpush1.bf16.msra.mxu0 %v365
    %2074 = vmatprep.subr.bf16.mxu0 0
    %2075 = vmatpush2.bf16.msra.mxu0 0
    %2076 = vmatprep.subr.bf16.mxu0 0
    %2077 = vmatpush2.bf16.msra.mxu0 0
    %2078 = vmatprep.subr.bf16.mxu0 0
    %2079 = vmatpush2.bf16.msra.mxu0 0
    %2080 = vmatprep.subr.bf16.mxu0 0
    %2081 = vmatpush2.bf16.msra.mxu0 0
    %2082 = vmatprep.subr.bf16.mxu0 0
    %2083 = vmatpush2.bf16.msra.mxu0 0
    %2084 = vmatprep.subr.bf16.mxu0 0
    %2085 = vmatpush2.bf16.msra.mxu0 0
    %2086 = vmatprep.subr.bf16.mxu0 0
    %2087 = vmatpush2.bf16.msra.mxu0 0
    %2088 = vmatprep.subr.bf16.mxu0 0
    %2089 = vmatpush2.bf16.msra.mxu0 0
    %2090 = vmatprep.mubr.bf16.mxu0 0
    %2091 = vmatmul.mubr.bf16.gmra.mxu0 %v2057
    %v2092 = vpop.f32.mrf.mxu0
    %v2093 = vadd.f32 0.0, %v2092
    %v2094 = vpop.f32.mrf.mxu0
    %v2095 = vadd.f32 0.0, %v2094
    %v2096 = vpop.f32.mrf.mxu0
    %v2097 = vpop.f32.mrf.mxu0
    %2098 = vdwg.mxu0
    %2099 = vmatprep.subr.bf16.mxu0 %v396
    %2100 = vmatpush1.bf16.msra.mxu0 %v395
    %2101 = vmatprep.subr.bf16.mxu0 %v392
    %2102 = vmatpush1.bf16.msra.mxu0 %v391
    %2103 = vmatprep.subr.bf16.mxu0 %v388
    %2104 = vmatpush1.bf16.msra.mxu0 %v387
    %2105 = vmatprep.subr.bf16.mxu0 %v384
    %2106 = vmatpush1.bf16.msra.mxu0 %v383
    %2107 = vmatprep.subr.bf16.mxu0 %v380
    %2108 = vmatpush1.bf16.msra.mxu0 %v379
    %2109 = vmatprep.subr.bf16.mxu0 %v376
    %2110 = vmatpush1.bf16.msra.mxu0 %v375
    %2111 = vmatprep.subr.bf16.mxu0 %v372
    %2112 = vmatpush1.bf16.msra.mxu0 %v371
    %2113 = vmatprep.subr.bf16.mxu0 %v368
    %2114 = vmatpush1.bf16.msra.mxu0 %v367
    %2115 = vmatprep.subr.bf16.mxu0 0
    %2116 = vmatpush2.bf16.msra.mxu0 0
    %2117 = vmatprep.subr.bf16.mxu0 0
    %2118 = vmatpush2.bf16.msra.mxu0 0
    %2119 = vmatprep.subr.bf16.mxu0 0
    %2120 = vmatpush2.bf16.msra.mxu0 0
    %2121 = vmatprep.subr.bf16.mxu0 0
    %2122 = vmatpush2.bf16.msra.mxu0 0
    %2123 = vmatprep.subr.bf16.mxu0 0
    %2124 = vmatpush2.bf16.msra.mxu0 0
    %2125 = vmatprep.subr.bf16.mxu0 0
    %2126 = vmatpush2.bf16.msra.mxu0 0
    %2127 = vmatprep.subr.bf16.mxu0 0
    %2128 = vmatpush2.bf16.msra.mxu0 0
    %2129 = vmatprep.subr.bf16.mxu0 0
    %2130 = vmatpush2.bf16.msra.mxu0 0
    %2131 = vmatprep.mubr.bf16.mxu0 0
    %2132 = vmatmul.mubr.bf16.gmra.mxu0 %v2057
    %v2133 = vpop.f32.mrf.mxu0
    %v2134 = vadd.f32 0.0, %v2133
    %v2135 = vpop.f32.mrf.mxu0
    %v2136 = vadd.f32 0.0, %v2135
    %v2137 = vpop.f32.mrf.mxu0
    %v2138 = vpop.f32.mrf.mxu0
    %2139 = vdwg.mxu0
    %v2144 = vcombine.low %v2093, %v2095
    %v2145 = vcombine.low %v2134, %v2136
    %v2147 = vunpack.c.l.s4 1983009808
    %v2148 = vunpack.c.0.s8 %v2147
    %v2149 = vlaneseq
    %v2150 = vshrl.u32 %v2149, 7
    %v2151 = vsub.s32 %v2148, %v2150
    %v2152 = vrot.slane %v2144, %v2151
    %v2154 = vunpack.c.l.s4 1983009808
    %v2155 = vunpack.c.0.s8 %v2154
    %v2156 = vlaneseq
    %v2157 = vshrl.u32 %v2156, 7
    %v2158 = vsub.s32 %v2155, %v2157
    %v2159 = vrot.slane %v2145, %v2158
    %v2160 = vcombine.low %v2152, %v2159
    %v2162 = vadd.f32 %v2055, %v2160
    %s2163 = scalar_lea.vmem [#allocation7], 8
    %v2164 = vld [vmem:[%s2163] sm:$0xf]
    %v2165 = vunpack.c.l.bf16 %v2164
    %v2166 = vld [vmem:[#allocation4] sm:$0x3]
    %v2167 = vpack.c.bf16 %v2166, %v2166
    %2168 = vmatprep.subr.bf16.mxu0 %v664
    %2169 = vmatpush1.bf16.msra.mxu0 %v663
    %2170 = vmatprep.subr.bf16.mxu0 %v660
    %2171 = vmatpush1.bf16.msra.mxu0 %v659
    %2172 = vmatprep.subr.bf16.mxu0 %v656
    %2173 = vmatpush1.bf16.msra.mxu0 %v655
    %2174 = vmatprep.subr.bf16.mxu0 %v652
    %2175 = vmatpush1.bf16.msra.mxu0 %v651
    %2176 = vmatprep.subr.bf16.mxu0 %v648
    %2177 = vmatpush1.bf16.msra.mxu0 %v647
    %2178 = vmatprep.subr.bf16.mxu0 %v644
    %2179 = vmatpush1.bf16.msra.mxu0 %v643
    %2180 = vmatprep.subr.bf16.mxu0 %v640
    %2181 = vmatpush1.bf16.msra.mxu0 %v639
    %2182 = vmatprep.subr.bf16.mxu0 %v636
    %2183 = vmatpush1.bf16.msra.mxu0 %v635
    %2184 = vmatprep.subr.bf16.mxu0 0
    %2185 = vmatpush2.bf16.msra.mxu0 0
    %2186 = vmatprep.subr.bf16.mxu0 0
    %2187 = vmatpush2.bf16.msra.mxu0 0
    %2188 = vmatprep.subr.bf16.mxu0 0
    %2189 = vmatpush2.bf16.msra.mxu0 0
    %2190 = vmatprep.subr.bf16.mxu0 0
    %2191 = vmatpush2.bf16.msra.mxu0 0
    %2192 = vmatprep.subr.bf16.mxu0 0
    %2193 = vmatpush2.bf16.msra.mxu0 0
    %2194 = vmatprep.subr.bf16.mxu0 0
    %2195 = vmatpush2.bf16.msra.mxu0 0
    %2196 = vmatprep.subr.bf16.mxu0 0
    %2197 = vmatpush2.bf16.msra.mxu0 0
    %2198 = vmatprep.subr.bf16.mxu0 0
    %2199 = vmatpush2.bf16.msra.mxu0 0
    %2200 = vmatprep.mubr.bf16.mxu0 0
    %2201 = vmatmul.mubr.bf16.gmra.mxu0 %v2167
    %v2202 = vpop.f32.mrf.mxu0
    %v2203 = vadd.f32 0.0, %v2202
    %v2204 = vpop.f32.mrf.mxu0
    %v2205 = vadd.f32 0.0, %v2204
    %v2206 = vpop.f32.mrf.mxu0
    %v2207 = vpop.f32.mrf.mxu0
    %2208 = vdwg.mxu0
    %2209 = vmatprep.subr.bf16.mxu0 %v666
    %2210 = vmatpush1.bf16.msra.mxu0 %v665
    %2211 = vmatprep.subr.bf16.mxu0 %v662
    %2212 = vmatpush1.bf16.msra.mxu0 %v661
    %2213 = vmatprep.subr.bf16.mxu0 %v658
    %2214 = vmatpush1.bf16.msra.mxu0 %v657
    %2215 = vmatprep.subr.bf16.mxu0 %v654
    %2216 = vmatpush1.bf16.msra.mxu0 %v653
    %2217 = vmatprep.subr.bf16.mxu0 %v650
    %2218 = vmatpush1.bf16.msra.mxu0 %v649
    %2219 = vmatprep.subr.bf16.mxu0 %v646
    %2220 = vmatpush1.bf16.msra.mxu0 %v645
    %2221 = vmatprep.subr.bf16.mxu0 %v642
    %2222 = vmatpush1.bf16.msra.mxu0 %v641
    %2223 = vmatprep.subr.bf16.mxu0 %v638
    %2224 = vmatpush1.bf16.msra.mxu0 %v637
    %2225 = vmatprep.subr.bf16.mxu0 0
    %2226 = vmatpush2.bf16.msra.mxu0 0
    %2227 = vmatprep.subr.bf16.mxu0 0
    %2228 = vmatpush2.bf16.msra.mxu0 0
    %2229 = vmatprep.subr.bf16.mxu0 0
    %2230 = vmatpush2.bf16.msra.mxu0 0
    %2231 = vmatprep.subr.bf16.mxu0 0
    %2232 = vmatpush2.bf16.msra.mxu0 0
    %2233 = vmatprep.subr.bf16.mxu0 0
    %2234 = vmatpush2.bf16.msra.mxu0 0
    %2235 = vmatprep.subr.bf16.mxu0 0
    %2236 = vmatpush2.bf16.msra.mxu0 0
    %2237 = vmatprep.subr.bf16.mxu0 0
    %2238 = vmatpush2.bf16.msra.mxu0 0
    %2239 = vmatprep.subr.bf16.mxu0 0
    %2240 = vmatpush2.bf16.msra.mxu0 0
    %2241 = vmatprep.mubr.bf16.mxu0 0
    %2242 = vmatmul.mubr.bf16.gmra.mxu0 %v2167
    %v2243 = vpop.f32.mrf.mxu0
    %v2244 = vadd.f32 0.0, %v2243
    %v2245 = vpop.f32.mrf.mxu0
    %v2246 = vadd.f32 0.0, %v2245
    %v2247 = vpop.f32.mrf.mxu0
    %v2248 = vpop.f32.mrf.mxu0
    %2249 = vdwg.mxu0
    %v2254 = vcombine.low %v2203, %v2205
    %v2255 = vcombine.low %v2244, %v2246
    %v2257 = vunpack.c.l.s4 1983009808
    %v2258 = vunpack.c.0.s8 %v2257
    %v2259 = vlaneseq
    %v2260 = vshrl.u32 %v2259, 7
    %v2261 = vsub.s32 %v2258, %v2260
    %v2262 = vrot.slane %v2254, %v2261
    %v2264 = vunpack.c.l.s4 1983009808
    %v2265 = vunpack.c.0.s8 %v2264
    %v2266 = vlaneseq
    %v2267 = vshrl.u32 %v2266, 7
    %v2268 = vsub.s32 %v2265, %v2267
    %v2269 = vrot.slane %v2255, %v2268
    %v2270 = vcombine.low %v2262, %v2269
    %v2272 = vadd.f32 %v2165, %v2270
    %v2273 = vld [vmem:[#allocation3] sm:$0x3]
    %v2274 = vxor.u32 %v2162, 2147483648
    %v2275 = vmul.f32 %v2274, 1.442695
    %v2276 = vpow.pop %v2275
    %v2277 = vadd.f32 %v2276, 1.0
    %v2278 = vrcp.pop %v2277
    %v2279 = vmul.f32 1.0, %v2278
    %v2281 = vrot.slane %v2162, 2
    %v2283 = vxor.u32 %v2281, 2147483648
    %v2284 = vmul.f32 %v2283, 1.442695
    %v2285 = vpow.pop %v2284
    %v2286 = vadd.f32 %v2285, 1.0
    %v2287 = vrcp.pop %v2286
    %v2288 = vmul.f32 1.0, %v2287
    %v2289 = vrot.slane %v2162, 4
    %v2291 = vtanh.pop %v2289
    %v2292 = vrot.slane %v2162, 6
    %v2294 = vxor.u32 %v2292, 2147483648
    %v2295 = vmul.f32 %v2294, 1.442695
    %v2296 = vpow.pop %v2295
    %v2297 = vadd.f32 %v2296, 1.0
    %v2298 = vrcp.pop %v2297
    %v2299 = vmul.f32 1.0, %v2298
    %v2300 = vmul.f32 %v2288, %v2273
    %v2301 = vmul.f32 %v2279, %v2291
    %v2302 = vadd.f32 %v2300, %v2301
    %v2303 = vtanh.pop %v2302
    %v2304 = vmul.f32 %v2299, %v2303
    %v2305 = vld [vmem:[#allocation5] sm:$0x3]
    %v2306 = vxor.u32 %v2272, 2147483648
    %v2307 = vmul.f32 %v2306, 1.442695
    %v2308 = vpow.pop %v2307
    %v2309 = vadd.f32 %v2308, 1.0
    %v2310 = vrcp.pop %v2309
    %v2311 = vmul.f32 1.0, %v2310
    %v2313 = vrot.slane %v2272, 2
    %v2315 = vxor.u32 %v2313, 2147483648
    %v2316 = vmul.f32 %v2315, 1.442695
    %v2317 = vpow.pop %v2316
    %v2318 = vadd.f32 %v2317, 1.0
    %v2319 = vrcp.pop %v2318
    %v2320 = vmul.f32 1.0, %v2319
    %v2321 = vrot.slane %v2272, 4
    %v2323 = vtanh.pop %v2321
    %v2324 = vrot.slane %v2272, 6
    %v2326 = vxor.u32 %v2324, 2147483648
    %v2327 = vmul.f32 %v2326, 1.442695
    %v2328 = vpow.pop %v2327
    %v2329 = vadd.f32 %v2328, 1.0
    %v2330 = vrcp.pop %v2329
    %v2331 = vmul.f32 1.0, %v2330
    %v2332 = vmul.f32 %v2320, %v2305
    %v2333 = vmul.f32 %v2311, %v2323
    %v2334 = vadd.f32 %v2332, %v2333
    %v2335 = vtanh.pop %v2334
    %v2336 = vmul.f32 %v2331, %v2335
    %2337 = vst [vmem:[#allocation2] sm:$0x3] %v2304
    %2338 = vst [vmem:[#allocation3] sm:$0x3] %v2302
    %2339 = vst [vmem:[#allocation4] sm:$0x3] %v2336
    %2340 = vst [vmem:[#allocation5] sm:$0x3] %v2334
    %v2341 = vpack.c.bf16 %v2304, %v2304
    %s2342 = scalar_lea.vmem %s3, 5
    %2343 = vst [vmem:[%s2342] sm:$0x1] %v2341
    %v2344 = vpack.c.bf16 %v2336, %v2336
    %s2345 = scalar_lea.vmem %s188, 2
    %2346 = vst [vmem:[%s2345] sm:$0x1] %v2344
    %s2347 = scalar_lea.vmem [#allocation6], 24
    %v2348 = vld [vmem:[%s2347] sm:$0xf]
    %v2349 = vunpack.c.l.bf16 %v2348
    %v2350 = vld [vmem:[#allocation2] sm:$0x3]
    %v2351 = vpack.c.bf16 %v2350, %v2350
    %2352 = vmatprep.subr.bf16.mxu0 %v394
    %2353 = vmatpush1.bf16.msra.mxu0 %v393
    %2354 = vmatprep.subr.bf16.mxu0 %v390
    %2355 = vmatpush1.bf16.msra.mxu0 %v389
    %2356 = vmatprep.subr.bf16.mxu0 %v386
    %2357 = vmatpush1.bf16.msra.mxu0 %v385
    %2358 = vmatprep.subr.bf16.mxu0 %v382
    %2359 = vmatpush1.bf16.msra.mxu0 %v381
    %2360 = vmatprep.subr.bf16.mxu0 %v378
    %2361 = vmatpush1.bf16.msra.mxu0 %v377
    %2362 = vmatprep.subr.bf16.mxu0 %v374
    %2363 = vmatpush1.bf16.msra.mxu0 %v373
    %2364 = vmatprep.subr.bf16.mxu0 %v370
    %2365 = vmatpush1.bf16.msra.mxu0 %v369
    %2366 = vmatprep.subr.bf16.mxu0 %v366
    %2367 = vmatpush1.bf16.msra.mxu0 %v365
    %2368 = vmatprep.subr.bf16.mxu0 0
    %2369 = vmatpush2.bf16.msra.mxu0 0
    %2370 = vmatprep.subr.bf16.mxu0 0
    %2371 = vmatpush2.bf16.msra.mxu0 0
    %2372 = vmatprep.subr.bf16.mxu0 0
    %2373 = vmatpush2.bf16.msra.mxu0 0
    %2374 = vmatprep.subr.bf16.mxu0 0
    %2375 = vmatpush2.bf16.msra.mxu0 0
    %2376 = vmatprep.subr.bf16.mxu0 0
    %2377 = vmatpush2.bf16.msra.mxu0 0
    %2378 = vmatprep.subr.bf16.mxu0 0
    %2379 = vmatpush2.bf16.msra.mxu0 0
    %2380 = vmatprep.subr.bf16.mxu0 0
    %2381 = vmatpush2.bf16.msra.mxu0 0
    %2382 = vmatprep.subr.bf16.mxu0 0
    %2383 = vmatpush2.bf16.msra.mxu0 0
    %2384 = vmatprep.mubr.bf16.mxu0 0
    %2385 = vmatmul.mubr.bf16.gmra.mxu0 %v2351
    %v2386 = vpop.f32.mrf.mxu0
    %v2387 = vadd.f32 0.0, %v2386
    %v2388 = vpop.f32.mrf.mxu0
    %v2389 = vadd.f32 0.0, %v2388
    %v2390 = vpop.f32.mrf.mxu0
    %v2391 = vpop.f32.mrf.mxu0
    %2392 = vdwg.mxu0
    %2393 = vmatprep.subr.bf16.mxu0 %v396
    %2394 = vmatpush1.bf16.msra.mxu0 %v395
    %2395 = vmatprep.subr.bf16.mxu0 %v392
    %2396 = vmatpush1.bf16.msra.mxu0 %v391
    %2397 = vmatprep.subr.bf16.mxu0 %v388
    %2398 = vmatpush1.bf16.msra.mxu0 %v387
    %2399 = vmatprep.subr.bf16.mxu0 %v384
    %2400 = vmatpush1.bf16.msra.mxu0 %v383
    %2401 = vmatprep.subr.bf16.mxu0 %v380
    %2402 = vmatpush1.bf16.msra.mxu0 %v379
    %2403 = vmatprep.subr.bf16.mxu0 %v376
    %2404 = vmatpush1.bf16.msra.mxu0 %v375
    %2405 = vmatprep.subr.bf16.mxu0 %v372
    %2406 = vmatpush1.bf16.msra.mxu0 %v371
    %2407 = vmatprep.subr.bf16.mxu0 %v368
    %2408 = vmatpush1.bf16.msra.mxu0 %v367
    %2409 = vmatprep.subr.bf16.mxu0 0
    %2410 = vmatpush2.bf16.msra.mxu0 0
    %2411 = vmatprep.subr.bf16.mxu0 0
    %2412 = vmatpush2.bf16.msra.mxu0 0
    %2413 = vmatprep.subr.bf16.mxu0 0
    %2414 = vmatpush2.bf16.msra.mxu0 0
    %2415 = vmatprep.subr.bf16.mxu0 0
    %2416 = vmatpush2.bf16.msra.mxu0 0
    %2417 = vmatprep.subr.bf16.mxu0 0
    %2418 = vmatpush2.bf16.msra.mxu0 0
    %2419 = vmatprep.subr.bf16.mxu0 0
    %2420 = vmatpush2.bf16.msra.mxu0 0
    %2421 = vmatprep.subr.bf16.mxu0 0
    %2422 = vmatpush2.bf16.msra.mxu0 0
    %2423 = vmatprep.subr.bf16.mxu0 0
    %2424 = vmatpush2.bf16.msra.mxu0 0
    %2425 = vmatprep.mubr.bf16.mxu0 0
    %2426 = vmatmul.mubr.bf16.gmra.mxu0 %v2351
    %v2427 = vpop.f32.mrf.mxu0
    %v2428 = vadd.f32 0.0, %v2427
    %v2429 = vpop.f32.mrf.mxu0
    %v2430 = vadd.f32 0.0, %v2429
    %v2431 = vpop.f32.mrf.mxu0
    %v2432 = vpop.f32.mrf.mxu0
    %2433 = vdwg.mxu0
    %v2438 = vcombine.low %v2387, %v2389
    %v2439 = vcombine.low %v2428, %v2430
    %v2441 = vunpack.c.l.s4 1983009808
    %v2442 = vunpack.c.0.s8 %v2441
    %v2443 = vlaneseq
    %v2444 = vshrl.u32 %v2443, 7
    %v2445 = vsub.s32 %v2442, %v2444
    %v2446 = vrot.slane %v2438, %v2445
    %v2448 = vunpack.c.l.s4 1983009808
    %v2449 = vunpack.c.0.s8 %v2448
    %v2450 = vlaneseq
    %v2451 = vshrl.u32 %v2450, 7
    %v2452 = vsub.s32 %v2449, %v2451
    %v2453 = vrot.slane %v2439, %v2452
    %v2454 = vcombine.low %v2446, %v2453
    %v2456 = vadd.f32 %v2349, %v2454
    %s2457 = scalar_lea.vmem [#allocation7], 4
    %v2458 = vld [vmem:[%s2457] sm:$0xf]
    %v2459 = vunpack.c.l.bf16 %v2458
    %v2460 = vld [vmem:[#allocation4] sm:$0x3]
    %v2461 = vpack.c.bf16 %v2460, %v2460
    %2462 = vmatprep.subr.bf16.mxu0 %v664
    %2463 = vmatpush1.bf16.msra.mxu0 %v663
    %2464 = vmatprep.subr.bf16.mxu0 %v660
    %2465 = vmatpush1.bf16.msra.mxu0 %v659
    %2466 = vmatprep.subr.bf16.mxu0 %v656
    %2467 = vmatpush1.bf16.msra.mxu0 %v655
    %2468 = vmatprep.subr.bf16.mxu0 %v652
    %2469 = vmatpush1.bf16.msra.mxu0 %v651
    %2470 = vmatprep.subr.bf16.mxu0 %v648
    %2471 = vmatpush1.bf16.msra.mxu0 %v647
    %2472 = vmatprep.subr.bf16.mxu0 %v644
    %2473 = vmatpush1.bf16.msra.mxu0 %v643
    %2474 = vmatprep.subr.bf16.mxu0 %v640
    %2475 = vmatpush1.bf16.msra.mxu0 %v639
    %2476 = vmatprep.subr.bf16.mxu0 %v636
    %2477 = vmatpush1.bf16.msra.mxu0 %v635
    %2478 = vmatprep.subr.bf16.mxu0 0
    %2479 = vmatpush2.bf16.msra.mxu0 0
    %2480 = vmatprep.subr.bf16.mxu0 0
    %2481 = vmatpush2.bf16.msra.mxu0 0
    %2482 = vmatprep.subr.bf16.mxu0 0
    %2483 = vmatpush2.bf16.msra.mxu0 0
    %2484 = vmatprep.subr.bf16.mxu0 0
    %2485 = vmatpush2.bf16.msra.mxu0 0
    %2486 = vmatprep.subr.bf16.mxu0 0
    %2487 = vmatpush2.bf16.msra.mxu0 0
    %2488 = vmatprep.subr.bf16.mxu0 0
    %2489 = vmatpush2.bf16.msra.mxu0 0
    %2490 = vmatprep.subr.bf16.mxu0 0
    %2491 = vmatpush2.bf16.msra.mxu0 0
    %2492 = vmatprep.subr.bf16.mxu0 0
    %2493 = vmatpush2.bf16.msra.mxu0 0
    %2494 = vmatprep.mubr.bf16.mxu0 0
    %2495 = vmatmul.mubr.bf16.gmra.mxu0 %v2461
    %v2496 = vpop.f32.mrf.mxu0
    %v2497 = vadd.f32 0.0, %v2496
    %v2498 = vpop.f32.mrf.mxu0
    %v2499 = vadd.f32 0.0, %v2498
    %v2500 = vpop.f32.mrf.mxu0
    %v2501 = vpop.f32.mrf.mxu0
    %2502 = vdwg.mxu0
    %2503 = vmatprep.subr.bf16.mxu0 %v666
    %2504 = vmatpush1.bf16.msra.mxu0 %v665
    %2505 = vmatprep.subr.bf16.mxu0 %v662
    %2506 = vmatpush1.bf16.msra.mxu0 %v661
    %2507 = vmatprep.subr.bf16.mxu0 %v658
    %2508 = vmatpush1.bf16.msra.mxu0 %v657
    %2509 = vmatprep.subr.bf16.mxu0 %v654
    %2510 = vmatpush1.bf16.msra.mxu0 %v653
    %2511 = vmatprep.subr.bf16.mxu0 %v650
    %2512 = vmatpush1.bf16.msra.mxu0 %v649
    %2513 = vmatprep.subr.bf16.mxu0 %v646
    %2514 = vmatpush1.bf16.msra.mxu0 %v645
    %2515 = vmatprep.subr.bf16.mxu0 %v642
    %2516 = vmatpush1.bf16.msra.mxu0 %v641
    %2517 = vmatprep.subr.bf16.mxu0 %v638
    %2518 = vmatpush1.bf16.msra.mxu0 %v637
    %2519 = vmatprep.subr.bf16.mxu0 0
    %2520 = vmatpush2.bf16.msra.mxu0 0
    %2521 = vmatprep.subr.bf16.mxu0 0
    %2522 = vmatpush2.bf16.msra.mxu0 0
    %2523 = vmatprep.subr.bf16.mxu0 0
    %2524 = vmatpush2.bf16.msra.mxu0 0
    %2525 = vmatprep.subr.bf16.mxu0 0
    %2526 = vmatpush2.bf16.msra.mxu0 0
    %2527 = vmatprep.subr.bf16.mxu0 0
    %2528 = vmatpush2.bf16.msra.mxu0 0
    %2529 = vmatprep.subr.bf16.mxu0 0
    %2530 = vmatpush2.bf16.msra.mxu0 0
    %2531 = vmatprep.subr.bf16.mxu0 0
    %2532 = vmatpush2.bf16.msra.mxu0 0
    %2533 = vmatprep.subr.bf16.mxu0 0
    %2534 = vmatpush2.bf16.msra.mxu0 0
    %2535 = vmatprep.mubr.bf16.mxu0 0
    %2536 = vmatmul.mubr.bf16.gmra.mxu0 %v2461
    %v2537 = vpop.f32.mrf.mxu0
    %v2538 = vadd.f32 0.0, %v2537
    %v2539 = vpop.f32.mrf.mxu0
    %v2540 = vadd.f32 0.0, %v2539
    %v2541 = vpop.f32.mrf.mxu0
    %v2542 = vpop.f32.mrf.mxu0
    %2543 = vdwg.mxu0
    %v2548 = vcombine.low %v2497, %v2499
    %v2549 = vcombine.low %v2538, %v2540
    %v2551 = vunpack.c.l.s4 1983009808
    %v2552 = vunpack.c.0.s8 %v2551
    %v2553 = vlaneseq
    %v2554 = vshrl.u32 %v2553, 7
    %v2555 = vsub.s32 %v2552, %v2554
    %v2556 = vrot.slane %v2548, %v2555
    %v2558 = vunpack.c.l.s4 1983009808
    %v2559 = vunpack.c.0.s8 %v2558
    %v2560 = vlaneseq
    %v2561 = vshrl.u32 %v2560, 7
    %v2562 = vsub.s32 %v2559, %v2561
    %v2563 = vrot.slane %v2549, %v2562
    %v2564 = vcombine.low %v2556, %v2563
    %v2566 = vadd.f32 %v2459, %v2564
    %v2567 = vld [vmem:[#allocation3] sm:$0x3]
    %v2568 = vxor.u32 %v2456, 2147483648
    %v2569 = vmul.f32 %v2568, 1.442695
    %v2570 = vpow.pop %v2569
    %v2571 = vadd.f32 %v2570, 1.0
    %v2572 = vrcp.pop %v2571
    %v2573 = vmul.f32 1.0, %v2572
    %v2575 = vrot.slane %v2456, 2
    %v2577 = vxor.u32 %v2575, 2147483648
    %v2578 = vmul.f32 %v2577, 1.442695
    %v2579 = vpow.pop %v2578
    %v2580 = vadd.f32 %v2579, 1.0
    %v2581 = vrcp.pop %v2580
    %v2582 = vmul.f32 1.0, %v2581
    %v2583 = vrot.slane %v2456, 4
    %v2585 = vtanh.pop %v2583
    %v2586 = vrot.slane %v2456, 6
    %v2588 = vxor.u32 %v2586, 2147483648
    %v2589 = vmul.f32 %v2588, 1.442695
    %v2590 = vpow.pop %v2589
    %v2591 = vadd.f32 %v2590, 1.0
    %v2592 = vrcp.pop %v2591
    %v2593 = vmul.f32 1.0, %v2592
    %v2594 = vmul.f32 %v2582, %v2567
    %v2595 = vmul.f32 %v2573, %v2585
    %v2596 = vadd.f32 %v2594, %v2595
    %v2597 = vtanh.pop %v2596
    %v2598 = vmul.f32 %v2593, %v2597
    %v2599 = vld [vmem:[#allocation5] sm:$0x3]
    %v2600 = vxor.u32 %v2566, 2147483648
    %v2601 = vmul.f32 %v2600, 1.442695
    %v2602 = vpow.pop %v2601
    %v2603 = vadd.f32 %v2602, 1.0
    %v2604 = vrcp.pop %v2603
    %v2605 = vmul.f32 1.0, %v2604
    %v2607 = vrot.slane %v2566, 2
    %v2609 = vxor.u32 %v2607, 2147483648
    %v2610 = vmul.f32 %v2609, 1.442695
    %v2611 = vpow.pop %v2610
    %v2612 = vadd.f32 %v2611, 1.0
    %v2613 = vrcp.pop %v2612
    %v2614 = vmul.f32 1.0, %v2613
    %v2615 = vrot.slane %v2566, 4
    %v2617 = vtanh.pop %v2615
    %v2618 = vrot.slane %v2566, 6
    %v2620 = vxor.u32 %v2618, 2147483648
    %v2621 = vmul.f32 %v2620, 1.442695
    %v2622 = vpow.pop %v2621
    %v2623 = vadd.f32 %v2622, 1.0
    %v2624 = vrcp.pop %v2623
    %v2625 = vmul.f32 1.0, %v2624
    %v2626 = vmul.f32 %v2614, %v2599
    %v2627 = vmul.f32 %v2605, %v2617
    %v2628 = vadd.f32 %v2626, %v2627
    %v2629 = vtanh.pop %v2628
    %v2630 = vmul.f32 %v2625, %v2629
    %2631 = vst [vmem:[#allocation2] sm:$0x3] %v2598
    %2632 = vst [vmem:[#allocation3] sm:$0x3] %v2596
    %2633 = vst [vmem:[#allocation4] sm:$0x3] %v2630
    %2634 = vst [vmem:[#allocation5] sm:$0x3] %v2628
    %v2635 = vpack.c.bf16 %v2598, %v2598
    %s2636 = scalar_lea.vmem %s3, 6
    %2637 = vst [vmem:[%s2636] sm:$0x1] %v2635
    %v2638 = vpack.c.bf16 %v2630, %v2630
    %s2639 = scalar_lea.vmem %s188, 1
    %2640 = vst [vmem:[%s2639] sm:$0x1] %v2638
    %s2641 = scalar_lea.vmem [#allocation6], 28
    %v2642 = vld [vmem:[%s2641] sm:$0xf]
    %v2643 = vunpack.c.l.bf16 %v2642
    %v2644 = vld [vmem:[#allocation2] sm:$0x3]
    %v2645 = vpack.c.bf16 %v2644, %v2644
    %2646 = vmatprep.subr.bf16.mxu0 %v394
    %2647 = vmatpush1.bf16.msra.mxu0 %v393
    %2648 = vmatprep.subr.bf16.mxu0 %v390
    %2649 = vmatpush1.bf16.msra.mxu0 %v389
    %2650 = vmatprep.subr.bf16.mxu0 %v386
    %2651 = vmatpush1.bf16.msra.mxu0 %v385
    %2652 = vmatprep.subr.bf16.mxu0 %v382
    %2653 = vmatpush1.bf16.msra.mxu0 %v381
    %2654 = vmatprep.subr.bf16.mxu0 %v378
    %2655 = vmatpush1.bf16.msra.mxu0 %v377
    %2656 = vmatprep.subr.bf16.mxu0 %v374
    %2657 = vmatpush1.bf16.msra.mxu0 %v373
    %2658 = vmatprep.subr.bf16.mxu0 %v370
    %2659 = vmatpush1.bf16.msra.mxu0 %v369
    %2660 = vmatprep.subr.bf16.mxu0 %v366
    %2661 = vmatpush1.bf16.msra.mxu0 %v365
    %2662 = vmatprep.subr.bf16.mxu0 0
    %2663 = vmatpush2.bf16.msra.mxu0 0
    %2664 = vmatprep.subr.bf16.mxu0 0
    %2665 = vmatpush2.bf16.msra.mxu0 0
    %2666 = vmatprep.subr.bf16.mxu0 0
    %2667 = vmatpush2.bf16.msra.mxu0 0
    %2668 = vmatprep.subr.bf16.mxu0 0
    %2669 = vmatpush2.bf16.msra.mxu0 0
    %2670 = vmatprep.subr.bf16.mxu0 0
    %2671 = vmatpush2.bf16.msra.mxu0 0
    %2672 = vmatprep.subr.bf16.mxu0 0
    %2673 = vmatpush2.bf16.msra.mxu0 0
    %2674 = vmatprep.subr.bf16.mxu0 0
    %2675 = vmatpush2.bf16.msra.mxu0 0
    %2676 = vmatprep.subr.bf16.mxu0 0
    %2677 = vmatpush2.bf16.msra.mxu0 0
    %2678 = vmatprep.mubr.bf16.mxu0 0
    %2679 = vmatmul.mubr.bf16.gmra.mxu0 %v2645
    %v2680 = vpop.f32.mrf.mxu0
    %v2681 = vadd.f32 0.0, %v2680
    %v2682 = vpop.f32.mrf.mxu0
    %v2683 = vadd.f32 0.0, %v2682
    %v2684 = vpop.f32.mrf.mxu0
    %v2685 = vpop.f32.mrf.mxu0
    %2686 = vdwg.mxu0
    %2687 = vmatprep.subr.bf16.mxu0 %v396
    %2688 = vmatpush1.bf16.msra.mxu0 %v395
    %2689 = vmatprep.subr.bf16.mxu0 %v392
    %2690 = vmatpush1.bf16.msra.mxu0 %v391
    %2691 = vmatprep.subr.bf16.mxu0 %v388
    %2692 = vmatpush1.bf16.msra.mxu0 %v387
    %2693 = vmatprep.subr.bf16.mxu0 %v384
    %2694 = vmatpush1.bf16.msra.mxu0 %v383
    %2695 = vmatprep.subr.bf16.mxu0 %v380
    %2696 = vmatpush1.bf16.msra.mxu0 %v379
    %2697 = vmatprep.subr.bf16.mxu0 %v376
    %2698 = vmatpush1.bf16.msra.mxu0 %v375
    %2699 = vmatprep.subr.bf16.mxu0 %v372
    %2700 = vmatpush1.bf16.msra.mxu0 %v371
    %2701 = vmatprep.subr.bf16.mxu0 %v368
    %2702 = vmatpush1.bf16.msra.mxu0 %v367
    %2703 = vmatprep.subr.bf16.mxu0 0
    %2704 = vmatpush2.bf16.msra.mxu0 0
    %2705 = vmatprep.subr.bf16.mxu0 0
    %2706 = vmatpush2.bf16.msra.mxu0 0
    %2707 = vmatprep.subr.bf16.mxu0 0
    %2708 = vmatpush2.bf16.msra.mxu0 0
    %2709 = vmatprep.subr.bf16.mxu0 0
    %2710 = vmatpush2.bf16.msra.mxu0 0
    %2711 = vmatprep.subr.bf16.mxu0 0
    %2712 = vmatpush2.bf16.msra.mxu0 0
    %2713 = vmatprep.subr.bf16.mxu0 0
    %2714 = vmatpush2.bf16.msra.mxu0 0
    %2715 = vmatprep.subr.bf16.mxu0 0
    %2716 = vmatpush2.bf16.msra.mxu0 0
    %2717 = vmatprep.subr.bf16.mxu0 0
    %2718 = vmatpush2.bf16.msra.mxu0 0
    %2719 = vmatprep.mubr.bf16.mxu0 0
    %2720 = vmatmul.mubr.bf16.gmra.mxu0 %v2645
    %v2721 = vpop.f32.mrf.mxu0
    %v2722 = vadd.f32 0.0, %v2721
    %v2723 = vpop.f32.mrf.mxu0
    %v2724 = vadd.f32 0.0, %v2723
    %v2725 = vpop.f32.mrf.mxu0
    %v2726 = vpop.f32.mrf.mxu0
    %2727 = vdwg.mxu0
    %v2732 = vcombine.low %v2681, %v2683
    %v2733 = vcombine.low %v2722, %v2724
    %v2735 = vunpack.c.l.s4 1983009808
    %v2736 = vunpack.c.0.s8 %v2735
    %v2737 = vlaneseq
    %v2738 = vshrl.u32 %v2737, 7
    %v2739 = vsub.s32 %v2736, %v2738
    %v2740 = vrot.slane %v2732, %v2739
    %v2742 = vunpack.c.l.s4 1983009808
    %v2743 = vunpack.c.0.s8 %v2742
    %v2744 = vlaneseq
    %v2745 = vshrl.u32 %v2744, 7
    %v2746 = vsub.s32 %v2743, %v2745
    %v2747 = vrot.slane %v2733, %v2746
    %v2748 = vcombine.low %v2740, %v2747
    %v2750 = vadd.f32 %v2643, %v2748
    %v2751 = vld [vmem:[#allocation7] sm:$0xf]
    %v2752 = vunpack.c.l.bf16 %v2751
    %v2753 = vld [vmem:[#allocation4] sm:$0x3]
    %v2754 = vpack.c.bf16 %v2753, %v2753
    %2755 = vmatprep.subr.bf16.mxu0 %v664
    %2756 = vmatpush1.bf16.msra.mxu0 %v663
    %2757 = vmatprep.subr.bf16.mxu0 %v660
    %2758 = vmatpush1.bf16.msra.mxu0 %v659
    %2759 = vmatprep.subr.bf16.mxu0 %v656
    %2760 = vmatpush1.bf16.msra.mxu0 %v655
    %2761 = vmatprep.subr.bf16.mxu0 %v652
    %2762 = vmatpush1.bf16.msra.mxu0 %v651
    %2763 = vmatprep.subr.bf16.mxu0 %v648
    %2764 = vmatpush1.bf16.msra.mxu0 %v647
    %2765 = vmatprep.subr.bf16.mxu0 %v644
    %2766 = vmatpush1.bf16.msra.mxu0 %v643
    %2767 = vmatprep.subr.bf16.mxu0 %v640
    %2768 = vmatpush1.bf16.msra.mxu0 %v639
    %2769 = vmatprep.subr.bf16.mxu0 %v636
    %2770 = vmatpush1.bf16.msra.mxu0 %v635
    %2771 = vmatprep.subr.bf16.mxu0 0
    %2772 = vmatpush2.bf16.msra.mxu0 0
    %2773 = vmatprep.subr.bf16.mxu0 0
    %2774 = vmatpush2.bf16.msra.mxu0 0
    %2775 = vmatprep.subr.bf16.mxu0 0
    %2776 = vmatpush2.bf16.msra.mxu0 0
    %2777 = vmatprep.subr.bf16.mxu0 0
    %2778 = vmatpush2.bf16.msra.mxu0 0
    %2779 = vmatprep.subr.bf16.mxu0 0
    %2780 = vmatpush2.bf16.msra.mxu0 0
    %2781 = vmatprep.subr.bf16.mxu0 0
    %2782 = vmatpush2.bf16.msra.mxu0 0
    %2783 = vmatprep.subr.bf16.mxu0 0
    %2784 = vmatpush2.bf16.msra.mxu0 0
    %2785 = vmatprep.subr.bf16.mxu0 0
    %2786 = vmatpush2.bf16.msra.mxu0 0
    %2787 = vmatprep.mubr.bf16.mxu0 0
    %2788 = vmatmul.mubr.bf16.gmra.mxu0 %v2754
    %v2789 = vpop.f32.mrf.mxu0
    %v2790 = vadd.f32 0.0, %v2789
    %v2791 = vpop.f32.mrf.mxu0
    %v2792 = vadd.f32 0.0, %v2791
    %v2793 = vpop.f32.mrf.mxu0
    %v2794 = vpop.f32.mrf.mxu0
    %2795 = vdwg.mxu0
    %2796 = vmatprep.subr.bf16.mxu0 %v666
    %2797 = vmatpush1.bf16.msra.mxu0 %v665
    %2798 = vmatprep.subr.bf16.mxu0 %v662
    %2799 = vmatpush1.bf16.msra.mxu0 %v661
    %2800 = vmatprep.subr.bf16.mxu0 %v658
    %2801 = vmatpush1.bf16.msra.mxu0 %v657
    %2802 = vmatprep.subr.bf16.mxu0 %v654
    %2803 = vmatpush1.bf16.msra.mxu0 %v653
    %2804 = vmatprep.subr.bf16.mxu0 %v650
    %2805 = vmatpush1.bf16.msra.mxu0 %v649
    %2806 = vmatprep.subr.bf16.mxu0 %v646
    %2807 = vmatpush1.bf16.msra.mxu0 %v645
    %2808 = vmatprep.subr.bf16.mxu0 %v642
    %2809 = vmatpush1.bf16.msra.mxu0 %v641
    %2810 = vmatprep.subr.bf16.mxu0 %v638
    %2811 = vmatpush1.bf16.msra.mxu0 %v637
    %2812 = vmatprep.subr.bf16.mxu0 0
    %2813 = vmatpush2.bf16.msra.mxu0 0
    %2814 = vmatprep.subr.bf16.mxu0 0
    %2815 = vmatpush2.bf16.msra.mxu0 0
    %2816 = vmatprep.subr.bf16.mxu0 0
    %2817 = vmatpush2.bf16.msra.mxu0 0
    %2818 = vmatprep.subr.bf16.mxu0 0
    %2819 = vmatpush2.bf16.msra.mxu0 0
    %2820 = vmatprep.subr.bf16.mxu0 0
    %2821 = vmatpush2.bf16.msra.mxu0 0
    %2822 = vmatprep.subr.bf16.mxu0 0
    %2823 = vmatpush2.bf16.msra.mxu0 0
    %2824 = vmatprep.subr.bf16.mxu0 0
    %2825 = vmatpush2.bf16.msra.mxu0 0
    %2826 = vmatprep.subr.bf16.mxu0 0
    %2827 = vmatpush2.bf16.msra.mxu0 0
    %2828 = vmatprep.mubr.bf16.mxu0 0
    %2829 = vmatmul.mubr.bf16.gmra.mxu0 %v2754
    %v2830 = vpop.f32.mrf.mxu0
    %v2831 = vadd.f32 0.0, %v2830
    %v2832 = vpop.f32.mrf.mxu0
    %v2833 = vadd.f32 0.0, %v2832
    %v2834 = vpop.f32.mrf.mxu0
    %v2835 = vpop.f32.mrf.mxu0
    %2836 = vdwg.mxu0
    %v2841 = vcombine.low %v2790, %v2792
    %v2842 = vcombine.low %v2831, %v2833
    %v2844 = vunpack.c.l.s4 1983009808
    %v2845 = vunpack.c.0.s8 %v2844
    %v2846 = vlaneseq
    %v2847 = vshrl.u32 %v2846, 7
    %v2848 = vsub.s32 %v2845, %v2847
    %v2849 = vrot.slane %v2841, %v2848
    %v2851 = vunpack.c.l.s4 1983009808
    %v2852 = vunpack.c.0.s8 %v2851
    %v2853 = vlaneseq
    %v2854 = vshrl.u32 %v2853, 7
    %v2855 = vsub.s32 %v2852, %v2854
    %v2856 = vrot.slane %v2842, %v2855
    %v2857 = vcombine.low %v2849, %v2856
    %v2859 = vadd.f32 %v2752, %v2857
    %v2860 = vld [vmem:[#allocation3] sm:$0x3]
    %v2861 = vxor.u32 %v2750, 2147483648
    %v2862 = vmul.f32 %v2861, 1.442695
    %v2863 = vpow.pop %v2862
    %v2864 = vadd.f32 %v2863, 1.0
    %v2865 = vrcp.pop %v2864
    %v2866 = vmul.f32 1.0, %v2865
    %v2868 = vrot.slane %v2750, 2
    %v2870 = vxor.u32 %v2868, 2147483648
    %v2871 = vmul.f32 %v2870, 1.442695
    %v2872 = vpow.pop %v2871
    %v2873 = vadd.f32 %v2872, 1.0
    %v2874 = vrcp.pop %v2873
    %v2875 = vmul.f32 1.0, %v2874
    %v2876 = vrot.slane %v2750, 4
    %v2878 = vtanh.pop %v2876
    %v2879 = vrot.slane %v2750, 6
    %v2881 = vxor.u32 %v2879, 2147483648
    %v2882 = vmul.f32 %v2881, 1.442695
    %v2883 = vpow.pop %v2882
    %v2884 = vadd.f32 %v2883, 1.0
    %v2885 = vrcp.pop %v2884
    %v2886 = vmul.f32 1.0, %v2885
    %v2887 = vmul.f32 %v2875, %v2860
    %v2888 = vmul.f32 %v2866, %v2878
    %v2889 = vadd.f32 %v2887, %v2888
    %v2890 = vtanh.pop %v2889
    %v2891 = vmul.f32 %v2886, %v2890
    %v2892 = vld [vmem:[#allocation5] sm:$0x3]
    %v2893 = vxor.u32 %v2859, 2147483648
    %v2894 = vmul.f32 %v2893, 1.442695
    %v2895 = vpow.pop %v2894
    %v2896 = vadd.f32 %v2895, 1.0
    %v2897 = vrcp.pop %v2896
    %v2898 = vmul.f32 1.0, %v2897
    %v2900 = vrot.slane %v2859, 2
    %v2902 = vxor.u32 %v2900, 2147483648
    %v2903 = vmul.f32 %v2902, 1.442695
    %v2904 = vpow.pop %v2903
    %v2905 = vadd.f32 %v2904, 1.0
    %v2906 = vrcp.pop %v2905
    %v2907 = vmul.f32 1.0, %v2906
    %v2908 = vrot.slane %v2859, 4
    %v2910 = vtanh.pop %v2908
    %v2911 = vrot.slane %v2859, 6
    %v2913 = vxor.u32 %v2911, 2147483648
    %v2914 = vmul.f32 %v2913, 1.442695
    %v2915 = vpow.pop %v2914
    %v2916 = vadd.f32 %v2915, 1.0
    %v2917 = vrcp.pop %v2916
    %v2918 = vmul.f32 1.0, %v2917
    %v2919 = vmul.f32 %v2907, %v2892
    %v2920 = vmul.f32 %v2898, %v2910
    %v2921 = vadd.f32 %v2919, %v2920
    %v2922 = vtanh.pop %v2921
    %v2923 = vmul.f32 %v2918, %v2922
    %2924 = vst [vmem:[#allocation2] sm:$0x3] %v2891
    %2925 = vst [vmem:[#allocation3] sm:$0x3] %v2889
    %2926 = vst [vmem:[#allocation4] sm:$0x3] %v2923
    %2927 = vst [vmem:[#allocation5] sm:$0x3] %v2921
    %v2928 = vpack.c.bf16 %v2891, %v2891
    %s2929 = scalar_lea.vmem %s3, 7
    %2930 = vst [vmem:[%s2929] sm:$0x1] %v2928
    %v2931 = vpack.c.bf16 %v2923, %v2923
    %2932 = vst [vmem:[%s188] sm:$0x1] %v2931
    %s2933 = ssub.s32 0, 0
    %s2934 = smul.u32 8, %s2933
    %p2935 = scmp.lt.s32.totalorder %s2934, 7
    %s2936 = scalar_select %p2935, %s2934, 7
    %s2937 = scalar_lea.vmem %s4, %s2936
    // Predicated region
    $region104: #{_lambda_.6} parent=1 // pred_check
      _
    $region105: #{_lambda_.6} parent=1 // pred_check_branch
      %2939 = sbr.rel (0) target = $region107
    $region106: #{_lambda_.6} parent=1 // pred_region
      _
    $region107: #{_lambda_.6} parent=1 // pred_fallthru
      _
    // Predicated region
    $region108: #{_lambda_.6} parent=1 // pred_check
      _
    $region109: #{_lambda_.6} parent=1 // pred_check_branch
      %2941 = sbr.rel (0) target = $region111
    $region110: #{_lambda_.6} parent=1 // pred_region
      %s2942 = ssub.s32 0, 0
      %s2943 = smul.u32 8, %s2942
    $region111: #{_lambda_.6} parent=1 // pred_fallthru
      _
    // Predicated region
    $region112: #{_lambda_.6} parent=1 // pred_check
      _
    $region113: #{_lambda_.6} parent=1 // pred_check_branch
      %2945 = sbr.rel (0) target = $region115
    $region114: #{_lambda_.6} parent=1 // pred_region
      _
    $region115: #{_lambda_.6} parent=1 // pred_fallthru
      _
    // Predicated region
    $region116: #{_lambda_.6} parent=1 // pred_check
      _
    $region117: #{_lambda_.6} parent=1 // pred_check_branch
      %2947 = sbr.rel (0) target = $region119
    $region118: #{_lambda_.6} parent=1 // pred_region
      %s2948 = ssub.s32 0, 0
      %s2949 = smul.u32 8, %s2948
      %p2950 = scmp.lt.s32.totalorder %s2949, 7
      %s2951 = scalar_select %p2950, %s2949, 7
      %s2952 = scalar_lea.vmem %s4, %s2951
    $region119: #{_lambda_.6} parent=1 // pred_fallthru
      _
    %2953 = vsyncpa [#allocation9], 1

</llo_original>
